<compile_context>
chip_gen: v5e
topology: v5e:2x2
jax: 0.10.0
libtpu: 0.0.40
codegen_flags: <defaults>
</compile_context>

<pallas_src>
import functools

import jax
import jax.numpy as jnp
from jax.experimental import pallas as pl
from jax.experimental.pallas import tpu as pltpu

KERNEL_SIZES = (3, 3, 3, 5, 5)   # static per-conv kernel sizes from the module


def _round_up(v, m):
    return ((v + m - 1) // m) * m


def _pick_tm(m_out, target=512):
    """Largest 8-aligned divisor of m_out <= target that keeps >=2 grid blocks."""
    if m_out < 16:
        return m_out
    best, d = 8, 8
    cap = min(target, m_out // 2)            # >=2 blocks -> both v7x TCs used
    while d <= cap:
        if m_out % d == 0:
            best = d
        d += 8
    return best


# ----------------------------------------------------------------------------
# Pallas kernel bodies
# ----------------------------------------------------------------------------
def _conv_pool_kernel(x_ref, w_ref, b_ref, o_ref):
    # x_ref: (4, tm, Kp) -- leading axis = the 4 members of each 2x2 maxpool
    # window.  Fused: conv matmul (MXU, f32 acc) + 2x2 maxpool + bias + ReLU.
    # max_s relu(a_s + b) == relu(max_s a_s + b) because relu(.+b) is monotone
    # and the bias is shared by the 4 window members.
    m = jnp.dot(x_ref[0], w_ref[...], preferred_element_type=jnp.float32)
    for s in range(1, 4):
        m = jnp.maximum(
            m, jnp.dot(x_ref[s], w_ref[...], preferred_element_type=jnp.float32))
    o_ref[...] = jnp.maximum(m + b_ref[...], 0.0).astype(o_ref.dtype)


def _tail_kernel(x_ref, w5_ref, b5_ref, w1_ref, b1_ref, w2_ref, b2_ref,
                 w3_ref, b3_ref, o_ref):
    # conv5 + ReLU + maxpool5 + [Dropout(0) -> Linear -> ReLU] x2 -> Linear,
    # fully resident in VMEM (single pallas_call, no intermediate HBM traffic).
    m = jnp.dot(x_ref[0], w5_ref[...], preferred_element_type=jnp.float32)
    for s in range(1, 4):
        m = jnp.maximum(
            m, jnp.dot(x_ref[s], w5_ref[...], preferred_element_type=jnp.float32))
    h = jnp.maximum(m + b5_ref[...], 0.0).astype(jnp.bfloat16)   # flat features
    h = jnp.dot(h, w1_ref[...], preferred_element_type=jnp.float32)
    h = jnp.maximum(h + b1_ref[...], 0.0).astype(jnp.bfloat16)
    h = jnp.dot(h, w2_ref[...], preferred_element_type=jnp.float32)
    h = jnp.maximum(h + b2_ref[...], 0.0).astype(jnp.bfloat16)
    y = jnp.dot(h, w3_ref[...], preferred_element_type=jnp.float32)
    o_ref[...] = (y + b3_ref[...]).astype(o_ref.dtype)


def _classifier_kernel(x_ref, w1_ref, b1_ref, w2_ref, b2_ref, w3_ref, b3_ref,
                       o_ref):
    # MLP head only (used for images_size > 32 where the tail is not fused).
    h = jnp.dot(x_ref[...], w1_ref[...], preferred_element_type=jnp.float32)
    h = jnp.maximum(h + b1_ref[...], 0.0).astype(jnp.bfloat16)
    h = jnp.dot(h, w2_ref[...], preferred_element_type=jnp.float32)
    h = jnp.maximum(h + b2_ref[...], 0.0).astype(jnp.bfloat16)
    y = jnp.dot(h, w3_ref[...], preferred_element_type=jnp.float32)
    o_ref[...] = (y + b3_ref[...]).astype(o_ref.dtype)


# ----------------------------------------------------------------------------
# Cached pallas_call builders (construction only; ONE top-level jit outside)
# ----------------------------------------------------------------------------
@functools.lru_cache(maxsize=None)
def _conv_pool_call(m_out, kp, np_, tm):
    grid = (m_out // tm,)
    bytes_accessed = 4 * m_out * kp * 2 + kp * np_ * 2 + np_ * 4 + m_out * np_ * 2
    return pl.pallas_call(
        _conv_pool_kernel,
        out_shape=jax.ShapeDtypeStruct((m_out, np_), jnp.bfloat16),
        grid_spec=pltpu.PrefetchScalarGridSpec(
            num_scalar_prefetch=0,
            grid=grid,
            in_specs=[
                pl.BlockSpec((4, tm, kp), lambda i: (0, i, 0)),  # pooled im2col
                pl.BlockSpec((kp, np_), lambda i: (0, 0)),       # weight (resident)
                pl.BlockSpec((1, np_), lambda i: (0, 0)),        # bias (lane-dense)
            ],
            out_specs=pl.BlockSpec((tm, np_), lambda i: (i, 0)),
        ),
        compiler_params=pltpu.CompilerParams(
            dimension_semantics=("parallel",)),
        cost_estimate=pl.CostEstimate(
            flops=2 * 4 * m_out * kp * np_, transcendentals=0,
            bytes_accessed=bytes_accessed),
    )


@functools.lru_cache(maxsize=None)
def _tail_call(mb, kp5, np5, flatp, n3p):
    flops = 2 * mb * (4 * kp5 * np5 + flatp * 128 + 128 * 256 + 256 * n3p)
    bytes_accessed = (4 * mb * kp5 * 2 + kp5 * np5 * 2 + flatp * 128 * 2
                      + 128 * 256 * 2 + 256 * n3p * 2 + mb * n3p * 4)
    return pl.pallas_call(
        _tail_kernel,
        out_shape=jax.ShapeDtypeStruct((mb, n3p), jnp.float32),
        cost_estimate=pl.CostEstimate(flops=flops, transcendentals=0,
                                      bytes_accessed=bytes_accessed),
    )


@functools.lru_cache(maxsize=None)
def _classifier_call(mb, flatp, n3p):
    flops = 2 * mb * (flatp * 128 + 128 * 256 + 256 * n3p)
    bytes_accessed = (mb * flatp * 2 + flatp * 128 * 2 + 128 * 256 * 2
                      + 256 * n3p * 2 + mb * n3p * 4)
    return pl.pallas_call(
        _classifier_kernel,
        out_shape=jax.ShapeDtypeStruct((mb, n3p), jnp.float32),
        cost_estimate=pl.CostEstimate(flops=flops, transcendentals=0,
                                      bytes_accessed=bytes_accessed),
    )


# ----------------------------------------------------------------------------
# Plain-JAX glue (fused by XLA under the single top-level jit)
# ----------------------------------------------------------------------------
def _pad_axis(x, axis, target):
    if target == x.shape[axis]:
        return x
    pad = [(0, 0)] * x.ndim
    pad[axis] = (0, target - x.shape[axis])
    return jnp.pad(x, pad)


def _im2col_pool_grouped(x_nhwc, k):
    """Stride-1 'same' conv patches regrouped by 2x2 maxpool-window member.

    Returns (4, B*(H//2)*(W//2), k*k*C): leading axis is the window member
    (dh*2+dw); rows are ordered (b, out_h, out_w), so the pooled conv output
    produced by the kernel is already in NHWC row order for the next stage.
    """
    b, h, w, c = x_nhwc.shape
    pad = (k - 1) // 2
    xp = jnp.pad(x_nhwc, ((0, 0), (pad, pad), (pad, pad), (0, 0)))
    cols = [xp[:, i:i + h, j:j + w, :] for i in range(k) for j in range(k)]
    patches = jnp.concatenate(cols, axis=-1)                 # (B, H, W, k*k*C)
    kk = k * k * c
    p = patches.reshape(b, h // 2, 2, w // 2, 2, kk)
    p = jnp.transpose(p, (2, 4, 0, 1, 3, 5))                 # (dh,dw,B,H/2,W/2,kk)
    return p.reshape(4, b * (h // 2) * (w // 2), kk)


def conv_bias_relu_maxpool(x_nhwc, w, b, k, cout):
    """Conv2d(k, stride 1, 'same', bias) + ReLU + MaxPool2d(2) as ONE kernel."""
    bsz, h, wd, _ = x_nhwc.shape
    kp, np_ = w.shape
    patches = _im2col_pool_grouped(x_nhwc, k)                # (4, M, k*k*C)
    patches = _pad_axis(patches, 2, kp)                      # lane-dense K
    m_out = patches.shape[1]
    tm = _pick_tm(m_out)
    y = _conv_pool_call(m_out, kp, np_, tm)(patches, w, b)   # (M, np) bf16
    y = y.reshape(bsz, h // 2, wd // 2, np_)
    return y[..., :cout]                                     # drop padded lanes


# ----------------------------------------------------------------------------
# Deterministic synthetic parameters (padded to lane-dense tiles)
# ----------------------------------------------------------------------------
class ParamGen:
    def __init__(self, seed):
        self.key = jax.random.PRNGKey(seed)

    def _next(self):
        self.key, sub = jax.random.split(self.key)
        return sub

    def conv(self, cin, cout, k):
        kk = k * k * cin
        kp, np_ = _round_up(kk, 128), _round_up(cout, 128)
        # Weight laid out (k*k*cin, cout) in (kh,kw,cin)-major im2col order.
        # TODO(synk): loading real PyTorch weights ((cout,cin,kh,kw)) needs a
        # (kh,kw,cin) permutation + transpose before this padding.
        w = jax.random.normal(self._next(), (kk, cout), jnp.float32)
        w = (w * (2.0 / kk) ** 0.5).astype(jnp.bfloat16)
        b = (jax.random.uniform(self._next(), (1, cout), jnp.float32) - 0.5) \
            * (2.0 / kk ** 0.5)
        return (jnp.pad(w, ((0, kp - kk), (0, np_ - cout))),
                jnp.pad(b, ((0, 0), (0, np_ - cout))))

    def linear(self, din, dout, din_pad=None, dout_pad=None):
        din_pad = din if din_pad is None else din_pad
        dout_pad = dout if dout_pad is None else dout_pad
        w = jax.random.normal(self._next(), (din, dout), jnp.float32)
        w = (w * (1.0 / din) ** 0.5).astype(jnp.bfloat16)
        b = (jax.random.uniform(self._next(), (1, dout), jnp.float32) - 0.5) * 0.02
        return (jnp.pad(w, ((0, din_pad - din), (0, dout_pad - dout))),
                jnp.pad(b, ((0, 0), (0, dout_pad - dout))))


def build_params(images_size=32, nb_class=86, seed=42):
    assert images_size % 32 == 0, "spatial must survive five stride-2 maxpools"
    pg = ParamGen(seed)
    chans = (images_size // 4, images_size // 2, images_size,
             images_size * 2, images_size)
    features, cin = [], 1
    for cout, k in zip(chans, KERNEL_SIZES):
        features.append(pg.conv(cin, cout, k))
        cin = cout
    spatial = images_size // 32                 # after the 5 maxpools
    flat = cin * spatial * spatial              # == probe-tensor out_features
    flatp = _round_up(flat, 128)
    n3p = _round_up(nb_class, 128)
    w1, b1 = pg.linear(flat, 128, din_pad=flatp)
    w2, b2 = pg.linear(128, 256)
    w3, b3 = pg.linear(256, nb_class, dout_pad=n3p)
    return {"features": features,
            "classifier": dict(w1=w1, b1=b1, w2=w2, b2=b2, w3=w3, b3=b3)}


# ----------------------------------------------------------------------------
# Forward pass (wrap in a single jax.jit at the call site)
# ----------------------------------------------------------------------------
def cnn_model_l2_forward(x_nchw, params, *, nb_class):
    bsz, _, images_size, _ = x_nchw.shape
    chans = (images_size // 4, images_size // 2, images_size,
             images_size * 2, images_size)
    x = jnp.transpose(x_nchw, (0, 2, 3, 1)).astype(jnp.bfloat16)   # NCHW->NHWC
    feats = params["features"]
    cls = params["classifier"]
    fuse_tail = (images_size // 32) == 1        # final pooled spatial is 1x1

    n_sep = len(feats) - 1 if fuse_tail else len(feats)
    for (w, b), k, cout in zip(feats[:n_sep], KERNEL_SIZES[:n_sep],
                               chans[:n_sep]):
        x = conv_bias_relu_maxpool(x, w, b, k, cout)

    mb = _round_up(max(bsz, 8), 8)              # full sublane for the MLP head
    flatp = cls["w1"].shape[0]
    n3p = cls["w3"].shape[1]

    if fuse_tail:
        # conv5 + pool5 + classifier in ONE VMEM-resident kernel.
        w5, b5 = feats[-1]
        kp5, np5 = w5.shape
        assert np5 == flatp                     # flat == C5 when spatial is 1x1
        patches = _im2col_pool_grouped(x, KERNEL_SIZES[-1])   # (4, B, k*k*C4)
        patches = _pad_axis(_pad_axis(patches, 2, kp5), 1, mb)
        out = _tail_call(mb, kp5, np5, flatp, n3p)(
            patches, w5, b5, cls["w1"], cls["b1"], cls["w2"], cls["b2"],
            cls["w3"], cls["b3"])
    else:
        # General images_size: last conv+pool as its own kernel, then the MLP
        # head; flatten in PyTorch's NCHW order to match the reference module.
        w5, b5 = feats[-1]
        x = conv_bias_relu_maxpool(x, w5, b5, KERNEL_SIZES[-1], chans[-1])
        feat = jnp.transpose(x, (0, 3, 1, 2)).reshape(bsz, -1).astype(jnp.bfloat16)
        feat = _pad_axis(_pad_axis(feat, 1, flatp), 0, mb)
        out = _classifier_call(mb, flatp, n3p)(
            feat, cls["w1"], cls["b1"], cls["w2"], cls["b2"],
            cls["w3"], cls["b3"])
    return out[:bsz, :nb_class]


# ----------------------------------------------------------------------------
if __name__ == "__main__":
    batch, images_size, nb_class = 2, 32, 86
    x = jax.random.normal(jax.random.PRNGKey(0),
                          (batch, 1, images_size, images_size), jnp.float32)
    params = build_params(images_size=images_size, nb_class=nb_class, seed=42)
    forward = jax.jit(functools.partial(cnn_model_l2_forward, nb_class=nb_class))
    out = jax.block_until_ready(forward(x, params))
    assert out.shape == (batch, nb_class), out.shape
    assert bool(jnp.all(jnp.isfinite(out)))
    print("KERNEL_OK")
</pallas_src>

<mosaic_0001>
module attributes {stable_mosaic.version = 11 : i64} {
  func.func @_conv_pool_kernel(%arg0: i32, %arg1: memref<4x256x128xbf16, #tpu.memory_space<vmem>>, %arg2: memref<128x128xbf16, #tpu.memory_space<vmem>>, %arg3: memref<1x128xf32, #tpu.memory_space<vmem>>, %arg4: memref<256x128xbf16, #tpu.memory_space<vmem>>) attributes {dimension_semantics = [#tpu.dimension_semantics<parallel>], iteration_bounds = array<i64: 2>, scalar_prefetch = 0 : i64, scratch_operands = 0 : i64, tpu.core_type = #tpu.core_type<tc>, window_params = [{transform_indices = @transform_0, window_bounds = array<i64: 4, 256, 128>}, {pipeline_mode = #tpu.pipeline_mode<synchronous>, transform_indices = @transform_1, window_bounds = array<i64: 128, 128>}, {pipeline_mode = #tpu.pipeline_mode<synchronous>, transform_indices = @transform_2, window_bounds = array<i64: 1, 128>}, {transform_indices = @transform_3, window_bounds = array<i64: 256, 128>}]} {
    %c0 = arith.constant 0 : index
    %c0_0 = arith.constant 0 : index
    %c0_1 = arith.constant 0 : index
    %0 = vector.load %arg1[%c0, %c0_0, %c0_1] : memref<4x256x128xbf16, #tpu.memory_space<vmem>>, vector<1x256x128xbf16>
    %1 = vector.shape_cast %0 : vector<1x256x128xbf16> to vector<256x128xbf16>
    %c0_2 = arith.constant 0 : index
    %c0_3 = arith.constant 0 : index
    %2 = vector.load %arg2[%c0_2, %c0_3] : memref<128x128xbf16, #tpu.memory_space<vmem>>, vector<128x128xbf16>
    %cst = arith.constant dense<0.000000e+00> : vector<256x128xf32>
    %3 = tpu.matmul %1, %2, %cst {dimension_numbers = #tpu.dot_dimension_numbers<[1], [0], [0], [1], [0, 0, 1, 1], [], []>} : vector<256x128xbf16>, vector<128x128xbf16>, vector<256x128xf32> -> vector<256x128xf32>
    %c1 = arith.constant 1 : index
    %c0_4 = arith.constant 0 : index
    %c0_5 = arith.constant 0 : index
    %4 = vector.load %arg1[%c1, %c0_4, %c0_5] : memref<4x256x128xbf16, #tpu.memory_space<vmem>>, vector<1x256x128xbf16>
    %5 = vector.shape_cast %4 : vector<1x256x128xbf16> to vector<256x128xbf16>
    %c0_6 = arith.constant 0 : index
    %c0_7 = arith.constant 0 : index
    %6 = vector.load %arg2[%c0_6, %c0_7] : memref<128x128xbf16, #tpu.memory_space<vmem>>, vector<128x128xbf16>
    %cst_8 = arith.constant dense<0.000000e+00> : vector<256x128xf32>
    %7 = tpu.matmul %5, %6, %cst_8 {dimension_numbers = #tpu.dot_dimension_numbers<[1], [0], [0], [1], [0, 0, 1, 1], [], []>} : vector<256x128xbf16>, vector<128x128xbf16>, vector<256x128xf32> -> vector<256x128xf32>
    %8 = arith.maximumf %3, %7 : vector<256x128xf32>
    %c2 = arith.constant 2 : index
    %c0_9 = arith.constant 0 : index
    %c0_10 = arith.constant 0 : index
    %9 = vector.load %arg1[%c2, %c0_9, %c0_10] : memref<4x256x128xbf16, #tpu.memory_space<vmem>>, vector<1x256x128xbf16>
    %10 = vector.shape_cast %9 : vector<1x256x128xbf16> to vector<256x128xbf16>
    %c0_11 = arith.constant 0 : index
    %c0_12 = arith.constant 0 : index
    %11 = vector.load %arg2[%c0_11, %c0_12] : memref<128x128xbf16, #tpu.memory_space<vmem>>, vector<128x128xbf16>
    %cst_13 = arith.constant dense<0.000000e+00> : vector<256x128xf32>
    %12 = tpu.matmul %10, %11, %cst_13 {dimension_numbers = #tpu.dot_dimension_numbers<[1], [0], [0], [1], [0, 0, 1, 1], [], []>} : vector<256x128xbf16>, vector<128x128xbf16>, vector<256x128xf32> -> vector<256x128xf32>
    %13 = arith.maximumf %8, %12 : vector<256x128xf32>
    %c3 = arith.constant 3 : index
    %c0_14 = arith.constant 0 : index
    %c0_15 = arith.constant 0 : index
    %14 = vector.load %arg1[%c3, %c0_14, %c0_15] : memref<4x256x128xbf16, #tpu.memory_space<vmem>>, vector<1x256x128xbf16>
    %15 = vector.shape_cast %14 : vector<1x256x128xbf16> to vector<256x128xbf16>
    %c0_16 = arith.constant 0 : index
    %c0_17 = arith.constant 0 : index
    %16 = vector.load %arg2[%c0_16, %c0_17] : memref<128x128xbf16, #tpu.memory_space<vmem>>, vector<128x128xbf16>
    %cst_18 = arith.constant dense<0.000000e+00> : vector<256x128xf32>
    %17 = tpu.matmul %15, %16, %cst_18 {dimension_numbers = #tpu.dot_dimension_numbers<[1], [0], [0], [1], [0, 0, 1, 1], [], []>} : vector<256x128xbf16>, vector<128x128xbf16>, vector<256x128xf32> -> vector<256x128xf32>
    %18 = arith.maximumf %13, %17 : vector<256x128xf32>
    %c0_19 = arith.constant 0 : index
    %c0_20 = arith.constant 0 : index
    %19 = vector.load %arg3[%c0_19, %c0_20] : memref<1x128xf32, #tpu.memory_space<vmem>>, vector<1x128xf32>
    %20 = vector.broadcast %19 : vector<1x128xf32> to vector<256x128xf32>
    %21 = arith.addf %18, %20 : vector<256x128xf32>
    %cst_21 = arith.constant 0.000000e+00 : f32
    %22 = vector.broadcast %cst_21 : f32 to vector<256x128xf32>
    %23 = arith.maximumf %21, %22 : vector<256x128xf32>
    %24 = arith.truncf %23 : vector<256x128xf32> to vector<256x128xbf16>
    %c0_22 = arith.constant 0 : index
    %c0_23 = arith.constant 0 : index
    %25 = vector.load %arg4[%c0_22, %c0_23] : memref<256x128xbf16, #tpu.memory_space<vmem>>, vector<256x128xbf16>
    tpu.vector_store %arg4[%c0_22, %c0_23], %24 {strides = array<i32>} : memref<256x128xbf16, #tpu.memory_space<vmem>>, vector<256x128xbf16>,
    return
  }
  func.func @transform_0(%arg0: i32) -> (i32, i32, i32) {
    %c0_i32 = arith.constant 0 : i32
    %c0_i32_0 = arith.constant 0 : i32
    %c0_i32_1 = arith.constant 0 : i32
    return %c0_i32, %arg0, %c0_i32_0 : i32, i32, i32
  }
  func.func @transform_1(%arg0: i32) -> (i32, i32) {
    %c0_i32 = arith.constant 0 : i32
    %c0_i32_0 = arith.constant 0 : i32
    %c0_i32_1 = arith.constant 0 : i32
    return %c0_i32, %c0_i32_0 : i32, i32
  }
  func.func @transform_2(%arg0: i32) -> (i32, i32) {
    %c0_i32 = arith.constant 0 : i32
    %c0_i32_0 = arith.constant 0 : i32
    %c0_i32_1 = arith.constant 0 : i32
    return %c0_i32, %c0_i32_0 : i32, i32
  }
  func.func @transform_3(%arg0: i32) -> (i32, i32) {
    %c0_i32 = arith.constant 0 : i32
    %c0_i32_0 = arith.constant 0 : i32
    return %arg0, %c0_i32 : i32, i32
  }
}

module attributes {stable_mosaic.version = 11 : i64} {
  func.func @_conv_pool_kernel(%arg0: i32, %arg1: memref<4x64x128xbf16, #tpu.memory_space<vmem>>, %arg2: memref<128x128xbf16, #tpu.memory_space<vmem>>, %arg3: memref<1x128xf32, #tpu.memory_space<vmem>>, %arg4: memref<64x128xbf16, #tpu.memory_space<vmem>>) attributes {dimension_semantics = [#tpu.dimension_semantics<parallel>], iteration_bounds = array<i64: 2>, scalar_prefetch = 0 : i64, scratch_operands = 0 : i64, tpu.core_type = #tpu.core_type<tc>, window_params = [{transform_indices = @transform_0, window_bounds = array<i64: 4, 64, 128>}, {pipeline_mode = #tpu.pipeline_mode<synchronous>, transform_indices = @transform_1, window_bounds = array<i64: 128, 128>}, {pipeline_mode = #tpu.pipeline_mode<synchronous>, transform_indices = @transform_2, window_bounds = array<i64: 1, 128>}, {transform_indices = @transform_3, window_bounds = array<i64: 64, 128>}]} {
    %c0 = arith.constant 0 : index
    %c0_0 = arith.constant 0 : index
    %c0_1 = arith.constant 0 : index
    %0 = vector.load %arg1[%c0, %c0_0, %c0_1] : memref<4x64x128xbf16, #tpu.memory_space<vmem>>, vector<1x64x128xbf16>
    %1 = vector.shape_cast %0 : vector<1x64x128xbf16> to vector<64x128xbf16>
    %c0_2 = arith.constant 0 : index
    %c0_3 = arith.constant 0 : index
    %2 = vector.load %arg2[%c0_2, %c0_3] : memref<128x128xbf16, #tpu.memory_space<vmem>>, vector<128x128xbf16>
    %cst = arith.constant dense<0.000000e+00> : vector<64x128xf32>
    %3 = tpu.matmul %1, %2, %cst {dimension_numbers = #tpu.dot_dimension_numbers<[1], [0], [0], [1], [0, 0, 1, 1], [], []>} : vector<64x128xbf16>, vector<128x128xbf16>, vector<64x128xf32> -> vector<64x128xf32>
    %c1 = arith.constant 1 : index
    %c0_4 = arith.constant 0 : index
    %c0_5 = arith.constant 0 : index
    %4 = vector.load %arg1[%c1, %c0_4, %c0_5] : memref<4x64x128xbf16, #tpu.memory_space<vmem>>, vector<1x64x128xbf16>
    %5 = vector.shape_cast %4 : vector<1x64x128xbf16> to vector<64x128xbf16>
    %c0_6 = arith.constant 0 : index
    %c0_7 = arith.constant 0 : index
    %6 = vector.load %arg2[%c0_6, %c0_7] : memref<128x128xbf16, #tpu.memory_space<vmem>>, vector<128x128xbf16>
    %cst_8 = arith.constant dense<0.000000e+00> : vector<64x128xf32>
    %7 = tpu.matmul %5, %6, %cst_8 {dimension_numbers = #tpu.dot_dimension_numbers<[1], [0], [0], [1], [0, 0, 1, 1], [], []>} : vector<64x128xbf16>, vector<128x128xbf16>, vector<64x128xf32> -> vector<64x128xf32>
    %8 = arith.maximumf %3, %7 : vector<64x128xf32>
    %c2 = arith.constant 2 : index
    %c0_9 = arith.constant 0 : index
    %c0_10 = arith.constant 0 : index
    %9 = vector.load %arg1[%c2, %c0_9, %c0_10] : memref<4x64x128xbf16, #tpu.memory_space<vmem>>, vector<1x64x128xbf16>
    %10 = vector.shape_cast %9 : vector<1x64x128xbf16> to vector<64x128xbf16>
    %c0_11 = arith.constant 0 : index
    %c0_12 = arith.constant 0 : index
    %11 = vector.load %arg2[%c0_11, %c0_12] : memref<128x128xbf16, #tpu.memory_space<vmem>>, vector<128x128xbf16>
    %cst_13 = arith.constant dense<0.000000e+00> : vector<64x128xf32>
    %12 = tpu.matmul %10, %11, %cst_13 {dimension_numbers = #tpu.dot_dimension_numbers<[1], [0], [0], [1], [0, 0, 1, 1], [], []>} : vector<64x128xbf16>, vector<128x128xbf16>, vector<64x128xf32> -> vector<64x128xf32>
    %13 = arith.maximumf %8, %12 : vector<64x128xf32>
    %c3 = arith.constant 3 : index
    %c0_14 = arith.constant 0 : index
    %c0_15 = arith.constant 0 : index
    %14 = vector.load %arg1[%c3, %c0_14, %c0_15] : memref<4x64x128xbf16, #tpu.memory_space<vmem>>, vector<1x64x128xbf16>
    %15 = vector.shape_cast %14 : vector<1x64x128xbf16> to vector<64x128xbf16>
    %c0_16 = arith.constant 0 : index
    %c0_17 = arith.constant 0 : index
    %16 = vector.load %arg2[%c0_16, %c0_17] : memref<128x128xbf16, #tpu.memory_space<vmem>>, vector<128x128xbf16>
    %cst_18 = arith.constant dense<0.000000e+00> : vector<64x128xf32>
    %17 = tpu.matmul %15, %16, %cst_18 {dimension_numbers = #tpu.dot_dimension_numbers<[1], [0], [0], [1], [0, 0, 1, 1], [], []>} : vector<64x128xbf16>, vector<128x128xbf16>, vector<64x128xf32> -> vector<64x128xf32>
    %18 = arith.maximumf %13, %17 : vector<64x128xf32>
    %c0_19 = arith.constant 0 : index
    %c0_20 = arith.constant 0 : index
    %19 = vector.load %arg3[%c0_19, %c0_20] : memref<1x128xf32, #tpu.memory_space<vmem>>, vector<1x128xf32>
    %20 = vector.broadcast %19 : vector<1x128xf32> to vector<64x128xf32>
    %21 = arith.addf %18, %20 : vector<64x128xf32>
    %cst_21 = arith.constant 0.000000e+00 : f32
    %22 = vector.broadcast %cst_21 : f32 to vector<64x128xf32>
    %23 = arith.maximumf %21, %22 : vector<64x128xf32>
    %24 = arith.truncf %23 : vector<64x128xf32> to vector<64x128xbf16>
    %c0_22 = arith.constant 0 : index
    %c0_23 = arith.constant 0 : index
    %25 = vector.load %arg4[%c0_22, %c0_23] : memref<64x128xbf16, #tpu.memory_space<vmem>>, vector<64x128xbf16>
    tpu.vector_store %arg4[%c0_22, %c0_23], %24 {strides = array<i32>} : memref<64x128xbf16, #tpu.memory_space<vmem>>, vector<64x128xbf16>,
    return
  }
  func.func @transform_0(%arg0: i32) -> (i32, i32, i32) {
    %c0_i32 = arith.constant 0 : i32
    %c0_i32_0 = arith.constant 0 : i32
    %c0_i32_1 = arith.constant 0 : i32
    return %c0_i32, %arg0, %c0_i32_0 : i32, i32, i32
  }
  func.func @transform_1(%arg0: i32) -> (i32, i32) {
    %c0_i32 = arith.constant 0 : i32
    %c0_i32_0 = arith.constant 0 : i32
    %c0_i32_1 = arith.constant 0 : i32
    return %c0_i32, %c0_i32_0 : i32, i32
  }
  func.func @transform_2(%arg0: i32) -> (i32, i32) {
    %c0_i32 = arith.constant 0 : i32
    %c0_i32_0 = arith.constant 0 : i32
    %c0_i32_1 = arith.constant 0 : i32
    return %c0_i32, %c0_i32_0 : i32, i32
  }
  func.func @transform_3(%arg0: i32) -> (i32, i32) {
    %c0_i32 = arith.constant 0 : i32
    %c0_i32_0 = arith.constant 0 : i32
    return %arg0, %c0_i32 : i32, i32
  }
}

module attributes {stable_mosaic.version = 11 : i64} {
  func.func @_conv_pool_kernel(%arg0: i32, %arg1: memref<4x16x256xbf16, #tpu.memory_space<vmem>>, %arg2: memref<256x128xbf16, #tpu.memory_space<vmem>>, %arg3: memref<1x128xf32, #tpu.memory_space<vmem>>, %arg4: memref<16x128xbf16, #tpu.memory_space<vmem>>) attributes {dimension_semantics = [#tpu.dimension_semantics<parallel>], iteration_bounds = array<i64: 2>, scalar_prefetch = 0 : i64, scratch_operands = 0 : i64, tpu.core_type = #tpu.core_type<tc>, window_params = [{transform_indices = @transform_0, window_bounds = array<i64: 4, 16, 256>}, {pipeline_mode = #tpu.pipeline_mode<synchronous>, transform_indices = @transform_1, window_bounds = array<i64: 256, 128>}, {pipeline_mode = #tpu.pipeline_mode<synchronous>, transform_indices = @transform_2, window_bounds = array<i64: 1, 128>}, {transform_indices = @transform_3, window_bounds = array<i64: 16, 128>}]} {
    %c0 = arith.constant 0 : index
    %c0_0 = arith.constant 0 : index
    %c0_1 = arith.constant 0 : index
    %0 = vector.load %arg1[%c0, %c0_0, %c0_1] : memref<4x16x256xbf16, #tpu.memory_space<vmem>>, vector<1x16x256xbf16>
    %1 = vector.shape_cast %0 : vector<1x16x256xbf16> to vector<16x256xbf16>
    %c0_2 = arith.constant 0 : index
    %c0_3 = arith.constant 0 : index
    %2 = vector.load %arg2[%c0_2, %c0_3] : memref<256x128xbf16, #tpu.memory_space<vmem>>, vector<256x128xbf16>
    %cst = arith.constant dense<0.000000e+00> : vector<16x128xf32>
    %3 = tpu.matmul %1, %2, %cst {dimension_numbers = #tpu.dot_dimension_numbers<[1], [0], [0], [1], [0, 0, 1, 1], [], []>} : vector<16x256xbf16>, vector<256x128xbf16>, vector<16x128xf32> -> vector<16x128xf32>
    %c1 = arith.constant 1 : index
    %c0_4 = arith.constant 0 : index
    %c0_5 = arith.constant 0 : index
    %4 = vector.load %arg1[%c1, %c0_4, %c0_5] : memref<4x16x256xbf16, #tpu.memory_space<vmem>>, vector<1x16x256xbf16>
    %5 = vector.shape_cast %4 : vector<1x16x256xbf16> to vector<16x256xbf16>
    %c0_6 = arith.constant 0 : index
    %c0_7 = arith.constant 0 : index
    %6 = vector.load %arg2[%c0_6, %c0_7] : memref<256x128xbf16, #tpu.memory_space<vmem>>, vector<256x128xbf16>
    %cst_8 = arith.constant dense<0.000000e+00> : vector<16x128xf32>
    %7 = tpu.matmul %5, %6, %cst_8 {dimension_numbers = #tpu.dot_dimension_numbers<[1], [0], [0], [1], [0, 0, 1, 1], [], []>} : vector<16x256xbf16>, vector<256x128xbf16>, vector<16x128xf32> -> vector<16x128xf32>
    %8 = arith.maximumf %3, %7 : vector<16x128xf32>
    %c2 = arith.constant 2 : index
    %c0_9 = arith.constant 0 : index
    %c0_10 = arith.constant 0 : index
    %9 = vector.load %arg1[%c2, %c0_9, %c0_10] : memref<4x16x256xbf16, #tpu.memory_space<vmem>>, vector<1x16x256xbf16>
    %10 = vector.shape_cast %9 : vector<1x16x256xbf16> to vector<16x256xbf16>
    %c0_11 = arith.constant 0 : index
    %c0_12 = arith.constant 0 : index
    %11 = vector.load %arg2[%c0_11, %c0_12] : memref<256x128xbf16, #tpu.memory_space<vmem>>, vector<256x128xbf16>
    %cst_13 = arith.constant dense<0.000000e+00> : vector<16x128xf32>
    %12 = tpu.matmul %10, %11, %cst_13 {dimension_numbers = #tpu.dot_dimension_numbers<[1], [0], [0], [1], [0, 0, 1, 1], [], []>} : vector<16x256xbf16>, vector<256x128xbf16>, vector<16x128xf32> -> vector<16x128xf32>
    %13 = arith.maximumf %8, %12 : vector<16x128xf32>
    %c3 = arith.constant 3 : index
    %c0_14 = arith.constant 0 : index
    %c0_15 = arith.constant 0 : index
    %14 = vector.load %arg1[%c3, %c0_14, %c0_15] : memref<4x16x256xbf16, #tpu.memory_space<vmem>>, vector<1x16x256xbf16>
    %15 = vector.shape_cast %14 : vector<1x16x256xbf16> to vector<16x256xbf16>
    %c0_16 = arith.constant 0 : index
    %c0_17 = arith.constant 0 : index
    %16 = vector.load %arg2[%c0_16, %c0_17] : memref<256x128xbf16, #tpu.memory_space<vmem>>, vector<256x128xbf16>
    %cst_18 = arith.constant dense<0.000000e+00> : vector<16x128xf32>
    %17 = tpu.matmul %15, %16, %cst_18 {dimension_numbers = #tpu.dot_dimension_numbers<[1], [0], [0], [1], [0, 0, 1, 1], [], []>} : vector<16x256xbf16>, vector<256x128xbf16>, vector<16x128xf32> -> vector<16x128xf32>
    %18 = arith.maximumf %13, %17 : vector<16x128xf32>
    %c0_19 = arith.constant 0 : index
    %c0_20 = arith.constant 0 : index
    %19 = vector.load %arg3[%c0_19, %c0_20] : memref<1x128xf32, #tpu.memory_space<vmem>>, vector<1x128xf32>
    %20 = vector.broadcast %19 : vector<1x128xf32> to vector<16x128xf32>
    %21 = arith.addf %18, %20 : vector<16x128xf32>
    %cst_21 = arith.constant 0.000000e+00 : f32
    %22 = vector.broadcast %cst_21 : f32 to vector<16x128xf32>
    %23 = arith.maximumf %21, %22 : vector<16x128xf32>
    %24 = arith.truncf %23 : vector<16x128xf32> to vector<16x128xbf16>
    %c0_22 = arith.constant 0 : index
    %c0_23 = arith.constant 0 : index
    %25 = vector.load %arg4[%c0_22, %c0_23] : memref<16x128xbf16, #tpu.memory_space<vmem>>, vector<16x128xbf16>
    tpu.vector_store %arg4[%c0_22, %c0_23], %24 {strides = array<i32>} : memref<16x128xbf16, #tpu.memory_space<vmem>>, vector<16x128xbf16>,
    return
  }
  func.func @transform_0(%arg0: i32) -> (i32, i32, i32) {
    %c0_i32 = arith.constant 0 : i32
    %c0_i32_0 = arith.constant 0 : i32
    %c0_i32_1 = arith.constant 0 : i32
    return %c0_i32, %arg0, %c0_i32_0 : i32, i32, i32
  }
  func.func @transform_1(%arg0: i32) -> (i32, i32) {
    %c0_i32 = arith.constant 0 : i32
    %c0_i32_0 = arith.constant 0 : i32
    %c0_i32_1 = arith.constant 0 : i32
    return %c0_i32, %c0_i32_0 : i32, i32
  }
  func.func @transform_2(%arg0: i32) -> (i32, i32) {
    %c0_i32 = arith.constant 0 : i32
    %c0_i32_0 = arith.constant 0 : i32
    %c0_i32_1 = arith.constant 0 : i32
    return %c0_i32, %c0_i32_0 : i32, i32
  }
  func.func @transform_3(%arg0: i32) -> (i32, i32) {
    %c0_i32 = arith.constant 0 : i32
    %c0_i32_0 = arith.constant 0 : i32
    return %arg0, %c0_i32 : i32, i32
  }
}

module attributes {stable_mosaic.version = 11 : i64} {
  func.func @_conv_pool_kernel(%arg0: i32, %arg1: memref<4x8x896xbf16, #tpu.memory_space<vmem>>, %arg2: memref<896x128xbf16, #tpu.memory_space<vmem>>, %arg3: memref<1x128xf32, #tpu.memory_space<vmem>>, %arg4: memref<8x128xbf16, #tpu.memory_space<vmem>>) attributes {dimension_semantics = [#tpu.dimension_semantics<parallel>], iteration_bounds = array<i64: 1>, scalar_prefetch = 0 : i64, scratch_operands = 0 : i64, tpu.core_type = #tpu.core_type<tc>, window_params = [{transform_indices = @transform_0, window_bounds = array<i64: 4, 8, 896>}, {pipeline_mode = #tpu.pipeline_mode<synchronous>, transform_indices = @transform_1, window_bounds = array<i64: 896, 128>}, {pipeline_mode = #tpu.pipeline_mode<synchronous>, transform_indices = @transform_2, window_bounds = array<i64: 1, 128>}, {transform_indices = @transform_3, window_bounds = array<i64: 8, 128>}]} {
    %c0 = arith.constant 0 : index
    %c0_0 = arith.constant 0 : index
    %c0_1 = arith.constant 0 : index
    %0 = vector.load %arg1[%c0, %c0_0, %c0_1] : memref<4x8x896xbf16, #tpu.memory_space<vmem>>, vector<1x8x896xbf16>
    %1 = vector.shape_cast %0 : vector<1x8x896xbf16> to vector<8x896xbf16>
    %c0_2 = arith.constant 0 : index
    %c0_3 = arith.constant 0 : index
    %2 = vector.load %arg2[%c0_2, %c0_3] : memref<896x128xbf16, #tpu.memory_space<vmem>>, vector<896x128xbf16>
    %cst = arith.constant dense<0.000000e+00> : vector<8x128xf32>
    %3 = tpu.matmul %1, %2, %cst {dimension_numbers = #tpu.dot_dimension_numbers<[1], [0], [0], [1], [0, 0, 1, 1], [], []>} : vector<8x896xbf16>, vector<896x128xbf16>, vector<8x128xf32> -> vector<8x128xf32>
    %c1 = arith.constant 1 : index
    %c0_4 = arith.constant 0 : index
    %c0_5 = arith.constant 0 : index
    %4 = vector.load %arg1[%c1, %c0_4, %c0_5] : memref<4x8x896xbf16, #tpu.memory_space<vmem>>, vector<1x8x896xbf16>
    %5 = vector.shape_cast %4 : vector<1x8x896xbf16> to vector<8x896xbf16>
    %c0_6 = arith.constant 0 : index
    %c0_7 = arith.constant 0 : index
    %6 = vector.load %arg2[%c0_6, %c0_7] : memref<896x128xbf16, #tpu.memory_space<vmem>>, vector<896x128xbf16>
    %cst_8 = arith.constant dense<0.000000e+00> : vector<8x128xf32>
    %7 = tpu.matmul %5, %6, %cst_8 {dimension_numbers = #tpu.dot_dimension_numbers<[1], [0], [0], [1], [0, 0, 1, 1], [], []>} : vector<8x896xbf16>, vector<896x128xbf16>, vector<8x128xf32> -> vector<8x128xf32>
    %8 = arith.maximumf %3, %7 : vector<8x128xf32>
    %c2 = arith.constant 2 : index
    %c0_9 = arith.constant 0 : index
    %c0_10 = arith.constant 0 : index
    %9 = vector.load %arg1[%c2, %c0_9, %c0_10] : memref<4x8x896xbf16, #tpu.memory_space<vmem>>, vector<1x8x896xbf16>
    %10 = vector.shape_cast %9 : vector<1x8x896xbf16> to vector<8x896xbf16>
    %c0_11 = arith.constant 0 : index
    %c0_12 = arith.constant 0 : index
    %11 = vector.load %arg2[%c0_11, %c0_12] : memref<896x128xbf16, #tpu.memory_space<vmem>>, vector<896x128xbf16>
    %cst_13 = arith.constant dense<0.000000e+00> : vector<8x128xf32>
    %12 = tpu.matmul %10, %11, %cst_13 {dimension_numbers = #tpu.dot_dimension_numbers<[1], [0], [0], [1], [0, 0, 1, 1], [], []>} : vector<8x896xbf16>, vector<896x128xbf16>, vector<8x128xf32> -> vector<8x128xf32>
    %13 = arith.maximumf %8, %12 : vector<8x128xf32>
    %c3 = arith.constant 3 : index
    %c0_14 = arith.constant 0 : index
    %c0_15 = arith.constant 0 : index
    %14 = vector.load %arg1[%c3, %c0_14, %c0_15] : memref<4x8x896xbf16, #tpu.memory_space<vmem>>, vector<1x8x896xbf16>
    %15 = vector.shape_cast %14 : vector<1x8x896xbf16> to vector<8x896xbf16>
    %c0_16 = arith.constant 0 : index
    %c0_17 = arith.constant 0 : index
    %16 = vector.load %arg2[%c0_16, %c0_17] : memref<896x128xbf16, #tpu.memory_space<vmem>>, vector<896x128xbf16>
    %cst_18 = arith.constant dense<0.000000e+00> : vector<8x128xf32>
    %17 = tpu.matmul %15, %16, %cst_18 {dimension_numbers = #tpu.dot_dimension_numbers<[1], [0], [0], [1], [0, 0, 1, 1], [], []>} : vector<8x896xbf16>, vector<896x128xbf16>, vector<8x128xf32> -> vector<8x128xf32>
    %18 = arith.maximumf %13, %17 : vector<8x128xf32>
    %c0_19 = arith.constant 0 : index
    %c0_20 = arith.constant 0 : index
    %19 = vector.load %arg3[%c0_19, %c0_20] : memref<1x128xf32, #tpu.memory_space<vmem>>, vector<1x128xf32>
    %20 = vector.broadcast %19 : vector<1x128xf32> to vector<8x128xf32>
    %21 = arith.addf %18, %20 : vector<8x128xf32>
    %cst_21 = arith.constant 0.000000e+00 : f32
    %22 = vector.broadcast %cst_21 : f32 to vector<8x128xf32>
    %23 = arith.maximumf %21, %22 : vector<8x128xf32>
    %24 = arith.truncf %23 : vector<8x128xf32> to vector<8x128xbf16>
    %c0_22 = arith.constant 0 : index
    %c0_23 = arith.constant 0 : index
    %25 = vector.load %arg4[%c0_22, %c0_23] : memref<8x128xbf16, #tpu.memory_space<vmem>>, vector<8x128xbf16>
    tpu.vector_store %arg4[%c0_22, %c0_23], %24 {strides = array<i32>} : memref<8x128xbf16, #tpu.memory_space<vmem>>, vector<8x128xbf16>,
    return
  }
  func.func @transform_0(%arg0: i32) -> (i32, i32, i32) {
    %c0_i32 = arith.constant 0 : i32
    %c0_i32_0 = arith.constant 0 : i32
    %c0_i32_1 = arith.constant 0 : i32
    return %c0_i32, %arg0, %c0_i32_0 : i32, i32, i32
  }
  func.func @transform_1(%arg0: i32) -> (i32, i32) {
    %c0_i32 = arith.constant 0 : i32
    %c0_i32_0 = arith.constant 0 : i32
    %c0_i32_1 = arith.constant 0 : i32
    return %c0_i32, %c0_i32_0 : i32, i32
  }
  func.func @transform_2(%arg0: i32) -> (i32, i32) {
    %c0_i32 = arith.constant 0 : i32
    %c0_i32_0 = arith.constant 0 : i32
    %c0_i32_1 = arith.constant 0 : i32
    return %c0_i32, %c0_i32_0 : i32, i32
  }
  func.func @transform_3(%arg0: i32) -> (i32, i32) {
    %c0_i32 = arith.constant 0 : i32
    %c0_i32_0 = arith.constant 0 : i32
    return %arg0, %c0_i32 : i32, i32
  }
}

module attributes {stable_mosaic.version = 11 : i64} {
  func.func @_tail_kernel(%arg0: memref<4x8x1664xbf16, #tpu.memory_space<vmem>>, %arg1: memref<1664x128xbf16, #tpu.memory_space<vmem>>, %arg2: memref<1x128xf32, #tpu.memory_space<vmem>>, %arg3: memref<128x128xbf16, #tpu.memory_space<vmem>>, %arg4: memref<1x128xf32, #tpu.memory_space<vmem>>, %arg5: memref<128x256xbf16, #tpu.memory_space<vmem>>, %arg6: memref<1x256xf32, #tpu.memory_space<vmem>>, %arg7: memref<256x128xbf16, #tpu.memory_space<vmem>>, %arg8: memref<1x128xf32, #tpu.memory_space<vmem>>, %arg9: memref<8x128xf32, #tpu.memory_space<vmem>>) attributes {dimension_semantics = [], scalar_prefetch = 0 : i64, scratch_operands = 0 : i64, tpu.core_type = #tpu.core_type<tc>} {
    %c0 = arith.constant 0 : index
    %c0_0 = arith.constant 0 : index
    %c0_1 = arith.constant 0 : index
    %0 = vector.load %arg0[%c0, %c0_0, %c0_1] : memref<4x8x1664xbf16, #tpu.memory_space<vmem>>, vector<1x8x1664xbf16>
    %1 = vector.shape_cast %0 : vector<1x8x1664xbf16> to vector<8x1664xbf16>
    %c0_2 = arith.constant 0 : index
    %c0_3 = arith.constant 0 : index
    %2 = vector.load %arg1[%c0_2, %c0_3] : memref<1664x128xbf16, #tpu.memory_space<vmem>>, vector<1664x128xbf16>
    %cst = arith.constant dense<0.000000e+00> : vector<8x128xf32>
    %3 = tpu.matmul %1, %2, %cst {dimension_numbers = #tpu.dot_dimension_numbers<[1], [0], [0], [1], [0, 0, 1, 1], [], []>} : vector<8x1664xbf16>, vector<1664x128xbf16>, vector<8x128xf32> -> vector<8x128xf32>
    %c1 = arith.constant 1 : index
    %c0_4 = arith.constant 0 : index
    %c0_5 = arith.constant 0 : index
    %4 = vector.load %arg0[%c1, %c0_4, %c0_5] : memref<4x8x1664xbf16, #tpu.memory_space<vmem>>, vector<1x8x1664xbf16>
    %5 = vector.shape_cast %4 : vector<1x8x1664xbf16> to vector<8x1664xbf16>
    %c0_6 = arith.constant 0 : index
    %c0_7 = arith.constant 0 : index
    %6 = vector.load %arg1[%c0_6, %c0_7] : memref<1664x128xbf16, #tpu.memory_space<vmem>>, vector<1664x128xbf16>
    %cst_8 = arith.constant dense<0.000000e+00> : vector<8x128xf32>
    %7 = tpu.matmul %5, %6, %cst_8 {dimension_numbers = #tpu.dot_dimension_numbers<[1], [0], [0], [1], [0, 0, 1, 1], [], []>} : vector<8x1664xbf16>, vector<1664x128xbf16>, vector<8x128xf32> -> vector<8x128xf32>
    %8 = arith.maximumf %3, %7 : vector<8x128xf32>
    %c2 = arith.constant 2 : index
    %c0_9 = arith.constant 0 : index
    %c0_10 = arith.constant 0 : index
    %9 = vector.load %arg0[%c2, %c0_9, %c0_10] : memref<4x8x1664xbf16, #tpu.memory_space<vmem>>, vector<1x8x1664xbf16>
    %10 = vector.shape_cast %9 : vector<1x8x1664xbf16> to vector<8x1664xbf16>
    %c0_11 = arith.constant 0 : index
    %c0_12 = arith.constant 0 : index
    %11 = vector.load %arg1[%c0_11, %c0_12] : memref<1664x128xbf16, #tpu.memory_space<vmem>>, vector<1664x128xbf16>
    %cst_13 = arith.constant dense<0.000000e+00> : vector<8x128xf32>
    %12 = tpu.matmul %10, %11, %cst_13 {dimension_numbers = #tpu.dot_dimension_numbers<[1], [0], [0], [1], [0, 0, 1, 1], [], []>} : vector<8x1664xbf16>, vector<1664x128xbf16>, vector<8x128xf32> -> vector<8x128xf32>
    %13 = arith.maximumf %8, %12 : vector<8x128xf32>
    %c3 = arith.constant 3 : index
    %c0_14 = arith.constant 0 : index
    %c0_15 = arith.constant 0 : index
    %14 = vector.load %arg0[%c3, %c0_14, %c0_15] : memref<4x8x1664xbf16, #tpu.memory_space<vmem>>, vector<1x8x1664xbf16>
    %15 = vector.shape_cast %14 : vector<1x8x1664xbf16> to vector<8x1664xbf16>
    %c0_16 = arith.constant 0 : index
    %c0_17 = arith.constant 0 : index
    %16 = vector.load %arg1[%c0_16, %c0_17] : memref<1664x128xbf16, #tpu.memory_space<vmem>>, vector<1664x128xbf16>
    %cst_18 = arith.constant dense<0.000000e+00> : vector<8x128xf32>
    %17 = tpu.matmul %15, %16, %cst_18 {dimension_numbers = #tpu.dot_dimension_numbers<[1], [0], [0], [1], [0, 0, 1, 1], [], []>} : vector<8x1664xbf16>, vector<1664x128xbf16>, vector<8x128xf32> -> vector<8x128xf32>
    %18 = arith.maximumf %13, %17 : vector<8x128xf32>
    %c0_19 = arith.constant 0 : index
    %c0_20 = arith.constant 0 : index
    %19 = vector.load %arg2[%c0_19, %c0_20] : memref<1x128xf32, #tpu.memory_space<vmem>>, vector<1x128xf32>
    %20 = vector.broadcast %19 : vector<1x128xf32> to vector<8x128xf32>
    %21 = arith.addf %18, %20 : vector<8x128xf32>
    %cst_21 = arith.constant 0.000000e+00 : f32
    %22 = vector.broadcast %cst_21 : f32 to vector<8x128xf32>
    %23 = arith.maximumf %21, %22 : vector<8x128xf32>
    %24 = arith.truncf %23 : vector<8x128xf32> to vector<8x128xbf16>
    %c0_22 = arith.constant 0 : index
    %c0_23 = arith.constant 0 : index
    %25 = vector.load %arg3[%c0_22, %c0_23] : memref<128x128xbf16, #tpu.memory_space<vmem>>, vector<128x128xbf16>
    %cst_24 = arith.constant dense<0.000000e+00> : vector<8x128xf32>
    %26 = tpu.matmul %24, %25, %cst_24 {dimension_numbers = #tpu.dot_dimension_numbers<[1], [0], [0], [1], [0, 0, 1, 1], [], []>} : vector<8x128xbf16>, vector<128x128xbf16>, vector<8x128xf32> -> vector<8x128xf32>
    %c0_25 = arith.constant 0 : index
    %c0_26 = arith.constant 0 : index
    %27 = vector.load %arg4[%c0_25, %c0_26] : memref<1x128xf32, #tpu.memory_space<vmem>>, vector<1x128xf32>
    %28 = vector.broadcast %27 : vector<1x128xf32> to vector<8x128xf32>
    %29 = arith.addf %26, %28 : vector<8x128xf32>
    %cst_27 = arith.constant 0.000000e+00 : f32
    %30 = vector.broadcast %cst_27 : f32 to vector<8x128xf32>
    %31 = arith.maximumf %29, %30 : vector<8x128xf32>
    %32 = arith.truncf %31 : vector<8x128xf32> to vector<8x128xbf16>
    %c0_28 = arith.constant 0 : index
    %c0_29 = arith.constant 0 : index
    %33 = vector.load %arg5[%c0_28, %c0_29] : memref<128x256xbf16, #tpu.memory_space<vmem>>, vector<128x256xbf16>
    %cst_30 = arith.constant dense<0.000000e+00> : vector<8x256xf32>
    %34 = tpu.matmul %32, %33, %cst_30 {dimension_numbers = #tpu.dot_dimension_numbers<[1], [0], [0], [1], [0, 0, 1, 1], [], []>} : vector<8x128xbf16>, vector<128x256xbf16>, vector<8x256xf32> -> vector<8x256xf32>
    %c0_31 = arith.constant 0 : index
    %c0_32 = arith.constant 0 : index
    %35 = vector.load %arg6[%c0_31, %c0_32] : memref<1x256xf32, #tpu.memory_space<vmem>>, vector<1x256xf32>
    %36 = vector.broadcast %35 : vector<1x256xf32> to vector<8x256xf32>
    %37 = arith.addf %34, %36 : vector<8x256xf32>
    %cst_33 = arith.constant 0.000000e+00 : f32
    %38 = vector.broadcast %cst_33 : f32 to vector<8x256xf32>
    %39 = arith.maximumf %37, %38 : vector<8x256xf32>
    %40 = arith.truncf %39 : vector<8x256xf32> to vector<8x256xbf16>
    %c0_34 = arith.constant 0 : index
    %c0_35 = arith.constant 0 : index
    %41 = vector.load %arg7[%c0_34, %c0_35] : memref<256x128xbf16, #tpu.memory_space<vmem>>, vector<256x128xbf16>
    %cst_36 = arith.constant dense<0.000000e+00> : vector<8x128xf32>
    %42 = tpu.matmul %40, %41, %cst_36 {dimension_numbers = #tpu.dot_dimension_numbers<[1], [0], [0], [1], [0, 0, 1, 1], [], []>} : vector<8x256xbf16>, vector<256x128xbf16>, vector<8x128xf32> -> vector<8x128xf32>
    %c0_37 = arith.constant 0 : index
    %c0_38 = arith.constant 0 : index
    %43 = vector.load %arg8[%c0_37, %c0_38] : memref<1x128xf32, #tpu.memory_space<vmem>>, vector<1x128xf32>
    %44 = vector.broadcast %43 : vector<1x128xf32> to vector<8x128xf32>
    %45 = arith.addf %42, %44 : vector<8x128xf32>
    %c0_39 = arith.constant 0 : index
    %c0_40 = arith.constant 0 : index
    %46 = vector.load %arg9[%c0_39, %c0_40] : memref<8x128xf32, #tpu.memory_space<vmem>>, vector<8x128xf32>
    tpu.vector_store %arg9[%c0_39, %c0_40], %45 {strides = array<i32>} : memref<8x128xf32, #tpu.memory_space<vmem>>, vector<8x128xf32>,
    return
  }
}

</mosaic_0001>

<llo_original>
// kernel: cnn_model_l2_forward.5
$region0: #{cnn_model_l2_forward.5}
  #allocation0 [shape = 'u32[]', space=smem, size = 0x4, offset = 0x4, fixed_abs, tag = 'smem constant byte address 0x4 - core index']
  #allocation1 [shape = 'u32[72,128]{1,0:T(1,128)}', space=vmem, size = 0x9000, scoped, tag = 'internal scratch']
  %s0 = inlined_call_operand.vmem [shape: bf16[4,512,128], index: 0, kind: input, shape index: {}]
  %s1 = inlined_call_operand.vmem [shape: bf16[128,128], index: 1, kind: input, shape index: {}]
  %s2 = inlined_call_operand.vmem [shape: f32[1,128], index: 2, kind: input, shape index: {}]
  %s3 = inlined_call_operand.vmem [shape: bf16[512,128], index: 3, kind: output, shape index: {}]
  %s4 = sld [smem:[#allocation0]]
  $region86: #{cnn_model_l2_forward.5} parent=0
    _
  %s6 = ssub.s32 1, %s4
  %s7 = scalar_select 0, %s6, %s4
  $region1: #{cnn_model_l2_forward.5} parent=0
    #allocation2 [shape = 'u8[524288]{0}', space=vmem, size = 0x80000, scoped, tag = 'input window, operand 0']
    loop: start=0, step=1, limit=4
    $region2: #{cnn_model_l2_forward.5} parent=1 // loop_pre_header
      _
    $region3: #{cnn_model_l2_forward.5} parent=1 // loop_header
      %s9 = sphi 0, %s13
      %p10 = scmp.ge.s32.totalorder %s9, 4
      %s19 = sphi 0, %s21
      %s22 = sphi 0, %s19
      %s23 = sphi 0, %s22
      %s39 = sphi 0, %s23
      %s43 = sphi 0, %s43
      %s45 = sphi 0, %s43
      %s46 = sphi 0, %s45
      %s60 = sphi 0, %s46
      %s64 = sphi 0, %s64
      %s66 = sphi 0, %s64
      %s67 = sphi 0, %s66
      %s81 = sphi 0, %s67
      %s87 = sphi 0, %s89
      %s90 = sphi 0, %s87
      %s91 = sphi 0, %s90
      %s107 = sphi 0, %s91
    $region4: #{cnn_model_l2_forward.5} parent=1 // loop_header_branch
      %12 = sbr.rel (%p10) target = $region8
    $region5: #{cnn_model_l2_forward.5} parent=1 // loop_body
      %s14 = ssub.s32 %s9, 1
      %s15 = ssub.s32 %s9, 2
      %s16 = sadd.s32 %s9, 1
      %s17 = ssub.s32 %s9, %s16
      %p18 = scmp.eq.s32.totalorder %s17, 0
      %s20 = sadd.s32 %s19, 1
      %s21 = scalar_select %p18, %s19, %s20
      %p24 = pneg %p18
      %p25 = scmp.eq.s32.totalorder %s9, 1
      %p26 = por %p24, %p25
      %p27 = scmp.ne.s32.totalorder %s19, %s22
      %p28 = scmp.eq.s32.totalorder %s9, 0
      %p29 = por %p27, %p28
      %p30 = scmp.ne.s32.totalorder %s19, %s22
      %p31 = scmp.eq.s32.totalorder %s14, 1
      %p32 = por %p30, %p31
      %p33 = scmp.ne.s32.totalorder %s22, %s23
      %p34 = scmp.eq.s32.totalorder %s14, 0
      %p35 = por %p33, %p34
      %p36 = scmp.ne.s32.totalorder %s22, %s23
      %p37 = scmp.eq.s32.totalorder %s15, 1
      %p38 = por %p36, %p37
      %p40 = scmp.ne.s32.totalorder %s23, %s39
      %p41 = scmp.eq.s32.totalorder %s15, 0
      %p42 = por %p40, %p41
      %s44 = sadd.s32 %s43, 1
      %p47 = scmp.eq.s32.totalorder %s9, 1
      %p48 = scmp.ne.s32.totalorder %s43, %s45
      %p49 = scmp.eq.s32.totalorder %s9, 0
      %p50 = por %p48, %p49
      %p51 = scmp.ne.s32.totalorder %s43, %s45
      %p52 = scmp.eq.s32.totalorder %s14, 1
      %p53 = por %p51, %p52
      %p54 = scmp.ne.s32.totalorder %s45, %s46
      %p55 = scmp.eq.s32.totalorder %s14, 0
      %p56 = por %p54, %p55
      %p57 = scmp.ne.s32.totalorder %s45, %s46
      %p58 = scmp.eq.s32.totalorder %s15, 1
      %p59 = por %p57, %p58
      %p61 = scmp.ne.s32.totalorder %s46, %s60
      %p62 = scmp.eq.s32.totalorder %s15, 0
      %p63 = por %p61, %p62
      %s65 = sadd.s32 %s64, 1
      %p68 = scmp.eq.s32.totalorder %s9, 1
      %p69 = scmp.ne.s32.totalorder %s64, %s66
      %p70 = scmp.eq.s32.totalorder %s9, 0
      %p71 = por %p69, %p70
      %p72 = scmp.ne.s32.totalorder %s64, %s66
      %p73 = scmp.eq.s32.totalorder %s14, 1
      %p74 = por %p72, %p73
      %p75 = scmp.ne.s32.totalorder %s66, %s67
      %p76 = scmp.eq.s32.totalorder %s14, 0
      %p77 = por %p75, %p76
      %p78 = scmp.ne.s32.totalorder %s66, %s67
      %p79 = scmp.eq.s32.totalorder %s15, 1
      %p80 = por %p78, %p79
      %p82 = scmp.ne.s32.totalorder %s67, %s81
      %p83 = scmp.eq.s32.totalorder %s15, 0
      %p84 = por %p82, %p83
      %s85 = ssub.s32 %s9, %s16
      %p86 = scmp.eq.s32.totalorder %s85, 0
      %s88 = sadd.s32 %s87, 1
      %s89 = scalar_select %p86, %s87, %s88
      %p92 = pneg %p86
      %p93 = scmp.eq.s32.totalorder %s9, 1
      %p94 = por %p92, %p93
      %p95 = scmp.ne.s32.totalorder %s87, %s90
      %p96 = scmp.eq.s32.totalorder %s9, 0
      %p97 = por %p95, %p96
      %p98 = scmp.ne.s32.totalorder %s87, %s90
      %p99 = scmp.eq.s32.totalorder %s14, 1
      %p100 = por %p98, %p99
      %p101 = scmp.ne.s32.totalorder %s90, %s91
      %p102 = scmp.eq.s32.totalorder %s14, 0
      %p103 = por %p101, %p102
      %p104 = scmp.ne.s32.totalorder %s90, %s91
      %p105 = scmp.eq.s32.totalorder %s15, 1
      %p106 = por %p104, %p105
      %p108 = scmp.ne.s32.totalorder %s91, %s107
      %p109 = scmp.eq.s32.totalorder %s15, 0
      %p110 = por %p108, %p109
      %p111 = scmp.le.s32.totalorder 1, %s9
      %p112 = scmp.lt.s32.totalorder %s9, 3
      %p113 = pnand %p111, %p112
      %p114 = pneg %p113
      // Predicated region
      $region9: #{cnn_model_l2_forward.5} parent=5 // pred_check
        _
      $region10: #{cnn_model_l2_forward.5} parent=5 // pred_check_branch
        %116 = sbr.rel (%p113) target = $region12
      $region11: #{cnn_model_l2_forward.5} parent=5 // pred_region
        %s117 = ssub.s32 %s9, 1
        // Predicated region
        $region13: #{cnn_model_l2_forward.5} parent=11 // pred_check
          %p118 = pneg %p56
        $region14: #{cnn_model_l2_forward.5} parent=11 // pred_check_branch
          %120 = sbr.rel (%p118) target = $region16
        $region15: #{cnn_model_l2_forward.5} parent=11 // pred_region
          _
        $region16: #{cnn_model_l2_forward.5} parent=11 // pred_fallthru
          _
        // Predicated region
        $region17: #{cnn_model_l2_forward.5} parent=11 // pred_check
          %p121 = pneg %p77
        $region18: #{cnn_model_l2_forward.5} parent=11 // pred_check_branch
          %123 = sbr.rel (%p121) target = $region20
        $region19: #{cnn_model_l2_forward.5} parent=11 // pred_region
          _
        $region20: #{cnn_model_l2_forward.5} parent=11 // pred_fallthru
          _
      $region12: #{cnn_model_l2_forward.5} parent=5 // pred_fallthru
        _
      %p124 = scmp.lt.s32.totalorder %s9, 2
      // Predicated region
      $region21: #{cnn_model_l2_forward.5} parent=5 // pred_check
        %p125 = pneg %p124
      $region22: #{cnn_model_l2_forward.5} parent=5 // pred_check_branch
        %127 = sbr.rel (%p125) target = $region24
      $region23: #{cnn_model_l2_forward.5} parent=5 // pred_region
        // Predicated region
        $region25: #{cnn_model_l2_forward.5} parent=23 // pred_check
          %p128 = pneg %p29
        $region26: #{cnn_model_l2_forward.5} parent=23 // pred_check_branch
          %130 = sbr.rel (%p128) target = $region28
        $region27: #{cnn_model_l2_forward.5} parent=23 // pred_region
          %s131 = sand.u32 %s19, 1
          %s132 = sand.u32 %s19, 1
          %s133 = smul.addr %s132, 512
          %s134 = scalar_lea.vmem [#allocation2], %s133
          %s135 = smul.u32 32, %s9
          %s136 = smul.addr %s135, 4
          %s137 = scalar_lea.vmem %s0, %s136
          // Predicated region
          $region29: #{cnn_model_l2_forward.5} parent=27 // pred_check
            _
          $region30: #{cnn_model_l2_forward.5} parent=27 // pred_check_branch
            %139 = sbr.rel (0) target = $region32
          $region31: #{cnn_model_l2_forward.5} parent=27 // pred_region
            // Predicated region
            $region33: #{cnn_model_l2_forward.5} parent=31 // pred_check
              _
            $region34: #{cnn_model_l2_forward.5} parent=31 // pred_check_branch
              %141 = sbr.rel target = $region36
            $region35: #{cnn_model_l2_forward.5} parent=31 // pred_region
              // Predicated region
              $region48: #{cnn_model_l2_forward.5} parent=35 // pred_check
                _
              $region49: #{cnn_model_l2_forward.5} parent=35 // pred_check_branch
                %411 = sbr.rel (0) target = $region51
              $region50: #{cnn_model_l2_forward.5} parent=35 // pred_region
                loop: start=0, step=1, limit=1
                $region52: #{cnn_model_l2_forward.5} parent=50 // loop_pre_header
                  _
                $region53: #{cnn_model_l2_forward.5} parent=50 // loop_header
                  %s413 = sphi 0, %s417
                  %p414 = scmp.ge.s32.totalorder %s413, 1
                  %s418 = sphi %s137, %s137
                  %s419 = sphi %s134, %s134
                $region54: #{cnn_model_l2_forward.5} parent=50 // loop_header_branch
                  %416 = sbr.rel (%p414) target = $region58
                $region55: #{cnn_model_l2_forward.5} parent=50 // loop_body
                  _
                $region56: #{cnn_model_l2_forward.5} parent=50 // loop_footer
                  %s417 = sadd.s32 1, %s413
                $region57: #{cnn_model_l2_forward.5} parent=50 // loop_footer_branch
                  %412 = sbr.rel target = $region53
                $region58: #{cnn_model_l2_forward.5} parent=50 // loop_exit
                  _
                %s421 = ssub.s32 16, 1
                loop: start=0, step=1, limit=1
                $region59: #{cnn_model_l2_forward.5} parent=50 // loop_pre_header
                  _
                $region60: #{cnn_model_l2_forward.5} parent=50 // loop_header
                  %s423 = sphi 0, %s427
                  %p424 = scmp.ge.s32.totalorder %s423, 1
                  %s428 = sphi %s137, %s137
                  %s429 = sphi %s134, %s134
                $region61: #{cnn_model_l2_forward.5} parent=50 // loop_header_branch
                  %426 = sbr.rel (%p424) target = $region65
                $region62: #{cnn_model_l2_forward.5} parent=50 // loop_body
                  %v430 = vld [vmem:[%s428] sm:%s421]
                  %431 = vst [vmem:[%s429] sm:%s421] %v430
                  %v432 = vld [vmem:[%s428 + $0x4] sm:%s421]
                  %433 = vst [vmem:[%s429 + $0x4] sm:%s421] %v432
                  %v434 = vld [vmem:[%s428 + $0x8] sm:%s421]
                  %435 = vst [vmem:[%s429 + $0x8] sm:%s421] %v434
                  %v436 = vld [vmem:[%s428 + $0xc] sm:%s421]
                  %437 = vst [vmem:[%s429 + $0xc] sm:%s421] %v436
                  %v438 = vld [vmem:[%s428 + $0x10] sm:%s421]
                  %439 = vst [vmem:[%s429 + $0x10] sm:%s421] %v438
                  %v440 = vld [vmem:[%s428 + $0x14] sm:%s421]
                  %441 = vst [vmem:[%s429 + $0x14] sm:%s421] %v440
                  %v442 = vld [vmem:[%s428 + $0x18] sm:%s421]
                  %443 = vst [vmem:[%s429 + $0x18] sm:%s421] %v442
                  %v444 = vld [vmem:[%s428 + $0x1c] sm:%s421]
                  %445 = vst [vmem:[%s429 + $0x1c] sm:%s421] %v444
                  %v446 = vld [vmem:[%s428 + $0x20] sm:%s421]
                  %447 = vst [vmem:[%s429 + $0x20] sm:%s421] %v446
                  %v448 = vld [vmem:[%s428 + $0x24] sm:%s421]
                  %449 = vst [vmem:[%s429 + $0x24] sm:%s421] %v448
                  %v450 = vld [vmem:[%s428 + $0x28] sm:%s421]
                  %451 = vst [vmem:[%s429 + $0x28] sm:%s421] %v450
                  %v452 = vld [vmem:[%s428 + $0x2c] sm:%s421]
                  %453 = vst [vmem:[%s429 + $0x2c] sm:%s421] %v452
                  %v454 = vld [vmem:[%s428 + $0x30] sm:%s421]
                  %455 = vst [vmem:[%s429 + $0x30] sm:%s421] %v454
                  %v456 = vld [vmem:[%s428 + $0x34] sm:%s421]
                  %457 = vst [vmem:[%s429 + $0x34] sm:%s421] %v456
                  %v458 = vld [vmem:[%s428 + $0x38] sm:%s421]
                  %459 = vst [vmem:[%s429 + $0x38] sm:%s421] %v458
                  %v460 = vld [vmem:[%s428 + $0x3c] sm:%s421]
                  %461 = vst [vmem:[%s429 + $0x3c] sm:%s421] %v460
                  %v462 = vld [vmem:[%s428 + $0x40] sm:%s421]
                  %463 = vst [vmem:[%s429 + $0x40] sm:%s421] %v462
                  %v464 = vld [vmem:[%s428 + $0x44] sm:%s421]
                  %465 = vst [vmem:[%s429 + $0x44] sm:%s421] %v464
                  %v466 = vld [vmem:[%s428 + $0x48] sm:%s421]
                  %467 = vst [vmem:[%s429 + $0x48] sm:%s421] %v466
                  %v468 = vld [vmem:[%s428 + $0x4c] sm:%s421]
                  %469 = vst [vmem:[%s429 + $0x4c] sm:%s421] %v468
                  %v470 = vld [vmem:[%s428 + $0x50] sm:%s421]
                  %471 = vst [vmem:[%s429 + $0x50] sm:%s421] %v470
                  %v472 = vld [vmem:[%s428 + $0x54] sm:%s421]
                  %473 = vst [vmem:[%s429 + $0x54] sm:%s421] %v472
                  %v474 = vld [vmem:[%s428 + $0x58] sm:%s421]
                  %475 = vst [vmem:[%s429 + $0x58] sm:%s421] %v474
                  %v476 = vld [vmem:[%s428 + $0x5c] sm:%s421]
                  %477 = vst [vmem:[%s429 + $0x5c] sm:%s421] %v476
                  %v478 = vld [vmem:[%s428 + $0x60] sm:%s421]
                  %479 = vst [vmem:[%s429 + $0x60] sm:%s421] %v478
                  %v480 = vld [vmem:[%s428 + $0x64] sm:%s421]
                  %481 = vst [vmem:[%s429 + $0x64] sm:%s421] %v480
                  %v482 = vld [vmem:[%s428 + $0x68] sm:%s421]
                  %483 = vst [vmem:[%s429 + $0x68] sm:%s421] %v482
                  %v484 = vld [vmem:[%s428 + $0x6c] sm:%s421]
                  %485 = vst [vmem:[%s429 + $0x6c] sm:%s421] %v484
                  %v486 = vld [vmem:[%s428 + $0x70] sm:%s421]
                  %487 = vst [vmem:[%s429 + $0x70] sm:%s421] %v486
                  %v488 = vld [vmem:[%s428 + $0x74] sm:%s421]
                  %489 = vst [vmem:[%s429 + $0x74] sm:%s421] %v488
                  %v490 = vld [vmem:[%s428 + $0x78] sm:%s421]
                  %491 = vst [vmem:[%s429 + $0x78] sm:%s421] %v490
                  %v492 = vld [vmem:[%s428 + $0x7c] sm:%s421]
                  %493 = vst [vmem:[%s429 + $0x7c] sm:%s421] %v492
                  %v494 = vld [vmem:[%s428 + $0x100] sm:%s421]
                  %495 = vst [vmem:[%s429 + $0x80] sm:%s421] %v494
                  %v496 = vld [vmem:[%s428 + $0x104] sm:%s421]
                  %497 = vst [vmem:[%s429 + $0x84] sm:%s421] %v496
                  %v498 = vld [vmem:[%s428 + $0x108] sm:%s421]
                  %499 = vst [vmem:[%s429 + $0x88] sm:%s421] %v498
                  %v500 = vld [vmem:[%s428 + $0x10c] sm:%s421]
                  %501 = vst [vmem:[%s429 + $0x8c] sm:%s421] %v500
                  %v502 = vld [vmem:[%s428 + $0x110] sm:%s421]
                  %503 = vst [vmem:[%s429 + $0x90] sm:%s421] %v502
                  %v504 = vld [vmem:[%s428 + $0x114] sm:%s421]
                  %505 = vst [vmem:[%s429 + $0x94] sm:%s421] %v504
                  %v506 = vld [vmem:[%s428 + $0x118] sm:%s421]
                  %507 = vst [vmem:[%s429 + $0x98] sm:%s421] %v506
                  %v508 = vld [vmem:[%s428 + $0x11c] sm:%s421]
                  %509 = vst [vmem:[%s429 + $0x9c] sm:%s421] %v508
                  %v510 = vld [vmem:[%s428 + $0x120] sm:%s421]
                  %511 = vst [vmem:[%s429 + $0xa0] sm:%s421] %v510
                  %v512 = vld [vmem:[%s428 + $0x124] sm:%s421]
                  %513 = vst [vmem:[%s429 + $0xa4] sm:%s421] %v512
                  %v514 = vld [vmem:[%s428 + $0x128] sm:%s421]
                  %515 = vst [vmem:[%s429 + $0xa8] sm:%s421] %v514
                  %v516 = vld [vmem:[%s428 + $0x12c] sm:%s421]
                  %517 = vst [vmem:[%s429 + $0xac] sm:%s421] %v516
                  %v518 = vld [vmem:[%s428 + $0x130] sm:%s421]
                  %519 = vst [vmem:[%s429 + $0xb0] sm:%s421] %v518
                  %v520 = vld [vmem:[%s428 + $0x134] sm:%s421]
                  %521 = vst [vmem:[%s429 + $0xb4] sm:%s421] %v520
                  %v522 = vld [vmem:[%s428 + $0x138] sm:%s421]
                  %523 = vst [vmem:[%s429 + $0xb8] sm:%s421] %v522
                  %v524 = vld [vmem:[%s428 + $0x13c] sm:%s421]
                  %525 = vst [vmem:[%s429 + $0xbc] sm:%s421] %v524
                  %v526 = vld [vmem:[%s428 + $0x140] sm:%s421]
                  %527 = vst [vmem:[%s429 + $0xc0] sm:%s421] %v526
                  %v528 = vld [vmem:[%s428 + $0x144] sm:%s421]
                  %529 = vst [vmem:[%s429 + $0xc4] sm:%s421] %v528
                  %v530 = vld [vmem:[%s428 + $0x148] sm:%s421]
                  %531 = vst [vmem:[%s429 + $0xc8] sm:%s421] %v530
                  %v532 = vld [vmem:[%s428 + $0x14c] sm:%s421]
                  %533 = vst [vmem:[%s429 + $0xcc] sm:%s421] %v532
                  %v534 = vld [vmem:[%s428 + $0x150] sm:%s421]
                  %535 = vst [vmem:[%s429 + $0xd0] sm:%s421] %v534
                  %v536 = vld [vmem:[%s428 + $0x154] sm:%s421]
                  %537 = vst [vmem:[%s429 + $0xd4] sm:%s421] %v536
                  %v538 = vld [vmem:[%s428 + $0x158] sm:%s421]
                  %539 = vst [vmem:[%s429 + $0xd8] sm:%s421] %v538
                  %v540 = vld [vmem:[%s428 + $0x15c] sm:%s421]
                  %541 = vst [vmem:[%s429 + $0xdc] sm:%s421] %v540
                  %v542 = vld [vmem:[%s428 + $0x160] sm:%s421]
                  %543 = vst [vmem:[%s429 + $0xe0] sm:%s421] %v542
                  %v544 = vld [vmem:[%s428 + $0x164] sm:%s421]
                  %545 = vst [vmem:[%s429 + $0xe4] sm:%s421] %v544
                  %v546 = vld [vmem:[%s428 + $0x168] sm:%s421]
                  %547 = vst [vmem:[%s429 + $0xe8] sm:%s421] %v546
                  %v548 = vld [vmem:[%s428 + $0x16c] sm:%s421]
                  %549 = vst [vmem:[%s429 + $0xec] sm:%s421] %v548
                  %v550 = vld [vmem:[%s428 + $0x170] sm:%s421]
                  %551 = vst [vmem:[%s429 + $0xf0] sm:%s421] %v550
                  %v552 = vld [vmem:[%s428 + $0x174] sm:%s421]
                  %553 = vst [vmem:[%s429 + $0xf4] sm:%s421] %v552
                  %v554 = vld [vmem:[%s428 + $0x178] sm:%s421]
                  %555 = vst [vmem:[%s429 + $0xf8] sm:%s421] %v554
                  %v556 = vld [vmem:[%s428 + $0x17c] sm:%s421]
                  %557 = vst [vmem:[%s429 + $0xfc] sm:%s421] %v556
                  %v558 = vld [vmem:[%s428 + $0x200] sm:%s421]
                  %559 = vst [vmem:[%s429 + $0x100] sm:%s421] %v558
                  %v560 = vld [vmem:[%s428 + $0x204] sm:%s421]
                  %561 = vst [vmem:[%s429 + $0x104] sm:%s421] %v560
                  %v562 = vld [vmem:[%s428 + $0x208] sm:%s421]
                  %563 = vst [vmem:[%s429 + $0x108] sm:%s421] %v562
                  %v564 = vld [vmem:[%s428 + $0x20c] sm:%s421]
                  %565 = vst [vmem:[%s429 + $0x10c] sm:%s421] %v564
                  %v566 = vld [vmem:[%s428 + $0x210] sm:%s421]
                  %567 = vst [vmem:[%s429 + $0x110] sm:%s421] %v566
                  %v568 = vld [vmem:[%s428 + $0x214] sm:%s421]
                  %569 = vst [vmem:[%s429 + $0x114] sm:%s421] %v568
                  %v570 = vld [vmem:[%s428 + $0x218] sm:%s421]
                  %571 = vst [vmem:[%s429 + $0x118] sm:%s421] %v570
                  %v572 = vld [vmem:[%s428 + $0x21c] sm:%s421]
                  %573 = vst [vmem:[%s429 + $0x11c] sm:%s421] %v572
                  %v574 = vld [vmem:[%s428 + $0x220] sm:%s421]
                  %575 = vst [vmem:[%s429 + $0x120] sm:%s421] %v574
                  %v576 = vld [vmem:[%s428 + $0x224] sm:%s421]
                  %577 = vst [vmem:[%s429 + $0x124] sm:%s421] %v576
                  %v578 = vld [vmem:[%s428 + $0x228] sm:%s421]
                  %579 = vst [vmem:[%s429 + $0x128] sm:%s421] %v578
                  %v580 = vld [vmem:[%s428 + $0x22c] sm:%s421]
                  %581 = vst [vmem:[%s429 + $0x12c] sm:%s421] %v580
                  %v582 = vld [vmem:[%s428 + $0x230] sm:%s421]
                  %583 = vst [vmem:[%s429 + $0x130] sm:%s421] %v582
                  %v584 = vld [vmem:[%s428 + $0x234] sm:%s421]
                  %585 = vst [vmem:[%s429 + $0x134] sm:%s421] %v584
                  %v586 = vld [vmem:[%s428 + $0x238] sm:%s421]
                  %587 = vst [vmem:[%s429 + $0x138] sm:%s421] %v586
                  %v588 = vld [vmem:[%s428 + $0x23c] sm:%s421]
                  %589 = vst [vmem:[%s429 + $0x13c] sm:%s421] %v588
                  %v590 = vld [vmem:[%s428 + $0x240] sm:%s421]
                  %591 = vst [vmem:[%s429 + $0x140] sm:%s421] %v590
                  %v592 = vld [vmem:[%s428 + $0x244] sm:%s421]
                  %593 = vst [vmem:[%s429 + $0x144] sm:%s421] %v592
                  %v594 = vld [vmem:[%s428 + $0x248] sm:%s421]
                  %595 = vst [vmem:[%s429 + $0x148] sm:%s421] %v594
                  %v596 = vld [vmem:[%s428 + $0x24c] sm:%s421]
                  %597 = vst [vmem:[%s429 + $0x14c] sm:%s421] %v596
                  %v598 = vld [vmem:[%s428 + $0x250] sm:%s421]
                  %599 = vst [vmem:[%s429 + $0x150] sm:%s421] %v598
                  %v600 = vld [vmem:[%s428 + $0x254] sm:%s421]
                  %601 = vst [vmem:[%s429 + $0x154] sm:%s421] %v600
                  %v602 = vld [vmem:[%s428 + $0x258] sm:%s421]
                  %603 = vst [vmem:[%s429 + $0x158] sm:%s421] %v602
                  %v604 = vld [vmem:[%s428 + $0x25c] sm:%s421]
                  %605 = vst [vmem:[%s429 + $0x15c] sm:%s421] %v604
                  %v606 = vld [vmem:[%s428 + $0x260] sm:%s421]
                  %607 = vst [vmem:[%s429 + $0x160] sm:%s421] %v606
                  %v608 = vld [vmem:[%s428 + $0x264] sm:%s421]
                  %609 = vst [vmem:[%s429 + $0x164] sm:%s421] %v608
                  %v610 = vld [vmem:[%s428 + $0x268] sm:%s421]
                  %611 = vst [vmem:[%s429 + $0x168] sm:%s421] %v610
                  %v612 = vld [vmem:[%s428 + $0x26c] sm:%s421]
                  %613 = vst [vmem:[%s429 + $0x16c] sm:%s421] %v612
                  %v614 = vld [vmem:[%s428 + $0x270] sm:%s421]
                  %615 = vst [vmem:[%s429 + $0x170] sm:%s421] %v614
                  %v616 = vld [vmem:[%s428 + $0x274] sm:%s421]
                  %617 = vst [vmem:[%s429 + $0x174] sm:%s421] %v616
                  %v618 = vld [vmem:[%s428 + $0x278] sm:%s421]
                  %619 = vst [vmem:[%s429 + $0x178] sm:%s421] %v618
                  %v620 = vld [vmem:[%s428 + $0x27c] sm:%s421]
                  %621 = vst [vmem:[%s429 + $0x17c] sm:%s421] %v620
                  %v622 = vld [vmem:[%s428 + $0x300] sm:%s421]
                  %623 = vst [vmem:[%s429 + $0x180] sm:%s421] %v622
                  %v624 = vld [vmem:[%s428 + $0x304] sm:%s421]
                  %625 = vst [vmem:[%s429 + $0x184] sm:%s421] %v624
                  %v626 = vld [vmem:[%s428 + $0x308] sm:%s421]
                  %627 = vst [vmem:[%s429 + $0x188] sm:%s421] %v626
                  %v628 = vld [vmem:[%s428 + $0x30c] sm:%s421]
                  %629 = vst [vmem:[%s429 + $0x18c] sm:%s421] %v628
                  %v630 = vld [vmem:[%s428 + $0x310] sm:%s421]
                  %631 = vst [vmem:[%s429 + $0x190] sm:%s421] %v630
                  %v632 = vld [vmem:[%s428 + $0x314] sm:%s421]
                  %633 = vst [vmem:[%s429 + $0x194] sm:%s421] %v632
                  %v634 = vld [vmem:[%s428 + $0x318] sm:%s421]
                  %635 = vst [vmem:[%s429 + $0x198] sm:%s421] %v634
                  %v636 = vld [vmem:[%s428 + $0x31c] sm:%s421]
                  %637 = vst [vmem:[%s429 + $0x19c] sm:%s421] %v636
                  %v638 = vld [vmem:[%s428 + $0x320] sm:%s421]
                  %639 = vst [vmem:[%s429 + $0x1a0] sm:%s421] %v638
                  %v640 = vld [vmem:[%s428 + $0x324] sm:%s421]
                  %641 = vst [vmem:[%s429 + $0x1a4] sm:%s421] %v640
                  %v642 = vld [vmem:[%s428 + $0x328] sm:%s421]
                  %643 = vst [vmem:[%s429 + $0x1a8] sm:%s421] %v642
                  %v644 = vld [vmem:[%s428 + $0x32c] sm:%s421]
                  %645 = vst [vmem:[%s429 + $0x1ac] sm:%s421] %v644
                  %v646 = vld [vmem:[%s428 + $0x330] sm:%s421]
                  %647 = vst [vmem:[%s429 + $0x1b0] sm:%s421] %v646
                  %v648 = vld [vmem:[%s428 + $0x334] sm:%s421]
                  %649 = vst [vmem:[%s429 + $0x1b4] sm:%s421] %v648
                  %v650 = vld [vmem:[%s428 + $0x338] sm:%s421]
                  %651 = vst [vmem:[%s429 + $0x1b8] sm:%s421] %v650
                  %v652 = vld [vmem:[%s428 + $0x33c] sm:%s421]
                  %653 = vst [vmem:[%s429 + $0x1bc] sm:%s421] %v652
                  %v654 = vld [vmem:[%s428 + $0x340] sm:%s421]
                  %655 = vst [vmem:[%s429 + $0x1c0] sm:%s421] %v654
                  %v656 = vld [vmem:[%s428 + $0x344] sm:%s421]
                  %657 = vst [vmem:[%s429 + $0x1c4] sm:%s421] %v656
                  %v658 = vld [vmem:[%s428 + $0x348] sm:%s421]
                  %659 = vst [vmem:[%s429 + $0x1c8] sm:%s421] %v658
                  %v660 = vld [vmem:[%s428 + $0x34c] sm:%s421]
                  %661 = vst [vmem:[%s429 + $0x1cc] sm:%s421] %v660
                  %v662 = vld [vmem:[%s428 + $0x350] sm:%s421]
                  %663 = vst [vmem:[%s429 + $0x1d0] sm:%s421] %v662
                  %v664 = vld [vmem:[%s428 + $0x354] sm:%s421]
                  %665 = vst [vmem:[%s429 + $0x1d4] sm:%s421] %v664
                  %v666 = vld [vmem:[%s428 + $0x358] sm:%s421]
                  %667 = vst [vmem:[%s429 + $0x1d8] sm:%s421] %v666
                  %v668 = vld [vmem:[%s428 + $0x35c] sm:%s421]
                  %669 = vst [vmem:[%s429 + $0x1dc] sm:%s421] %v668
                  %v670 = vld [vmem:[%s428 + $0x360] sm:%s421]
                  %671 = vst [vmem:[%s429 + $0x1e0] sm:%s421] %v670
                  %v672 = vld [vmem:[%s428 + $0x364] sm:%s421]
                  %673 = vst [vmem:[%s429 + $0x1e4] sm:%s421] %v672
                  %v674 = vld [vmem:[%s428 + $0x368] sm:%s421]
                  %675 = vst [vmem:[%s429 + $0x1e8] sm:%s421] %v674
                  %v676 = vld [vmem:[%s428 + $0x36c] sm:%s421]
                  %677 = vst [vmem:[%s429 + $0x1ec] sm:%s421] %v676
                  %v678 = vld [vmem:[%s428 + $0x370] sm:%s421]
                  %679 = vst [vmem:[%s429 + $0x1f0] sm:%s421] %v678
                  %v680 = vld [vmem:[%s428 + $0x374] sm:%s421]
                  %681 = vst [vmem:[%s429 + $0x1f4] sm:%s421] %v680
                  %v682 = vld [vmem:[%s428 + $0x378] sm:%s421]
                  %683 = vst [vmem:[%s429 + $0x1f8] sm:%s421] %v682
                  %v684 = vld [vmem:[%s428 + $0x37c] sm:%s421]
                  %685 = vst [vmem:[%s429 + $0x1fc] sm:%s421] %v684
                $region63: #{cnn_model_l2_forward.5} parent=50 // loop_footer
                  %s427 = sadd.s32 1, %s423
                $region64: #{cnn_model_l2_forward.5} parent=50 // loop_footer_branch
                  %422 = sbr.rel target = $region60
                $region65: #{cnn_model_l2_forward.5} parent=50 // loop_exit
                  _
              $region51: #{cnn_model_l2_forward.5} parent=35 // pred_fallthru
                _
            $region36: #{cnn_model_l2_forward.5} parent=31 // pred_fallthru
              _
            // Predicated region
            $region37: #{cnn_model_l2_forward.5} parent=31 // pred_check
              _
            $region38: #{cnn_model_l2_forward.5} parent=31 // pred_check_branch
              %143 = sbr.rel (0) target = $region40
            $region39: #{cnn_model_l2_forward.5} parent=31 // pred_region
              %s145 = ssub.s32 16, 1
              loop: start=0, step=1, limit=1
              $region41: #{cnn_model_l2_forward.5} parent=39 // loop_pre_header
                _
              $region42: #{cnn_model_l2_forward.5} parent=39 // loop_header
                %s147 = sphi 0, %s151
                %p148 = scmp.ge.s32.totalorder %s147, 1
                %s152 = sphi %s137, %s137
                %s153 = sphi %s134, %s134
              $region43: #{cnn_model_l2_forward.5} parent=39 // loop_header_branch
                %150 = sbr.rel (%p148) target = $region47
              $region44: #{cnn_model_l2_forward.5} parent=39 // loop_body
                %v154 = vld [vmem:[%s152] sm:%s145]
                %155 = vst [vmem:[%s153] sm:%s145] %v154
                %v156 = vld [vmem:[%s152 + $0x4] sm:%s145]
                %157 = vst [vmem:[%s153 + $0x4] sm:%s145] %v156
                %v158 = vld [vmem:[%s152 + $0x8] sm:%s145]
                %159 = vst [vmem:[%s153 + $0x8] sm:%s145] %v158
                %v160 = vld [vmem:[%s152 + $0xc] sm:%s145]
                %161 = vst [vmem:[%s153 + $0xc] sm:%s145] %v160
                %v162 = vld [vmem:[%s152 + $0x10] sm:%s145]
                %163 = vst [vmem:[%s153 + $0x10] sm:%s145] %v162
                %v164 = vld [vmem:[%s152 + $0x14] sm:%s145]
                %165 = vst [vmem:[%s153 + $0x14] sm:%s145] %v164
                %v166 = vld [vmem:[%s152 + $0x18] sm:%s145]
                %167 = vst [vmem:[%s153 + $0x18] sm:%s145] %v166
                %v168 = vld [vmem:[%s152 + $0x1c] sm:%s145]
                %169 = vst [vmem:[%s153 + $0x1c] sm:%s145] %v168
                %v170 = vld [vmem:[%s152 + $0x20] sm:%s145]
                %171 = vst [vmem:[%s153 + $0x20] sm:%s145] %v170
                %v172 = vld [vmem:[%s152 + $0x24] sm:%s145]
                %173 = vst [vmem:[%s153 + $0x24] sm:%s145] %v172
                %v174 = vld [vmem:[%s152 + $0x28] sm:%s145]
                %175 = vst [vmem:[%s153 + $0x28] sm:%s145] %v174
                %v176 = vld [vmem:[%s152 + $0x2c] sm:%s145]
                %177 = vst [vmem:[%s153 + $0x2c] sm:%s145] %v176
                %v178 = vld [vmem:[%s152 + $0x30] sm:%s145]
                %179 = vst [vmem:[%s153 + $0x30] sm:%s145] %v178
                %v180 = vld [vmem:[%s152 + $0x34] sm:%s145]
                %181 = vst [vmem:[%s153 + $0x34] sm:%s145] %v180
                %v182 = vld [vmem:[%s152 + $0x38] sm:%s145]
                %183 = vst [vmem:[%s153 + $0x38] sm:%s145] %v182
                %v184 = vld [vmem:[%s152 + $0x3c] sm:%s145]
                %185 = vst [vmem:[%s153 + $0x3c] sm:%s145] %v184
                %v186 = vld [vmem:[%s152 + $0x40] sm:%s145]
                %187 = vst [vmem:[%s153 + $0x40] sm:%s145] %v186
                %v188 = vld [vmem:[%s152 + $0x44] sm:%s145]
                %189 = vst [vmem:[%s153 + $0x44] sm:%s145] %v188
                %v190 = vld [vmem:[%s152 + $0x48] sm:%s145]
                %191 = vst [vmem:[%s153 + $0x48] sm:%s145] %v190
                %v192 = vld [vmem:[%s152 + $0x4c] sm:%s145]
                %193 = vst [vmem:[%s153 + $0x4c] sm:%s145] %v192
                %v194 = vld [vmem:[%s152 + $0x50] sm:%s145]
                %195 = vst [vmem:[%s153 + $0x50] sm:%s145] %v194
                %v196 = vld [vmem:[%s152 + $0x54] sm:%s145]
                %197 = vst [vmem:[%s153 + $0x54] sm:%s145] %v196
                %v198 = vld [vmem:[%s152 + $0x58] sm:%s145]
                %199 = vst [vmem:[%s153 + $0x58] sm:%s145] %v198
                %v200 = vld [vmem:[%s152 + $0x5c] sm:%s145]
                %201 = vst [vmem:[%s153 + $0x5c] sm:%s145] %v200
                %v202 = vld [vmem:[%s152 + $0x60] sm:%s145]
                %203 = vst [vmem:[%s153 + $0x60] sm:%s145] %v202
                %v204 = vld [vmem:[%s152 + $0x64] sm:%s145]
                %205 = vst [vmem:[%s153 + $0x64] sm:%s145] %v204
                %v206 = vld [vmem:[%s152 + $0x68] sm:%s145]
                %207 = vst [vmem:[%s153 + $0x68] sm:%s145] %v206
                %v208 = vld [vmem:[%s152 + $0x6c] sm:%s145]
                %209 = vst [vmem:[%s153 + $0x6c] sm:%s145] %v208
                %v210 = vld [vmem:[%s152 + $0x70] sm:%s145]
                %211 = vst [vmem:[%s153 + $0x70] sm:%s145] %v210
                %v212 = vld [vmem:[%s152 + $0x74] sm:%s145]
                %213 = vst [vmem:[%s153 + $0x74] sm:%s145] %v212
                %v214 = vld [vmem:[%s152 + $0x78] sm:%s145]
                %215 = vst [vmem:[%s153 + $0x78] sm:%s145] %v214
                %v216 = vld [vmem:[%s152 + $0x7c] sm:%s145]
                %217 = vst [vmem:[%s153 + $0x7c] sm:%s145] %v216
                %v218 = vld [vmem:[%s152 + $0x100] sm:%s145]
                %219 = vst [vmem:[%s153 + $0x80] sm:%s145] %v218
                %v220 = vld [vmem:[%s152 + $0x104] sm:%s145]
                %221 = vst [vmem:[%s153 + $0x84] sm:%s145] %v220
                %v222 = vld [vmem:[%s152 + $0x108] sm:%s145]
                %223 = vst [vmem:[%s153 + $0x88] sm:%s145] %v222
                %v224 = vld [vmem:[%s152 + $0x10c] sm:%s145]
                %225 = vst [vmem:[%s153 + $0x8c] sm:%s145] %v224
                %v226 = vld [vmem:[%s152 + $0x110] sm:%s145]
                %227 = vst [vmem:[%s153 + $0x90] sm:%s145] %v226
                %v228 = vld [vmem:[%s152 + $0x114] sm:%s145]
                %229 = vst [vmem:[%s153 + $0x94] sm:%s145] %v228
                %v230 = vld [vmem:[%s152 + $0x118] sm:%s145]
                %231 = vst [vmem:[%s153 + $0x98] sm:%s145] %v230
                %v232 = vld [vmem:[%s152 + $0x11c] sm:%s145]
                %233 = vst [vmem:[%s153 + $0x9c] sm:%s145] %v232
                %v234 = vld [vmem:[%s152 + $0x120] sm:%s145]
                %235 = vst [vmem:[%s153 + $0xa0] sm:%s145] %v234
                %v236 = vld [vmem:[%s152 + $0x124] sm:%s145]
                %237 = vst [vmem:[%s153 + $0xa4] sm:%s145] %v236
                %v238 = vld [vmem:[%s152 + $0x128] sm:%s145]
                %239 = vst [vmem:[%s153 + $0xa8] sm:%s145] %v238
                %v240 = vld [vmem:[%s152 + $0x12c] sm:%s145]
                %241 = vst [vmem:[%s153 + $0xac] sm:%s145] %v240
                %v242 = vld [vmem:[%s152 + $0x130] sm:%s145]
                %243 = vst [vmem:[%s153 + $0xb0] sm:%s145] %v242
                %v244 = vld [vmem:[%s152 + $0x134] sm:%s145]
                %245 = vst [vmem:[%s153 + $0xb4] sm:%s145] %v244
                %v246 = vld [vmem:[%s152 + $0x138] sm:%s145]
                %247 = vst [vmem:[%s153 + $0xb8] sm:%s145] %v246
                %v248 = vld [vmem:[%s152 + $0x13c] sm:%s145]
                %249 = vst [vmem:[%s153 + $0xbc] sm:%s145] %v248
                %v250 = vld [vmem:[%s152 + $0x140] sm:%s145]
                %251 = vst [vmem:[%s153 + $0xc0] sm:%s145] %v250
                %v252 = vld [vmem:[%s152 + $0x144] sm:%s145]
                %253 = vst [vmem:[%s153 + $0xc4] sm:%s145] %v252
                %v254 = vld [vmem:[%s152 + $0x148] sm:%s145]
                %255 = vst [vmem:[%s153 + $0xc8] sm:%s145] %v254
                %v256 = vld [vmem:[%s152 + $0x14c] sm:%s145]
                %257 = vst [vmem:[%s153 + $0xcc] sm:%s145] %v256
                %v258 = vld [vmem:[%s152 + $0x150] sm:%s145]
                %259 = vst [vmem:[%s153 + $0xd0] sm:%s145] %v258
                %v260 = vld [vmem:[%s152 + $0x154] sm:%s145]
                %261 = vst [vmem:[%s153 + $0xd4] sm:%s145] %v260
                %v262 = vld [vmem:[%s152 + $0x158] sm:%s145]
                %263 = vst [vmem:[%s153 + $0xd8] sm:%s145] %v262
                %v264 = vld [vmem:[%s152 + $0x15c] sm:%s145]
                %265 = vst [vmem:[%s153 + $0xdc] sm:%s145] %v264
                %v266 = vld [vmem:[%s152 + $0x160] sm:%s145]
                %267 = vst [vmem:[%s153 + $0xe0] sm:%s145] %v266
                %v268 = vld [vmem:[%s152 + $0x164] sm:%s145]
                %269 = vst [vmem:[%s153 + $0xe4] sm:%s145] %v268
                %v270 = vld [vmem:[%s152 + $0x168] sm:%s145]
                %271 = vst [vmem:[%s153 + $0xe8] sm:%s145] %v270
                %v272 = vld [vmem:[%s152 + $0x16c] sm:%s145]
                %273 = vst [vmem:[%s153 + $0xec] sm:%s145] %v272
                %v274 = vld [vmem:[%s152 + $0x170] sm:%s145]
                %275 = vst [vmem:[%s153 + $0xf0] sm:%s145] %v274
                %v276 = vld [vmem:[%s152 + $0x174] sm:%s145]
                %277 = vst [vmem:[%s153 + $0xf4] sm:%s145] %v276
                %v278 = vld [vmem:[%s152 + $0x178] sm:%s145]
                %279 = vst [vmem:[%s153 + $0xf8] sm:%s145] %v278
                %v280 = vld [vmem:[%s152 + $0x17c] sm:%s145]
                %281 = vst [vmem:[%s153 + $0xfc] sm:%s145] %v280
                %v282 = vld [vmem:[%s152 + $0x200] sm:%s145]
                %283 = vst [vmem:[%s153 + $0x100] sm:%s145] %v282
                %v284 = vld [vmem:[%s152 + $0x204] sm:%s145]
                %285 = vst [vmem:[%s153 + $0x104] sm:%s145] %v284
                %v286 = vld [vmem:[%s152 + $0x208] sm:%s145]
                %287 = vst [vmem:[%s153 + $0x108] sm:%s145] %v286
                %v288 = vld [vmem:[%s152 + $0x20c] sm:%s145]
                %289 = vst [vmem:[%s153 + $0x10c] sm:%s145] %v288
                %v290 = vld [vmem:[%s152 + $0x210] sm:%s145]
                %291 = vst [vmem:[%s153 + $0x110] sm:%s145] %v290
                %v292 = vld [vmem:[%s152 + $0x214] sm:%s145]
                %293 = vst [vmem:[%s153 + $0x114] sm:%s145] %v292
                %v294 = vld [vmem:[%s152 + $0x218] sm:%s145]
                %295 = vst [vmem:[%s153 + $0x118] sm:%s145] %v294
                %v296 = vld [vmem:[%s152 + $0x21c] sm:%s145]
                %297 = vst [vmem:[%s153 + $0x11c] sm:%s145] %v296
                %v298 = vld [vmem:[%s152 + $0x220] sm:%s145]
                %299 = vst [vmem:[%s153 + $0x120] sm:%s145] %v298
                %v300 = vld [vmem:[%s152 + $0x224] sm:%s145]
                %301 = vst [vmem:[%s153 + $0x124] sm:%s145] %v300
                %v302 = vld [vmem:[%s152 + $0x228] sm:%s145]
                %303 = vst [vmem:[%s153 + $0x128] sm:%s145] %v302
                %v304 = vld [vmem:[%s152 + $0x22c] sm:%s145]
                %305 = vst [vmem:[%s153 + $0x12c] sm:%s145] %v304
                %v306 = vld [vmem:[%s152 + $0x230] sm:%s145]
                %307 = vst [vmem:[%s153 + $0x130] sm:%s145] %v306
                %v308 = vld [vmem:[%s152 + $0x234] sm:%s145]
                %309 = vst [vmem:[%s153 + $0x134] sm:%s145] %v308
                %v310 = vld [vmem:[%s152 + $0x238] sm:%s145]
                %311 = vst [vmem:[%s153 + $0x138] sm:%s145] %v310
                %v312 = vld [vmem:[%s152 + $0x23c] sm:%s145]
                %313 = vst [vmem:[%s153 + $0x13c] sm:%s145] %v312
                %v314 = vld [vmem:[%s152 + $0x240] sm:%s145]
                %315 = vst [vmem:[%s153 + $0x140] sm:%s145] %v314
                %v316 = vld [vmem:[%s152 + $0x244] sm:%s145]
                %317 = vst [vmem:[%s153 + $0x144] sm:%s145] %v316
                %v318 = vld [vmem:[%s152 + $0x248] sm:%s145]
                %319 = vst [vmem:[%s153 + $0x148] sm:%s145] %v318
                %v320 = vld [vmem:[%s152 + $0x24c] sm:%s145]
                %321 = vst [vmem:[%s153 + $0x14c] sm:%s145] %v320
                %v322 = vld [vmem:[%s152 + $0x250] sm:%s145]
                %323 = vst [vmem:[%s153 + $0x150] sm:%s145] %v322
                %v324 = vld [vmem:[%s152 + $0x254] sm:%s145]
                %325 = vst [vmem:[%s153 + $0x154] sm:%s145] %v324
                %v326 = vld [vmem:[%s152 + $0x258] sm:%s145]
                %327 = vst [vmem:[%s153 + $0x158] sm:%s145] %v326
                %v328 = vld [vmem:[%s152 + $0x25c] sm:%s145]
                %329 = vst [vmem:[%s153 + $0x15c] sm:%s145] %v328
                %v330 = vld [vmem:[%s152 + $0x260] sm:%s145]
                %331 = vst [vmem:[%s153 + $0x160] sm:%s145] %v330
                %v332 = vld [vmem:[%s152 + $0x264] sm:%s145]
                %333 = vst [vmem:[%s153 + $0x164] sm:%s145] %v332
                %v334 = vld [vmem:[%s152 + $0x268] sm:%s145]
                %335 = vst [vmem:[%s153 + $0x168] sm:%s145] %v334
                %v336 = vld [vmem:[%s152 + $0x26c] sm:%s145]
                %337 = vst [vmem:[%s153 + $0x16c] sm:%s145] %v336
                %v338 = vld [vmem:[%s152 + $0x270] sm:%s145]
                %339 = vst [vmem:[%s153 + $0x170] sm:%s145] %v338
                %v340 = vld [vmem:[%s152 + $0x274] sm:%s145]
                %341 = vst [vmem:[%s153 + $0x174] sm:%s145] %v340
                %v342 = vld [vmem:[%s152 + $0x278] sm:%s145]
                %343 = vst [vmem:[%s153 + $0x178] sm:%s145] %v342
                %v344 = vld [vmem:[%s152 + $0x27c] sm:%s145]
                %345 = vst [vmem:[%s153 + $0x17c] sm:%s145] %v344
                %v346 = vld [vmem:[%s152 + $0x300] sm:%s145]
                %347 = vst [vmem:[%s153 + $0x180] sm:%s145] %v346
                %v348 = vld [vmem:[%s152 + $0x304] sm:%s145]
                %349 = vst [vmem:[%s153 + $0x184] sm:%s145] %v348
                %v350 = vld [vmem:[%s152 + $0x308] sm:%s145]
                %351 = vst [vmem:[%s153 + $0x188] sm:%s145] %v350
                %v352 = vld [vmem:[%s152 + $0x30c] sm:%s145]
                %353 = vst [vmem:[%s153 + $0x18c] sm:%s145] %v352
                %v354 = vld [vmem:[%s152 + $0x310] sm:%s145]
                %355 = vst [vmem:[%s153 + $0x190] sm:%s145] %v354
                %v356 = vld [vmem:[%s152 + $0x314] sm:%s145]
                %357 = vst [vmem:[%s153 + $0x194] sm:%s145] %v356
                %v358 = vld [vmem:[%s152 + $0x318] sm:%s145]
                %359 = vst [vmem:[%s153 + $0x198] sm:%s145] %v358
                %v360 = vld [vmem:[%s152 + $0x31c] sm:%s145]
                %361 = vst [vmem:[%s153 + $0x19c] sm:%s145] %v360
                %v362 = vld [vmem:[%s152 + $0x320] sm:%s145]
                %363 = vst [vmem:[%s153 + $0x1a0] sm:%s145] %v362
                %v364 = vld [vmem:[%s152 + $0x324] sm:%s145]
                %365 = vst [vmem:[%s153 + $0x1a4] sm:%s145] %v364
                %v366 = vld [vmem:[%s152 + $0x328] sm:%s145]
                %367 = vst [vmem:[%s153 + $0x1a8] sm:%s145] %v366
                %v368 = vld [vmem:[%s152 + $0x32c] sm:%s145]
                %369 = vst [vmem:[%s153 + $0x1ac] sm:%s145] %v368
                %v370 = vld [vmem:[%s152 + $0x330] sm:%s145]
                %371 = vst [vmem:[%s153 + $0x1b0] sm:%s145] %v370
                %v372 = vld [vmem:[%s152 + $0x334] sm:%s145]
                %373 = vst [vmem:[%s153 + $0x1b4] sm:%s145] %v372
                %v374 = vld [vmem:[%s152 + $0x338] sm:%s145]
                %375 = vst [vmem:[%s153 + $0x1b8] sm:%s145] %v374
                %v376 = vld [vmem:[%s152 + $0x33c] sm:%s145]
                %377 = vst [vmem:[%s153 + $0x1bc] sm:%s145] %v376
                %v378 = vld [vmem:[%s152 + $0x340] sm:%s145]
                %379 = vst [vmem:[%s153 + $0x1c0] sm:%s145] %v378
                %v380 = vld [vmem:[%s152 + $0x344] sm:%s145]
                %381 = vst [vmem:[%s153 + $0x1c4] sm:%s145] %v380
                %v382 = vld [vmem:[%s152 + $0x348] sm:%s145]
                %383 = vst [vmem:[%s153 + $0x1c8] sm:%s145] %v382
                %v384 = vld [vmem:[%s152 + $0x34c] sm:%s145]
                %385 = vst [vmem:[%s153 + $0x1cc] sm:%s145] %v384
                %v386 = vld [vmem:[%s152 + $0x350] sm:%s145]
                %387 = vst [vmem:[%s153 + $0x1d0] sm:%s145] %v386
                %v388 = vld [vmem:[%s152 + $0x354] sm:%s145]
                %389 = vst [vmem:[%s153 + $0x1d4] sm:%s145] %v388
                %v390 = vld [vmem:[%s152 + $0x358] sm:%s145]
                %391 = vst [vmem:[%s153 + $0x1d8] sm:%s145] %v390
                %v392 = vld [vmem:[%s152 + $0x35c] sm:%s145]
                %393 = vst [vmem:[%s153 + $0x1dc] sm:%s145] %v392
                %v394 = vld [vmem:[%s152 + $0x360] sm:%s145]
                %395 = vst [vmem:[%s153 + $0x1e0] sm:%s145] %v394
                %v396 = vld [vmem:[%s152 + $0x364] sm:%s145]
                %397 = vst [vmem:[%s153 + $0x1e4] sm:%s145] %v396
                %v398 = vld [vmem:[%s152 + $0x368] sm:%s145]
                %399 = vst [vmem:[%s153 + $0x1e8] sm:%s145] %v398
                %v400 = vld [vmem:[%s152 + $0x36c] sm:%s145]
                %401 = vst [vmem:[%s153 + $0x1ec] sm:%s145] %v400
                %v402 = vld [vmem:[%s152 + $0x370] sm:%s145]
                %403 = vst [vmem:[%s153 + $0x1f0] sm:%s145] %v402
                %v404 = vld [vmem:[%s152 + $0x374] sm:%s145]
                %405 = vst [vmem:[%s153 + $0x1f4] sm:%s145] %v404
                %v406 = vld [vmem:[%s152 + $0x378] sm:%s145]
                %407 = vst [vmem:[%s153 + $0x1f8] sm:%s145] %v406
                %v408 = vld [vmem:[%s152 + $0x37c] sm:%s145]
                %409 = vst [vmem:[%s153 + $0x1fc] sm:%s145] %v408
              $region45: #{cnn_model_l2_forward.5} parent=39 // loop_footer
                %s151 = sadd.s32 1, %s147
              $region46: #{cnn_model_l2_forward.5} parent=39 // loop_footer_branch
                %146 = sbr.rel target = $region42
              $region47: #{cnn_model_l2_forward.5} parent=39 // loop_exit
                _
            $region40: #{cnn_model_l2_forward.5} parent=31 // pred_fallthru
              _
          $region32: #{cnn_model_l2_forward.5} parent=27 // pred_fallthru
            _
          %686 = vnop
        $region28: #{cnn_model_l2_forward.5} parent=23 // pred_fallthru
          _
      $region24: #{cnn_model_l2_forward.5} parent=5 // pred_fallthru
        _
      %p687 = scmp.le.s32.totalorder 1, %s9
      %p688 = scmp.lt.s32.totalorder %s9, 3
      %p689 = pnand %p687, %p688
      %p690 = pneg %p689
      // Predicated region
      $region66: #{cnn_model_l2_forward.5} parent=5 // pred_check
        _
      $region67: #{cnn_model_l2_forward.5} parent=5 // pred_check_branch
        %692 = sbr.rel (%p689) target = $region69
      $region68: #{cnn_model_l2_forward.5} parent=5 // pred_region
        %s693 = ssub.s32 %s9, 1
        %s694 = sand.u32 %s22, 1
        %s695 = sand.u32 %s22, 1
        %s696 = smul.addr %s695, 512
        %s697 = scalar_lea.vmem [#allocation2], %s696
        // Predicated region
        $region70: #{cnn_model_l2_forward.5} parent=68 // pred_check
          %p698 = pneg %p35
        $region71: #{cnn_model_l2_forward.5} parent=68 // pred_check_branch
          %700 = sbr.rel (%p698) target = $region73
        $region72: #{cnn_model_l2_forward.5} parent=68 // pred_region
          _
        $region73: #{cnn_model_l2_forward.5} parent=68 // pred_fallthru
          _
        %s701 = sand.u32 %s22, 1
        %s702 = sand.u32 %s22, 1
        %s703 = smul.addr %s702, 512
        %s704 = scalar_lea.vmem [#allocation2], %s703
        %p705 = pneg %p35
        %p706 = pneg %p32
        %p707 = pneg %p56
        %p708 = pneg %p53
        %p709 = pneg %p77
        %p710 = pneg %p74
        %p711 = pneg %p103
        %p712 = pneg %p100
        %s713 = smul.u32 32, %s14
        %p714 = scmp.lt.s32.totalorder %s713, 63
        %s715 = scalar_select %p714, %s713, 63
        %s716 = smul.addr %s715, 4
        %s717 = scalar_lea.vmem %s3, %s716
        %s718 = smul.u32 32, %s14
        %s719 = smul.u32 32, %s14
        %p720 = scmp.lt.s32.totalorder %s719, 63
        %s721 = scalar_select %p720, %s719, 63
        %s722 = smul.addr %s721, 4
        %s723 = scalar_lea.vmem %s3, %s722
        %s724 = smul.u32 32, %s14
        %v725 = vld [vmem:[%s697] sm:$0xf]
        %v726 = vld [vmem:[%s697 + $0x4] sm:$0xf]
        %v727 = vld [vmem:[%s697 + $0x8] sm:$0xf]
        %v728 = vld [vmem:[%s697 + $0xc] sm:$0xf]
        %v729 = vld [vmem:[%s697 + $0x10] sm:$0xf]
        %v730 = vld [vmem:[%s697 + $0x14] sm:$0xf]
        %v731 = vld [vmem:[%s697 + $0x18] sm:$0xf]
        %v732 = vld [vmem:[%s697 + $0x1c] sm:$0xf]
        %v733 = vld [vmem:[%s697 + $0x20] sm:$0xf]
        %v734 = vld [vmem:[%s697 + $0x24] sm:$0xf]
        %v735 = vld [vmem:[%s697 + $0x28] sm:$0xf]
        %v736 = vld [vmem:[%s697 + $0x2c] sm:$0xf]
        %v737 = vld [vmem:[%s697 + $0x30] sm:$0xf]
        %v738 = vld [vmem:[%s697 + $0x34] sm:$0xf]
        %v739 = vld [vmem:[%s697 + $0x38] sm:$0xf]
        %v740 = vld [vmem:[%s697 + $0x3c] sm:$0xf]
        %v741 = vld [vmem:[%s697 + $0x40] sm:$0xf]
        %v742 = vld [vmem:[%s697 + $0x44] sm:$0xf]
        %v743 = vld [vmem:[%s697 + $0x48] sm:$0xf]
        %v744 = vld [vmem:[%s697 + $0x4c] sm:$0xf]
        %v745 = vld [vmem:[%s697 + $0x50] sm:$0xf]
        %v746 = vld [vmem:[%s697 + $0x54] sm:$0xf]
        %v747 = vld [vmem:[%s697 + $0x58] sm:$0xf]
        %v748 = vld [vmem:[%s697 + $0x5c] sm:$0xf]
        %v749 = vld [vmem:[%s697 + $0x60] sm:$0xf]
        %v750 = vld [vmem:[%s697 + $0x64] sm:$0xf]
        %v751 = vld [vmem:[%s697 + $0x68] sm:$0xf]
        %v752 = vld [vmem:[%s697 + $0x6c] sm:$0xf]
        %v753 = vld [vmem:[%s697 + $0x70] sm:$0xf]
        %v754 = vld [vmem:[%s697 + $0x74] sm:$0xf]
        %v755 = vld [vmem:[%s697 + $0x78] sm:$0xf]
        %v756 = vld [vmem:[%s697 + $0x7c] sm:$0xf]
        %v757 = vld [vmem:[%s1] sm:$0xf]
        %v758 = vld [vmem:[%s1 + $0x4] sm:$0xf]
        %v759 = vld [vmem:[%s1 + $0x8] sm:$0xf]
        %v760 = vld [vmem:[%s1 + $0xc] sm:$0xf]
        %v761 = vld [vmem:[%s1 + $0x10] sm:$0xf]
        %v762 = vld [vmem:[%s1 + $0x14] sm:$0xf]
        %v763 = vld [vmem:[%s1 + $0x18] sm:$0xf]
        %v764 = vld [vmem:[%s1 + $0x1c] sm:$0xf]
        %v765 = vld [vmem:[%s1 + $0x20] sm:$0xf]
        %v766 = vld [vmem:[%s1 + $0x24] sm:$0xf]
        %v767 = vld [vmem:[%s1 + $0x28] sm:$0xf]
        %v768 = vld [vmem:[%s1 + $0x2c] sm:$0xf]
        %v769 = vld [vmem:[%s1 + $0x30] sm:$0xf]
        %v770 = vld [vmem:[%s1 + $0x34] sm:$0xf]
        %v771 = vld [vmem:[%s1 + $0x38] sm:$0xf]
        %v772 = vld [vmem:[%s1 + $0x3c] sm:$0xf]
        %v805 = vunpack.c.l.b16 %v725
        %v806 = vunpack.c.l.b16 %v726
        %v807 = vunpack.c.l.b16 %v727
        %v808 = vunpack.c.l.b16 %v728
        %v809 = vunpack.c.l.b16 %v729
        %v810 = vunpack.c.l.b16 %v730
        %v811 = vunpack.c.l.b16 %v731
        %v812 = vunpack.c.l.b16 %v732
        %v813 = vunpack.c.l.b16 %v733
        %v814 = vunpack.c.l.b16 %v734
        %v815 = vunpack.c.l.b16 %v735
        %v816 = vunpack.c.l.b16 %v736
        %v817 = vunpack.c.l.b16 %v737
        %v818 = vunpack.c.l.b16 %v738
        %v819 = vunpack.c.l.b16 %v739
        %v820 = vunpack.c.l.b16 %v740
        %v821 = vunpack.c.l.b16 %v741
        %v822 = vunpack.c.l.b16 %v742
        %v823 = vunpack.c.l.b16 %v743
        %v824 = vunpack.c.l.b16 %v744
        %v825 = vunpack.c.l.b16 %v745
        %v826 = vunpack.c.l.b16 %v746
        %v827 = vunpack.c.l.b16 %v747
        %v828 = vunpack.c.l.b16 %v748
        %v829 = vunpack.c.l.b16 %v749
        %v830 = vunpack.c.l.b16 %v750
        %v831 = vunpack.c.l.b16 %v751
        %v832 = vunpack.c.l.b16 %v752
        %v833 = vunpack.c.l.b16 %v753
        %v834 = vunpack.c.l.b16 %v754
        %v835 = vunpack.c.l.b16 %v755
        %v836 = vunpack.c.l.b16 %v756
        %v837 = vpack.c.b16 %v806, %v805
        %v838 = vpack.c.b16 %v808, %v807
        %v839 = vpack.c.b16 %v810, %v809
        %v840 = vpack.c.b16 %v812, %v811
        %v841 = vpack.c.b16 %v814, %v813
        %v842 = vpack.c.b16 %v816, %v815
        %v843 = vpack.c.b16 %v818, %v817
        %v844 = vpack.c.b16 %v820, %v819
        %v845 = vpack.c.b16 %v822, %v821
        %v846 = vpack.c.b16 %v824, %v823
        %v847 = vpack.c.b16 %v826, %v825
        %v848 = vpack.c.b16 %v828, %v827
        %v849 = vpack.c.b16 %v830, %v829
        %v850 = vpack.c.b16 %v832, %v831
        %v851 = vpack.c.b16 %v834, %v833
        %v852 = vpack.c.b16 %v836, %v835
        %v885 = vunpack.c.l.b16 %v757
        %v886 = vunpack.c.l.b16 %v758
        %v887 = vunpack.c.l.b16 %v759
        %v888 = vunpack.c.l.b16 %v760
        %v889 = vunpack.c.l.b16 %v761
        %v890 = vunpack.c.l.b16 %v762
        %v891 = vunpack.c.l.b16 %v763
        %v892 = vunpack.c.l.b16 %v764
        %v893 = vunpack.c.l.b16 %v765
        %v894 = vunpack.c.l.b16 %v766
        %v895 = vunpack.c.l.b16 %v767
        %v896 = vunpack.c.l.b16 %v768
        %v897 = vunpack.c.l.b16 %v769
        %v898 = vunpack.c.l.b16 %v770
        %v899 = vunpack.c.l.b16 %v771
        %v900 = vunpack.c.l.b16 %v772
        %v901 = vpack.c.b16 %v886, %v885
        %v902 = vpack.c.b16 %v888, %v887
        %v903 = vpack.c.b16 %v890, %v889
        %v904 = vpack.c.b16 %v892, %v891
        %v905 = vpack.c.b16 %v894, %v893
        %v906 = vpack.c.b16 %v896, %v895
        %v907 = vpack.c.b16 %v898, %v897
        %v908 = vpack.c.b16 %v900, %v899
        %917 = vmatpush.bf16.msra.mxu0 %v908
        %918 = vmatpush.bf16.msra.mxu0 %v907
        %919 = vmatpush.bf16.msra.mxu0 %v906
        %920 = vmatpush.bf16.msra.mxu0 %v905
        %921 = vmatpush.bf16.msra.mxu0 %v904
        %922 = vmatpush.bf16.msra.mxu0 %v903
        %923 = vmatpush.bf16.msra.mxu0 %v902
        %924 = vmatpush.bf16.msra.mxu0 %v901
        %925 = vmatmul.bf16.gmra.mxu0 %v837
        %v926 = vpop.f32.mrf.mxu0
        %v927 = vadd.f32 0.0, %v926
        %v928 = vpop.f32.mrf.mxu0
        %v929 = vadd.f32 0.0, %v928
        %930 = vmatmul.bf16.gmra.mxu0 %v838
        %v931 = vpop.f32.mrf.mxu0
        %v932 = vadd.f32 0.0, %v931
        %v933 = vpop.f32.mrf.mxu0
        %v934 = vadd.f32 0.0, %v933
        %935 = vmatmul.bf16.gmra.mxu0 %v839
        %v936 = vpop.f32.mrf.mxu0
        %v937 = vadd.f32 0.0, %v936
        %v938 = vpop.f32.mrf.mxu0
        %v939 = vadd.f32 0.0, %v938
        %940 = vmatmul.bf16.gmra.mxu0 %v840
        %v941 = vpop.f32.mrf.mxu0
        %v942 = vadd.f32 0.0, %v941
        %v943 = vpop.f32.mrf.mxu0
        %v944 = vadd.f32 0.0, %v943
        %945 = vmatmul.bf16.gmra.mxu0 %v841
        %v946 = vpop.f32.mrf.mxu0
        %v947 = vadd.f32 0.0, %v946
        %v948 = vpop.f32.mrf.mxu0
        %v949 = vadd.f32 0.0, %v948
        %950 = vmatmul.bf16.gmra.mxu0 %v842
        %v951 = vpop.f32.mrf.mxu0
        %v952 = vadd.f32 0.0, %v951
        %v953 = vpop.f32.mrf.mxu0
        %v954 = vadd.f32 0.0, %v953
        %955 = vmatmul.bf16.gmra.mxu0 %v843
        %v956 = vpop.f32.mrf.mxu0
        %v957 = vadd.f32 0.0, %v956
        %v958 = vpop.f32.mrf.mxu0
        %v959 = vadd.f32 0.0, %v958
        %960 = vmatmul.bf16.gmra.mxu0 %v844
        %v961 = vpop.f32.mrf.mxu0
        %v962 = vadd.f32 0.0, %v961
        %v963 = vpop.f32.mrf.mxu0
        %v964 = vadd.f32 0.0, %v963
        %965 = vmatmul.bf16.gmra.mxu0 %v845
        %v966 = vpop.f32.mrf.mxu0
        %v967 = vadd.f32 0.0, %v966
        %v968 = vpop.f32.mrf.mxu0
        %v969 = vadd.f32 0.0, %v968
        %970 = vmatmul.bf16.gmra.mxu0 %v846
        %v971 = vpop.f32.mrf.mxu0
        %v972 = vadd.f32 0.0, %v971
        %v973 = vpop.f32.mrf.mxu0
        %v974 = vadd.f32 0.0, %v973
        %975 = vmatmul.bf16.gmra.mxu0 %v847
        %v976 = vpop.f32.mrf.mxu0
        %v977 = vadd.f32 0.0, %v976
        %v978 = vpop.f32.mrf.mxu0
        %v979 = vadd.f32 0.0, %v978
        %980 = vmatmul.bf16.gmra.mxu0 %v848
        %v981 = vpop.f32.mrf.mxu0
        %v982 = vadd.f32 0.0, %v981
        %v983 = vpop.f32.mrf.mxu0
        %v984 = vadd.f32 0.0, %v983
        %985 = vmatmul.bf16.gmra.mxu0 %v849
        %v986 = vpop.f32.mrf.mxu0
        %v987 = vadd.f32 0.0, %v986
        %v988 = vpop.f32.mrf.mxu0
        %v989 = vadd.f32 0.0, %v988
        %990 = vmatmul.bf16.gmra.mxu0 %v850
        %v991 = vpop.f32.mrf.mxu0
        %v992 = vadd.f32 0.0, %v991
        %v993 = vpop.f32.mrf.mxu0
        %v994 = vadd.f32 0.0, %v993
        %995 = vmatmul.bf16.gmra.mxu0 %v851
        %v996 = vpop.f32.mrf.mxu0
        %v997 = vadd.f32 0.0, %v996
        %v998 = vpop.f32.mrf.mxu0
        %v999 = vadd.f32 0.0, %v998
        %1000 = vmatmul.bf16.gmra.mxu0 %v852
        %v1001 = vpop.f32.mrf.mxu0
        %v1002 = vadd.f32 0.0, %v1001
        %v1003 = vpop.f32.mrf.mxu0
        %v1004 = vadd.f32 0.0, %v1003
        %1005 = vdwg.mxu0
        %s1006 = scalar_lea.vmem %s697, 128 [#allocation2]
        %v1007 = vld [vmem:[%s1006] sm:$0xf]
        %v1008 = vld [vmem:[%s1006 + $0x4] sm:$0xf]
        %v1009 = vld [vmem:[%s1006 + $0x8] sm:$0xf]
        %v1010 = vld [vmem:[%s1006 + $0xc] sm:$0xf]
        %v1011 = vld [vmem:[%s1006 + $0x10] sm:$0xf]
        %v1012 = vld [vmem:[%s1006 + $0x14] sm:$0xf]
        %v1013 = vld [vmem:[%s1006 + $0x18] sm:$0xf]
        %v1014 = vld [vmem:[%s1006 + $0x1c] sm:$0xf]
        %v1015 = vld [vmem:[%s1006 + $0x20] sm:$0xf]
        %v1016 = vld [vmem:[%s1006 + $0x24] sm:$0xf]
        %v1017 = vld [vmem:[%s1006 + $0x28] sm:$0xf]
        %v1018 = vld [vmem:[%s1006 + $0x2c] sm:$0xf]
        %v1019 = vld [vmem:[%s1006 + $0x30] sm:$0xf]
        %v1020 = vld [vmem:[%s1006 + $0x34] sm:$0xf]
        %v1021 = vld [vmem:[%s1006 + $0x38] sm:$0xf]
        %v1022 = vld [vmem:[%s1006 + $0x3c] sm:$0xf]
        %v1023 = vld [vmem:[%s1006 + $0x40] sm:$0xf]
        %v1024 = vld [vmem:[%s1006 + $0x44] sm:$0xf]
        %v1025 = vld [vmem:[%s1006 + $0x48] sm:$0xf]
        %v1026 = vld [vmem:[%s1006 + $0x4c] sm:$0xf]
        %v1027 = vld [vmem:[%s1006 + $0x50] sm:$0xf]
        %v1028 = vld [vmem:[%s1006 + $0x54] sm:$0xf]
        %v1029 = vld [vmem:[%s1006 + $0x58] sm:$0xf]
        %v1030 = vld [vmem:[%s1006 + $0x5c] sm:$0xf]
        %v1031 = vld [vmem:[%s1006 + $0x60] sm:$0xf]
        %v1032 = vld [vmem:[%s1006 + $0x64] sm:$0xf]
        %v1033 = vld [vmem:[%s1006 + $0x68] sm:$0xf]
        %v1034 = vld [vmem:[%s1006 + $0x6c] sm:$0xf]
        %v1035 = vld [vmem:[%s1006 + $0x70] sm:$0xf]
        %v1036 = vld [vmem:[%s1006 + $0x74] sm:$0xf]
        %v1037 = vld [vmem:[%s1006 + $0x78] sm:$0xf]
        %v1038 = vld [vmem:[%s1006 + $0x7c] sm:$0xf]
        %v1071 = vunpack.c.l.b16 %v1007
        %v1072 = vunpack.c.l.b16 %v1008
        %v1073 = vunpack.c.l.b16 %v1009
        %v1074 = vunpack.c.l.b16 %v1010
        %v1075 = vunpack.c.l.b16 %v1011
        %v1076 = vunpack.c.l.b16 %v1012
        %v1077 = vunpack.c.l.b16 %v1013
        %v1078 = vunpack.c.l.b16 %v1014
        %v1079 = vunpack.c.l.b16 %v1015
        %v1080 = vunpack.c.l.b16 %v1016
        %v1081 = vunpack.c.l.b16 %v1017
        %v1082 = vunpack.c.l.b16 %v1018
        %v1083 = vunpack.c.l.b16 %v1019
        %v1084 = vunpack.c.l.b16 %v1020
        %v1085 = vunpack.c.l.b16 %v1021
        %v1086 = vunpack.c.l.b16 %v1022
        %v1087 = vunpack.c.l.b16 %v1023
        %v1088 = vunpack.c.l.b16 %v1024
        %v1089 = vunpack.c.l.b16 %v1025
        %v1090 = vunpack.c.l.b16 %v1026
        %v1091 = vunpack.c.l.b16 %v1027
        %v1092 = vunpack.c.l.b16 %v1028
        %v1093 = vunpack.c.l.b16 %v1029
        %v1094 = vunpack.c.l.b16 %v1030
        %v1095 = vunpack.c.l.b16 %v1031
        %v1096 = vunpack.c.l.b16 %v1032
        %v1097 = vunpack.c.l.b16 %v1033
        %v1098 = vunpack.c.l.b16 %v1034
        %v1099 = vunpack.c.l.b16 %v1035
        %v1100 = vunpack.c.l.b16 %v1036
        %v1101 = vunpack.c.l.b16 %v1037
        %v1102 = vunpack.c.l.b16 %v1038
        %v1103 = vpack.c.b16 %v1072, %v1071
        %v1104 = vpack.c.b16 %v1074, %v1073
        %v1105 = vpack.c.b16 %v1076, %v1075
        %v1106 = vpack.c.b16 %v1078, %v1077
        %v1107 = vpack.c.b16 %v1080, %v1079
        %v1108 = vpack.c.b16 %v1082, %v1081
        %v1109 = vpack.c.b16 %v1084, %v1083
        %v1110 = vpack.c.b16 %v1086, %v1085
        %v1111 = vpack.c.b16 %v1088, %v1087
        %v1112 = vpack.c.b16 %v1090, %v1089
        %v1113 = vpack.c.b16 %v1092, %v1091
        %v1114 = vpack.c.b16 %v1094, %v1093
        %v1115 = vpack.c.b16 %v1096, %v1095
        %v1116 = vpack.c.b16 %v1098, %v1097
        %v1117 = vpack.c.b16 %v1100, %v1099
        %v1118 = vpack.c.b16 %v1102, %v1101
        %1135 = vmatpush.bf16.msra.mxu0 %v908
        %1136 = vmatpush.bf16.msra.mxu0 %v907
        %1137 = vmatpush.bf16.msra.mxu0 %v906
        %1138 = vmatpush.bf16.msra.mxu0 %v905
        %1139 = vmatpush.bf16.msra.mxu0 %v904
        %1140 = vmatpush.bf16.msra.mxu0 %v903
        %1141 = vmatpush.bf16.msra.mxu0 %v902
        %1142 = vmatpush.bf16.msra.mxu0 %v901
        %1143 = vmatmul.bf16.gmra.mxu0 %v1103
        %v1144 = vpop.f32.mrf.mxu0
        %v1145 = vadd.f32 0.0, %v1144
        %v1146 = vpop.f32.mrf.mxu0
        %v1147 = vadd.f32 0.0, %v1146
        %1148 = vmatmul.bf16.gmra.mxu0 %v1104
        %v1149 = vpop.f32.mrf.mxu0
        %v1150 = vadd.f32 0.0, %v1149
        %v1151 = vpop.f32.mrf.mxu0
        %v1152 = vadd.f32 0.0, %v1151
        %1153 = vmatmul.bf16.gmra.mxu0 %v1105
        %v1154 = vpop.f32.mrf.mxu0
        %v1155 = vadd.f32 0.0, %v1154
        %v1156 = vpop.f32.mrf.mxu0
        %v1157 = vadd.f32 0.0, %v1156
        %1158 = vmatmul.bf16.gmra.mxu0 %v1106
        %v1159 = vpop.f32.mrf.mxu0
        %v1160 = vadd.f32 0.0, %v1159
        %v1161 = vpop.f32.mrf.mxu0
        %v1162 = vadd.f32 0.0, %v1161
        %1163 = vmatmul.bf16.gmra.mxu0 %v1107
        %v1164 = vpop.f32.mrf.mxu0
        %v1165 = vadd.f32 0.0, %v1164
        %v1166 = vpop.f32.mrf.mxu0
        %v1167 = vadd.f32 0.0, %v1166
        %1168 = vmatmul.bf16.gmra.mxu0 %v1108
        %v1169 = vpop.f32.mrf.mxu0
        %v1170 = vadd.f32 0.0, %v1169
        %v1171 = vpop.f32.mrf.mxu0
        %v1172 = vadd.f32 0.0, %v1171
        %1173 = vmatmul.bf16.gmra.mxu0 %v1109
        %v1174 = vpop.f32.mrf.mxu0
        %v1175 = vadd.f32 0.0, %v1174
        %v1176 = vpop.f32.mrf.mxu0
        %v1177 = vadd.f32 0.0, %v1176
        %1178 = vmatmul.bf16.gmra.mxu0 %v1110
        %v1179 = vpop.f32.mrf.mxu0
        %v1180 = vadd.f32 0.0, %v1179
        %v1181 = vpop.f32.mrf.mxu0
        %v1182 = vadd.f32 0.0, %v1181
        %1183 = vmatmul.bf16.gmra.mxu0 %v1111
        %v1184 = vpop.f32.mrf.mxu0
        %v1185 = vadd.f32 0.0, %v1184
        %v1186 = vpop.f32.mrf.mxu0
        %v1187 = vadd.f32 0.0, %v1186
        %1188 = vmatmul.bf16.gmra.mxu0 %v1112
        %v1189 = vpop.f32.mrf.mxu0
        %v1190 = vadd.f32 0.0, %v1189
        %v1191 = vpop.f32.mrf.mxu0
        %v1192 = vadd.f32 0.0, %v1191
        %1193 = vmatmul.bf16.gmra.mxu0 %v1113
        %v1194 = vpop.f32.mrf.mxu0
        %v1195 = vadd.f32 0.0, %v1194
        %v1196 = vpop.f32.mrf.mxu0
        %v1197 = vadd.f32 0.0, %v1196
        %1198 = vmatmul.bf16.gmra.mxu0 %v1114
        %v1199 = vpop.f32.mrf.mxu0
        %v1200 = vadd.f32 0.0, %v1199
        %v1201 = vpop.f32.mrf.mxu0
        %v1202 = vadd.f32 0.0, %v1201
        %1203 = vmatmul.bf16.gmra.mxu0 %v1115
        %v1204 = vpop.f32.mrf.mxu0
        %v1205 = vadd.f32 0.0, %v1204
        %v1206 = vpop.f32.mrf.mxu0
        %v1207 = vadd.f32 0.0, %v1206
        %1208 = vmatmul.bf16.gmra.mxu0 %v1116
        %v1209 = vpop.f32.mrf.mxu0
        %v1210 = vadd.f32 0.0, %v1209
        %v1211 = vpop.f32.mrf.mxu0
        %v1212 = vadd.f32 0.0, %v1211
        %1213 = vmatmul.bf16.gmra.mxu0 %v1117
        %v1214 = vpop.f32.mrf.mxu0
        %v1215 = vadd.f32 0.0, %v1214
        %v1216 = vpop.f32.mrf.mxu0
        %v1217 = vadd.f32 0.0, %v1216
        %1218 = vmatmul.bf16.gmra.mxu0 %v1118
        %v1219 = vpop.f32.mrf.mxu0
        %v1220 = vadd.f32 0.0, %v1219
        %v1221 = vpop.f32.mrf.mxu0
        %v1222 = vadd.f32 0.0, %v1221
        %1223 = vdwg.mxu0
        %v1224 = vmax.f32 %v927, %v1145
        %v1225 = vmax.f32 %v929, %v1147
        %v1226 = vmax.f32 %v932, %v1150
        %v1227 = vmax.f32 %v934, %v1152
        %v1228 = vmax.f32 %v937, %v1155
        %v1229 = vmax.f32 %v939, %v1157
        %v1230 = vmax.f32 %v942, %v1160
        %v1231 = vmax.f32 %v944, %v1162
        %v1232 = vmax.f32 %v947, %v1165
        %v1233 = vmax.f32 %v949, %v1167
        %v1234 = vmax.f32 %v952, %v1170
        %v1235 = vmax.f32 %v954, %v1172
        %v1236 = vmax.f32 %v957, %v1175
        %v1237 = vmax.f32 %v959, %v1177
        %v1238 = vmax.f32 %v962, %v1180
        %v1239 = vmax.f32 %v964, %v1182
        %v1240 = vmax.f32 %v967, %v1185
        %v1241 = vmax.f32 %v969, %v1187
        %v1242 = vmax.f32 %v972, %v1190
        %v1243 = vmax.f32 %v974, %v1192
        %v1244 = vmax.f32 %v977, %v1195
        %v1245 = vmax.f32 %v979, %v1197
        %v1246 = vmax.f32 %v982, %v1200
        %v1247 = vmax.f32 %v984, %v1202
        %v1248 = vmax.f32 %v987, %v1205
        %v1249 = vmax.f32 %v989, %v1207
        %v1250 = vmax.f32 %v992, %v1210
        %v1251 = vmax.f32 %v994, %v1212
        %v1252 = vmax.f32 %v997, %v1215
        %v1253 = vmax.f32 %v999, %v1217
        %v1254 = vmax.f32 %v1002, %v1220
        %v1255 = vmax.f32 %v1004, %v1222
        %s1256 = scalar_lea.vmem %s697, 256 [#allocation2]
        %v1257 = vld [vmem:[%s1256] sm:$0xf]
        %v1258 = vld [vmem:[%s1256 + $0x4] sm:$0xf]
        %v1259 = vld [vmem:[%s1256 + $0x8] sm:$0xf]
        %v1260 = vld [vmem:[%s1256 + $0xc] sm:$0xf]
        %v1261 = vld [vmem:[%s1256 + $0x10] sm:$0xf]
        %v1262 = vld [vmem:[%s1256 + $0x14] sm:$0xf]
        %v1263 = vld [vmem:[%s1256 + $0x18] sm:$0xf]
        %v1264 = vld [vmem:[%s1256 + $0x1c] sm:$0xf]
        %v1265 = vld [vmem:[%s1256 + $0x20] sm:$0xf]
        %v1266 = vld [vmem:[%s1256 + $0x24] sm:$0xf]
        %v1267 = vld [vmem:[%s1256 + $0x28] sm:$0xf]
        %v1268 = vld [vmem:[%s1256 + $0x2c] sm:$0xf]
        %v1269 = vld [vmem:[%s1256 + $0x30] sm:$0xf]
        %v1270 = vld [vmem:[%s1256 + $0x34] sm:$0xf]
        %v1271 = vld [vmem:[%s1256 + $0x38] sm:$0xf]
        %v1272 = vld [vmem:[%s1256 + $0x3c] sm:$0xf]
        %v1273 = vld [vmem:[%s1256 + $0x40] sm:$0xf]
        %v1274 = vld [vmem:[%s1256 + $0x44] sm:$0xf]
        %v1275 = vld [vmem:[%s1256 + $0x48] sm:$0xf]
        %v1276 = vld [vmem:[%s1256 + $0x4c] sm:$0xf]
        %v1277 = vld [vmem:[%s1256 + $0x50] sm:$0xf]
        %v1278 = vld [vmem:[%s1256 + $0x54] sm:$0xf]
        %v1279 = vld [vmem:[%s1256 + $0x58] sm:$0xf]
        %v1280 = vld [vmem:[%s1256 + $0x5c] sm:$0xf]
        %v1281 = vld [vmem:[%s1256 + $0x60] sm:$0xf]
        %v1282 = vld [vmem:[%s1256 + $0x64] sm:$0xf]
        %v1283 = vld [vmem:[%s1256 + $0x68] sm:$0xf]
        %v1284 = vld [vmem:[%s1256 + $0x6c] sm:$0xf]
        %v1285 = vld [vmem:[%s1256 + $0x70] sm:$0xf]
        %v1286 = vld [vmem:[%s1256 + $0x74] sm:$0xf]
        %v1287 = vld [vmem:[%s1256 + $0x78] sm:$0xf]
        %v1288 = vld [vmem:[%s1256 + $0x7c] sm:$0xf]
        %v1321 = vunpack.c.l.b16 %v1257
        %v1322 = vunpack.c.l.b16 %v1258
        %v1323 = vunpack.c.l.b16 %v1259
        %v1324 = vunpack.c.l.b16 %v1260
        %v1325 = vunpack.c.l.b16 %v1261
        %v1326 = vunpack.c.l.b16 %v1262
        %v1327 = vunpack.c.l.b16 %v1263
        %v1328 = vunpack.c.l.b16 %v1264
        %v1329 = vunpack.c.l.b16 %v1265
        %v1330 = vunpack.c.l.b16 %v1266
        %v1331 = vunpack.c.l.b16 %v1267
        %v1332 = vunpack.c.l.b16 %v1268
        %v1333 = vunpack.c.l.b16 %v1269
        %v1334 = vunpack.c.l.b16 %v1270
        %v1335 = vunpack.c.l.b16 %v1271
        %v1336 = vunpack.c.l.b16 %v1272
        %v1337 = vunpack.c.l.b16 %v1273
        %v1338 = vunpack.c.l.b16 %v1274
        %v1339 = vunpack.c.l.b16 %v1275
        %v1340 = vunpack.c.l.b16 %v1276
        %v1341 = vunpack.c.l.b16 %v1277
        %v1342 = vunpack.c.l.b16 %v1278
        %v1343 = vunpack.c.l.b16 %v1279
        %v1344 = vunpack.c.l.b16 %v1280
        %v1345 = vunpack.c.l.b16 %v1281
        %v1346 = vunpack.c.l.b16 %v1282
        %v1347 = vunpack.c.l.b16 %v1283
        %v1348 = vunpack.c.l.b16 %v1284
        %v1349 = vunpack.c.l.b16 %v1285
        %v1350 = vunpack.c.l.b16 %v1286
        %v1351 = vunpack.c.l.b16 %v1287
        %v1352 = vunpack.c.l.b16 %v1288
        %v1353 = vpack.c.b16 %v1322, %v1321
        %v1354 = vpack.c.b16 %v1324, %v1323
        %v1355 = vpack.c.b16 %v1326, %v1325
        %v1356 = vpack.c.b16 %v1328, %v1327
        %v1357 = vpack.c.b16 %v1330, %v1329
        %v1358 = vpack.c.b16 %v1332, %v1331
        %v1359 = vpack.c.b16 %v1334, %v1333
        %v1360 = vpack.c.b16 %v1336, %v1335
        %v1361 = vpack.c.b16 %v1338, %v1337
        %v1362 = vpack.c.b16 %v1340, %v1339
        %v1363 = vpack.c.b16 %v1342, %v1341
        %v1364 = vpack.c.b16 %v1344, %v1343
        %v1365 = vpack.c.b16 %v1346, %v1345
        %v1366 = vpack.c.b16 %v1348, %v1347
        %v1367 = vpack.c.b16 %v1350, %v1349
        %v1368 = vpack.c.b16 %v1352, %v1351
        %1385 = vmatpush.bf16.msra.mxu0 %v908
        %1386 = vmatpush.bf16.msra.mxu0 %v907
        %1387 = vmatpush.bf16.msra.mxu0 %v906
        %1388 = vmatpush.bf16.msra.mxu0 %v905
        %1389 = vmatpush.bf16.msra.mxu0 %v904
        %1390 = vmatpush.bf16.msra.mxu0 %v903
        %1391 = vmatpush.bf16.msra.mxu0 %v902
        %1392 = vmatpush.bf16.msra.mxu0 %v901
        %1393 = vmatmul.bf16.gmra.mxu0 %v1353
        %v1394 = vpop.f32.mrf.mxu0
        %v1395 = vadd.f32 0.0, %v1394
        %v1396 = vpop.f32.mrf.mxu0
        %v1397 = vadd.f32 0.0, %v1396
        %1398 = vmatmul.bf16.gmra.mxu0 %v1354
        %v1399 = vpop.f32.mrf.mxu0
        %v1400 = vadd.f32 0.0, %v1399
        %v1401 = vpop.f32.mrf.mxu0
        %v1402 = vadd.f32 0.0, %v1401
        %1403 = vmatmul.bf16.gmra.mxu0 %v1355
        %v1404 = vpop.f32.mrf.mxu0
        %v1405 = vadd.f32 0.0, %v1404
        %v1406 = vpop.f32.mrf.mxu0
        %v1407 = vadd.f32 0.0, %v1406
        %1408 = vmatmul.bf16.gmra.mxu0 %v1356
        %v1409 = vpop.f32.mrf.mxu0
        %v1410 = vadd.f32 0.0, %v1409
        %v1411 = vpop.f32.mrf.mxu0
        %v1412 = vadd.f32 0.0, %v1411
        %1413 = vmatmul.bf16.gmra.mxu0 %v1357
        %v1414 = vpop.f32.mrf.mxu0
        %v1415 = vadd.f32 0.0, %v1414
        %v1416 = vpop.f32.mrf.mxu0
        %v1417 = vadd.f32 0.0, %v1416
        %1418 = vmatmul.bf16.gmra.mxu0 %v1358
        %v1419 = vpop.f32.mrf.mxu0
        %v1420 = vadd.f32 0.0, %v1419
        %v1421 = vpop.f32.mrf.mxu0
        %v1422 = vadd.f32 0.0, %v1421
        %1423 = vmatmul.bf16.gmra.mxu0 %v1359
        %v1424 = vpop.f32.mrf.mxu0
        %v1425 = vadd.f32 0.0, %v1424
        %v1426 = vpop.f32.mrf.mxu0
        %v1427 = vadd.f32 0.0, %v1426
        %1428 = vmatmul.bf16.gmra.mxu0 %v1360
        %v1429 = vpop.f32.mrf.mxu0
        %v1430 = vadd.f32 0.0, %v1429
        %v1431 = vpop.f32.mrf.mxu0
        %v1432 = vadd.f32 0.0, %v1431
        %1433 = vmatmul.bf16.gmra.mxu0 %v1361
        %v1434 = vpop.f32.mrf.mxu0
        %v1435 = vadd.f32 0.0, %v1434
        %v1436 = vpop.f32.mrf.mxu0
        %v1437 = vadd.f32 0.0, %v1436
        %1438 = vmatmul.bf16.gmra.mxu0 %v1362
        %v1439 = vpop.f32.mrf.mxu0
        %v1440 = vadd.f32 0.0, %v1439
        %v1441 = vpop.f32.mrf.mxu0
        %v1442 = vadd.f32 0.0, %v1441
        %1443 = vmatmul.bf16.gmra.mxu0 %v1363
        %v1444 = vpop.f32.mrf.mxu0
        %v1445 = vadd.f32 0.0, %v1444
        %v1446 = vpop.f32.mrf.mxu0
        %v1447 = vadd.f32 0.0, %v1446
        %1448 = vmatmul.bf16.gmra.mxu0 %v1364
        %v1449 = vpop.f32.mrf.mxu0
        %v1450 = vadd.f32 0.0, %v1449
        %v1451 = vpop.f32.mrf.mxu0
        %v1452 = vadd.f32 0.0, %v1451
        %1453 = vmatmul.bf16.gmra.mxu0 %v1365
        %v1454 = vpop.f32.mrf.mxu0
        %v1455 = vadd.f32 0.0, %v1454
        %v1456 = vpop.f32.mrf.mxu0
        %v1457 = vadd.f32 0.0, %v1456
        %1458 = vmatmul.bf16.gmra.mxu0 %v1366
        %v1459 = vpop.f32.mrf.mxu0
        %v1460 = vadd.f32 0.0, %v1459
        %v1461 = vpop.f32.mrf.mxu0
        %v1462 = vadd.f32 0.0, %v1461
        %1463 = vmatmul.bf16.gmra.mxu0 %v1367
        %v1464 = vpop.f32.mrf.mxu0
        %v1465 = vadd.f32 0.0, %v1464
        %v1466 = vpop.f32.mrf.mxu0
        %v1467 = vadd.f32 0.0, %v1466
        %1468 = vmatmul.bf16.gmra.mxu0 %v1368
        %v1469 = vpop.f32.mrf.mxu0
        %v1470 = vadd.f32 0.0, %v1469
        %v1471 = vpop.f32.mrf.mxu0
        %v1472 = vadd.f32 0.0, %v1471
        %1473 = vdwg.mxu0
        %v1474 = vmax.f32 %v1224, %v1395
        %v1475 = vmax.f32 %v1225, %v1397
        %v1476 = vmax.f32 %v1226, %v1400
        %v1477 = vmax.f32 %v1227, %v1402
        %v1478 = vmax.f32 %v1228, %v1405
        %v1479 = vmax.f32 %v1229, %v1407
        %v1480 = vmax.f32 %v1230, %v1410
        %v1481 = vmax.f32 %v1231, %v1412
        %v1482 = vmax.f32 %v1232, %v1415
        %v1483 = vmax.f32 %v1233, %v1417
        %v1484 = vmax.f32 %v1234, %v1420
        %v1485 = vmax.f32 %v1235, %v1422
        %v1486 = vmax.f32 %v1236, %v1425
        %v1487 = vmax.f32 %v1237, %v1427
        %v1488 = vmax.f32 %v1238, %v1430
        %v1489 = vmax.f32 %v1239, %v1432
        %v1490 = vmax.f32 %v1240, %v1435
        %v1491 = vmax.f32 %v1241, %v1437
        %v1492 = vmax.f32 %v1242, %v1440
        %v1493 = vmax.f32 %v1243, %v1442
        %v1494 = vmax.f32 %v1244, %v1445
        %v1495 = vmax.f32 %v1245, %v1447
        %v1496 = vmax.f32 %v1246, %v1450
        %v1497 = vmax.f32 %v1247, %v1452
        %v1498 = vmax.f32 %v1248, %v1455
        %v1499 = vmax.f32 %v1249, %v1457
        %v1500 = vmax.f32 %v1250, %v1460
        %v1501 = vmax.f32 %v1251, %v1462
        %v1502 = vmax.f32 %v1252, %v1465
        %v1503 = vmax.f32 %v1253, %v1467
        %v1504 = vmax.f32 %v1254, %v1470
        %v1505 = vmax.f32 %v1255, %v1472
        %s1506 = scalar_lea.vmem %s697, 384 [#allocation2]
        %v1507 = vld [vmem:[%s1506] sm:$0xf]
        %v1508 = vld [vmem:[%s1506 + $0x4] sm:$0xf]
        %v1509 = vld [vmem:[%s1506 + $0x8] sm:$0xf]
        %v1510 = vld [vmem:[%s1506 + $0xc] sm:$0xf]
        %v1511 = vld [vmem:[%s1506 + $0x10] sm:$0xf]
        %v1512 = vld [vmem:[%s1506 + $0x14] sm:$0xf]
        %v1513 = vld [vmem:[%s1506 + $0x18] sm:$0xf]
        %v1514 = vld [vmem:[%s1506 + $0x1c] sm:$0xf]
        %v1515 = vld [vmem:[%s1506 + $0x20] sm:$0xf]
        %v1516 = vld [vmem:[%s1506 + $0x24] sm:$0xf]
        %v1517 = vld [vmem:[%s1506 + $0x28] sm:$0xf]
        %v1518 = vld [vmem:[%s1506 + $0x2c] sm:$0xf]
        %v1519 = vld [vmem:[%s1506 + $0x30] sm:$0xf]
        %v1520 = vld [vmem:[%s1506 + $0x34] sm:$0xf]
        %v1521 = vld [vmem:[%s1506 + $0x38] sm:$0xf]
        %v1522 = vld [vmem:[%s1506 + $0x3c] sm:$0xf]
        %v1523 = vld [vmem:[%s1506 + $0x40] sm:$0xf]
        %v1524 = vld [vmem:[%s1506 + $0x44] sm:$0xf]
        %v1525 = vld [vmem:[%s1506 + $0x48] sm:$0xf]
        %v1526 = vld [vmem:[%s1506 + $0x4c] sm:$0xf]
        %v1527 = vld [vmem:[%s1506 + $0x50] sm:$0xf]
        %v1528 = vld [vmem:[%s1506 + $0x54] sm:$0xf]
        %v1529 = vld [vmem:[%s1506 + $0x58] sm:$0xf]
        %v1530 = vld [vmem:[%s1506 + $0x5c] sm:$0xf]
        %v1531 = vld [vmem:[%s1506 + $0x60] sm:$0xf]
        %v1532 = vld [vmem:[%s1506 + $0x64] sm:$0xf]
        %v1533 = vld [vmem:[%s1506 + $0x68] sm:$0xf]
        %v1534 = vld [vmem:[%s1506 + $0x6c] sm:$0xf]
        %v1535 = vld [vmem:[%s1506 + $0x70] sm:$0xf]
        %v1536 = vld [vmem:[%s1506 + $0x74] sm:$0xf]
        %v1537 = vld [vmem:[%s1506 + $0x78] sm:$0xf]
        %v1538 = vld [vmem:[%s1506 + $0x7c] sm:$0xf]
        %v1571 = vunpack.c.l.b16 %v1507
        %v1572 = vunpack.c.l.b16 %v1508
        %v1573 = vunpack.c.l.b16 %v1509
        %v1574 = vunpack.c.l.b16 %v1510
        %v1575 = vunpack.c.l.b16 %v1511
        %v1576 = vunpack.c.l.b16 %v1512
        %v1577 = vunpack.c.l.b16 %v1513
        %v1578 = vunpack.c.l.b16 %v1514
        %v1579 = vunpack.c.l.b16 %v1515
        %v1580 = vunpack.c.l.b16 %v1516
        %v1581 = vunpack.c.l.b16 %v1517
        %v1582 = vunpack.c.l.b16 %v1518
        %v1583 = vunpack.c.l.b16 %v1519
        %v1584 = vunpack.c.l.b16 %v1520
        %v1585 = vunpack.c.l.b16 %v1521
        %v1586 = vunpack.c.l.b16 %v1522
        %v1587 = vunpack.c.l.b16 %v1523
        %v1588 = vunpack.c.l.b16 %v1524
        %v1589 = vunpack.c.l.b16 %v1525
        %v1590 = vunpack.c.l.b16 %v1526
        %v1591 = vunpack.c.l.b16 %v1527
        %v1592 = vunpack.c.l.b16 %v1528
        %v1593 = vunpack.c.l.b16 %v1529
        %v1594 = vunpack.c.l.b16 %v1530
        %v1595 = vunpack.c.l.b16 %v1531
        %v1596 = vunpack.c.l.b16 %v1532
        %v1597 = vunpack.c.l.b16 %v1533
        %v1598 = vunpack.c.l.b16 %v1534
        %v1599 = vunpack.c.l.b16 %v1535
        %v1600 = vunpack.c.l.b16 %v1536
        %v1601 = vunpack.c.l.b16 %v1537
        %v1602 = vunpack.c.l.b16 %v1538
        %v1603 = vpack.c.b16 %v1572, %v1571
        %v1604 = vpack.c.b16 %v1574, %v1573
        %v1605 = vpack.c.b16 %v1576, %v1575
        %v1606 = vpack.c.b16 %v1578, %v1577
        %v1607 = vpack.c.b16 %v1580, %v1579
        %v1608 = vpack.c.b16 %v1582, %v1581
        %v1609 = vpack.c.b16 %v1584, %v1583
        %v1610 = vpack.c.b16 %v1586, %v1585
        %v1611 = vpack.c.b16 %v1588, %v1587
        %v1612 = vpack.c.b16 %v1590, %v1589
        %v1613 = vpack.c.b16 %v1592, %v1591
        %v1614 = vpack.c.b16 %v1594, %v1593
        %v1615 = vpack.c.b16 %v1596, %v1595
        %v1616 = vpack.c.b16 %v1598, %v1597
        %v1617 = vpack.c.b16 %v1600, %v1599
        %v1618 = vpack.c.b16 %v1602, %v1601
        %1635 = vmatpush.bf16.msra.mxu0 %v908
        %1636 = vmatpush.bf16.msra.mxu0 %v907
        %1637 = vmatpush.bf16.msra.mxu0 %v906
        %1638 = vmatpush.bf16.msra.mxu0 %v905
        %1639 = vmatpush.bf16.msra.mxu0 %v904
        %1640 = vmatpush.bf16.msra.mxu0 %v903
        %1641 = vmatpush.bf16.msra.mxu0 %v902
        %1642 = vmatpush.bf16.msra.mxu0 %v901
        %1643 = vmatmul.bf16.gmra.mxu0 %v1603
        %v1644 = vpop.f32.mrf.mxu0
        %v1645 = vadd.f32 0.0, %v1644
        %v1646 = vpop.f32.mrf.mxu0
        %v1647 = vadd.f32 0.0, %v1646
        %1648 = vmatmul.bf16.gmra.mxu0 %v1604
        %v1649 = vpop.f32.mrf.mxu0
        %v1650 = vadd.f32 0.0, %v1649
        %v1651 = vpop.f32.mrf.mxu0
        %v1652 = vadd.f32 0.0, %v1651
        %1653 = vmatmul.bf16.gmra.mxu0 %v1605
        %v1654 = vpop.f32.mrf.mxu0
        %v1655 = vadd.f32 0.0, %v1654
        %v1656 = vpop.f32.mrf.mxu0
        %v1657 = vadd.f32 0.0, %v1656
        %1658 = vmatmul.bf16.gmra.mxu0 %v1606
        %v1659 = vpop.f32.mrf.mxu0
        %v1660 = vadd.f32 0.0, %v1659
        %v1661 = vpop.f32.mrf.mxu0
        %v1662 = vadd.f32 0.0, %v1661
        %1663 = vmatmul.bf16.gmra.mxu0 %v1607
        %v1664 = vpop.f32.mrf.mxu0
        %v1665 = vadd.f32 0.0, %v1664
        %v1666 = vpop.f32.mrf.mxu0
        %v1667 = vadd.f32 0.0, %v1666
        %1668 = vmatmul.bf16.gmra.mxu0 %v1608
        %v1669 = vpop.f32.mrf.mxu0
        %v1670 = vadd.f32 0.0, %v1669
        %v1671 = vpop.f32.mrf.mxu0
        %v1672 = vadd.f32 0.0, %v1671
        %1673 = vmatmul.bf16.gmra.mxu0 %v1609
        %v1674 = vpop.f32.mrf.mxu0
        %v1675 = vadd.f32 0.0, %v1674
        %v1676 = vpop.f32.mrf.mxu0
        %v1677 = vadd.f32 0.0, %v1676
        %1678 = vmatmul.bf16.gmra.mxu0 %v1610
        %v1679 = vpop.f32.mrf.mxu0
        %v1680 = vadd.f32 0.0, %v1679
        %v1681 = vpop.f32.mrf.mxu0
        %v1682 = vadd.f32 0.0, %v1681
        %1683 = vmatmul.bf16.gmra.mxu0 %v1611
        %v1684 = vpop.f32.mrf.mxu0
        %v1685 = vadd.f32 0.0, %v1684
        %v1686 = vpop.f32.mrf.mxu0
        %v1687 = vadd.f32 0.0, %v1686
        %1688 = vmatmul.bf16.gmra.mxu0 %v1612
        %v1689 = vpop.f32.mrf.mxu0
        %v1690 = vadd.f32 0.0, %v1689
        %v1691 = vpop.f32.mrf.mxu0
        %v1692 = vadd.f32 0.0, %v1691
        %1693 = vmatmul.bf16.gmra.mxu0 %v1613
        %v1694 = vpop.f32.mrf.mxu0
        %v1695 = vadd.f32 0.0, %v1694
        %v1696 = vpop.f32.mrf.mxu0
        %v1697 = vadd.f32 0.0, %v1696
        %1698 = vmatmul.bf16.gmra.mxu0 %v1614
        %v1699 = vpop.f32.mrf.mxu0
        %v1700 = vadd.f32 0.0, %v1699
        %v1701 = vpop.f32.mrf.mxu0
        %v1702 = vadd.f32 0.0, %v1701
        %1703 = vmatmul.bf16.gmra.mxu0 %v1615
        %v1704 = vpop.f32.mrf.mxu0
        %v1705 = vadd.f32 0.0, %v1704
        %v1706 = vpop.f32.mrf.mxu0
        %v1707 = vadd.f32 0.0, %v1706
        %1708 = vmatmul.bf16.gmra.mxu0 %v1616
        %v1709 = vpop.f32.mrf.mxu0
        %v1710 = vadd.f32 0.0, %v1709
        %v1711 = vpop.f32.mrf.mxu0
        %v1712 = vadd.f32 0.0, %v1711
        %1713 = vmatmul.bf16.gmra.mxu0 %v1617
        %v1714 = vpop.f32.mrf.mxu0
        %v1715 = vadd.f32 0.0, %v1714
        %v1716 = vpop.f32.mrf.mxu0
        %v1717 = vadd.f32 0.0, %v1716
        %1718 = vmatmul.bf16.gmra.mxu0 %v1618
        %v1719 = vpop.f32.mrf.mxu0
        %v1720 = vadd.f32 0.0, %v1719
        %v1721 = vpop.f32.mrf.mxu0
        %v1722 = vadd.f32 0.0, %v1721
        %1723 = vdwg.mxu0
        %v1724 = vmax.f32 %v1474, %v1645
        %v1725 = vmax.f32 %v1475, %v1647
        %v1726 = vmax.f32 %v1476, %v1650
        %v1727 = vmax.f32 %v1477, %v1652
        %v1728 = vmax.f32 %v1478, %v1655
        %v1729 = vmax.f32 %v1479, %v1657
        %v1730 = vmax.f32 %v1480, %v1660
        %v1731 = vmax.f32 %v1481, %v1662
        %v1732 = vmax.f32 %v1482, %v1665
        %v1733 = vmax.f32 %v1483, %v1667
        %v1734 = vmax.f32 %v1484, %v1670
        %v1735 = vmax.f32 %v1485, %v1672
        %v1736 = vmax.f32 %v1486, %v1675
        %v1737 = vmax.f32 %v1487, %v1677
        %v1738 = vmax.f32 %v1488, %v1680
        %v1739 = vmax.f32 %v1489, %v1682
        %v1740 = vmax.f32 %v1490, %v1685
        %v1741 = vmax.f32 %v1491, %v1687
        %v1742 = vmax.f32 %v1492, %v1690
        %v1743 = vmax.f32 %v1493, %v1692
        %v1744 = vmax.f32 %v1494, %v1695
        %v1745 = vmax.f32 %v1495, %v1697
        %v1746 = vmax.f32 %v1496, %v1700
        %v1747 = vmax.f32 %v1497, %v1702
        %v1748 = vmax.f32 %v1498, %v1705
        %v1749 = vmax.f32 %v1499, %v1707
        %v1750 = vmax.f32 %v1500, %v1710
        %v1751 = vmax.f32 %v1501, %v1712
        %v1752 = vmax.f32 %v1502, %v1715
        %v1753 = vmax.f32 %v1503, %v1717
        %v1754 = vmax.f32 %v1504, %v1720
        %v1755 = vmax.f32 %v1505, %v1722
        %v1756 = vld [vmem:[%s2] sm:$0x1]
        %v1758 = vperm.slane %v1756, 0
        %v1760 = vadd.f32 %v1724, %v1758
        %v1761 = vadd.f32 %v1725, %v1758
        %v1762 = vadd.f32 %v1726, %v1758
        %v1763 = vadd.f32 %v1727, %v1758
        %v1764 = vadd.f32 %v1728, %v1758
        %v1765 = vadd.f32 %v1729, %v1758
        %v1766 = vadd.f32 %v1730, %v1758
        %v1767 = vadd.f32 %v1731, %v1758
        %v1768 = vadd.f32 %v1732, %v1758
        %v1769 = vadd.f32 %v1733, %v1758
        %v1770 = vadd.f32 %v1734, %v1758
        %v1771 = vadd.f32 %v1735, %v1758
        %v1772 = vadd.f32 %v1736, %v1758
        %v1773 = vadd.f32 %v1737, %v1758
        %v1774 = vadd.f32 %v1738, %v1758
        %v1775 = vadd.f32 %v1739, %v1758
        %v1776 = vadd.f32 %v1740, %v1758
        %v1777 = vadd.f32 %v1741, %v1758
        %v1778 = vadd.f32 %v1742, %v1758
        %v1779 = vadd.f32 %v1743, %v1758
        %v1780 = vadd.f32 %v1744, %v1758
        %v1781 = vadd.f32 %v1745, %v1758
        %v1782 = vadd.f32 %v1746, %v1758
        %v1783 = vadd.f32 %v1747, %v1758
        %v1784 = vadd.f32 %v1748, %v1758
        %v1785 = vadd.f32 %v1749, %v1758
        %v1786 = vadd.f32 %v1750, %v1758
        %v1787 = vadd.f32 %v1751, %v1758
        %v1788 = vadd.f32 %v1752, %v1758
        %v1789 = vadd.f32 %v1753, %v1758
        %v1790 = vadd.f32 %v1754, %v1758
        %v1791 = vadd.f32 %v1755, %v1758
        %v1792 = vmax.f32 %v1760, 0.0
        %v1793 = vmax.f32 %v1761, 0.0
        %v1794 = vmax.f32 %v1762, 0.0
        %v1795 = vmax.f32 %v1763, 0.0
        %v1796 = vmax.f32 %v1764, 0.0
        %v1797 = vmax.f32 %v1765, 0.0
        %v1798 = vmax.f32 %v1766, 0.0
        %v1799 = vmax.f32 %v1767, 0.0
        %v1800 = vmax.f32 %v1768, 0.0
        %v1801 = vmax.f32 %v1769, 0.0
        %v1802 = vmax.f32 %v1770, 0.0
        %v1803 = vmax.f32 %v1771, 0.0
        %v1804 = vmax.f32 %v1772, 0.0
        %v1805 = vmax.f32 %v1773, 0.0
        %v1806 = vmax.f32 %v1774, 0.0
        %v1807 = vmax.f32 %v1775, 0.0
        %v1808 = vmax.f32 %v1776, 0.0
        %v1809 = vmax.f32 %v1777, 0.0
        %v1810 = vmax.f32 %v1778, 0.0
        %v1811 = vmax.f32 %v1779, 0.0
        %v1812 = vmax.f32 %v1780, 0.0
        %v1813 = vmax.f32 %v1781, 0.0
        %v1814 = vmax.f32 %v1782, 0.0
        %v1815 = vmax.f32 %v1783, 0.0
        %v1816 = vmax.f32 %v1784, 0.0
        %v1817 = vmax.f32 %v1785, 0.0
        %v1818 = vmax.f32 %v1786, 0.0
        %v1819 = vmax.f32 %v1787, 0.0
        %v1820 = vmax.f32 %v1788, 0.0
        %v1821 = vmax.f32 %v1789, 0.0
        %v1822 = vmax.f32 %v1790, 0.0
        %v1823 = vmax.f32 %v1791, 0.0
        %v1824 = vpack.c.bf16 %v1792, %v1792
        %v1825 = vpack.c.bf16 %v1793, %v1793
        %v1826 = vpack.c.bf16 %v1794, %v1794
        %v1827 = vpack.c.bf16 %v1795, %v1795
        %v1828 = vpack.c.bf16 %v1796, %v1796
        %v1829 = vpack.c.bf16 %v1797, %v1797
        %v1830 = vpack.c.bf16 %v1798, %v1798
        %v1831 = vpack.c.bf16 %v1799, %v1799
        %v1832 = vpack.c.bf16 %v1800, %v1800
        %v1833 = vpack.c.bf16 %v1801, %v1801
        %v1834 = vpack.c.bf16 %v1802, %v1802
        %v1835 = vpack.c.bf16 %v1803, %v1803
        %v1836 = vpack.c.bf16 %v1804, %v1804
        %v1837 = vpack.c.bf16 %v1805, %v1805
        %v1838 = vpack.c.bf16 %v1806, %v1806
        %v1839 = vpack.c.bf16 %v1807, %v1807
        %v1840 = vpack.c.bf16 %v1808, %v1808
        %v1841 = vpack.c.bf16 %v1809, %v1809
        %v1842 = vpack.c.bf16 %v1810, %v1810
        %v1843 = vpack.c.bf16 %v1811, %v1811
        %v1844 = vpack.c.bf16 %v1812, %v1812
        %v1845 = vpack.c.bf16 %v1813, %v1813
        %v1846 = vpack.c.bf16 %v1814, %v1814
        %v1847 = vpack.c.bf16 %v1815, %v1815
        %v1848 = vpack.c.bf16 %v1816, %v1816
        %v1849 = vpack.c.bf16 %v1817, %v1817
        %v1850 = vpack.c.bf16 %v1818, %v1818
        %v1851 = vpack.c.bf16 %v1819, %v1819
        %v1852 = vpack.c.bf16 %v1820, %v1820
        %v1853 = vpack.c.bf16 %v1821, %v1821
        %v1854 = vpack.c.bf16 %v1822, %v1822
        %v1855 = vpack.c.bf16 %v1823, %v1823
        %1856 = vst [vmem:[%s723] sm:$0xf] %v1824
        %1857 = vst [vmem:[%s723 + $0x4] sm:$0xf] %v1825
        %1858 = vst [vmem:[%s723 + $0x8] sm:$0xf] %v1826
        %1859 = vst [vmem:[%s723 + $0xc] sm:$0xf] %v1827
        %1860 = vst [vmem:[%s723 + $0x10] sm:$0xf] %v1828
        %1861 = vst [vmem:[%s723 + $0x14] sm:$0xf] %v1829
        %1862 = vst [vmem:[%s723 + $0x18] sm:$0xf] %v1830
        %1863 = vst [vmem:[%s723 + $0x1c] sm:$0xf] %v1831
        %1864 = vst [vmem:[%s723 + $0x20] sm:$0xf] %v1832
        %1865 = vst [vmem:[%s723 + $0x24] sm:$0xf] %v1833
        %1866 = vst [vmem:[%s723 + $0x28] sm:$0xf] %v1834
        %1867 = vst [vmem:[%s723 + $0x2c] sm:$0xf] %v1835
        %1868 = vst [vmem:[%s723 + $0x30] sm:$0xf] %v1836
        %1869 = vst [vmem:[%s723 + $0x34] sm:$0xf] %v1837
        %1870 = vst [vmem:[%s723 + $0x38] sm:$0xf] %v1838
        %1871 = vst [vmem:[%s723 + $0x3c] sm:$0xf] %v1839
        %1872 = vst [vmem:[%s723 + $0x40] sm:$0xf] %v1840
        %1873 = vst [vmem:[%s723 + $0x44] sm:$0xf] %v1841
        %1874 = vst [vmem:[%s723 + $0x48] sm:$0xf] %v1842
        %1875 = vst [vmem:[%s723 + $0x4c] sm:$0xf] %v1843
        %1876 = vst [vmem:[%s723 + $0x50] sm:$0xf] %v1844
        %1877 = vst [vmem:[%s723 + $0x54] sm:$0xf] %v1845
        %1878 = vst [vmem:[%s723 + $0x58] sm:$0xf] %v1846
        %1879 = vst [vmem:[%s723 + $0x5c] sm:$0xf] %v1847
        %1880 = vst [vmem:[%s723 + $0x60] sm:$0xf] %v1848
        %1881 = vst [vmem:[%s723 + $0x64] sm:$0xf] %v1849
        %1882 = vst [vmem:[%s723 + $0x68] sm:$0xf] %v1850
        %1883 = vst [vmem:[%s723 + $0x6c] sm:$0xf] %v1851
        %1884 = vst [vmem:[%s723 + $0x70] sm:$0xf] %v1852
        %1885 = vst [vmem:[%s723 + $0x74] sm:$0xf] %v1853
        %1886 = vst [vmem:[%s723 + $0x78] sm:$0xf] %v1854
        %1887 = vst [vmem:[%s723 + $0x7c] sm:$0xf] %v1855
        %s1888 = smul.u32 32, %s14
        %p1889 = scmp.lt.s32.totalorder %s1888, 63
        %s1890 = scalar_select %p1889, %s1888, 63
        %s1891 = smul.addr %s1890, 4
        %s1892 = scalar_lea.vmem %s3, %s1891
        // Predicated region
        $region74: #{cnn_model_l2_forward.5} parent=68 // pred_check
          %p1893 = pneg %p100
        $region75: #{cnn_model_l2_forward.5} parent=68 // pred_check_branch
          %1895 = sbr.rel (%p1893) target = $region77
        $region76: #{cnn_model_l2_forward.5} parent=68 // pred_region
          %s1896 = smul.u32 32, %s14
        $region77: #{cnn_model_l2_forward.5} parent=68 // pred_fallthru
          _
      $region69: #{cnn_model_l2_forward.5} parent=5 // pred_fallthru
        _
      %p1897 = scmp.le.s32.totalorder 2, %s9
      // Predicated region
      $region78: #{cnn_model_l2_forward.5} parent=5 // pred_check
        %p1898 = pneg %p1897
      $region79: #{cnn_model_l2_forward.5} parent=5 // pred_check_branch
        %1900 = sbr.rel (%p1898) target = $region81
      $region80: #{cnn_model_l2_forward.5} parent=5 // pred_region
        %s1901 = ssub.s32 %s9, 2
        // Predicated region
        $region82: #{cnn_model_l2_forward.5} parent=80 // pred_check
          %p1902 = pneg %p106
        $region83: #{cnn_model_l2_forward.5} parent=80 // pred_check_branch
          %1904 = sbr.rel (%p1902) target = $region85
        $region84: #{cnn_model_l2_forward.5} parent=80 // pred_region
          %s1905 = smul.u32 32, %s15
          %p1906 = scmp.lt.s32.totalorder %s1905, 63
          %s1907 = scalar_select %p1906, %s1905, 63
          %s1908 = smul.addr %s1907, 4
          %s1909 = scalar_lea.vmem %s3, %s1908
        $region85: #{cnn_model_l2_forward.5} parent=80 // pred_fallthru
          _
      $region81: #{cnn_model_l2_forward.5} parent=5 // pred_fallthru
        _
    $region6: #{cnn_model_l2_forward.5} parent=1 // loop_footer
      %s13 = sadd.s32 1, %s9
    $region7: #{cnn_model_l2_forward.5} parent=1 // loop_footer_branch
      %8 = sbr.rel target = $region3
    $region8: #{cnn_model_l2_forward.5} parent=1 // loop_exit
      _

// kernel: cnn_model_l2_forward.6
$region0: #{cnn_model_l2_forward.6}
  #allocation0 [shape = 'u32[]', space=smem, size = 0x4, offset = 0x4, fixed_abs, tag = 'smem constant byte address 0x4 - core index']
  #allocation1 [shape = 'u32[72,128]{1,0:T(1,128)}', space=vmem, size = 0x9000, scoped, tag = 'internal scratch']
  %s0 = inlined_call_operand.vmem [shape: bf16[4,128,128], index: 0, kind: input, shape index: {}]
  %s1 = inlined_call_operand.vmem [shape: bf16[128,128], index: 1, kind: input, shape index: {}]
  %s2 = inlined_call_operand.vmem [shape: f32[1,128], index: 2, kind: input, shape index: {}]
  %s3 = inlined_call_operand.vmem [shape: bf16[128,128], index: 3, kind: output, shape index: {}]
  %s4 = sld [smem:[#allocation0]]
  $region86: #{cnn_model_l2_forward.6} parent=0
    _
  %s6 = ssub.s32 1, %s4
  %s7 = scalar_select 0, %s6, %s4
  $region1: #{cnn_model_l2_forward.6} parent=0
    #allocation2 [shape = 'u8[131072]{0}', space=vmem, size = 0x20000, scoped, tag = 'input window, operand 0']
    loop: start=0, step=1, limit=4
    $region2: #{cnn_model_l2_forward.6} parent=1 // loop_pre_header
      _
    $region3: #{cnn_model_l2_forward.6} parent=1 // loop_header
      %s9 = sphi 0, %s13
      %p10 = scmp.ge.s32.totalorder %s9, 4
      %s19 = sphi 0, %s21
      %s22 = sphi 0, %s19
      %s23 = sphi 0, %s22
      %s39 = sphi 0, %s23
      %s43 = sphi 0, %s43
      %s45 = sphi 0, %s43
      %s46 = sphi 0, %s45
      %s60 = sphi 0, %s46
      %s64 = sphi 0, %s64
      %s66 = sphi 0, %s64
      %s67 = sphi 0, %s66
      %s81 = sphi 0, %s67
      %s87 = sphi 0, %s89
      %s90 = sphi 0, %s87
      %s91 = sphi 0, %s90
      %s107 = sphi 0, %s91
    $region4: #{cnn_model_l2_forward.6} parent=1 // loop_header_branch
      %12 = sbr.rel (%p10) target = $region8
    $region5: #{cnn_model_l2_forward.6} parent=1 // loop_body
      %s14 = ssub.s32 %s9, 1
      %s15 = ssub.s32 %s9, 2
      %s16 = sadd.s32 %s9, 1
      %s17 = ssub.s32 %s9, %s16
      %p18 = scmp.eq.s32.totalorder %s17, 0
      %s20 = sadd.s32 %s19, 1
      %s21 = scalar_select %p18, %s19, %s20
      %p24 = pneg %p18
      %p25 = scmp.eq.s32.totalorder %s9, 1
      %p26 = por %p24, %p25
      %p27 = scmp.ne.s32.totalorder %s19, %s22
      %p28 = scmp.eq.s32.totalorder %s9, 0
      %p29 = por %p27, %p28
      %p30 = scmp.ne.s32.totalorder %s19, %s22
      %p31 = scmp.eq.s32.totalorder %s14, 1
      %p32 = por %p30, %p31
      %p33 = scmp.ne.s32.totalorder %s22, %s23
      %p34 = scmp.eq.s32.totalorder %s14, 0
      %p35 = por %p33, %p34
      %p36 = scmp.ne.s32.totalorder %s22, %s23
      %p37 = scmp.eq.s32.totalorder %s15, 1
      %p38 = por %p36, %p37
      %p40 = scmp.ne.s32.totalorder %s23, %s39
      %p41 = scmp.eq.s32.totalorder %s15, 0
      %p42 = por %p40, %p41
      %s44 = sadd.s32 %s43, 1
      %p47 = scmp.eq.s32.totalorder %s9, 1
      %p48 = scmp.ne.s32.totalorder %s43, %s45
      %p49 = scmp.eq.s32.totalorder %s9, 0
      %p50 = por %p48, %p49
      %p51 = scmp.ne.s32.totalorder %s43, %s45
      %p52 = scmp.eq.s32.totalorder %s14, 1
      %p53 = por %p51, %p52
      %p54 = scmp.ne.s32.totalorder %s45, %s46
      %p55 = scmp.eq.s32.totalorder %s14, 0
      %p56 = por %p54, %p55
      %p57 = scmp.ne.s32.totalorder %s45, %s46
      %p58 = scmp.eq.s32.totalorder %s15, 1
      %p59 = por %p57, %p58
      %p61 = scmp.ne.s32.totalorder %s46, %s60
      %p62 = scmp.eq.s32.totalorder %s15, 0
      %p63 = por %p61, %p62
      %s65 = sadd.s32 %s64, 1
      %p68 = scmp.eq.s32.totalorder %s9, 1
      %p69 = scmp.ne.s32.totalorder %s64, %s66
      %p70 = scmp.eq.s32.totalorder %s9, 0
      %p71 = por %p69, %p70
      %p72 = scmp.ne.s32.totalorder %s64, %s66
      %p73 = scmp.eq.s32.totalorder %s14, 1
      %p74 = por %p72, %p73
      %p75 = scmp.ne.s32.totalorder %s66, %s67
      %p76 = scmp.eq.s32.totalorder %s14, 0
      %p77 = por %p75, %p76
      %p78 = scmp.ne.s32.totalorder %s66, %s67
      %p79 = scmp.eq.s32.totalorder %s15, 1
      %p80 = por %p78, %p79
      %p82 = scmp.ne.s32.totalorder %s67, %s81
      %p83 = scmp.eq.s32.totalorder %s15, 0
      %p84 = por %p82, %p83
      %s85 = ssub.s32 %s9, %s16
      %p86 = scmp.eq.s32.totalorder %s85, 0
      %s88 = sadd.s32 %s87, 1
      %s89 = scalar_select %p86, %s87, %s88
      %p92 = pneg %p86
      %p93 = scmp.eq.s32.totalorder %s9, 1
      %p94 = por %p92, %p93
      %p95 = scmp.ne.s32.totalorder %s87, %s90
      %p96 = scmp.eq.s32.totalorder %s9, 0
      %p97 = por %p95, %p96
      %p98 = scmp.ne.s32.totalorder %s87, %s90
      %p99 = scmp.eq.s32.totalorder %s14, 1
      %p100 = por %p98, %p99
      %p101 = scmp.ne.s32.totalorder %s90, %s91
      %p102 = scmp.eq.s32.totalorder %s14, 0
      %p103 = por %p101, %p102
      %p104 = scmp.ne.s32.totalorder %s90, %s91
      %p105 = scmp.eq.s32.totalorder %s15, 1
      %p106 = por %p104, %p105
      %p108 = scmp.ne.s32.totalorder %s91, %s107
      %p109 = scmp.eq.s32.totalorder %s15, 0
      %p110 = por %p108, %p109
      %p111 = scmp.le.s32.totalorder 1, %s9
      %p112 = scmp.lt.s32.totalorder %s9, 3
      %p113 = pnand %p111, %p112
      %p114 = pneg %p113
      // Predicated region
      $region9: #{cnn_model_l2_forward.6} parent=5 // pred_check
        _
      $region10: #{cnn_model_l2_forward.6} parent=5 // pred_check_branch
        %116 = sbr.rel (%p113) target = $region12
      $region11: #{cnn_model_l2_forward.6} parent=5 // pred_region
        %s117 = ssub.s32 %s9, 1
        // Predicated region
        $region13: #{cnn_model_l2_forward.6} parent=11 // pred_check
          %p118 = pneg %p56
        $region14: #{cnn_model_l2_forward.6} parent=11 // pred_check_branch
          %120 = sbr.rel (%p118) target = $region16
        $region15: #{cnn_model_l2_forward.6} parent=11 // pred_region
          _
        $region16: #{cnn_model_l2_forward.6} parent=11 // pred_fallthru
          _
        // Predicated region
        $region17: #{cnn_model_l2_forward.6} parent=11 // pred_check
          %p121 = pneg %p77
        $region18: #{cnn_model_l2_forward.6} parent=11 // pred_check_branch
          %123 = sbr.rel (%p121) target = $region20
        $region19: #{cnn_model_l2_forward.6} parent=11 // pred_region
          _
        $region20: #{cnn_model_l2_forward.6} parent=11 // pred_fallthru
          _
      $region12: #{cnn_model_l2_forward.6} parent=5 // pred_fallthru
        _
      %p124 = scmp.lt.s32.totalorder %s9, 2
      // Predicated region
      $region21: #{cnn_model_l2_forward.6} parent=5 // pred_check
        %p125 = pneg %p124
      $region22: #{cnn_model_l2_forward.6} parent=5 // pred_check_branch
        %127 = sbr.rel (%p125) target = $region24
      $region23: #{cnn_model_l2_forward.6} parent=5 // pred_region
        // Predicated region
        $region25: #{cnn_model_l2_forward.6} parent=23 // pred_check
          %p128 = pneg %p29
        $region26: #{cnn_model_l2_forward.6} parent=23 // pred_check_branch
          %130 = sbr.rel (%p128) target = $region28
        $region27: #{cnn_model_l2_forward.6} parent=23 // pred_region
          %s131 = sand.u32 %s19, 1
          %s132 = sand.u32 %s19, 1
          %s133 = smul.addr %s132, 128
          %s134 = scalar_lea.vmem [#allocation2], %s133
          %s135 = smul.u32 8, %s9
          %s136 = smul.addr %s135, 4
          %s137 = scalar_lea.vmem %s0, %s136
          // Predicated region
          $region29: #{cnn_model_l2_forward.6} parent=27 // pred_check
            _
          $region30: #{cnn_model_l2_forward.6} parent=27 // pred_check_branch
            %139 = sbr.rel (0) target = $region32
          $region31: #{cnn_model_l2_forward.6} parent=27 // pred_region
            // Predicated region
            $region33: #{cnn_model_l2_forward.6} parent=31 // pred_check
              _
            $region34: #{cnn_model_l2_forward.6} parent=31 // pred_check_branch
              %141 = sbr.rel target = $region36
            $region35: #{cnn_model_l2_forward.6} parent=31 // pred_region
              // Predicated region
              $region48: #{cnn_model_l2_forward.6} parent=35 // pred_check
                _
              $region49: #{cnn_model_l2_forward.6} parent=35 // pred_check_branch
                %219 = sbr.rel (0) target = $region51
              $region50: #{cnn_model_l2_forward.6} parent=35 // pred_region
                loop: start=0, step=1, limit=1
                $region52: #{cnn_model_l2_forward.6} parent=50 // loop_pre_header
                  _
                $region53: #{cnn_model_l2_forward.6} parent=50 // loop_header
                  %s221 = sphi 0, %s225
                  %p222 = scmp.ge.s32.totalorder %s221, 1
                  %s226 = sphi %s137, %s137
                  %s227 = sphi %s134, %s134
                $region54: #{cnn_model_l2_forward.6} parent=50 // loop_header_branch
                  %224 = sbr.rel (%p222) target = $region58
                $region55: #{cnn_model_l2_forward.6} parent=50 // loop_body
                  _
                $region56: #{cnn_model_l2_forward.6} parent=50 // loop_footer
                  %s225 = sadd.s32 1, %s221
                $region57: #{cnn_model_l2_forward.6} parent=50 // loop_footer_branch
                  %220 = sbr.rel target = $region53
                $region58: #{cnn_model_l2_forward.6} parent=50 // loop_exit
                  _
                %s229 = ssub.s32 16, 1
                loop: start=0, step=1, limit=1
                $region59: #{cnn_model_l2_forward.6} parent=50 // loop_pre_header
                  _
                $region60: #{cnn_model_l2_forward.6} parent=50 // loop_header
                  %s231 = sphi 0, %s235
                  %p232 = scmp.ge.s32.totalorder %s231, 1
                  %s236 = sphi %s137, %s137
                  %s237 = sphi %s134, %s134
                $region61: #{cnn_model_l2_forward.6} parent=50 // loop_header_branch
                  %234 = sbr.rel (%p232) target = $region65
                $region62: #{cnn_model_l2_forward.6} parent=50 // loop_body
                  %v238 = vld [vmem:[%s236] sm:%s229]
                  %239 = vst [vmem:[%s237] sm:%s229] %v238
                  %v240 = vld [vmem:[%s236 + $0x4] sm:%s229]
                  %241 = vst [vmem:[%s237 + $0x4] sm:%s229] %v240
                  %v242 = vld [vmem:[%s236 + $0x8] sm:%s229]
                  %243 = vst [vmem:[%s237 + $0x8] sm:%s229] %v242
                  %v244 = vld [vmem:[%s236 + $0xc] sm:%s229]
                  %245 = vst [vmem:[%s237 + $0xc] sm:%s229] %v244
                  %v246 = vld [vmem:[%s236 + $0x10] sm:%s229]
                  %247 = vst [vmem:[%s237 + $0x10] sm:%s229] %v246
                  %v248 = vld [vmem:[%s236 + $0x14] sm:%s229]
                  %249 = vst [vmem:[%s237 + $0x14] sm:%s229] %v248
                  %v250 = vld [vmem:[%s236 + $0x18] sm:%s229]
                  %251 = vst [vmem:[%s237 + $0x18] sm:%s229] %v250
                  %v252 = vld [vmem:[%s236 + $0x1c] sm:%s229]
                  %253 = vst [vmem:[%s237 + $0x1c] sm:%s229] %v252
                  %v254 = vld [vmem:[%s236 + $0x40] sm:%s229]
                  %255 = vst [vmem:[%s237 + $0x20] sm:%s229] %v254
                  %v256 = vld [vmem:[%s236 + $0x44] sm:%s229]
                  %257 = vst [vmem:[%s237 + $0x24] sm:%s229] %v256
                  %v258 = vld [vmem:[%s236 + $0x48] sm:%s229]
                  %259 = vst [vmem:[%s237 + $0x28] sm:%s229] %v258
                  %v260 = vld [vmem:[%s236 + $0x4c] sm:%s229]
                  %261 = vst [vmem:[%s237 + $0x2c] sm:%s229] %v260
                  %v262 = vld [vmem:[%s236 + $0x50] sm:%s229]
                  %263 = vst [vmem:[%s237 + $0x30] sm:%s229] %v262
                  %v264 = vld [vmem:[%s236 + $0x54] sm:%s229]
                  %265 = vst [vmem:[%s237 + $0x34] sm:%s229] %v264
                  %v266 = vld [vmem:[%s236 + $0x58] sm:%s229]
                  %267 = vst [vmem:[%s237 + $0x38] sm:%s229] %v266
                  %v268 = vld [vmem:[%s236 + $0x5c] sm:%s229]
                  %269 = vst [vmem:[%s237 + $0x3c] sm:%s229] %v268
                  %v270 = vld [vmem:[%s236 + $0x80] sm:%s229]
                  %271 = vst [vmem:[%s237 + $0x40] sm:%s229] %v270
                  %v272 = vld [vmem:[%s236 + $0x84] sm:%s229]
                  %273 = vst [vmem:[%s237 + $0x44] sm:%s229] %v272
                  %v274 = vld [vmem:[%s236 + $0x88] sm:%s229]
                  %275 = vst [vmem:[%s237 + $0x48] sm:%s229] %v274
                  %v276 = vld [vmem:[%s236 + $0x8c] sm:%s229]
                  %277 = vst [vmem:[%s237 + $0x4c] sm:%s229] %v276
                  %v278 = vld [vmem:[%s236 + $0x90] sm:%s229]
                  %279 = vst [vmem:[%s237 + $0x50] sm:%s229] %v278
                  %v280 = vld [vmem:[%s236 + $0x94] sm:%s229]
                  %281 = vst [vmem:[%s237 + $0x54] sm:%s229] %v280
                  %v282 = vld [vmem:[%s236 + $0x98] sm:%s229]
                  %283 = vst [vmem:[%s237 + $0x58] sm:%s229] %v282
                  %v284 = vld [vmem:[%s236 + $0x9c] sm:%s229]
                  %285 = vst [vmem:[%s237 + $0x5c] sm:%s229] %v284
                  %v286 = vld [vmem:[%s236 + $0xc0] sm:%s229]
                  %287 = vst [vmem:[%s237 + $0x60] sm:%s229] %v286
                  %v288 = vld [vmem:[%s236 + $0xc4] sm:%s229]
                  %289 = vst [vmem:[%s237 + $0x64] sm:%s229] %v288
                  %v290 = vld [vmem:[%s236 + $0xc8] sm:%s229]
                  %291 = vst [vmem:[%s237 + $0x68] sm:%s229] %v290
                  %v292 = vld [vmem:[%s236 + $0xcc] sm:%s229]
                  %293 = vst [vmem:[%s237 + $0x6c] sm:%s229] %v292
                  %v294 = vld [vmem:[%s236 + $0xd0] sm:%s229]
                  %295 = vst [vmem:[%s237 + $0x70] sm:%s229] %v294
                  %v296 = vld [vmem:[%s236 + $0xd4] sm:%s229]
                  %297 = vst [vmem:[%s237 + $0x74] sm:%s229] %v296
                  %v298 = vld [vmem:[%s236 + $0xd8] sm:%s229]
                  %299 = vst [vmem:[%s237 + $0x78] sm:%s229] %v298
                  %v300 = vld [vmem:[%s236 + $0xdc] sm:%s229]
                  %301 = vst [vmem:[%s237 + $0x7c] sm:%s229] %v300
                $region63: #{cnn_model_l2_forward.6} parent=50 // loop_footer
                  %s235 = sadd.s32 1, %s231
                $region64: #{cnn_model_l2_forward.6} parent=50 // loop_footer_branch
                  %230 = sbr.rel target = $region60
                $region65: #{cnn_model_l2_forward.6} parent=50 // loop_exit
                  _
              $region51: #{cnn_model_l2_forward.6} parent=35 // pred_fallthru
                _
            $region36: #{cnn_model_l2_forward.6} parent=31 // pred_fallthru
              _
            // Predicated region
            $region37: #{cnn_model_l2_forward.6} parent=31 // pred_check
              _
            $region38: #{cnn_model_l2_forward.6} parent=31 // pred_check_branch
              %143 = sbr.rel (0) target = $region40
            $region39: #{cnn_model_l2_forward.6} parent=31 // pred_region
              %s145 = ssub.s32 16, 1
              loop: start=0, step=1, limit=1
              $region41: #{cnn_model_l2_forward.6} parent=39 // loop_pre_header
                _
              $region42: #{cnn_model_l2_forward.6} parent=39 // loop_header
                %s147 = sphi 0, %s151
                %p148 = scmp.ge.s32.totalorder %s147, 1
                %s152 = sphi %s137, %s137
                %s153 = sphi %s134, %s134
              $region43: #{cnn_model_l2_forward.6} parent=39 // loop_header_branch
                %150 = sbr.rel (%p148) target = $region47
              $region44: #{cnn_model_l2_forward.6} parent=39 // loop_body
                %v154 = vld [vmem:[%s152] sm:%s145]
                %155 = vst [vmem:[%s153] sm:%s145] %v154
                %v156 = vld [vmem:[%s152 + $0x4] sm:%s145]
                %157 = vst [vmem:[%s153 + $0x4] sm:%s145] %v156
                %v158 = vld [vmem:[%s152 + $0x8] sm:%s145]
                %159 = vst [vmem:[%s153 + $0x8] sm:%s145] %v158
                %v160 = vld [vmem:[%s152 + $0xc] sm:%s145]
                %161 = vst [vmem:[%s153 + $0xc] sm:%s145] %v160
                %v162 = vld [vmem:[%s152 + $0x10] sm:%s145]
                %163 = vst [vmem:[%s153 + $0x10] sm:%s145] %v162
                %v164 = vld [vmem:[%s152 + $0x14] sm:%s145]
                %165 = vst [vmem:[%s153 + $0x14] sm:%s145] %v164
                %v166 = vld [vmem:[%s152 + $0x18] sm:%s145]
                %167 = vst [vmem:[%s153 + $0x18] sm:%s145] %v166
                %v168 = vld [vmem:[%s152 + $0x1c] sm:%s145]
                %169 = vst [vmem:[%s153 + $0x1c] sm:%s145] %v168
                %v170 = vld [vmem:[%s152 + $0x40] sm:%s145]
                %171 = vst [vmem:[%s153 + $0x20] sm:%s145] %v170
                %v172 = vld [vmem:[%s152 + $0x44] sm:%s145]
                %173 = vst [vmem:[%s153 + $0x24] sm:%s145] %v172
                %v174 = vld [vmem:[%s152 + $0x48] sm:%s145]
                %175 = vst [vmem:[%s153 + $0x28] sm:%s145] %v174
                %v176 = vld [vmem:[%s152 + $0x4c] sm:%s145]
                %177 = vst [vmem:[%s153 + $0x2c] sm:%s145] %v176
                %v178 = vld [vmem:[%s152 + $0x50] sm:%s145]
                %179 = vst [vmem:[%s153 + $0x30] sm:%s145] %v178
                %v180 = vld [vmem:[%s152 + $0x54] sm:%s145]
                %181 = vst [vmem:[%s153 + $0x34] sm:%s145] %v180
                %v182 = vld [vmem:[%s152 + $0x58] sm:%s145]
                %183 = vst [vmem:[%s153 + $0x38] sm:%s145] %v182
                %v184 = vld [vmem:[%s152 + $0x5c] sm:%s145]
                %185 = vst [vmem:[%s153 + $0x3c] sm:%s145] %v184
                %v186 = vld [vmem:[%s152 + $0x80] sm:%s145]
                %187 = vst [vmem:[%s153 + $0x40] sm:%s145] %v186
                %v188 = vld [vmem:[%s152 + $0x84] sm:%s145]
                %189 = vst [vmem:[%s153 + $0x44] sm:%s145] %v188
                %v190 = vld [vmem:[%s152 + $0x88] sm:%s145]
                %191 = vst [vmem:[%s153 + $0x48] sm:%s145] %v190
                %v192 = vld [vmem:[%s152 + $0x8c] sm:%s145]
                %193 = vst [vmem:[%s153 + $0x4c] sm:%s145] %v192
                %v194 = vld [vmem:[%s152 + $0x90] sm:%s145]
                %195 = vst [vmem:[%s153 + $0x50] sm:%s145] %v194
                %v196 = vld [vmem:[%s152 + $0x94] sm:%s145]
                %197 = vst [vmem:[%s153 + $0x54] sm:%s145] %v196
                %v198 = vld [vmem:[%s152 + $0x98] sm:%s145]
                %199 = vst [vmem:[%s153 + $0x58] sm:%s145] %v198
                %v200 = vld [vmem:[%s152 + $0x9c] sm:%s145]
                %201 = vst [vmem:[%s153 + $0x5c] sm:%s145] %v200
                %v202 = vld [vmem:[%s152 + $0xc0] sm:%s145]
                %203 = vst [vmem:[%s153 + $0x60] sm:%s145] %v202
                %v204 = vld [vmem:[%s152 + $0xc4] sm:%s145]
                %205 = vst [vmem:[%s153 + $0x64] sm:%s145] %v204
                %v206 = vld [vmem:[%s152 + $0xc8] sm:%s145]
                %207 = vst [vmem:[%s153 + $0x68] sm:%s145] %v206
                %v208 = vld [vmem:[%s152 + $0xcc] sm:%s145]
                %209 = vst [vmem:[%s153 + $0x6c] sm:%s145] %v208
                %v210 = vld [vmem:[%s152 + $0xd0] sm:%s145]
                %211 = vst [vmem:[%s153 + $0x70] sm:%s145] %v210
                %v212 = vld [vmem:[%s152 + $0xd4] sm:%s145]
                %213 = vst [vmem:[%s153 + $0x74] sm:%s145] %v212
                %v214 = vld [vmem:[%s152 + $0xd8] sm:%s145]
                %215 = vst [vmem:[%s153 + $0x78] sm:%s145] %v214
                %v216 = vld [vmem:[%s152 + $0xdc] sm:%s145]
                %217 = vst [vmem:[%s153 + $0x7c] sm:%s145] %v216
              $region45: #{cnn_model_l2_forward.6} parent=39 // loop_footer
                %s151 = sadd.s32 1, %s147
              $region46: #{cnn_model_l2_forward.6} parent=39 // loop_footer_branch
                %146 = sbr.rel target = $region42
              $region47: #{cnn_model_l2_forward.6} parent=39 // loop_exit
                _
            $region40: #{cnn_model_l2_forward.6} parent=31 // pred_fallthru
              _
          $region32: #{cnn_model_l2_forward.6} parent=27 // pred_fallthru
            _
          %302 = vnop
        $region28: #{cnn_model_l2_forward.6} parent=23 // pred_fallthru
          _
      $region24: #{cnn_model_l2_forward.6} parent=5 // pred_fallthru
        _
      %p303 = scmp.le.s32.totalorder 1, %s9
      %p304 = scmp.lt.s32.totalorder %s9, 3
      %p305 = pnand %p303, %p304
      %p306 = pneg %p305
      // Predicated region
      $region66: #{cnn_model_l2_forward.6} parent=5 // pred_check
        _
      $region67: #{cnn_model_l2_forward.6} parent=5 // pred_check_branch
        %308 = sbr.rel (%p305) target = $region69
      $region68: #{cnn_model_l2_forward.6} parent=5 // pred_region
        %s309 = ssub.s32 %s9, 1
        %s310 = sand.u32 %s22, 1
        %s311 = sand.u32 %s22, 1
        %s312 = smul.addr %s311, 128
        %s313 = scalar_lea.vmem [#allocation2], %s312
        // Predicated region
        $region70: #{cnn_model_l2_forward.6} parent=68 // pred_check
          %p314 = pneg %p35
        $region71: #{cnn_model_l2_forward.6} parent=68 // pred_check_branch
          %316 = sbr.rel (%p314) target = $region73
        $region72: #{cnn_model_l2_forward.6} parent=68 // pred_region
          _
        $region73: #{cnn_model_l2_forward.6} parent=68 // pred_fallthru
          _
        %s317 = sand.u32 %s22, 1
        %s318 = sand.u32 %s22, 1
        %s319 = smul.addr %s318, 128
        %s320 = scalar_lea.vmem [#allocation2], %s319
        %p321 = pneg %p35
        %p322 = pneg %p32
        %p323 = pneg %p56
        %p324 = pneg %p53
        %p325 = pneg %p77
        %p326 = pneg %p74
        %p327 = pneg %p103
        %p328 = pneg %p100
        %s329 = smul.u32 8, %s14
        %p330 = scmp.lt.s32.totalorder %s329, 15
        %s331 = scalar_select %p330, %s329, 15
        %s332 = smul.addr %s331, 4
        %s333 = scalar_lea.vmem %s3, %s332
        %s334 = smul.u32 8, %s14
        %s335 = smul.u32 8, %s14
        %p336 = scmp.lt.s32.totalorder %s335, 15
        %s337 = scalar_select %p336, %s335, 15
        %s338 = smul.addr %s337, 4
        %s339 = scalar_lea.vmem %s3, %s338
        %s340 = smul.u32 8, %s14
        %v341 = vld [vmem:[%s313] sm:$0xf]
        %v342 = vld [vmem:[%s313 + $0x4] sm:$0xf]
        %v343 = vld [vmem:[%s313 + $0x8] sm:$0xf]
        %v344 = vld [vmem:[%s313 + $0xc] sm:$0xf]
        %v345 = vld [vmem:[%s313 + $0x10] sm:$0xf]
        %v346 = vld [vmem:[%s313 + $0x14] sm:$0xf]
        %v347 = vld [vmem:[%s313 + $0x18] sm:$0xf]
        %v348 = vld [vmem:[%s313 + $0x1c] sm:$0xf]
        %v349 = vld [vmem:[%s1] sm:$0xf]
        %v350 = vld [vmem:[%s1 + $0x4] sm:$0xf]
        %v351 = vld [vmem:[%s1 + $0x8] sm:$0xf]
        %v352 = vld [vmem:[%s1 + $0xc] sm:$0xf]
        %v353 = vld [vmem:[%s1 + $0x10] sm:$0xf]
        %v354 = vld [vmem:[%s1 + $0x14] sm:$0xf]
        %v355 = vld [vmem:[%s1 + $0x18] sm:$0xf]
        %v356 = vld [vmem:[%s1 + $0x1c] sm:$0xf]
        %v357 = vld [vmem:[%s1 + $0x20] sm:$0xf]
        %v358 = vld [vmem:[%s1 + $0x24] sm:$0xf]
        %v359 = vld [vmem:[%s1 + $0x28] sm:$0xf]
        %v360 = vld [vmem:[%s1 + $0x2c] sm:$0xf]
        %v361 = vld [vmem:[%s1 + $0x30] sm:$0xf]
        %v362 = vld [vmem:[%s1 + $0x34] sm:$0xf]
        %v363 = vld [vmem:[%s1 + $0x38] sm:$0xf]
        %v364 = vld [vmem:[%s1 + $0x3c] sm:$0xf]
        %v373 = vunpack.c.l.b16 %v341
        %v374 = vunpack.c.l.b16 %v342
        %v375 = vunpack.c.l.b16 %v343
        %v376 = vunpack.c.l.b16 %v344
        %v377 = vunpack.c.l.b16 %v345
        %v378 = vunpack.c.l.b16 %v346
        %v379 = vunpack.c.l.b16 %v347
        %v380 = vunpack.c.l.b16 %v348
        %v381 = vpack.c.b16 %v374, %v373
        %v382 = vpack.c.b16 %v376, %v375
        %v383 = vpack.c.b16 %v378, %v377
        %v384 = vpack.c.b16 %v380, %v379
        %v405 = vunpack.c.l.b16 %v349
        %v406 = vunpack.c.l.b16 %v350
        %v407 = vunpack.c.l.b16 %v351
        %v408 = vunpack.c.l.b16 %v352
        %v409 = vunpack.c.l.b16 %v353
        %v410 = vunpack.c.l.b16 %v354
        %v411 = vunpack.c.l.b16 %v355
        %v412 = vunpack.c.l.b16 %v356
        %v413 = vunpack.c.l.b16 %v357
        %v414 = vunpack.c.l.b16 %v358
        %v415 = vunpack.c.l.b16 %v359
        %v416 = vunpack.c.l.b16 %v360
        %v417 = vunpack.c.l.b16 %v361
        %v418 = vunpack.c.l.b16 %v362
        %v419 = vunpack.c.l.b16 %v363
        %v420 = vunpack.c.l.b16 %v364
        %v421 = vpack.c.b16 %v406, %v405
        %v422 = vpack.c.b16 %v408, %v407
        %v423 = vpack.c.b16 %v410, %v409
        %v424 = vpack.c.b16 %v412, %v411
        %v425 = vpack.c.b16 %v414, %v413
        %v426 = vpack.c.b16 %v416, %v415
        %v427 = vpack.c.b16 %v418, %v417
        %v428 = vpack.c.b16 %v420, %v419
        %437 = vmatpush.bf16.msra.mxu0 %v428
        %438 = vmatpush.bf16.msra.mxu0 %v427
        %439 = vmatpush.bf16.msra.mxu0 %v426
        %440 = vmatpush.bf16.msra.mxu0 %v425
        %441 = vmatpush.bf16.msra.mxu0 %v424
        %442 = vmatpush.bf16.msra.mxu0 %v423
        %443 = vmatpush.bf16.msra.mxu0 %v422
        %444 = vmatpush.bf16.msra.mxu0 %v421
        %445 = vmatmul.bf16.gmra.mxu0 %v381
        %v446 = vpop.f32.mrf.mxu0
        %v447 = vadd.f32 0.0, %v446
        %v448 = vpop.f32.mrf.mxu0
        %v449 = vadd.f32 0.0, %v448
        %450 = vmatmul.bf16.gmra.mxu0 %v382
        %v451 = vpop.f32.mrf.mxu0
        %v452 = vadd.f32 0.0, %v451
        %v453 = vpop.f32.mrf.mxu0
        %v454 = vadd.f32 0.0, %v453
        %455 = vmatmul.bf16.gmra.mxu0 %v383
        %v456 = vpop.f32.mrf.mxu0
        %v457 = vadd.f32 0.0, %v456
        %v458 = vpop.f32.mrf.mxu0
        %v459 = vadd.f32 0.0, %v458
        %460 = vmatmul.bf16.gmra.mxu0 %v384
        %v461 = vpop.f32.mrf.mxu0
        %v462 = vadd.f32 0.0, %v461
        %v463 = vpop.f32.mrf.mxu0
        %v464 = vadd.f32 0.0, %v463
        %465 = vdwg.mxu0
        %s466 = scalar_lea.vmem %s313, 32 [#allocation2]
        %v467 = vld [vmem:[%s466] sm:$0xf]
        %v468 = vld [vmem:[%s466 + $0x4] sm:$0xf]
        %v469 = vld [vmem:[%s466 + $0x8] sm:$0xf]
        %v470 = vld [vmem:[%s466 + $0xc] sm:$0xf]
        %v471 = vld [vmem:[%s466 + $0x10] sm:$0xf]
        %v472 = vld [vmem:[%s466 + $0x14] sm:$0xf]
        %v473 = vld [vmem:[%s466 + $0x18] sm:$0xf]
        %v474 = vld [vmem:[%s466 + $0x1c] sm:$0xf]
        %v483 = vunpack.c.l.b16 %v467
        %v484 = vunpack.c.l.b16 %v468
        %v485 = vunpack.c.l.b16 %v469
        %v486 = vunpack.c.l.b16 %v470
        %v487 = vunpack.c.l.b16 %v471
        %v488 = vunpack.c.l.b16 %v472
        %v489 = vunpack.c.l.b16 %v473
        %v490 = vunpack.c.l.b16 %v474
        %v491 = vpack.c.b16 %v484, %v483
        %v492 = vpack.c.b16 %v486, %v485
        %v493 = vpack.c.b16 %v488, %v487
        %v494 = vpack.c.b16 %v490, %v489
        %499 = vmatpush.bf16.msra.mxu0 %v428
        %500 = vmatpush.bf16.msra.mxu0 %v427
        %501 = vmatpush.bf16.msra.mxu0 %v426
        %502 = vmatpush.bf16.msra.mxu0 %v425
        %503 = vmatpush.bf16.msra.mxu0 %v424
        %504 = vmatpush.bf16.msra.mxu0 %v423
        %505 = vmatpush.bf16.msra.mxu0 %v422
        %506 = vmatpush.bf16.msra.mxu0 %v421
        %507 = vmatmul.bf16.gmra.mxu0 %v491
        %v508 = vpop.f32.mrf.mxu0
        %v509 = vadd.f32 0.0, %v508
        %v510 = vpop.f32.mrf.mxu0
        %v511 = vadd.f32 0.0, %v510
        %512 = vmatmul.bf16.gmra.mxu0 %v492
        %v513 = vpop.f32.mrf.mxu0
        %v514 = vadd.f32 0.0, %v513
        %v515 = vpop.f32.mrf.mxu0
        %v516 = vadd.f32 0.0, %v515
        %517 = vmatmul.bf16.gmra.mxu0 %v493
        %v518 = vpop.f32.mrf.mxu0
        %v519 = vadd.f32 0.0, %v518
        %v520 = vpop.f32.mrf.mxu0
        %v521 = vadd.f32 0.0, %v520
        %522 = vmatmul.bf16.gmra.mxu0 %v494
        %v523 = vpop.f32.mrf.mxu0
        %v524 = vadd.f32 0.0, %v523
        %v525 = vpop.f32.mrf.mxu0
        %v526 = vadd.f32 0.0, %v525
        %527 = vdwg.mxu0
        %v528 = vmax.f32 %v447, %v509
        %v529 = vmax.f32 %v449, %v511
        %v530 = vmax.f32 %v452, %v514
        %v531 = vmax.f32 %v454, %v516
        %v532 = vmax.f32 %v457, %v519
        %v533 = vmax.f32 %v459, %v521
        %v534 = vmax.f32 %v462, %v524
        %v535 = vmax.f32 %v464, %v526
        %s536 = scalar_lea.vmem %s313, 64 [#allocation2]
        %v537 = vld [vmem:[%s536] sm:$0xf]
        %v538 = vld [vmem:[%s536 + $0x4] sm:$0xf]
        %v539 = vld [vmem:[%s536 + $0x8] sm:$0xf]
        %v540 = vld [vmem:[%s536 + $0xc] sm:$0xf]
        %v541 = vld [vmem:[%s536 + $0x10] sm:$0xf]
        %v542 = vld [vmem:[%s536 + $0x14] sm:$0xf]
        %v543 = vld [vmem:[%s536 + $0x18] sm:$0xf]
        %v544 = vld [vmem:[%s536 + $0x1c] sm:$0xf]
        %v553 = vunpack.c.l.b16 %v537
        %v554 = vunpack.c.l.b16 %v538
        %v555 = vunpack.c.l.b16 %v539
        %v556 = vunpack.c.l.b16 %v540
        %v557 = vunpack.c.l.b16 %v541
        %v558 = vunpack.c.l.b16 %v542
        %v559 = vunpack.c.l.b16 %v543
        %v560 = vunpack.c.l.b16 %v544
        %v561 = vpack.c.b16 %v554, %v553
        %v562 = vpack.c.b16 %v556, %v555
        %v563 = vpack.c.b16 %v558, %v557
        %v564 = vpack.c.b16 %v560, %v559
        %569 = vmatpush.bf16.msra.mxu0 %v428
        %570 = vmatpush.bf16.msra.mxu0 %v427
        %571 = vmatpush.bf16.msra.mxu0 %v426
        %572 = vmatpush.bf16.msra.mxu0 %v425
        %573 = vmatpush.bf16.msra.mxu0 %v424
        %574 = vmatpush.bf16.msra.mxu0 %v423
        %575 = vmatpush.bf16.msra.mxu0 %v422
        %576 = vmatpush.bf16.msra.mxu0 %v421
        %577 = vmatmul.bf16.gmra.mxu0 %v561
        %v578 = vpop.f32.mrf.mxu0
        %v579 = vadd.f32 0.0, %v578
        %v580 = vpop.f32.mrf.mxu0
        %v581 = vadd.f32 0.0, %v580
        %582 = vmatmul.bf16.gmra.mxu0 %v562
        %v583 = vpop.f32.mrf.mxu0
        %v584 = vadd.f32 0.0, %v583
        %v585 = vpop.f32.mrf.mxu0
        %v586 = vadd.f32 0.0, %v585
        %587 = vmatmul.bf16.gmra.mxu0 %v563
        %v588 = vpop.f32.mrf.mxu0
        %v589 = vadd.f32 0.0, %v588
        %v590 = vpop.f32.mrf.mxu0
        %v591 = vadd.f32 0.0, %v590
        %592 = vmatmul.bf16.gmra.mxu0 %v564
        %v593 = vpop.f32.mrf.mxu0
        %v594 = vadd.f32 0.0, %v593
        %v595 = vpop.f32.mrf.mxu0
        %v596 = vadd.f32 0.0, %v595
        %597 = vdwg.mxu0
        %v598 = vmax.f32 %v528, %v579
        %v599 = vmax.f32 %v529, %v581
        %v600 = vmax.f32 %v530, %v584
        %v601 = vmax.f32 %v531, %v586
        %v602 = vmax.f32 %v532, %v589
        %v603 = vmax.f32 %v533, %v591
        %v604 = vmax.f32 %v534, %v594
        %v605 = vmax.f32 %v535, %v596
        %s606 = scalar_lea.vmem %s313, 96 [#allocation2]
        %v607 = vld [vmem:[%s606] sm:$0xf]
        %v608 = vld [vmem:[%s606 + $0x4] sm:$0xf]
        %v609 = vld [vmem:[%s606 + $0x8] sm:$0xf]
        %v610 = vld [vmem:[%s606 + $0xc] sm:$0xf]
        %v611 = vld [vmem:[%s606 + $0x10] sm:$0xf]
        %v612 = vld [vmem:[%s606 + $0x14] sm:$0xf]
        %v613 = vld [vmem:[%s606 + $0x18] sm:$0xf]
        %v614 = vld [vmem:[%s606 + $0x1c] sm:$0xf]
        %v623 = vunpack.c.l.b16 %v607
        %v624 = vunpack.c.l.b16 %v608
        %v625 = vunpack.c.l.b16 %v609
        %v626 = vunpack.c.l.b16 %v610
        %v627 = vunpack.c.l.b16 %v611
        %v628 = vunpack.c.l.b16 %v612
        %v629 = vunpack.c.l.b16 %v613
        %v630 = vunpack.c.l.b16 %v614
        %v631 = vpack.c.b16 %v624, %v623
        %v632 = vpack.c.b16 %v626, %v625
        %v633 = vpack.c.b16 %v628, %v627
        %v634 = vpack.c.b16 %v630, %v629
        %639 = vmatpush.bf16.msra.mxu0 %v428
        %640 = vmatpush.bf16.msra.mxu0 %v427
        %641 = vmatpush.bf16.msra.mxu0 %v426
        %642 = vmatpush.bf16.msra.mxu0 %v425
        %643 = vmatpush.bf16.msra.mxu0 %v424
        %644 = vmatpush.bf16.msra.mxu0 %v423
        %645 = vmatpush.bf16.msra.mxu0 %v422
        %646 = vmatpush.bf16.msra.mxu0 %v421
        %647 = vmatmul.bf16.gmra.mxu0 %v631
        %v648 = vpop.f32.mrf.mxu0
        %v649 = vadd.f32 0.0, %v648
        %v650 = vpop.f32.mrf.mxu0
        %v651 = vadd.f32 0.0, %v650
        %652 = vmatmul.bf16.gmra.mxu0 %v632
        %v653 = vpop.f32.mrf.mxu0
        %v654 = vadd.f32 0.0, %v653
        %v655 = vpop.f32.mrf.mxu0
        %v656 = vadd.f32 0.0, %v655
        %657 = vmatmul.bf16.gmra.mxu0 %v633
        %v658 = vpop.f32.mrf.mxu0
        %v659 = vadd.f32 0.0, %v658
        %v660 = vpop.f32.mrf.mxu0
        %v661 = vadd.f32 0.0, %v660
        %662 = vmatmul.bf16.gmra.mxu0 %v634
        %v663 = vpop.f32.mrf.mxu0
        %v664 = vadd.f32 0.0, %v663
        %v665 = vpop.f32.mrf.mxu0
        %v666 = vadd.f32 0.0, %v665
        %667 = vdwg.mxu0
        %v668 = vmax.f32 %v598, %v649
        %v669 = vmax.f32 %v599, %v651
        %v670 = vmax.f32 %v600, %v654
        %v671 = vmax.f32 %v601, %v656
        %v672 = vmax.f32 %v602, %v659
        %v673 = vmax.f32 %v603, %v661
        %v674 = vmax.f32 %v604, %v664
        %v675 = vmax.f32 %v605, %v666
        %v676 = vld [vmem:[%s2] sm:$0x1]
        %v678 = vperm.slane %v676, 0
        %v680 = vadd.f32 %v668, %v678
        %v681 = vadd.f32 %v669, %v678
        %v682 = vadd.f32 %v670, %v678
        %v683 = vadd.f32 %v671, %v678
        %v684 = vadd.f32 %v672, %v678
        %v685 = vadd.f32 %v673, %v678
        %v686 = vadd.f32 %v674, %v678
        %v687 = vadd.f32 %v675, %v678
        %v688 = vmax.f32 %v680, 0.0
        %v689 = vmax.f32 %v681, 0.0
        %v690 = vmax.f32 %v682, 0.0
        %v691 = vmax.f32 %v683, 0.0
        %v692 = vmax.f32 %v684, 0.0
        %v693 = vmax.f32 %v685, 0.0
        %v694 = vmax.f32 %v686, 0.0
        %v695 = vmax.f32 %v687, 0.0
        %v696 = vpack.c.bf16 %v688, %v688
        %v697 = vpack.c.bf16 %v689, %v689
        %v698 = vpack.c.bf16 %v690, %v690
        %v699 = vpack.c.bf16 %v691, %v691
        %v700 = vpack.c.bf16 %v692, %v692
        %v701 = vpack.c.bf16 %v693, %v693
        %v702 = vpack.c.bf16 %v694, %v694
        %v703 = vpack.c.bf16 %v695, %v695
        %704 = vst [vmem:[%s339] sm:$0xf] %v696
        %705 = vst [vmem:[%s339 + $0x4] sm:$0xf] %v697
        %706 = vst [vmem:[%s339 + $0x8] sm:$0xf] %v698
        %707 = vst [vmem:[%s339 + $0xc] sm:$0xf] %v699
        %708 = vst [vmem:[%s339 + $0x10] sm:$0xf] %v700
        %709 = vst [vmem:[%s339 + $0x14] sm:$0xf] %v701
        %710 = vst [vmem:[%s339 + $0x18] sm:$0xf] %v702
        %711 = vst [vmem:[%s339 + $0x1c] sm:$0xf] %v703
        %s712 = smul.u32 8, %s14
        %p713 = scmp.lt.s32.totalorder %s712, 15
        %s714 = scalar_select %p713, %s712, 15
        %s715 = smul.addr %s714, 4
        %s716 = scalar_lea.vmem %s3, %s715
        // Predicated region
        $region74: #{cnn_model_l2_forward.6} parent=68 // pred_check
          %p717 = pneg %p100
        $region75: #{cnn_model_l2_forward.6} parent=68 // pred_check_branch
          %719 = sbr.rel (%p717) target = $region77
        $region76: #{cnn_model_l2_forward.6} parent=68 // pred_region
          %s720 = smul.u32 8, %s14
        $region77: #{cnn_model_l2_forward.6} parent=68 // pred_fallthru
          _
      $region69: #{cnn_model_l2_forward.6} parent=5 // pred_fallthru
        _
      %p721 = scmp.le.s32.totalorder 2, %s9
      // Predicated region
      $region78: #{cnn_model_l2_forward.6} parent=5 // pred_check
        %p722 = pneg %p721
      $region79: #{cnn_model_l2_forward.6} parent=5 // pred_check_branch
        %724 = sbr.rel (%p722) target = $region81
      $region80: #{cnn_model_l2_forward.6} parent=5 // pred_region
        %s725 = ssub.s32 %s9, 2
        // Predicated region
        $region82: #{cnn_model_l2_forward.6} parent=80 // pred_check
          %p726 = pneg %p106
        $region83: #{cnn_model_l2_forward.6} parent=80 // pred_check_branch
          %728 = sbr.rel (%p726) target = $region85
        $region84: #{cnn_model_l2_forward.6} parent=80 // pred_region
          %s729 = smul.u32 8, %s15
          %p730 = scmp.lt.s32.totalorder %s729, 15
          %s731 = scalar_select %p730, %s729, 15
          %s732 = smul.addr %s731, 4
          %s733 = scalar_lea.vmem %s3, %s732
        $region85: #{cnn_model_l2_forward.6} parent=80 // pred_fallthru
          _
      $region81: #{cnn_model_l2_forward.6} parent=5 // pred_fallthru
        _
    $region6: #{cnn_model_l2_forward.6} parent=1 // loop_footer
      %s13 = sadd.s32 1, %s9
    $region7: #{cnn_model_l2_forward.6} parent=1 // loop_footer_branch
      %8 = sbr.rel target = $region3
    $region8: #{cnn_model_l2_forward.6} parent=1 // loop_exit
      _

// kernel: cnn_model_l2_forward.7
$region0: #{cnn_model_l2_forward.7}
  #allocation0 [shape = 'u32[]', space=smem, size = 0x4, offset = 0x4, fixed_abs, tag = 'smem constant byte address 0x4 - core index']
  #allocation1 [shape = 'u32[72,128]{1,0:T(1,128)}', space=vmem, size = 0x9000, scoped, tag = 'internal scratch']
  %s0 = inlined_call_operand.vmem [shape: bf16[4,32,256], index: 0, kind: input, shape index: {}]
  %s1 = inlined_call_operand.vmem [shape: bf16[256,128], index: 1, kind: input, shape index: {}]
  %s2 = inlined_call_operand.vmem [shape: f32[1,128], index: 2, kind: input, shape index: {}]
  %s3 = inlined_call_operand.vmem [shape: bf16[32,128], index: 3, kind: output, shape index: {}]
  %s4 = sld [smem:[#allocation0]]
  $region83: #{cnn_model_l2_forward.7} parent=0
    _
  %s6 = ssub.s32 1, %s4
  %s7 = scalar_select 0, %s6, %s4
  $region1: #{cnn_model_l2_forward.7} parent=0
    #allocation2 [shape = 'u8[65536]{0}', space=vmem, size = 0x10000, scoped, tag = 'input window, operand 0']
    loop: start=0, step=1, limit=4
    $region2: #{cnn_model_l2_forward.7} parent=1 // loop_pre_header
      _
    $region3: #{cnn_model_l2_forward.7} parent=1 // loop_header
      %s9 = sphi 0, %s13
      %p10 = scmp.ge.s32.totalorder %s9, 4
      %s19 = sphi 0, %s21
      %s22 = sphi 0, %s19
      %s23 = sphi 0, %s22
      %s39 = sphi 0, %s23
      %s43 = sphi 0, %s43
      %s45 = sphi 0, %s43
      %s46 = sphi 0, %s45
      %s60 = sphi 0, %s46
      %s64 = sphi 0, %s64
      %s66 = sphi 0, %s64
      %s67 = sphi 0, %s66
      %s81 = sphi 0, %s67
      %s87 = sphi 0, %s89
      %s90 = sphi 0, %s87
      %s91 = sphi 0, %s90
      %s107 = sphi 0, %s91
    $region4: #{cnn_model_l2_forward.7} parent=1 // loop_header_branch
      %12 = sbr.rel (%p10) target = $region8
    $region5: #{cnn_model_l2_forward.7} parent=1 // loop_body
      %s14 = ssub.s32 %s9, 1
      %s15 = ssub.s32 %s9, 2
      %s16 = sadd.s32 %s9, 1
      %s17 = ssub.s32 %s9, %s16
      %p18 = scmp.eq.s32.totalorder %s17, 0
      %s20 = sadd.s32 %s19, 1
      %s21 = scalar_select %p18, %s19, %s20
      %p24 = pneg %p18
      %p25 = scmp.eq.s32.totalorder %s9, 1
      %p26 = por %p24, %p25
      %p27 = scmp.ne.s32.totalorder %s19, %s22
      %p28 = scmp.eq.s32.totalorder %s9, 0
      %p29 = por %p27, %p28
      %p30 = scmp.ne.s32.totalorder %s19, %s22
      %p31 = scmp.eq.s32.totalorder %s14, 1
      %p32 = por %p30, %p31
      %p33 = scmp.ne.s32.totalorder %s22, %s23
      %p34 = scmp.eq.s32.totalorder %s14, 0
      %p35 = por %p33, %p34
      %p36 = scmp.ne.s32.totalorder %s22, %s23
      %p37 = scmp.eq.s32.totalorder %s15, 1
      %p38 = por %p36, %p37
      %p40 = scmp.ne.s32.totalorder %s23, %s39
      %p41 = scmp.eq.s32.totalorder %s15, 0
      %p42 = por %p40, %p41
      %s44 = sadd.s32 %s43, 1
      %p47 = scmp.eq.s32.totalorder %s9, 1
      %p48 = scmp.ne.s32.totalorder %s43, %s45
      %p49 = scmp.eq.s32.totalorder %s9, 0
      %p50 = por %p48, %p49
      %p51 = scmp.ne.s32.totalorder %s43, %s45
      %p52 = scmp.eq.s32.totalorder %s14, 1
      %p53 = por %p51, %p52
      %p54 = scmp.ne.s32.totalorder %s45, %s46
      %p55 = scmp.eq.s32.totalorder %s14, 0
      %p56 = por %p54, %p55
      %p57 = scmp.ne.s32.totalorder %s45, %s46
      %p58 = scmp.eq.s32.totalorder %s15, 1
      %p59 = por %p57, %p58
      %p61 = scmp.ne.s32.totalorder %s46, %s60
      %p62 = scmp.eq.s32.totalorder %s15, 0
      %p63 = por %p61, %p62
      %s65 = sadd.s32 %s64, 1
      %p68 = scmp.eq.s32.totalorder %s9, 1
      %p69 = scmp.ne.s32.totalorder %s64, %s66
      %p70 = scmp.eq.s32.totalorder %s9, 0
      %p71 = por %p69, %p70
      %p72 = scmp.ne.s32.totalorder %s64, %s66
      %p73 = scmp.eq.s32.totalorder %s14, 1
      %p74 = por %p72, %p73
      %p75 = scmp.ne.s32.totalorder %s66, %s67
      %p76 = scmp.eq.s32.totalorder %s14, 0
      %p77 = por %p75, %p76
      %p78 = scmp.ne.s32.totalorder %s66, %s67
      %p79 = scmp.eq.s32.totalorder %s15, 1
      %p80 = por %p78, %p79
      %p82 = scmp.ne.s32.totalorder %s67, %s81
      %p83 = scmp.eq.s32.totalorder %s15, 0
      %p84 = por %p82, %p83
      %s85 = ssub.s32 %s9, %s16
      %p86 = scmp.eq.s32.totalorder %s85, 0
      %s88 = sadd.s32 %s87, 1
      %s89 = scalar_select %p86, %s87, %s88
      %p92 = pneg %p86
      %p93 = scmp.eq.s32.totalorder %s9, 1
      %p94 = por %p92, %p93
      %p95 = scmp.ne.s32.totalorder %s87, %s90
      %p96 = scmp.eq.s32.totalorder %s9, 0
      %p97 = por %p95, %p96
      %p98 = scmp.ne.s32.totalorder %s87, %s90
      %p99 = scmp.eq.s32.totalorder %s14, 1
      %p100 = por %p98, %p99
      %p101 = scmp.ne.s32.totalorder %s90, %s91
      %p102 = scmp.eq.s32.totalorder %s14, 0
      %p103 = por %p101, %p102
      %p104 = scmp.ne.s32.totalorder %s90, %s91
      %p105 = scmp.eq.s32.totalorder %s15, 1
      %p106 = por %p104, %p105
      %p108 = scmp.ne.s32.totalorder %s91, %s107
      %p109 = scmp.eq.s32.totalorder %s15, 0
      %p110 = por %p108, %p109
      %p111 = scmp.le.s32.totalorder 1, %s9
      %p112 = scmp.lt.s32.totalorder %s9, 3
      %p113 = pnand %p111, %p112
      %p114 = pneg %p113
      // Predicated region
      $region9: #{cnn_model_l2_forward.7} parent=5 // pred_check
        _
      $region10: #{cnn_model_l2_forward.7} parent=5 // pred_check_branch
        %116 = sbr.rel (%p113) target = $region12
      $region11: #{cnn_model_l2_forward.7} parent=5 // pred_region
        %s117 = ssub.s32 %s9, 1
        // Predicated region
        $region13: #{cnn_model_l2_forward.7} parent=11 // pred_check
          %p118 = pneg %p56
        $region14: #{cnn_model_l2_forward.7} parent=11 // pred_check_branch
          %120 = sbr.rel (%p118) target = $region16
        $region15: #{cnn_model_l2_forward.7} parent=11 // pred_region
          _
        $region16: #{cnn_model_l2_forward.7} parent=11 // pred_fallthru
          _
        // Predicated region
        $region17: #{cnn_model_l2_forward.7} parent=11 // pred_check
          %p121 = pneg %p77
        $region18: #{cnn_model_l2_forward.7} parent=11 // pred_check_branch
          %123 = sbr.rel (%p121) target = $region20
        $region19: #{cnn_model_l2_forward.7} parent=11 // pred_region
          _
        $region20: #{cnn_model_l2_forward.7} parent=11 // pred_fallthru
          _
      $region12: #{cnn_model_l2_forward.7} parent=5 // pred_fallthru
        _
      %p124 = scmp.lt.s32.totalorder %s9, 2
      // Predicated region
      $region21: #{cnn_model_l2_forward.7} parent=5 // pred_check
        %p125 = pneg %p124
      $region22: #{cnn_model_l2_forward.7} parent=5 // pred_check_branch
        %127 = sbr.rel (%p125) target = $region24
      $region23: #{cnn_model_l2_forward.7} parent=5 // pred_region
        // Predicated region
        $region25: #{cnn_model_l2_forward.7} parent=23 // pred_check
          %p128 = pneg %p29
        $region26: #{cnn_model_l2_forward.7} parent=23 // pred_check_branch
          %130 = sbr.rel (%p128) target = $region28
        $region27: #{cnn_model_l2_forward.7} parent=23 // pred_region
          %s131 = sand.u32 %s19, 1
          %s132 = sand.u32 %s19, 1
          %s133 = smul.addr %s132, 64
          %s134 = scalar_lea.vmem [#allocation2], %s133
          %s135 = smul.u32 2, %s9
          %s136 = smul.addr %s135, 2
          %s137 = smul.addr %s136, 4
          %s138 = scalar_lea.vmem %s0, %s137
          // Predicated region
          $region29: #{cnn_model_l2_forward.7} parent=27 // pred_check
            _
          $region30: #{cnn_model_l2_forward.7} parent=27 // pred_check_branch
            %140 = sbr.rel (0) target = $region32
          $region31: #{cnn_model_l2_forward.7} parent=27 // pred_region
            // Predicated region
            $region33: #{cnn_model_l2_forward.7} parent=31 // pred_check
              _
            $region34: #{cnn_model_l2_forward.7} parent=31 // pred_check_branch
              %142 = sbr.rel (0) target = $region36
            $region35: #{cnn_model_l2_forward.7} parent=31 // pred_region
              // Predicated region
              $region48: #{cnn_model_l2_forward.7} parent=35 // pred_check
                _
              $region49: #{cnn_model_l2_forward.7} parent=35 // pred_check_branch
                %172 = sbr.rel (0) target = $region51
              $region50: #{cnn_model_l2_forward.7} parent=35 // pred_region
                loop: start=0, step=1, limit=1
                $region52: #{cnn_model_l2_forward.7} parent=50 // loop_pre_header
                  _
                $region53: #{cnn_model_l2_forward.7} parent=50 // loop_header
                  %s174 = sphi 0, %s178
                  %p175 = scmp.ge.s32.totalorder %s174, 1
                  %s179 = sphi %s138, %s138
                  %s180 = sphi %s134, %s134
                $region54: #{cnn_model_l2_forward.7} parent=50 // loop_header_branch
                  %177 = sbr.rel (%p175) target = $region58
                $region55: #{cnn_model_l2_forward.7} parent=50 // loop_body
                  %v181 = vld [vmem:[%s179] sm:$0xff]
                  %182 = vst [vmem:[%s180] sm:$0xff] %v181
                  %v183 = vld [vmem:[%s179 + $0x8] sm:$0xff]
                  %184 = vst [vmem:[%s180 + $0x8] sm:$0xff] %v183
                  %v185 = vld [vmem:[%s179 + $0x20] sm:$0xff]
                  %186 = vst [vmem:[%s180 + $0x10] sm:$0xff] %v185
                  %v187 = vld [vmem:[%s179 + $0x28] sm:$0xff]
                  %188 = vst [vmem:[%s180 + $0x18] sm:$0xff] %v187
                  %v189 = vld [vmem:[%s179 + $0x40] sm:$0xff]
                  %190 = vst [vmem:[%s180 + $0x20] sm:$0xff] %v189
                  %v191 = vld [vmem:[%s179 + $0x48] sm:$0xff]
                  %192 = vst [vmem:[%s180 + $0x28] sm:$0xff] %v191
                  %v193 = vld [vmem:[%s179 + $0x60] sm:$0xff]
                  %194 = vst [vmem:[%s180 + $0x30] sm:$0xff] %v193
                  %v195 = vld [vmem:[%s179 + $0x68] sm:$0xff]
                  %196 = vst [vmem:[%s180 + $0x38] sm:$0xff] %v195
                $region56: #{cnn_model_l2_forward.7} parent=50 // loop_footer
                  %s178 = sadd.s32 1, %s174
                $region57: #{cnn_model_l2_forward.7} parent=50 // loop_footer_branch
                  %173 = sbr.rel target = $region53
                $region58: #{cnn_model_l2_forward.7} parent=50 // loop_exit
                  _
              $region51: #{cnn_model_l2_forward.7} parent=35 // pred_fallthru
                _
              // Predicated region
              $region59: #{cnn_model_l2_forward.7} parent=35 // pred_check
                _
              $region60: #{cnn_model_l2_forward.7} parent=35 // pred_check_branch
                %198 = sbr.rel target = $region62
              $region61: #{cnn_model_l2_forward.7} parent=35 // pred_region
                _
              $region62: #{cnn_model_l2_forward.7} parent=35 // pred_fallthru
                _
            $region36: #{cnn_model_l2_forward.7} parent=31 // pred_fallthru
              _
            // Predicated region
            $region37: #{cnn_model_l2_forward.7} parent=31 // pred_check
              _
            $region38: #{cnn_model_l2_forward.7} parent=31 // pred_check_branch
              %144 = sbr.rel target = $region40
            $region39: #{cnn_model_l2_forward.7} parent=31 // pred_region
              %s146 = ssub.s32 256, 1
              loop: start=0, step=1, limit=1
              $region41: #{cnn_model_l2_forward.7} parent=39 // loop_pre_header
                _
              $region42: #{cnn_model_l2_forward.7} parent=39 // loop_header
                %s148 = sphi 0, %s152
                %p149 = scmp.ge.s32.totalorder %s148, 1
                %s153 = sphi %s138, %s138
                %s154 = sphi %s134, %s134
              $region43: #{cnn_model_l2_forward.7} parent=39 // loop_header_branch
                %151 = sbr.rel (%p149) target = $region47
              $region44: #{cnn_model_l2_forward.7} parent=39 // loop_body
                %v155 = vld [vmem:[%s153] sm:%s146]
                %156 = vst [vmem:[%s154] sm:%s146] %v155
                %v157 = vld [vmem:[%s153 + $0x8] sm:%s146]
                %158 = vst [vmem:[%s154 + $0x8] sm:%s146] %v157
                %v159 = vld [vmem:[%s153 + $0x20] sm:%s146]
                %160 = vst [vmem:[%s154 + $0x10] sm:%s146] %v159
                %v161 = vld [vmem:[%s153 + $0x28] sm:%s146]
                %162 = vst [vmem:[%s154 + $0x18] sm:%s146] %v161
                %v163 = vld [vmem:[%s153 + $0x40] sm:%s146]
                %164 = vst [vmem:[%s154 + $0x20] sm:%s146] %v163
                %v165 = vld [vmem:[%s153 + $0x48] sm:%s146]
                %166 = vst [vmem:[%s154 + $0x28] sm:%s146] %v165
                %v167 = vld [vmem:[%s153 + $0x60] sm:%s146]
                %168 = vst [vmem:[%s154 + $0x30] sm:%s146] %v167
                %v169 = vld [vmem:[%s153 + $0x68] sm:%s146]
                %170 = vst [vmem:[%s154 + $0x38] sm:%s146] %v169
              $region45: #{cnn_model_l2_forward.7} parent=39 // loop_footer
                %s152 = sadd.s32 1, %s148
              $region46: #{cnn_model_l2_forward.7} parent=39 // loop_footer_branch
                %147 = sbr.rel target = $region42
              $region47: #{cnn_model_l2_forward.7} parent=39 // loop_exit
                _
            $region40: #{cnn_model_l2_forward.7} parent=31 // pred_fallthru
              _
          $region32: #{cnn_model_l2_forward.7} parent=27 // pred_fallthru
            _
          %199 = vnop
        $region28: #{cnn_model_l2_forward.7} parent=23 // pred_fallthru
          _
      $region24: #{cnn_model_l2_forward.7} parent=5 // pred_fallthru
        _
      %p200 = scmp.le.s32.totalorder 1, %s9
      %p201 = scmp.lt.s32.totalorder %s9, 3
      %p202 = pnand %p200, %p201
      %p203 = pneg %p202
      // Predicated region
      $region63: #{cnn_model_l2_forward.7} parent=5 // pred_check
        _
      $region64: #{cnn_model_l2_forward.7} parent=5 // pred_check_branch
        %205 = sbr.rel (%p202) target = $region66
      $region65: #{cnn_model_l2_forward.7} parent=5 // pred_region
        %s206 = ssub.s32 %s9, 1
        %s207 = sand.u32 %s22, 1
        %s208 = sand.u32 %s22, 1
        %s209 = smul.addr %s208, 64
        %s210 = scalar_lea.vmem [#allocation2], %s209
        // Predicated region
        $region67: #{cnn_model_l2_forward.7} parent=65 // pred_check
          %p211 = pneg %p35
        $region68: #{cnn_model_l2_forward.7} parent=65 // pred_check_branch
          %213 = sbr.rel (%p211) target = $region70
        $region69: #{cnn_model_l2_forward.7} parent=65 // pred_region
          _
        $region70: #{cnn_model_l2_forward.7} parent=65 // pred_fallthru
          _
        %s214 = sand.u32 %s22, 1
        %s215 = sand.u32 %s22, 1
        %s216 = smul.addr %s215, 64
        %s217 = scalar_lea.vmem [#allocation2], %s216
        %p218 = pneg %p35
        %p219 = pneg %p32
        %p220 = pneg %p56
        %p221 = pneg %p53
        %p222 = pneg %p77
        %p223 = pneg %p74
        %p224 = pneg %p103
        %p225 = pneg %p100
        %s226 = smul.u32 2, %s14
        %p227 = scmp.lt.s32.totalorder %s226, 3
        %s228 = scalar_select %p227, %s226, 3
        %s229 = smul.addr %s228, 4
        %s230 = scalar_lea.vmem %s3, %s229
        %s231 = smul.u32 2, %s14
        %s232 = smul.u32 2, %s14
        %p233 = scmp.lt.s32.totalorder %s232, 3
        %s234 = scalar_select %p233, %s232, 3
        %s235 = smul.addr %s234, 4
        %s236 = scalar_lea.vmem %s3, %s235
        %s237 = smul.u32 2, %s14
        %v238 = vld [vmem:[%s210] sm:$0xff]
        %v239 = vld [vmem:[%s210 + $0x8] sm:$0xff]
        %v240 = vld [vmem:[%s1] sm:$0xf]
        %v241 = vld [vmem:[%s1 + $0x4] sm:$0xf]
        %v242 = vld [vmem:[%s1 + $0x8] sm:$0xf]
        %v243 = vld [vmem:[%s1 + $0xc] sm:$0xf]
        %v244 = vld [vmem:[%s1 + $0x10] sm:$0xf]
        %v245 = vld [vmem:[%s1 + $0x14] sm:$0xf]
        %v246 = vld [vmem:[%s1 + $0x18] sm:$0xf]
        %v247 = vld [vmem:[%s1 + $0x1c] sm:$0xf]
        %v248 = vld [vmem:[%s1 + $0x20] sm:$0xf]
        %v249 = vld [vmem:[%s1 + $0x24] sm:$0xf]
        %v250 = vld [vmem:[%s1 + $0x28] sm:$0xf]
        %v251 = vld [vmem:[%s1 + $0x2c] sm:$0xf]
        %v252 = vld [vmem:[%s1 + $0x30] sm:$0xf]
        %v253 = vld [vmem:[%s1 + $0x34] sm:$0xf]
        %v254 = vld [vmem:[%s1 + $0x38] sm:$0xf]
        %v255 = vld [vmem:[%s1 + $0x3c] sm:$0xf]
        %v256 = vld [vmem:[%s1 + $0x40] sm:$0xf]
        %v257 = vld [vmem:[%s1 + $0x44] sm:$0xf]
        %v258 = vld [vmem:[%s1 + $0x48] sm:$0xf]
        %v259 = vld [vmem:[%s1 + $0x4c] sm:$0xf]
        %v260 = vld [vmem:[%s1 + $0x50] sm:$0xf]
        %v261 = vld [vmem:[%s1 + $0x54] sm:$0xf]
        %v262 = vld [vmem:[%s1 + $0x58] sm:$0xf]
        %v263 = vld [vmem:[%s1 + $0x5c] sm:$0xf]
        %v264 = vld [vmem:[%s1 + $0x60] sm:$0xf]
        %v265 = vld [vmem:[%s1 + $0x64] sm:$0xf]
        %v266 = vld [vmem:[%s1 + $0x68] sm:$0xf]
        %v267 = vld [vmem:[%s1 + $0x6c] sm:$0xf]
        %v268 = vld [vmem:[%s1 + $0x70] sm:$0xf]
        %v269 = vld [vmem:[%s1 + $0x74] sm:$0xf]
        %v270 = vld [vmem:[%s1 + $0x78] sm:$0xf]
        %v271 = vld [vmem:[%s1 + $0x7c] sm:$0xf]
        %v274 = vunpack.c.l.b16 %v238
        %v275 = vunpack.c.h.b16 %v238
        %v276 = vunpack.c.l.b16 %v239
        %v277 = vunpack.c.h.b16 %v239
        %v278 = vpack.c.b16 %v276, %v274
        %v279 = vpack.c.b16 %v277, %v275
        %v314 = vunpack.c.l.b16 %v240
        %v315 = vunpack.c.l.b16 %v241
        %v316 = vunpack.c.l.b16 %v242
        %v317 = vunpack.c.l.b16 %v243
        %v318 = vunpack.c.l.b16 %v244
        %v319 = vunpack.c.l.b16 %v245
        %v320 = vunpack.c.l.b16 %v246
        %v321 = vunpack.c.l.b16 %v247
        %v322 = vunpack.c.l.b16 %v248
        %v323 = vunpack.c.l.b16 %v249
        %v324 = vunpack.c.l.b16 %v250
        %v325 = vunpack.c.l.b16 %v251
        %v326 = vunpack.c.l.b16 %v252
        %v327 = vunpack.c.l.b16 %v253
        %v328 = vunpack.c.l.b16 %v254
        %v329 = vunpack.c.l.b16 %v255
        %v330 = vunpack.c.l.b16 %v256
        %v331 = vunpack.c.l.b16 %v257
        %v332 = vunpack.c.l.b16 %v258
        %v333 = vunpack.c.l.b16 %v259
        %v334 = vunpack.c.l.b16 %v260
        %v335 = vunpack.c.l.b16 %v261
        %v336 = vunpack.c.l.b16 %v262
        %v337 = vunpack.c.l.b16 %v263
        %v338 = vunpack.c.l.b16 %v264
        %v339 = vunpack.c.l.b16 %v265
        %v340 = vunpack.c.l.b16 %v266
        %v341 = vunpack.c.l.b16 %v267
        %v342 = vunpack.c.l.b16 %v268
        %v343 = vunpack.c.l.b16 %v269
        %v344 = vunpack.c.l.b16 %v270
        %v345 = vunpack.c.l.b16 %v271
        %v346 = vpack.c.b16 %v315, %v314
        %v347 = vpack.c.b16 %v317, %v316
        %v348 = vpack.c.b16 %v319, %v318
        %v349 = vpack.c.b16 %v321, %v320
        %v350 = vpack.c.b16 %v323, %v322
        %v351 = vpack.c.b16 %v325, %v324
        %v352 = vpack.c.b16 %v327, %v326
        %v353 = vpack.c.b16 %v329, %v328
        %v354 = vpack.c.b16 %v331, %v330
        %v355 = vpack.c.b16 %v333, %v332
        %v356 = vpack.c.b16 %v335, %v334
        %v357 = vpack.c.b16 %v337, %v336
        %v358 = vpack.c.b16 %v339, %v338
        %v359 = vpack.c.b16 %v341, %v340
        %v360 = vpack.c.b16 %v343, %v342
        %v361 = vpack.c.b16 %v345, %v344
        %378 = vmatpush.bf16.msra.mxu0 %v353
        %379 = vmatpush.bf16.msra.mxu0 %v352
        %380 = vmatpush.bf16.msra.mxu0 %v351
        %381 = vmatpush.bf16.msra.mxu0 %v350
        %382 = vmatpush.bf16.msra.mxu0 %v349
        %383 = vmatpush.bf16.msra.mxu0 %v348
        %384 = vmatpush.bf16.msra.mxu0 %v347
        %385 = vmatpush.bf16.msra.mxu0 %v346
        %386 = vmatmul.bf16.gmra.mxu0 %v278
        %v387 = vpop.f32.mrf.mxu0
        %v388 = vadd.f32 0.0, %v387
        %v389 = vpop.f32.mrf.mxu0
        %v390 = vadd.f32 0.0, %v389
        %391 = vdwg.mxu0
        %392 = vmatpush.bf16.msra.mxu0 %v361
        %393 = vmatpush.bf16.msra.mxu0 %v360
        %394 = vmatpush.bf16.msra.mxu0 %v359
        %395 = vmatpush.bf16.msra.mxu0 %v358
        %396 = vmatpush.bf16.msra.mxu0 %v357
        %397 = vmatpush.bf16.msra.mxu0 %v356
        %398 = vmatpush.bf16.msra.mxu0 %v355
        %399 = vmatpush.bf16.msra.mxu0 %v354
        %400 = vmatmul.bf16.gmra.mxu0 %v279
        %v401 = vpop.f32.mrf.mxu0
        %v402 = vadd.f32 %v388, %v401
        %v403 = vpop.f32.mrf.mxu0
        %v404 = vadd.f32 %v390, %v403
        %405 = vdwg.mxu0
        %s406 = scalar_lea.vmem %s210, 16 [#allocation2]
        %v407 = vld [vmem:[%s406] sm:$0xff]
        %v408 = vld [vmem:[%s406 + $0x8] sm:$0xff]
        %v411 = vunpack.c.l.b16 %v407
        %v412 = vunpack.c.h.b16 %v407
        %v413 = vunpack.c.l.b16 %v408
        %v414 = vunpack.c.h.b16 %v408
        %v415 = vpack.c.b16 %v413, %v411
        %v416 = vpack.c.b16 %v414, %v412
        %419 = vmatpush.bf16.msra.mxu0 %v353
        %420 = vmatpush.bf16.msra.mxu0 %v352
        %421 = vmatpush.bf16.msra.mxu0 %v351
        %422 = vmatpush.bf16.msra.mxu0 %v350
        %423 = vmatpush.bf16.msra.mxu0 %v349
        %424 = vmatpush.bf16.msra.mxu0 %v348
        %425 = vmatpush.bf16.msra.mxu0 %v347
        %426 = vmatpush.bf16.msra.mxu0 %v346
        %427 = vmatmul.bf16.gmra.mxu0 %v415
        %v428 = vpop.f32.mrf.mxu0
        %v429 = vadd.f32 0.0, %v428
        %v430 = vpop.f32.mrf.mxu0
        %v431 = vadd.f32 0.0, %v430
        %432 = vdwg.mxu0
        %433 = vmatpush.bf16.msra.mxu0 %v361
        %434 = vmatpush.bf16.msra.mxu0 %v360
        %435 = vmatpush.bf16.msra.mxu0 %v359
        %436 = vmatpush.bf16.msra.mxu0 %v358
        %437 = vmatpush.bf16.msra.mxu0 %v357
        %438 = vmatpush.bf16.msra.mxu0 %v356
        %439 = vmatpush.bf16.msra.mxu0 %v355
        %440 = vmatpush.bf16.msra.mxu0 %v354
        %441 = vmatmul.bf16.gmra.mxu0 %v416
        %v442 = vpop.f32.mrf.mxu0
        %v443 = vadd.f32 %v429, %v442
        %v444 = vpop.f32.mrf.mxu0
        %v445 = vadd.f32 %v431, %v444
        %446 = vdwg.mxu0
        %v447 = vmax.f32 %v402, %v443
        %v448 = vmax.f32 %v404, %v445
        %s449 = scalar_lea.vmem %s210, 32 [#allocation2]
        %v450 = vld [vmem:[%s449] sm:$0xff]
        %v451 = vld [vmem:[%s449 + $0x8] sm:$0xff]
        %v454 = vunpack.c.l.b16 %v450
        %v455 = vunpack.c.h.b16 %v450
        %v456 = vunpack.c.l.b16 %v451
        %v457 = vunpack.c.h.b16 %v451
        %v458 = vpack.c.b16 %v456, %v454
        %v459 = vpack.c.b16 %v457, %v455
        %462 = vmatpush.bf16.msra.mxu0 %v353
        %463 = vmatpush.bf16.msra.mxu0 %v352
        %464 = vmatpush.bf16.msra.mxu0 %v351
        %465 = vmatpush.bf16.msra.mxu0 %v350
        %466 = vmatpush.bf16.msra.mxu0 %v349
        %467 = vmatpush.bf16.msra.mxu0 %v348
        %468 = vmatpush.bf16.msra.mxu0 %v347
        %469 = vmatpush.bf16.msra.mxu0 %v346
        %470 = vmatmul.bf16.gmra.mxu0 %v458
        %v471 = vpop.f32.mrf.mxu0
        %v472 = vadd.f32 0.0, %v471
        %v473 = vpop.f32.mrf.mxu0
        %v474 = vadd.f32 0.0, %v473
        %475 = vdwg.mxu0
        %476 = vmatpush.bf16.msra.mxu0 %v361
        %477 = vmatpush.bf16.msra.mxu0 %v360
        %478 = vmatpush.bf16.msra.mxu0 %v359
        %479 = vmatpush.bf16.msra.mxu0 %v358
        %480 = vmatpush.bf16.msra.mxu0 %v357
        %481 = vmatpush.bf16.msra.mxu0 %v356
        %482 = vmatpush.bf16.msra.mxu0 %v355
        %483 = vmatpush.bf16.msra.mxu0 %v354
        %484 = vmatmul.bf16.gmra.mxu0 %v459
        %v485 = vpop.f32.mrf.mxu0
        %v486 = vadd.f32 %v472, %v485
        %v487 = vpop.f32.mrf.mxu0
        %v488 = vadd.f32 %v474, %v487
        %489 = vdwg.mxu0
        %v490 = vmax.f32 %v447, %v486
        %v491 = vmax.f32 %v448, %v488
        %s492 = scalar_lea.vmem %s210, 48 [#allocation2]
        %v493 = vld [vmem:[%s492] sm:$0xff]
        %v494 = vld [vmem:[%s492 + $0x8] sm:$0xff]
        %v497 = vunpack.c.l.b16 %v493
        %v498 = vunpack.c.h.b16 %v493
        %v499 = vunpack.c.l.b16 %v494
        %v500 = vunpack.c.h.b16 %v494
        %v501 = vpack.c.b16 %v499, %v497
        %v502 = vpack.c.b16 %v500, %v498
        %505 = vmatpush.bf16.msra.mxu0 %v353
        %506 = vmatpush.bf16.msra.mxu0 %v352
        %507 = vmatpush.bf16.msra.mxu0 %v351
        %508 = vmatpush.bf16.msra.mxu0 %v350
        %509 = vmatpush.bf16.msra.mxu0 %v349
        %510 = vmatpush.bf16.msra.mxu0 %v348
        %511 = vmatpush.bf16.msra.mxu0 %v347
        %512 = vmatpush.bf16.msra.mxu0 %v346
        %513 = vmatmul.bf16.gmra.mxu0 %v501
        %v514 = vpop.f32.mrf.mxu0
        %v515 = vadd.f32 0.0, %v514
        %v516 = vpop.f32.mrf.mxu0
        %v517 = vadd.f32 0.0, %v516
        %518 = vdwg.mxu0
        %519 = vmatpush.bf16.msra.mxu0 %v361
        %520 = vmatpush.bf16.msra.mxu0 %v360
        %521 = vmatpush.bf16.msra.mxu0 %v359
        %522 = vmatpush.bf16.msra.mxu0 %v358
        %523 = vmatpush.bf16.msra.mxu0 %v357
        %524 = vmatpush.bf16.msra.mxu0 %v356
        %525 = vmatpush.bf16.msra.mxu0 %v355
        %526 = vmatpush.bf16.msra.mxu0 %v354
        %527 = vmatmul.bf16.gmra.mxu0 %v502
        %v528 = vpop.f32.mrf.mxu0
        %v529 = vadd.f32 %v515, %v528
        %v530 = vpop.f32.mrf.mxu0
        %v531 = vadd.f32 %v517, %v530
        %532 = vdwg.mxu0
        %v533 = vmax.f32 %v490, %v529
        %v534 = vmax.f32 %v491, %v531
        %v535 = vld [vmem:[%s2] sm:$0x1]
        %v537 = vperm.slane %v535, 0
        %v539 = vadd.f32 %v533, %v537
        %v540 = vadd.f32 %v534, %v537
        %v541 = vmax.f32 %v539, 0.0
        %v542 = vmax.f32 %v540, 0.0
        %v543 = vpack.c.bf16 %v541, %v541
        %v544 = vpack.c.bf16 %v542, %v542
        %545 = vst [vmem:[%s236] sm:$0xf] %v543
        %546 = vst [vmem:[%s236 + $0x4] sm:$0xf] %v544
        %s547 = smul.u32 2, %s14
        %p548 = scmp.lt.s32.totalorder %s547, 3
        %s549 = scalar_select %p548, %s547, 3
        %s550 = smul.addr %s549, 4
        %s551 = scalar_lea.vmem %s3, %s550
        // Predicated region
        $region71: #{cnn_model_l2_forward.7} parent=65 // pred_check
          %p552 = pneg %p100
        $region72: #{cnn_model_l2_forward.7} parent=65 // pred_check_branch
          %554 = sbr.rel (%p552) target = $region74
        $region73: #{cnn_model_l2_forward.7} parent=65 // pred_region
          %s555 = smul.u32 2, %s14
        $region74: #{cnn_model_l2_forward.7} parent=65 // pred_fallthru
          _
      $region66: #{cnn_model_l2_forward.7} parent=5 // pred_fallthru
        _
      %p556 = scmp.le.s32.totalorder 2, %s9
      // Predicated region
      $region75: #{cnn_model_l2_forward.7} parent=5 // pred_check
        %p557 = pneg %p556
      $region76: #{cnn_model_l2_forward.7} parent=5 // pred_check_branch
        %559 = sbr.rel (%p557) target = $region78
      $region77: #{cnn_model_l2_forward.7} parent=5 // pred_region
        %s560 = ssub.s32 %s9, 2
        // Predicated region
        $region79: #{cnn_model_l2_forward.7} parent=77 // pred_check
          %p561 = pneg %p106
        $region80: #{cnn_model_l2_forward.7} parent=77 // pred_check_branch
          %563 = sbr.rel (%p561) target = $region82
        $region81: #{cnn_model_l2_forward.7} parent=77 // pred_region
          %s564 = smul.u32 2, %s15
          %p565 = scmp.lt.s32.totalorder %s564, 3
          %s566 = scalar_select %p565, %s564, 3
          %s567 = smul.addr %s566, 4
          %s568 = scalar_lea.vmem %s3, %s567
        $region82: #{cnn_model_l2_forward.7} parent=77 // pred_fallthru
          _
      $region78: #{cnn_model_l2_forward.7} parent=5 // pred_fallthru
        _
    $region6: #{cnn_model_l2_forward.7} parent=1 // loop_footer
      %s13 = sadd.s32 1, %s9
    $region7: #{cnn_model_l2_forward.7} parent=1 // loop_footer_branch
      %8 = sbr.rel target = $region3
    $region8: #{cnn_model_l2_forward.7} parent=1 // loop_exit
      _

// kernel: cnn_model_l2_forward.8
$region0: #{cnn_model_l2_forward.8}
  #allocation0 [shape = 'u32[]', space=smem, size = 0x4, offset = 0x4, fixed_abs, tag = 'smem constant byte address 0x4 - core index']
  #allocation1 [shape = 'u32[72,128]{1,0:T(1,128)}', space=vmem, size = 0x9000, scoped, tag = 'internal scratch']
  %s0 = inlined_call_operand.vmem [shape: bf16[4,8,896], index: 0, kind: input, shape index: {}]
  %s1 = inlined_call_operand.vmem [shape: bf16[896,128], index: 1, kind: input, shape index: {}]
  %s2 = inlined_call_operand.vmem [shape: f32[1,128], index: 2, kind: input, shape index: {}]
  %s3 = inlined_call_operand.vmem [shape: bf16[8,128], index: 3, kind: output, shape index: {}]
  %s4 = sld [smem:[#allocation0]]
  $region22: #{cnn_model_l2_forward.8} parent=0
    _
  %s6 = ssub.s32 1, %s4
  %s7 = scalar_select 0, %s6, %s4
  // Predicated region
  $region2: #{cnn_model_l2_forward.8} parent=0 // pred_check
    _
  $region3: #{cnn_model_l2_forward.8} parent=0 // pred_check_branch
    %9 = sbr.rel (0) target = $region5
  $region4: #{cnn_model_l2_forward.8} parent=0 // pred_region
    _
  $region5: #{cnn_model_l2_forward.8} parent=0 // pred_fallthru
    _
  // Predicated region
  $region6: #{cnn_model_l2_forward.8} parent=0 // pred_check
    _
  $region7: #{cnn_model_l2_forward.8} parent=0 // pred_check_branch
    %11 = sbr.rel (0) target = $region9
  $region8: #{cnn_model_l2_forward.8} parent=0 // pred_region
    _
  $region9: #{cnn_model_l2_forward.8} parent=0 // pred_fallthru
    _
  // Predicated region
  $region10: #{cnn_model_l2_forward.8} parent=0 // pred_check
    _
  $region11: #{cnn_model_l2_forward.8} parent=0 // pred_check_branch
    %13 = sbr.rel (0) target = $region13
  $region12: #{cnn_model_l2_forward.8} parent=0 // pred_region
    _
  $region13: #{cnn_model_l2_forward.8} parent=0 // pred_fallthru
    _
  %v14 = vld [vmem:[%s0] sm:$0xff]
  %v15 = vld [vmem:[%s0 + $0x8] sm:$0xff]
  %v16 = vld [vmem:[%s0 + $0x10] sm:$0xff]
  %v17 = vld [vmem:[%s0 + $0x18] sm:$0xf]
  %v18 = vld [vmem:[%s1] sm:$0xf]
  %v19 = vld [vmem:[%s1 + $0x4] sm:$0xf]
  %v20 = vld [vmem:[%s1 + $0x8] sm:$0xf]
  %v21 = vld [vmem:[%s1 + $0xc] sm:$0xf]
  %v22 = vld [vmem:[%s1 + $0x10] sm:$0xf]
  %v23 = vld [vmem:[%s1 + $0x14] sm:$0xf]
  %v24 = vld [vmem:[%s1 + $0x18] sm:$0xf]
  %v25 = vld [vmem:[%s1 + $0x1c] sm:$0xf]
  %v26 = vld [vmem:[%s1 + $0x20] sm:$0xf]
  %v27 = vld [vmem:[%s1 + $0x24] sm:$0xf]
  %v28 = vld [vmem:[%s1 + $0x28] sm:$0xf]
  %v29 = vld [vmem:[%s1 + $0x2c] sm:$0xf]
  %v30 = vld [vmem:[%s1 + $0x30] sm:$0xf]
  %v31 = vld [vmem:[%s1 + $0x34] sm:$0xf]
  %v32 = vld [vmem:[%s1 + $0x38] sm:$0xf]
  %v33 = vld [vmem:[%s1 + $0x3c] sm:$0xf]
  %v34 = vld [vmem:[%s1 + $0x40] sm:$0xf]
  %v35 = vld [vmem:[%s1 + $0x44] sm:$0xf]
  %v36 = vld [vmem:[%s1 + $0x48] sm:$0xf]
  %v37 = vld [vmem:[%s1 + $0x4c] sm:$0xf]
  %v38 = vld [vmem:[%s1 + $0x50] sm:$0xf]
  %v39 = vld [vmem:[%s1 + $0x54] sm:$0xf]
  %v40 = vld [vmem:[%s1 + $0x58] sm:$0xf]
  %v41 = vld [vmem:[%s1 + $0x5c] sm:$0xf]
  %v42 = vld [vmem:[%s1 + $0x60] sm:$0xf]
  %v43 = vld [vmem:[%s1 + $0x64] sm:$0xf]
  %v44 = vld [vmem:[%s1 + $0x68] sm:$0xf]
  %v45 = vld [vmem:[%s1 + $0x6c] sm:$0xf]
  %v46 = vld [vmem:[%s1 + $0x70] sm:$0xf]
  %v47 = vld [vmem:[%s1 + $0x74] sm:$0xf]
  %v48 = vld [vmem:[%s1 + $0x78] sm:$0xf]
  %v49 = vld [vmem:[%s1 + $0x7c] sm:$0xf]
  %v50 = vld [vmem:[%s1 + $0x80] sm:$0xf]
  %v51 = vld [vmem:[%s1 + $0x84] sm:$0xf]
  %v52 = vld [vmem:[%s1 + $0x88] sm:$0xf]
  %v53 = vld [vmem:[%s1 + $0x8c] sm:$0xf]
  %v54 = vld [vmem:[%s1 + $0x90] sm:$0xf]
  %v55 = vld [vmem:[%s1 + $0x94] sm:$0xf]
  %v56 = vld [vmem:[%s1 + $0x98] sm:$0xf]
  %v57 = vld [vmem:[%s1 + $0x9c] sm:$0xf]
  %v58 = vld [vmem:[%s1 + $0xa0] sm:$0xf]
  %v59 = vld [vmem:[%s1 + $0xa4] sm:$0xf]
  %v60 = vld [vmem:[%s1 + $0xa8] sm:$0xf]
  %v61 = vld [vmem:[%s1 + $0xac] sm:$0xf]
  %v62 = vld [vmem:[%s1 + $0xb0] sm:$0xf]
  %v63 = vld [vmem:[%s1 + $0xb4] sm:$0xf]
  %v64 = vld [vmem:[%s1 + $0xb8] sm:$0xf]
  %v65 = vld [vmem:[%s1 + $0xbc] sm:$0xf]
  %v66 = vld [vmem:[%s1 + $0xc0] sm:$0xf]
  %v67 = vld [vmem:[%s1 + $0xc4] sm:$0xf]
  %v68 = vld [vmem:[%s1 + $0xc8] sm:$0xf]
  %v69 = vld [vmem:[%s1 + $0xcc] sm:$0xf]
  %v70 = vld [vmem:[%s1 + $0xd0] sm:$0xf]
  %v71 = vld [vmem:[%s1 + $0xd4] sm:$0xf]
  %v72 = vld [vmem:[%s1 + $0xd8] sm:$0xf]
  %v73 = vld [vmem:[%s1 + $0xdc] sm:$0xf]
  %v74 = vld [vmem:[%s1 + $0xe0] sm:$0xf]
  %v75 = vld [vmem:[%s1 + $0xe4] sm:$0xf]
  %v76 = vld [vmem:[%s1 + $0xe8] sm:$0xf]
  %v77 = vld [vmem:[%s1 + $0xec] sm:$0xf]
  %v78 = vld [vmem:[%s1 + $0xf0] sm:$0xf]
  %v79 = vld [vmem:[%s1 + $0xf4] sm:$0xf]
  %v80 = vld [vmem:[%s1 + $0xf8] sm:$0xf]
  %v81 = vld [vmem:[%s1 + $0xfc] sm:$0xf]
  %v82 = vld [vmem:[%s1 + $0x100] sm:$0xf]
  %v83 = vld [vmem:[%s1 + $0x104] sm:$0xf]
  %v84 = vld [vmem:[%s1 + $0x108] sm:$0xf]
  %v85 = vld [vmem:[%s1 + $0x10c] sm:$0xf]
  %v86 = vld [vmem:[%s1 + $0x110] sm:$0xf]
  %v87 = vld [vmem:[%s1 + $0x114] sm:$0xf]
  %v88 = vld [vmem:[%s1 + $0x118] sm:$0xf]
  %v89 = vld [vmem:[%s1 + $0x11c] sm:$0xf]
  %v90 = vld [vmem:[%s1 + $0x120] sm:$0xf]
  %v91 = vld [vmem:[%s1 + $0x124] sm:$0xf]
  %v92 = vld [vmem:[%s1 + $0x128] sm:$0xf]
  %v93 = vld [vmem:[%s1 + $0x12c] sm:$0xf]
  %v94 = vld [vmem:[%s1 + $0x130] sm:$0xf]
  %v95 = vld [vmem:[%s1 + $0x134] sm:$0xf]
  %v96 = vld [vmem:[%s1 + $0x138] sm:$0xf]
  %v97 = vld [vmem:[%s1 + $0x13c] sm:$0xf]
  %v98 = vld [vmem:[%s1 + $0x140] sm:$0xf]
  %v99 = vld [vmem:[%s1 + $0x144] sm:$0xf]
  %v100 = vld [vmem:[%s1 + $0x148] sm:$0xf]
  %v101 = vld [vmem:[%s1 + $0x14c] sm:$0xf]
  %v102 = vld [vmem:[%s1 + $0x150] sm:$0xf]
  %v103 = vld [vmem:[%s1 + $0x154] sm:$0xf]
  %v104 = vld [vmem:[%s1 + $0x158] sm:$0xf]
  %v105 = vld [vmem:[%s1 + $0x15c] sm:$0xf]
  %v106 = vld [vmem:[%s1 + $0x160] sm:$0xf]
  %v107 = vld [vmem:[%s1 + $0x164] sm:$0xf]
  %v108 = vld [vmem:[%s1 + $0x168] sm:$0xf]
  %v109 = vld [vmem:[%s1 + $0x16c] sm:$0xf]
  %v110 = vld [vmem:[%s1 + $0x170] sm:$0xf]
  %v111 = vld [vmem:[%s1 + $0x174] sm:$0xf]
  %v112 = vld [vmem:[%s1 + $0x178] sm:$0xf]
  %v113 = vld [vmem:[%s1 + $0x17c] sm:$0xf]
  %v114 = vld [vmem:[%s1 + $0x180] sm:$0xf]
  %v115 = vld [vmem:[%s1 + $0x184] sm:$0xf]
  %v116 = vld [vmem:[%s1 + $0x188] sm:$0xf]
  %v117 = vld [vmem:[%s1 + $0x18c] sm:$0xf]
  %v118 = vld [vmem:[%s1 + $0x190] sm:$0xf]
  %v119 = vld [vmem:[%s1 + $0x194] sm:$0xf]
  %v120 = vld [vmem:[%s1 + $0x198] sm:$0xf]
  %v121 = vld [vmem:[%s1 + $0x19c] sm:$0xf]
  %v122 = vld [vmem:[%s1 + $0x1a0] sm:$0xf]
  %v123 = vld [vmem:[%s1 + $0x1a4] sm:$0xf]
  %v124 = vld [vmem:[%s1 + $0x1a8] sm:$0xf]
  %v125 = vld [vmem:[%s1 + $0x1ac] sm:$0xf]
  %v126 = vld [vmem:[%s1 + $0x1b0] sm:$0xf]
  %v127 = vld [vmem:[%s1 + $0x1b4] sm:$0xf]
  %v128 = vld [vmem:[%s1 + $0x1b8] sm:$0xf]
  %v129 = vld [vmem:[%s1 + $0x1bc] sm:$0xf]
  %v134 = vunpack.c.l.b16 %v14
  %v135 = vunpack.c.h.b16 %v14
  %v136 = vunpack.c.l.b16 %v15
  %v137 = vunpack.c.h.b16 %v15
  %v138 = vunpack.c.l.b16 %v16
  %v139 = vunpack.c.h.b16 %v16
  %v140 = vunpack.c.l.b16 %v17
  %v141 = vpack.c.b16 %v134, %v134
  %v142 = vpack.c.b16 %v135, %v135
  %v143 = vpack.c.b16 %v136, %v136
  %v144 = vpack.c.b16 %v137, %v137
  %v145 = vpack.c.b16 %v138, %v138
  %v146 = vpack.c.b16 %v139, %v139
  %v147 = vpack.c.b16 %v140, %v140
  %v267 = vunpack.c.l.b16 %v18
  %v268 = vunpack.c.l.b16 %v19
  %v269 = vunpack.c.l.b16 %v20
  %v270 = vunpack.c.l.b16 %v21
  %v271 = vunpack.c.l.b16 %v22
  %v272 = vunpack.c.l.b16 %v23
  %v273 = vunpack.c.l.b16 %v24
  %v274 = vunpack.c.l.b16 %v25
  %v275 = vunpack.c.l.b16 %v26
  %v276 = vunpack.c.l.b16 %v27
  %v277 = vunpack.c.l.b16 %v28
  %v278 = vunpack.c.l.b16 %v29
  %v279 = vunpack.c.l.b16 %v30
  %v280 = vunpack.c.l.b16 %v31
  %v281 = vunpack.c.l.b16 %v32
  %v282 = vunpack.c.l.b16 %v33
  %v283 = vunpack.c.l.b16 %v34
  %v284 = vunpack.c.l.b16 %v35
  %v285 = vunpack.c.l.b16 %v36
  %v286 = vunpack.c.l.b16 %v37
  %v287 = vunpack.c.l.b16 %v38
  %v288 = vunpack.c.l.b16 %v39
  %v289 = vunpack.c.l.b16 %v40
  %v290 = vunpack.c.l.b16 %v41
  %v291 = vunpack.c.l.b16 %v42
  %v292 = vunpack.c.l.b16 %v43
  %v293 = vunpack.c.l.b16 %v44
  %v294 = vunpack.c.l.b16 %v45
  %v295 = vunpack.c.l.b16 %v46
  %v296 = vunpack.c.l.b16 %v47
  %v297 = vunpack.c.l.b16 %v48
  %v298 = vunpack.c.l.b16 %v49
  %v299 = vunpack.c.l.b16 %v50
  %v300 = vunpack.c.l.b16 %v51
  %v301 = vunpack.c.l.b16 %v52
  %v302 = vunpack.c.l.b16 %v53
  %v303 = vunpack.c.l.b16 %v54
  %v304 = vunpack.c.l.b16 %v55
  %v305 = vunpack.c.l.b16 %v56
  %v306 = vunpack.c.l.b16 %v57
  %v307 = vunpack.c.l.b16 %v58
  %v308 = vunpack.c.l.b16 %v59
  %v309 = vunpack.c.l.b16 %v60
  %v310 = vunpack.c.l.b16 %v61
  %v311 = vunpack.c.l.b16 %v62
  %v312 = vunpack.c.l.b16 %v63
  %v313 = vunpack.c.l.b16 %v64
  %v314 = vunpack.c.l.b16 %v65
  %v315 = vunpack.c.l.b16 %v66
  %v316 = vunpack.c.l.b16 %v67
  %v317 = vunpack.c.l.b16 %v68
  %v318 = vunpack.c.l.b16 %v69
  %v319 = vunpack.c.l.b16 %v70
  %v320 = vunpack.c.l.b16 %v71
  %v321 = vunpack.c.l.b16 %v72
  %v322 = vunpack.c.l.b16 %v73
  %v323 = vunpack.c.l.b16 %v74
  %v324 = vunpack.c.l.b16 %v75
  %v325 = vunpack.c.l.b16 %v76
  %v326 = vunpack.c.l.b16 %v77
  %v327 = vunpack.c.l.b16 %v78
  %v328 = vunpack.c.l.b16 %v79
  %v329 = vunpack.c.l.b16 %v80
  %v330 = vunpack.c.l.b16 %v81
  %v331 = vunpack.c.l.b16 %v82
  %v332 = vunpack.c.l.b16 %v83
  %v333 = vunpack.c.l.b16 %v84
  %v334 = vunpack.c.l.b16 %v85
  %v335 = vunpack.c.l.b16 %v86
  %v336 = vunpack.c.l.b16 %v87
  %v337 = vunpack.c.l.b16 %v88
  %v338 = vunpack.c.l.b16 %v89
  %v339 = vunpack.c.l.b16 %v90
  %v340 = vunpack.c.l.b16 %v91
  %v341 = vunpack.c.l.b16 %v92
  %v342 = vunpack.c.l.b16 %v93
  %v343 = vunpack.c.l.b16 %v94
  %v344 = vunpack.c.l.b16 %v95
  %v345 = vunpack.c.l.b16 %v96
  %v346 = vunpack.c.l.b16 %v97
  %v347 = vunpack.c.l.b16 %v98
  %v348 = vunpack.c.l.b16 %v99
  %v349 = vunpack.c.l.b16 %v100
  %v350 = vunpack.c.l.b16 %v101
  %v351 = vunpack.c.l.b16 %v102
  %v352 = vunpack.c.l.b16 %v103
  %v353 = vunpack.c.l.b16 %v104
  %v354 = vunpack.c.l.b16 %v105
  %v355 = vunpack.c.l.b16 %v106
  %v356 = vunpack.c.l.b16 %v107
  %v357 = vunpack.c.l.b16 %v108
  %v358 = vunpack.c.l.b16 %v109
  %v359 = vunpack.c.l.b16 %v110
  %v360 = vunpack.c.l.b16 %v111
  %v361 = vunpack.c.l.b16 %v112
  %v362 = vunpack.c.l.b16 %v113
  %v363 = vunpack.c.l.b16 %v114
  %v364 = vunpack.c.l.b16 %v115
  %v365 = vunpack.c.l.b16 %v116
  %v366 = vunpack.c.l.b16 %v117
  %v367 = vunpack.c.l.b16 %v118
  %v368 = vunpack.c.l.b16 %v119
  %v369 = vunpack.c.l.b16 %v120
  %v370 = vunpack.c.l.b16 %v121
  %v371 = vunpack.c.l.b16 %v122
  %v372 = vunpack.c.l.b16 %v123
  %v373 = vunpack.c.l.b16 %v124
  %v374 = vunpack.c.l.b16 %v125
  %v375 = vunpack.c.l.b16 %v126
  %v376 = vunpack.c.l.b16 %v127
  %v377 = vunpack.c.l.b16 %v128
  %v378 = vunpack.c.l.b16 %v129
  %v379 = vpack.c.b16 %v268, %v267
  %v380 = vpack.c.b16 %v270, %v269
  %v381 = vpack.c.b16 %v272, %v271
  %v382 = vpack.c.b16 %v274, %v273
  %v383 = vpack.c.b16 %v276, %v275
  %v384 = vpack.c.b16 %v278, %v277
  %v385 = vpack.c.b16 %v280, %v279
  %v386 = vpack.c.b16 %v282, %v281
  %v387 = vpack.c.b16 %v284, %v283
  %v388 = vpack.c.b16 %v286, %v285
  %v389 = vpack.c.b16 %v288, %v287
  %v390 = vpack.c.b16 %v290, %v289
  %v391 = vpack.c.b16 %v292, %v291
  %v392 = vpack.c.b16 %v294, %v293
  %v393 = vpack.c.b16 %v296, %v295
  %v394 = vpack.c.b16 %v298, %v297
  %v395 = vpack.c.b16 %v300, %v299
  %v396 = vpack.c.b16 %v302, %v301
  %v397 = vpack.c.b16 %v304, %v303
  %v398 = vpack.c.b16 %v306, %v305
  %v399 = vpack.c.b16 %v308, %v307
  %v400 = vpack.c.b16 %v310, %v309
  %v401 = vpack.c.b16 %v312, %v311
  %v402 = vpack.c.b16 %v314, %v313
  %v403 = vpack.c.b16 %v316, %v315
  %v404 = vpack.c.b16 %v318, %v317
  %v405 = vpack.c.b16 %v320, %v319
  %v406 = vpack.c.b16 %v322, %v321
  %v407 = vpack.c.b16 %v324, %v323
  %v408 = vpack.c.b16 %v326, %v325
  %v409 = vpack.c.b16 %v328, %v327
  %v410 = vpack.c.b16 %v330, %v329
  %v411 = vpack.c.b16 %v332, %v331
  %v412 = vpack.c.b16 %v334, %v333
  %v413 = vpack.c.b16 %v336, %v335
  %v414 = vpack.c.b16 %v338, %v337
  %v415 = vpack.c.b16 %v340, %v339
  %v416 = vpack.c.b16 %v342, %v341
  %v417 = vpack.c.b16 %v344, %v343
  %v418 = vpack.c.b16 %v346, %v345
  %v419 = vpack.c.b16 %v348, %v347
  %v420 = vpack.c.b16 %v350, %v349
  %v421 = vpack.c.b16 %v352, %v351
  %v422 = vpack.c.b16 %v354, %v353
  %v423 = vpack.c.b16 %v356, %v355
  %v424 = vpack.c.b16 %v358, %v357
  %v425 = vpack.c.b16 %v360, %v359
  %v426 = vpack.c.b16 %v362, %v361
  %v427 = vpack.c.b16 %v364, %v363
  %v428 = vpack.c.b16 %v366, %v365
  %v429 = vpack.c.b16 %v368, %v367
  %v430 = vpack.c.b16 %v370, %v369
  %v431 = vpack.c.b16 %v372, %v371
  %v432 = vpack.c.b16 %v374, %v373
  %v433 = vpack.c.b16 %v376, %v375
  %v434 = vpack.c.b16 %v378, %v377
  %491 = vmatpush.bf16.msra.mxu0 %v386
  %492 = vmatpush.bf16.msra.mxu0 %v385
  %493 = vmatpush.bf16.msra.mxu0 %v384
  %494 = vmatpush.bf16.msra.mxu0 %v383
  %495 = vmatpush.bf16.msra.mxu0 %v382
  %496 = vmatpush.bf16.msra.mxu0 %v381
  %497 = vmatpush.bf16.msra.mxu0 %v380
  %498 = vmatpush.bf16.msra.mxu0 %v379
  %499 = vmatmul.bf16.gmra.mxu0 %v141
  %v500 = vpop.f32.mrf.mxu0
  %v501 = vadd.f32 0.0, %v500
  %v502 = vpop.f32.mrf.mxu0
  %503 = vdwg.mxu0
  %504 = vmatpush.bf16.msra.mxu0 %v394
  %505 = vmatpush.bf16.msra.mxu0 %v393
  %506 = vmatpush.bf16.msra.mxu0 %v392
  %507 = vmatpush.bf16.msra.mxu0 %v391
  %508 = vmatpush.bf16.msra.mxu0 %v390
  %509 = vmatpush.bf16.msra.mxu0 %v389
  %510 = vmatpush.bf16.msra.mxu0 %v388
  %511 = vmatpush.bf16.msra.mxu0 %v387
  %512 = vmatmul.bf16.gmra.mxu0 %v142
  %v513 = vpop.f32.mrf.mxu0
  %v514 = vadd.f32 %v501, %v513
  %v515 = vpop.f32.mrf.mxu0
  %516 = vdwg.mxu0
  %517 = vmatpush.bf16.msra.mxu0 %v402
  %518 = vmatpush.bf16.msra.mxu0 %v401
  %519 = vmatpush.bf16.msra.mxu0 %v400
  %520 = vmatpush.bf16.msra.mxu0 %v399
  %521 = vmatpush.bf16.msra.mxu0 %v398
  %522 = vmatpush.bf16.msra.mxu0 %v397
  %523 = vmatpush.bf16.msra.mxu0 %v396
  %524 = vmatpush.bf16.msra.mxu0 %v395
  %525 = vmatmul.bf16.gmra.mxu0 %v143
  %v526 = vpop.f32.mrf.mxu0
  %v527 = vadd.f32 %v514, %v526
  %v528 = vpop.f32.mrf.mxu0
  %529 = vdwg.mxu0
  %530 = vmatpush.bf16.msra.mxu0 %v410
  %531 = vmatpush.bf16.msra.mxu0 %v409
  %532 = vmatpush.bf16.msra.mxu0 %v408
  %533 = vmatpush.bf16.msra.mxu0 %v407
  %534 = vmatpush.bf16.msra.mxu0 %v406
  %535 = vmatpush.bf16.msra.mxu0 %v405
  %536 = vmatpush.bf16.msra.mxu0 %v404
  %537 = vmatpush.bf16.msra.mxu0 %v403
  %538 = vmatmul.bf16.gmra.mxu0 %v144
  %v539 = vpop.f32.mrf.mxu0
  %v540 = vadd.f32 %v527, %v539
  %v541 = vpop.f32.mrf.mxu0
  %542 = vdwg.mxu0
  %543 = vmatpush.bf16.msra.mxu0 %v418
  %544 = vmatpush.bf16.msra.mxu0 %v417
  %545 = vmatpush.bf16.msra.mxu0 %v416
  %546 = vmatpush.bf16.msra.mxu0 %v415
  %547 = vmatpush.bf16.msra.mxu0 %v414
  %548 = vmatpush.bf16.msra.mxu0 %v413
  %549 = vmatpush.bf16.msra.mxu0 %v412
  %550 = vmatpush.bf16.msra.mxu0 %v411
  %551 = vmatmul.bf16.gmra.mxu0 %v145
  %v552 = vpop.f32.mrf.mxu0
  %v553 = vadd.f32 %v540, %v552
  %v554 = vpop.f32.mrf.mxu0
  %555 = vdwg.mxu0
  %556 = vmatpush.bf16.msra.mxu0 %v426
  %557 = vmatpush.bf16.msra.mxu0 %v425
  %558 = vmatpush.bf16.msra.mxu0 %v424
  %559 = vmatpush.bf16.msra.mxu0 %v423
  %560 = vmatpush.bf16.msra.mxu0 %v422
  %561 = vmatpush.bf16.msra.mxu0 %v421
  %562 = vmatpush.bf16.msra.mxu0 %v420
  %563 = vmatpush.bf16.msra.mxu0 %v419
  %564 = vmatmul.bf16.gmra.mxu0 %v146
  %v565 = vpop.f32.mrf.mxu0
  %v566 = vadd.f32 %v553, %v565
  %v567 = vpop.f32.mrf.mxu0
  %568 = vdwg.mxu0
  %569 = vmatpush.bf16.msra.mxu0 %v434
  %570 = vmatpush.bf16.msra.mxu0 %v433
  %571 = vmatpush.bf16.msra.mxu0 %v432
  %572 = vmatpush.bf16.msra.mxu0 %v431
  %573 = vmatpush.bf16.msra.mxu0 %v430
  %574 = vmatpush.bf16.msra.mxu0 %v429
  %575 = vmatpush.bf16.msra.mxu0 %v428
  %576 = vmatpush.bf16.msra.mxu0 %v427
  %577 = vmatmul.bf16.gmra.mxu0 %v147
  %v578 = vpop.f32.mrf.mxu0
  %v579 = vadd.f32 %v566, %v578
  %v580 = vpop.f32.mrf.mxu0
  %581 = vdwg.mxu0
  %s582 = scalar_lea.vmem %s0, 28
  %v583 = vld [vmem:[%s582] sm:$0xff]
  %v584 = vld [vmem:[%s582 + $0x8] sm:$0xff]
  %v585 = vld [vmem:[%s582 + $0x10] sm:$0xff]
  %v586 = vld [vmem:[%s582 + $0x18] sm:$0xf]
  %v591 = vunpack.c.l.b16 %v583
  %v592 = vunpack.c.h.b16 %v583
  %v593 = vunpack.c.l.b16 %v584
  %v594 = vunpack.c.h.b16 %v584
  %v595 = vunpack.c.l.b16 %v585
  %v596 = vunpack.c.h.b16 %v585
  %v597 = vunpack.c.l.b16 %v586
  %v598 = vpack.c.b16 %v591, %v591
  %v599 = vpack.c.b16 %v592, %v592
  %v600 = vpack.c.b16 %v593, %v593
  %v601 = vpack.c.b16 %v594, %v594
  %v602 = vpack.c.b16 %v595, %v595
  %v603 = vpack.c.b16 %v596, %v596
  %v604 = vpack.c.b16 %v597, %v597
  %612 = vmatpush.bf16.msra.mxu0 %v386
  %613 = vmatpush.bf16.msra.mxu0 %v385
  %614 = vmatpush.bf16.msra.mxu0 %v384
  %615 = vmatpush.bf16.msra.mxu0 %v383
  %616 = vmatpush.bf16.msra.mxu0 %v382
  %617 = vmatpush.bf16.msra.mxu0 %v381
  %618 = vmatpush.bf16.msra.mxu0 %v380
  %619 = vmatpush.bf16.msra.mxu0 %v379
  %620 = vmatmul.bf16.gmra.mxu0 %v598
  %v621 = vpop.f32.mrf.mxu0
  %v622 = vadd.f32 0.0, %v621
  %v623 = vpop.f32.mrf.mxu0
  %624 = vdwg.mxu0
  %625 = vmatpush.bf16.msra.mxu0 %v394
  %626 = vmatpush.bf16.msra.mxu0 %v393
  %627 = vmatpush.bf16.msra.mxu0 %v392
  %628 = vmatpush.bf16.msra.mxu0 %v391
  %629 = vmatpush.bf16.msra.mxu0 %v390
  %630 = vmatpush.bf16.msra.mxu0 %v389
  %631 = vmatpush.bf16.msra.mxu0 %v388
  %632 = vmatpush.bf16.msra.mxu0 %v387
  %633 = vmatmul.bf16.gmra.mxu0 %v599
  %v634 = vpop.f32.mrf.mxu0
  %v635 = vadd.f32 %v622, %v634
  %v636 = vpop.f32.mrf.mxu0
  %637 = vdwg.mxu0
  %638 = vmatpush.bf16.msra.mxu0 %v402
  %639 = vmatpush.bf16.msra.mxu0 %v401
  %640 = vmatpush.bf16.msra.mxu0 %v400
  %641 = vmatpush.bf16.msra.mxu0 %v399
  %642 = vmatpush.bf16.msra.mxu0 %v398
  %643 = vmatpush.bf16.msra.mxu0 %v397
  %644 = vmatpush.bf16.msra.mxu0 %v396
  %645 = vmatpush.bf16.msra.mxu0 %v395
  %646 = vmatmul.bf16.gmra.mxu0 %v600
  %v647 = vpop.f32.mrf.mxu0
  %v648 = vadd.f32 %v635, %v647
  %v649 = vpop.f32.mrf.mxu0
  %650 = vdwg.mxu0
  %651 = vmatpush.bf16.msra.mxu0 %v410
  %652 = vmatpush.bf16.msra.mxu0 %v409
  %653 = vmatpush.bf16.msra.mxu0 %v408
  %654 = vmatpush.bf16.msra.mxu0 %v407
  %655 = vmatpush.bf16.msra.mxu0 %v406
  %656 = vmatpush.bf16.msra.mxu0 %v405
  %657 = vmatpush.bf16.msra.mxu0 %v404
  %658 = vmatpush.bf16.msra.mxu0 %v403
  %659 = vmatmul.bf16.gmra.mxu0 %v601
  %v660 = vpop.f32.mrf.mxu0
  %v661 = vadd.f32 %v648, %v660
  %v662 = vpop.f32.mrf.mxu0
  %663 = vdwg.mxu0
  %664 = vmatpush.bf16.msra.mxu0 %v418
  %665 = vmatpush.bf16.msra.mxu0 %v417
  %666 = vmatpush.bf16.msra.mxu0 %v416
  %667 = vmatpush.bf16.msra.mxu0 %v415
  %668 = vmatpush.bf16.msra.mxu0 %v414
  %669 = vmatpush.bf16.msra.mxu0 %v413
  %670 = vmatpush.bf16.msra.mxu0 %v412
  %671 = vmatpush.bf16.msra.mxu0 %v411
  %672 = vmatmul.bf16.gmra.mxu0 %v602
  %v673 = vpop.f32.mrf.mxu0
  %v674 = vadd.f32 %v661, %v673
  %v675 = vpop.f32.mrf.mxu0
  %676 = vdwg.mxu0
  %677 = vmatpush.bf16.msra.mxu0 %v426
  %678 = vmatpush.bf16.msra.mxu0 %v425
  %679 = vmatpush.bf16.msra.mxu0 %v424
  %680 = vmatpush.bf16.msra.mxu0 %v423
  %681 = vmatpush.bf16.msra.mxu0 %v422
  %682 = vmatpush.bf16.msra.mxu0 %v421
  %683 = vmatpush.bf16.msra.mxu0 %v420
  %684 = vmatpush.bf16.msra.mxu0 %v419
  %685 = vmatmul.bf16.gmra.mxu0 %v603
  %v686 = vpop.f32.mrf.mxu0
  %v687 = vadd.f32 %v674, %v686
  %v688 = vpop.f32.mrf.mxu0
  %689 = vdwg.mxu0
  %690 = vmatpush.bf16.msra.mxu0 %v434
  %691 = vmatpush.bf16.msra.mxu0 %v433
  %692 = vmatpush.bf16.msra.mxu0 %v432
  %693 = vmatpush.bf16.msra.mxu0 %v431
  %694 = vmatpush.bf16.msra.mxu0 %v430
  %695 = vmatpush.bf16.msra.mxu0 %v429
  %696 = vmatpush.bf16.msra.mxu0 %v428
  %697 = vmatpush.bf16.msra.mxu0 %v427
  %698 = vmatmul.bf16.gmra.mxu0 %v604
  %v699 = vpop.f32.mrf.mxu0
  %v700 = vadd.f32 %v687, %v699
  %v701 = vpop.f32.mrf.mxu0
  %702 = vdwg.mxu0
  %v703 = vmax.f32 %v579, %v700
  %s704 = scalar_lea.vmem %s0, 56
  %v705 = vld [vmem:[%s704] sm:$0xff]
  %v706 = vld [vmem:[%s704 + $0x8] sm:$0xff]
  %v707 = vld [vmem:[%s704 + $0x10] sm:$0xff]
  %v708 = vld [vmem:[%s704 + $0x18] sm:$0xf]
  %v713 = vunpack.c.l.b16 %v705
  %v714 = vunpack.c.h.b16 %v705
  %v715 = vunpack.c.l.b16 %v706
  %v716 = vunpack.c.h.b16 %v706
  %v717 = vunpack.c.l.b16 %v707
  %v718 = vunpack.c.h.b16 %v707
  %v719 = vunpack.c.l.b16 %v708
  %v720 = vpack.c.b16 %v713, %v713
  %v721 = vpack.c.b16 %v714, %v714
  %v722 = vpack.c.b16 %v715, %v715
  %v723 = vpack.c.b16 %v716, %v716
  %v724 = vpack.c.b16 %v717, %v717
  %v725 = vpack.c.b16 %v718, %v718
  %v726 = vpack.c.b16 %v719, %v719
  %734 = vmatpush.bf16.msra.mxu0 %v386
  %735 = vmatpush.bf16.msra.mxu0 %v385
  %736 = vmatpush.bf16.msra.mxu0 %v384
  %737 = vmatpush.bf16.msra.mxu0 %v383
  %738 = vmatpush.bf16.msra.mxu0 %v382
  %739 = vmatpush.bf16.msra.mxu0 %v381
  %740 = vmatpush.bf16.msra.mxu0 %v380
  %741 = vmatpush.bf16.msra.mxu0 %v379
  %742 = vmatmul.bf16.gmra.mxu0 %v720
  %v743 = vpop.f32.mrf.mxu0
  %v744 = vadd.f32 0.0, %v743
  %v745 = vpop.f32.mrf.mxu0
  %746 = vdwg.mxu0
  %747 = vmatpush.bf16.msra.mxu0 %v394
  %748 = vmatpush.bf16.msra.mxu0 %v393
  %749 = vmatpush.bf16.msra.mxu0 %v392
  %750 = vmatpush.bf16.msra.mxu0 %v391
  %751 = vmatpush.bf16.msra.mxu0 %v390
  %752 = vmatpush.bf16.msra.mxu0 %v389
  %753 = vmatpush.bf16.msra.mxu0 %v388
  %754 = vmatpush.bf16.msra.mxu0 %v387
  %755 = vmatmul.bf16.gmra.mxu0 %v721
  %v756 = vpop.f32.mrf.mxu0
  %v757 = vadd.f32 %v744, %v756
  %v758 = vpop.f32.mrf.mxu0
  %759 = vdwg.mxu0
  %760 = vmatpush.bf16.msra.mxu0 %v402
  %761 = vmatpush.bf16.msra.mxu0 %v401
  %762 = vmatpush.bf16.msra.mxu0 %v400
  %763 = vmatpush.bf16.msra.mxu0 %v399
  %764 = vmatpush.bf16.msra.mxu0 %v398
  %765 = vmatpush.bf16.msra.mxu0 %v397
  %766 = vmatpush.bf16.msra.mxu0 %v396
  %767 = vmatpush.bf16.msra.mxu0 %v395
  %768 = vmatmul.bf16.gmra.mxu0 %v722
  %v769 = vpop.f32.mrf.mxu0
  %v770 = vadd.f32 %v757, %v769
  %v771 = vpop.f32.mrf.mxu0
  %772 = vdwg.mxu0
  %773 = vmatpush.bf16.msra.mxu0 %v410
  %774 = vmatpush.bf16.msra.mxu0 %v409
  %775 = vmatpush.bf16.msra.mxu0 %v408
  %776 = vmatpush.bf16.msra.mxu0 %v407
  %777 = vmatpush.bf16.msra.mxu0 %v406
  %778 = vmatpush.bf16.msra.mxu0 %v405
  %779 = vmatpush.bf16.msra.mxu0 %v404
  %780 = vmatpush.bf16.msra.mxu0 %v403
  %781 = vmatmul.bf16.gmra.mxu0 %v723
  %v782 = vpop.f32.mrf.mxu0
  %v783 = vadd.f32 %v770, %v782
  %v784 = vpop.f32.mrf.mxu0
  %785 = vdwg.mxu0
  %786 = vmatpush.bf16.msra.mxu0 %v418
  %787 = vmatpush.bf16.msra.mxu0 %v417
  %788 = vmatpush.bf16.msra.mxu0 %v416
  %789 = vmatpush.bf16.msra.mxu0 %v415
  %790 = vmatpush.bf16.msra.mxu0 %v414
  %791 = vmatpush.bf16.msra.mxu0 %v413
  %792 = vmatpush.bf16.msra.mxu0 %v412
  %793 = vmatpush.bf16.msra.mxu0 %v411
  %794 = vmatmul.bf16.gmra.mxu0 %v724
  %v795 = vpop.f32.mrf.mxu0
  %v796 = vadd.f32 %v783, %v795
  %v797 = vpop.f32.mrf.mxu0
  %798 = vdwg.mxu0
  %799 = vmatpush.bf16.msra.mxu0 %v426
  %800 = vmatpush.bf16.msra.mxu0 %v425
  %801 = vmatpush.bf16.msra.mxu0 %v424
  %802 = vmatpush.bf16.msra.mxu0 %v423
  %803 = vmatpush.bf16.msra.mxu0 %v422
  %804 = vmatpush.bf16.msra.mxu0 %v421
  %805 = vmatpush.bf16.msra.mxu0 %v420
  %806 = vmatpush.bf16.msra.mxu0 %v419
  %807 = vmatmul.bf16.gmra.mxu0 %v725
  %v808 = vpop.f32.mrf.mxu0
  %v809 = vadd.f32 %v796, %v808
  %v810 = vpop.f32.mrf.mxu0
  %811 = vdwg.mxu0
  %812 = vmatpush.bf16.msra.mxu0 %v434
  %813 = vmatpush.bf16.msra.mxu0 %v433
  %814 = vmatpush.bf16.msra.mxu0 %v432
  %815 = vmatpush.bf16.msra.mxu0 %v431
  %816 = vmatpush.bf16.msra.mxu0 %v430
  %817 = vmatpush.bf16.msra.mxu0 %v429
  %818 = vmatpush.bf16.msra.mxu0 %v428
  %819 = vmatpush.bf16.msra.mxu0 %v427
  %820 = vmatmul.bf16.gmra.mxu0 %v726
  %v821 = vpop.f32.mrf.mxu0
  %v822 = vadd.f32 %v809, %v821
  %v823 = vpop.f32.mrf.mxu0
  %824 = vdwg.mxu0
  %v825 = vmax.f32 %v703, %v822
  %s826 = scalar_lea.vmem %s0, 84
  %v827 = vld [vmem:[%s826] sm:$0xff]
  %v828 = vld [vmem:[%s826 + $0x8] sm:$0xff]
  %v829 = vld [vmem:[%s826 + $0x10] sm:$0xff]
  %v830 = vld [vmem:[%s826 + $0x18] sm:$0xf]
  %v835 = vunpack.c.l.b16 %v827
  %v836 = vunpack.c.h.b16 %v827
  %v837 = vunpack.c.l.b16 %v828
  %v838 = vunpack.c.h.b16 %v828
  %v839 = vunpack.c.l.b16 %v829
  %v840 = vunpack.c.h.b16 %v829
  %v841 = vunpack.c.l.b16 %v830
  %v842 = vpack.c.b16 %v835, %v835
  %v843 = vpack.c.b16 %v836, %v836
  %v844 = vpack.c.b16 %v837, %v837
  %v845 = vpack.c.b16 %v838, %v838
  %v846 = vpack.c.b16 %v839, %v839
  %v847 = vpack.c.b16 %v840, %v840
  %v848 = vpack.c.b16 %v841, %v841
  %856 = vmatpush.bf16.msra.mxu0 %v386
  %857 = vmatpush.bf16.msra.mxu0 %v385
  %858 = vmatpush.bf16.msra.mxu0 %v384
  %859 = vmatpush.bf16.msra.mxu0 %v383
  %860 = vmatpush.bf16.msra.mxu0 %v382
  %861 = vmatpush.bf16.msra.mxu0 %v381
  %862 = vmatpush.bf16.msra.mxu0 %v380
  %863 = vmatpush.bf16.msra.mxu0 %v379
  %864 = vmatmul.bf16.gmra.mxu0 %v842
  %v865 = vpop.f32.mrf.mxu0
  %v866 = vadd.f32 0.0, %v865
  %v867 = vpop.f32.mrf.mxu0
  %868 = vdwg.mxu0
  %869 = vmatpush.bf16.msra.mxu0 %v394
  %870 = vmatpush.bf16.msra.mxu0 %v393
  %871 = vmatpush.bf16.msra.mxu0 %v392
  %872 = vmatpush.bf16.msra.mxu0 %v391
  %873 = vmatpush.bf16.msra.mxu0 %v390
  %874 = vmatpush.bf16.msra.mxu0 %v389
  %875 = vmatpush.bf16.msra.mxu0 %v388
  %876 = vmatpush.bf16.msra.mxu0 %v387
  %877 = vmatmul.bf16.gmra.mxu0 %v843
  %v878 = vpop.f32.mrf.mxu0
  %v879 = vadd.f32 %v866, %v878
  %v880 = vpop.f32.mrf.mxu0
  %881 = vdwg.mxu0
  %882 = vmatpush.bf16.msra.mxu0 %v402
  %883 = vmatpush.bf16.msra.mxu0 %v401
  %884 = vmatpush.bf16.msra.mxu0 %v400
  %885 = vmatpush.bf16.msra.mxu0 %v399
  %886 = vmatpush.bf16.msra.mxu0 %v398
  %887 = vmatpush.bf16.msra.mxu0 %v397
  %888 = vmatpush.bf16.msra.mxu0 %v396
  %889 = vmatpush.bf16.msra.mxu0 %v395
  %890 = vmatmul.bf16.gmra.mxu0 %v844
  %v891 = vpop.f32.mrf.mxu0
  %v892 = vadd.f32 %v879, %v891
  %v893 = vpop.f32.mrf.mxu0
  %894 = vdwg.mxu0
  %895 = vmatpush.bf16.msra.mxu0 %v410
  %896 = vmatpush.bf16.msra.mxu0 %v409
  %897 = vmatpush.bf16.msra.mxu0 %v408
  %898 = vmatpush.bf16.msra.mxu0 %v407
  %899 = vmatpush.bf16.msra.mxu0 %v406
  %900 = vmatpush.bf16.msra.mxu0 %v405
  %901 = vmatpush.bf16.msra.mxu0 %v404
  %902 = vmatpush.bf16.msra.mxu0 %v403
  %903 = vmatmul.bf16.gmra.mxu0 %v845
  %v904 = vpop.f32.mrf.mxu0
  %v905 = vadd.f32 %v892, %v904
  %v906 = vpop.f32.mrf.mxu0
  %907 = vdwg.mxu0
  %908 = vmatpush.bf16.msra.mxu0 %v418
  %909 = vmatpush.bf16.msra.mxu0 %v417
  %910 = vmatpush.bf16.msra.mxu0 %v416
  %911 = vmatpush.bf16.msra.mxu0 %v415
  %912 = vmatpush.bf16.msra.mxu0 %v414
  %913 = vmatpush.bf16.msra.mxu0 %v413
  %914 = vmatpush.bf16.msra.mxu0 %v412
  %915 = vmatpush.bf16.msra.mxu0 %v411
  %916 = vmatmul.bf16.gmra.mxu0 %v846
  %v917 = vpop.f32.mrf.mxu0
  %v918 = vadd.f32 %v905, %v917
  %v919 = vpop.f32.mrf.mxu0
  %920 = vdwg.mxu0
  %921 = vmatpush.bf16.msra.mxu0 %v426
  %922 = vmatpush.bf16.msra.mxu0 %v425
  %923 = vmatpush.bf16.msra.mxu0 %v424
  %924 = vmatpush.bf16.msra.mxu0 %v423
  %925 = vmatpush.bf16.msra.mxu0 %v422
  %926 = vmatpush.bf16.msra.mxu0 %v421
  %927 = vmatpush.bf16.msra.mxu0 %v420
  %928 = vmatpush.bf16.msra.mxu0 %v419
  %929 = vmatmul.bf16.gmra.mxu0 %v847
  %v930 = vpop.f32.mrf.mxu0
  %v931 = vadd.f32 %v918, %v930
  %v932 = vpop.f32.mrf.mxu0
  %933 = vdwg.mxu0
  %934 = vmatpush.bf16.msra.mxu0 %v434
  %935 = vmatpush.bf16.msra.mxu0 %v433
  %936 = vmatpush.bf16.msra.mxu0 %v432
  %937 = vmatpush.bf16.msra.mxu0 %v431
  %938 = vmatpush.bf16.msra.mxu0 %v430
  %939 = vmatpush.bf16.msra.mxu0 %v429
  %940 = vmatpush.bf16.msra.mxu0 %v428
  %941 = vmatpush.bf16.msra.mxu0 %v427
  %942 = vmatmul.bf16.gmra.mxu0 %v848
  %v943 = vpop.f32.mrf.mxu0
  %v944 = vadd.f32 %v931, %v943
  %v945 = vpop.f32.mrf.mxu0
  %946 = vdwg.mxu0
  %v947 = vmax.f32 %v825, %v944
  %v948 = vld [vmem:[%s2] sm:$0x1]
  %v950 = vperm.slane %v948, 0
  %v952 = vadd.f32 %v947, %v950
  %v953 = vmax.f32 %v952, 0.0
  %v954 = vpack.c.bf16 %v953, %v953
  %955 = vst [vmem:[%s3] sm:$0xf] %v954
  // Predicated region
  $region14: #{cnn_model_l2_forward.8} parent=0 // pred_check
    _
  $region15: #{cnn_model_l2_forward.8} parent=0 // pred_check_branch
    %957 = sbr.rel (0) target = $region17
  $region16: #{cnn_model_l2_forward.8} parent=0 // pred_region
    _
  $region17: #{cnn_model_l2_forward.8} parent=0 // pred_fallthru
    _
  // Predicated region
  $region18: #{cnn_model_l2_forward.8} parent=0 // pred_check
    _
  $region19: #{cnn_model_l2_forward.8} parent=0 // pred_check_branch
    %959 = sbr.rel (0) target = $region21
  $region20: #{cnn_model_l2_forward.8} parent=0 // pred_region
    _
  $region21: #{cnn_model_l2_forward.8} parent=0 // pred_fallthru
    _

// kernel: cnn_model_l2_forward.9
$region0: #{cnn_model_l2_forward.9}
  #allocation0 [shape = 'u32[]', space=smem, size = 0x4, offset = 0x4, fixed_abs, tag = 'smem constant byte address 0x4 - core index']
  #allocation1 [shape = 'u32[72,128]{1,0:T(1,128)}', space=vmem, size = 0x9000, scoped, tag = 'internal scratch']
  %s0 = inlined_call_operand.vmem [shape: bf16[4,8,1664], index: 0, kind: input, shape index: {}]
  %s1 = inlined_call_operand.vmem [shape: bf16[1664,128], index: 1, kind: input, shape index: {}]
  %s2 = inlined_call_operand.vmem [shape: f32[1,128], index: 2, kind: input, shape index: {}]
  %s3 = inlined_call_operand.vmem [shape: bf16[128,128], index: 3, kind: input, shape index: {}]
  %s4 = inlined_call_operand.vmem [shape: f32[1,128], index: 4, kind: input, shape index: {}]
  %s5 = inlined_call_operand.vmem [shape: bf16[128,256], index: 5, kind: input, shape index: {}]
  %s6 = inlined_call_operand.vmem [shape: f32[1,256], index: 6, kind: input, shape index: {}]
  %s7 = inlined_call_operand.vmem [shape: bf16[256,128], index: 7, kind: input, shape index: {}]
  %s8 = inlined_call_operand.vmem [shape: f32[1,128], index: 8, kind: input, shape index: {}]
  %s9 = inlined_call_operand.vmem [shape: f32[8,128], index: 9, kind: output, shape index: {}]
  %s10 = sld [smem:[#allocation0]]
  $region46: #{cnn_model_l2_forward.9} parent=0
    _
  %s12 = ssub.s32 1, %s10
  %s13 = scalar_select 0, %s12, %s10
  // Predicated region
  $region2: #{cnn_model_l2_forward.9} parent=0 // pred_check
    _
  $region3: #{cnn_model_l2_forward.9} parent=0 // pred_check_branch
    %15 = sbr.rel (0) target = $region5
  $region4: #{cnn_model_l2_forward.9} parent=0 // pred_region
    _
  $region5: #{cnn_model_l2_forward.9} parent=0 // pred_fallthru
    _
  // Predicated region
  $region6: #{cnn_model_l2_forward.9} parent=0 // pred_check
    _
  $region7: #{cnn_model_l2_forward.9} parent=0 // pred_check_branch
    %17 = sbr.rel (0) target = $region9
  $region8: #{cnn_model_l2_forward.9} parent=0 // pred_region
    _
  $region9: #{cnn_model_l2_forward.9} parent=0 // pred_fallthru
    _
  // Predicated region
  $region10: #{cnn_model_l2_forward.9} parent=0 // pred_check
    _
  $region11: #{cnn_model_l2_forward.9} parent=0 // pred_check_branch
    %19 = sbr.rel (0) target = $region13
  $region12: #{cnn_model_l2_forward.9} parent=0 // pred_region
    _
  $region13: #{cnn_model_l2_forward.9} parent=0 // pred_fallthru
    _
  // Predicated region
  $region14: #{cnn_model_l2_forward.9} parent=0 // pred_check
    _
  $region15: #{cnn_model_l2_forward.9} parent=0 // pred_check_branch
    %21 = sbr.rel (0) target = $region17
  $region16: #{cnn_model_l2_forward.9} parent=0 // pred_region
    _
  $region17: #{cnn_model_l2_forward.9} parent=0 // pred_fallthru
    _
  // Predicated region
  $region18: #{cnn_model_l2_forward.9} parent=0 // pred_check
    _
  $region19: #{cnn_model_l2_forward.9} parent=0 // pred_check_branch
    %23 = sbr.rel (0) target = $region21
  $region20: #{cnn_model_l2_forward.9} parent=0 // pred_region
    _
  $region21: #{cnn_model_l2_forward.9} parent=0 // pred_fallthru
    _
  // Predicated region
  $region22: #{cnn_model_l2_forward.9} parent=0 // pred_check
    _
  $region23: #{cnn_model_l2_forward.9} parent=0 // pred_check_branch
    %25 = sbr.rel (0) target = $region25
  $region24: #{cnn_model_l2_forward.9} parent=0 // pred_region
    _
  $region25: #{cnn_model_l2_forward.9} parent=0 // pred_fallthru
    _
  // Predicated region
  $region26: #{cnn_model_l2_forward.9} parent=0 // pred_check
    _
  $region27: #{cnn_model_l2_forward.9} parent=0 // pred_check_branch
    %27 = sbr.rel (0) target = $region29
  $region28: #{cnn_model_l2_forward.9} parent=0 // pred_region
    _
  $region29: #{cnn_model_l2_forward.9} parent=0 // pred_fallthru
    _
  // Predicated region
  $region30: #{cnn_model_l2_forward.9} parent=0 // pred_check
    _
  $region31: #{cnn_model_l2_forward.9} parent=0 // pred_check_branch
    %29 = sbr.rel (0) target = $region33
  $region32: #{cnn_model_l2_forward.9} parent=0 // pred_region
    _
  $region33: #{cnn_model_l2_forward.9} parent=0 // pred_fallthru
    _
  // Predicated region
  $region34: #{cnn_model_l2_forward.9} parent=0 // pred_check
    _
  $region35: #{cnn_model_l2_forward.9} parent=0 // pred_check_branch
    %31 = sbr.rel (0) target = $region37
  $region36: #{cnn_model_l2_forward.9} parent=0 // pred_region
    _
  $region37: #{cnn_model_l2_forward.9} parent=0 // pred_fallthru
    _
  %v32 = vld [vmem:[%s0] sm:$0xff]
  %v33 = vld [vmem:[%s0 + $0x8] sm:$0xff]
  %v34 = vld [vmem:[%s0 + $0x10] sm:$0xff]
  %v35 = vld [vmem:[%s0 + $0x18] sm:$0xff]
  %v36 = vld [vmem:[%s0 + $0x20] sm:$0xff]
  %v37 = vld [vmem:[%s0 + $0x28] sm:$0xff]
  %v38 = vld [vmem:[%s0 + $0x30] sm:$0xf]
  %v39 = vld [vmem:[%s1] sm:$0xf]
  %v40 = vld [vmem:[%s1 + $0x4] sm:$0xf]
  %v41 = vld [vmem:[%s1 + $0x8] sm:$0xf]
  %v42 = vld [vmem:[%s1 + $0xc] sm:$0xf]
  %v43 = vld [vmem:[%s1 + $0x10] sm:$0xf]
  %v44 = vld [vmem:[%s1 + $0x14] sm:$0xf]
  %v45 = vld [vmem:[%s1 + $0x18] sm:$0xf]
  %v46 = vld [vmem:[%s1 + $0x1c] sm:$0xf]
  %v47 = vld [vmem:[%s1 + $0x20] sm:$0xf]
  %v48 = vld [vmem:[%s1 + $0x24] sm:$0xf]
  %v49 = vld [vmem:[%s1 + $0x28] sm:$0xf]
  %v50 = vld [vmem:[%s1 + $0x2c] sm:$0xf]
  %v51 = vld [vmem:[%s1 + $0x30] sm:$0xf]
  %v52 = vld [vmem:[%s1 + $0x34] sm:$0xf]
  %v53 = vld [vmem:[%s1 + $0x38] sm:$0xf]
  %v54 = vld [vmem:[%s1 + $0x3c] sm:$0xf]
  %v55 = vld [vmem:[%s1 + $0x40] sm:$0xf]
  %v56 = vld [vmem:[%s1 + $0x44] sm:$0xf]
  %v57 = vld [vmem:[%s1 + $0x48] sm:$0xf]
  %v58 = vld [vmem:[%s1 + $0x4c] sm:$0xf]
  %v59 = vld [vmem:[%s1 + $0x50] sm:$0xf]
  %v60 = vld [vmem:[%s1 + $0x54] sm:$0xf]
  %v61 = vld [vmem:[%s1 + $0x58] sm:$0xf]
  %v62 = vld [vmem:[%s1 + $0x5c] sm:$0xf]
  %v63 = vld [vmem:[%s1 + $0x60] sm:$0xf]
  %v64 = vld [vmem:[%s1 + $0x64] sm:$0xf]
  %v65 = vld [vmem:[%s1 + $0x68] sm:$0xf]
  %v66 = vld [vmem:[%s1 + $0x6c] sm:$0xf]
  %v67 = vld [vmem:[%s1 + $0x70] sm:$0xf]
  %v68 = vld [vmem:[%s1 + $0x74] sm:$0xf]
  %v69 = vld [vmem:[%s1 + $0x78] sm:$0xf]
  %v70 = vld [vmem:[%s1 + $0x7c] sm:$0xf]
  %v71 = vld [vmem:[%s1 + $0x80] sm:$0xf]
  %v72 = vld [vmem:[%s1 + $0x84] sm:$0xf]
  %v73 = vld [vmem:[%s1 + $0x88] sm:$0xf]
  %v74 = vld [vmem:[%s1 + $0x8c] sm:$0xf]
  %v75 = vld [vmem:[%s1 + $0x90] sm:$0xf]
  %v76 = vld [vmem:[%s1 + $0x94] sm:$0xf]
  %v77 = vld [vmem:[%s1 + $0x98] sm:$0xf]
  %v78 = vld [vmem:[%s1 + $0x9c] sm:$0xf]
  %v79 = vld [vmem:[%s1 + $0xa0] sm:$0xf]
  %v80 = vld [vmem:[%s1 + $0xa4] sm:$0xf]
  %v81 = vld [vmem:[%s1 + $0xa8] sm:$0xf]
  %v82 = vld [vmem:[%s1 + $0xac] sm:$0xf]
  %v83 = vld [vmem:[%s1 + $0xb0] sm:$0xf]
  %v84 = vld [vmem:[%s1 + $0xb4] sm:$0xf]
  %v85 = vld [vmem:[%s1 + $0xb8] sm:$0xf]
  %v86 = vld [vmem:[%s1 + $0xbc] sm:$0xf]
  %v87 = vld [vmem:[%s1 + $0xc0] sm:$0xf]
  %v88 = vld [vmem:[%s1 + $0xc4] sm:$0xf]
  %v89 = vld [vmem:[%s1 + $0xc8] sm:$0xf]
  %v90 = vld [vmem:[%s1 + $0xcc] sm:$0xf]
  %v91 = vld [vmem:[%s1 + $0xd0] sm:$0xf]
  %v92 = vld [vmem:[%s1 + $0xd4] sm:$0xf]
  %v93 = vld [vmem:[%s1 + $0xd8] sm:$0xf]
  %v94 = vld [vmem:[%s1 + $0xdc] sm:$0xf]
  %v95 = vld [vmem:[%s1 + $0xe0] sm:$0xf]
  %v96 = vld [vmem:[%s1 + $0xe4] sm:$0xf]
  %v97 = vld [vmem:[%s1 + $0xe8] sm:$0xf]
  %v98 = vld [vmem:[%s1 + $0xec] sm:$0xf]
  %v99 = vld [vmem:[%s1 + $0xf0] sm:$0xf]
  %v100 = vld [vmem:[%s1 + $0xf4] sm:$0xf]
  %v101 = vld [vmem:[%s1 + $0xf8] sm:$0xf]
  %v102 = vld [vmem:[%s1 + $0xfc] sm:$0xf]
  %v103 = vld [vmem:[%s1 + $0x100] sm:$0xf]
  %v104 = vld [vmem:[%s1 + $0x104] sm:$0xf]
  %v105 = vld [vmem:[%s1 + $0x108] sm:$0xf]
  %v106 = vld [vmem:[%s1 + $0x10c] sm:$0xf]
  %v107 = vld [vmem:[%s1 + $0x110] sm:$0xf]
  %v108 = vld [vmem:[%s1 + $0x114] sm:$0xf]
  %v109 = vld [vmem:[%s1 + $0x118] sm:$0xf]
  %v110 = vld [vmem:[%s1 + $0x11c] sm:$0xf]
  %v111 = vld [vmem:[%s1 + $0x120] sm:$0xf]
  %v112 = vld [vmem:[%s1 + $0x124] sm:$0xf]
  %v113 = vld [vmem:[%s1 + $0x128] sm:$0xf]
  %v114 = vld [vmem:[%s1 + $0x12c] sm:$0xf]
  %v115 = vld [vmem:[%s1 + $0x130] sm:$0xf]
  %v116 = vld [vmem:[%s1 + $0x134] sm:$0xf]
  %v117 = vld [vmem:[%s1 + $0x138] sm:$0xf]
  %v118 = vld [vmem:[%s1 + $0x13c] sm:$0xf]
  %v119 = vld [vmem:[%s1 + $0x140] sm:$0xf]
  %v120 = vld [vmem:[%s1 + $0x144] sm:$0xf]
  %v121 = vld [vmem:[%s1 + $0x148] sm:$0xf]
  %v122 = vld [vmem:[%s1 + $0x14c] sm:$0xf]
  %v123 = vld [vmem:[%s1 + $0x150] sm:$0xf]
  %v124 = vld [vmem:[%s1 + $0x154] sm:$0xf]
  %v125 = vld [vmem:[%s1 + $0x158] sm:$0xf]
  %v126 = vld [vmem:[%s1 + $0x15c] sm:$0xf]
  %v127 = vld [vmem:[%s1 + $0x160] sm:$0xf]
  %v128 = vld [vmem:[%s1 + $0x164] sm:$0xf]
  %v129 = vld [vmem:[%s1 + $0x168] sm:$0xf]
  %v130 = vld [vmem:[%s1 + $0x16c] sm:$0xf]
  %v131 = vld [vmem:[%s1 + $0x170] sm:$0xf]
  %v132 = vld [vmem:[%s1 + $0x174] sm:$0xf]
  %v133 = vld [vmem:[%s1 + $0x178] sm:$0xf]
  %v134 = vld [vmem:[%s1 + $0x17c] sm:$0xf]
  %v135 = vld [vmem:[%s1 + $0x180] sm:$0xf]
  %v136 = vld [vmem:[%s1 + $0x184] sm:$0xf]
  %v137 = vld [vmem:[%s1 + $0x188] sm:$0xf]
  %v138 = vld [vmem:[%s1 + $0x18c] sm:$0xf]
  %v139 = vld [vmem:[%s1 + $0x190] sm:$0xf]
  %v140 = vld [vmem:[%s1 + $0x194] sm:$0xf]
  %v141 = vld [vmem:[%s1 + $0x198] sm:$0xf]
  %v142 = vld [vmem:[%s1 + $0x19c] sm:$0xf]
  %v143 = vld [vmem:[%s1 + $0x1a0] sm:$0xf]
  %v144 = vld [vmem:[%s1 + $0x1a4] sm:$0xf]
  %v145 = vld [vmem:[%s1 + $0x1a8] sm:$0xf]
  %v146 = vld [vmem:[%s1 + $0x1ac] sm:$0xf]
  %v147 = vld [vmem:[%s1 + $0x1b0] sm:$0xf]
  %v148 = vld [vmem:[%s1 + $0x1b4] sm:$0xf]
  %v149 = vld [vmem:[%s1 + $0x1b8] sm:$0xf]
  %v150 = vld [vmem:[%s1 + $0x1bc] sm:$0xf]
  %v151 = vld [vmem:[%s1 + $0x1c0] sm:$0xf]
  %v152 = vld [vmem:[%s1 + $0x1c4] sm:$0xf]
  %v153 = vld [vmem:[%s1 + $0x1c8] sm:$0xf]
  %v154 = vld [vmem:[%s1 + $0x1cc] sm:$0xf]
  %v155 = vld [vmem:[%s1 + $0x1d0] sm:$0xf]
  %v156 = vld [vmem:[%s1 + $0x1d4] sm:$0xf]
  %v157 = vld [vmem:[%s1 + $0x1d8] sm:$0xf]
  %v158 = vld [vmem:[%s1 + $0x1dc] sm:$0xf]
  %v159 = vld [vmem:[%s1 + $0x1e0] sm:$0xf]
  %v160 = vld [vmem:[%s1 + $0x1e4] sm:$0xf]
  %v161 = vld [vmem:[%s1 + $0x1e8] sm:$0xf]
  %v162 = vld [vmem:[%s1 + $0x1ec] sm:$0xf]
  %v163 = vld [vmem:[%s1 + $0x1f0] sm:$0xf]
  %v164 = vld [vmem:[%s1 + $0x1f4] sm:$0xf]
  %v165 = vld [vmem:[%s1 + $0x1f8] sm:$0xf]
  %v166 = vld [vmem:[%s1 + $0x1fc] sm:$0xf]
  %v167 = vld [vmem:[%s1 + $0x200] sm:$0xf]
  %v168 = vld [vmem:[%s1 + $0x204] sm:$0xf]
  %v169 = vld [vmem:[%s1 + $0x208] sm:$0xf]
  %v170 = vld [vmem:[%s1 + $0x20c] sm:$0xf]
  %v171 = vld [vmem:[%s1 + $0x210] sm:$0xf]
  %v172 = vld [vmem:[%s1 + $0x214] sm:$0xf]
  %v173 = vld [vmem:[%s1 + $0x218] sm:$0xf]
  %v174 = vld [vmem:[%s1 + $0x21c] sm:$0xf]
  %v175 = vld [vmem:[%s1 + $0x220] sm:$0xf]
  %v176 = vld [vmem:[%s1 + $0x224] sm:$0xf]
  %v177 = vld [vmem:[%s1 + $0x228] sm:$0xf]
  %v178 = vld [vmem:[%s1 + $0x22c] sm:$0xf]
  %v179 = vld [vmem:[%s1 + $0x230] sm:$0xf]
  %v180 = vld [vmem:[%s1 + $0x234] sm:$0xf]
  %v181 = vld [vmem:[%s1 + $0x238] sm:$0xf]
  %v182 = vld [vmem:[%s1 + $0x23c] sm:$0xf]
  %v183 = vld [vmem:[%s1 + $0x240] sm:$0xf]
  %v184 = vld [vmem:[%s1 + $0x244] sm:$0xf]
  %v185 = vld [vmem:[%s1 + $0x248] sm:$0xf]
  %v186 = vld [vmem:[%s1 + $0x24c] sm:$0xf]
  %v187 = vld [vmem:[%s1 + $0x250] sm:$0xf]
  %v188 = vld [vmem:[%s1 + $0x254] sm:$0xf]
  %v189 = vld [vmem:[%s1 + $0x258] sm:$0xf]
  %v190 = vld [vmem:[%s1 + $0x25c] sm:$0xf]
  %v191 = vld [vmem:[%s1 + $0x260] sm:$0xf]
  %v192 = vld [vmem:[%s1 + $0x264] sm:$0xf]
  %v193 = vld [vmem:[%s1 + $0x268] sm:$0xf]
  %v194 = vld [vmem:[%s1 + $0x26c] sm:$0xf]
  %v195 = vld [vmem:[%s1 + $0x270] sm:$0xf]
  %v196 = vld [vmem:[%s1 + $0x274] sm:$0xf]
  %v197 = vld [vmem:[%s1 + $0x278] sm:$0xf]
  %v198 = vld [vmem:[%s1 + $0x27c] sm:$0xf]
  %v199 = vld [vmem:[%s1 + $0x280] sm:$0xf]
  %v200 = vld [vmem:[%s1 + $0x284] sm:$0xf]
  %v201 = vld [vmem:[%s1 + $0x288] sm:$0xf]
  %v202 = vld [vmem:[%s1 + $0x28c] sm:$0xf]
  %v203 = vld [vmem:[%s1 + $0x290] sm:$0xf]
  %v204 = vld [vmem:[%s1 + $0x294] sm:$0xf]
  %v205 = vld [vmem:[%s1 + $0x298] sm:$0xf]
  %v206 = vld [vmem:[%s1 + $0x29c] sm:$0xf]
  %v207 = vld [vmem:[%s1 + $0x2a0] sm:$0xf]
  %v208 = vld [vmem:[%s1 + $0x2a4] sm:$0xf]
  %v209 = vld [vmem:[%s1 + $0x2a8] sm:$0xf]
  %v210 = vld [vmem:[%s1 + $0x2ac] sm:$0xf]
  %v211 = vld [vmem:[%s1 + $0x2b0] sm:$0xf]
  %v212 = vld [vmem:[%s1 + $0x2b4] sm:$0xf]
  %v213 = vld [vmem:[%s1 + $0x2b8] sm:$0xf]
  %v214 = vld [vmem:[%s1 + $0x2bc] sm:$0xf]
  %v215 = vld [vmem:[%s1 + $0x2c0] sm:$0xf]
  %v216 = vld [vmem:[%s1 + $0x2c4] sm:$0xf]
  %v217 = vld [vmem:[%s1 + $0x2c8] sm:$0xf]
  %v218 = vld [vmem:[%s1 + $0x2cc] sm:$0xf]
  %v219 = vld [vmem:[%s1 + $0x2d0] sm:$0xf]
  %v220 = vld [vmem:[%s1 + $0x2d4] sm:$0xf]
  %v221 = vld [vmem:[%s1 + $0x2d8] sm:$0xf]
  %v222 = vld [vmem:[%s1 + $0x2dc] sm:$0xf]
  %v223 = vld [vmem:[%s1 + $0x2e0] sm:$0xf]
  %v224 = vld [vmem:[%s1 + $0x2e4] sm:$0xf]
  %v225 = vld [vmem:[%s1 + $0x2e8] sm:$0xf]
  %v226 = vld [vmem:[%s1 + $0x2ec] sm:$0xf]
  %v227 = vld [vmem:[%s1 + $0x2f0] sm:$0xf]
  %v228 = vld [vmem:[%s1 + $0x2f4] sm:$0xf]
  %v229 = vld [vmem:[%s1 + $0x2f8] sm:$0xf]
  %v230 = vld [vmem:[%s1 + $0x2fc] sm:$0xf]
  %v231 = vld [vmem:[%s1 + $0x300] sm:$0xf]
  %v232 = vld [vmem:[%s1 + $0x304] sm:$0xf]
  %v233 = vld [vmem:[%s1 + $0x308] sm:$0xf]
  %v234 = vld [vmem:[%s1 + $0x30c] sm:$0xf]
  %v235 = vld [vmem:[%s1 + $0x310] sm:$0xf]
  %v236 = vld [vmem:[%s1 + $0x314] sm:$0xf]
  %v237 = vld [vmem:[%s1 + $0x318] sm:$0xf]
  %v238 = vld [vmem:[%s1 + $0x31c] sm:$0xf]
  %v239 = vld [vmem:[%s1 + $0x320] sm:$0xf]
  %v240 = vld [vmem:[%s1 + $0x324] sm:$0xf]
  %v241 = vld [vmem:[%s1 + $0x328] sm:$0xf]
  %v242 = vld [vmem:[%s1 + $0x32c] sm:$0xf]
  %v243 = vld [vmem:[%s1 + $0x330] sm:$0xf]
  %v244 = vld [vmem:[%s1 + $0x334] sm:$0xf]
  %v245 = vld [vmem:[%s1 + $0x338] sm:$0xf]
  %v246 = vld [vmem:[%s1 + $0x33c] sm:$0xf]
  %v254 = vunpack.c.l.b16 %v32
  %v255 = vunpack.c.h.b16 %v32
  %v256 = vunpack.c.l.b16 %v33
  %v257 = vunpack.c.h.b16 %v33
  %v258 = vunpack.c.l.b16 %v34
  %v259 = vunpack.c.h.b16 %v34
  %v260 = vunpack.c.l.b16 %v35
  %v261 = vunpack.c.h.b16 %v35
  %v262 = vunpack.c.l.b16 %v36
  %v263 = vunpack.c.h.b16 %v36
  %v264 = vunpack.c.l.b16 %v37
  %v265 = vunpack.c.h.b16 %v37
  %v266 = vunpack.c.l.b16 %v38
  %v267 = vpack.c.b16 %v254, %v254
  %v268 = vpack.c.b16 %v255, %v255
  %v269 = vpack.c.b16 %v256, %v256
  %v270 = vpack.c.b16 %v257, %v257
  %v271 = vpack.c.b16 %v258, %v258
  %v272 = vpack.c.b16 %v259, %v259
  %v273 = vpack.c.b16 %v260, %v260
  %v274 = vpack.c.b16 %v261, %v261
  %v275 = vpack.c.b16 %v262, %v262
  %v276 = vpack.c.b16 %v263, %v263
  %v277 = vpack.c.b16 %v264, %v264
  %v278 = vpack.c.b16 %v265, %v265
  %v279 = vpack.c.b16 %v266, %v266
  %v501 = vunpack.c.l.b16 %v39
  %v502 = vunpack.c.l.b16 %v40
  %v503 = vunpack.c.l.b16 %v41
  %v504 = vunpack.c.l.b16 %v42
  %v505 = vunpack.c.l.b16 %v43
  %v506 = vunpack.c.l.b16 %v44
  %v507 = vunpack.c.l.b16 %v45
  %v508 = vunpack.c.l.b16 %v46
  %v509 = vunpack.c.l.b16 %v47
  %v510 = vunpack.c.l.b16 %v48
  %v511 = vunpack.c.l.b16 %v49
  %v512 = vunpack.c.l.b16 %v50
  %v513 = vunpack.c.l.b16 %v51
  %v514 = vunpack.c.l.b16 %v52
  %v515 = vunpack.c.l.b16 %v53
  %v516 = vunpack.c.l.b16 %v54
  %v517 = vunpack.c.l.b16 %v55
  %v518 = vunpack.c.l.b16 %v56
  %v519 = vunpack.c.l.b16 %v57
  %v520 = vunpack.c.l.b16 %v58
  %v521 = vunpack.c.l.b16 %v59
  %v522 = vunpack.c.l.b16 %v60
  %v523 = vunpack.c.l.b16 %v61
  %v524 = vunpack.c.l.b16 %v62
  %v525 = vunpack.c.l.b16 %v63
  %v526 = vunpack.c.l.b16 %v64
  %v527 = vunpack.c.l.b16 %v65
  %v528 = vunpack.c.l.b16 %v66
  %v529 = vunpack.c.l.b16 %v67
  %v530 = vunpack.c.l.b16 %v68
  %v531 = vunpack.c.l.b16 %v69
  %v532 = vunpack.c.l.b16 %v70
  %v533 = vunpack.c.l.b16 %v71
  %v534 = vunpack.c.l.b16 %v72
  %v535 = vunpack.c.l.b16 %v73
  %v536 = vunpack.c.l.b16 %v74
  %v537 = vunpack.c.l.b16 %v75
  %v538 = vunpack.c.l.b16 %v76
  %v539 = vunpack.c.l.b16 %v77
  %v540 = vunpack.c.l.b16 %v78
  %v541 = vunpack.c.l.b16 %v79
  %v542 = vunpack.c.l.b16 %v80
  %v543 = vunpack.c.l.b16 %v81
  %v544 = vunpack.c.l.b16 %v82
  %v545 = vunpack.c.l.b16 %v83
  %v546 = vunpack.c.l.b16 %v84
  %v547 = vunpack.c.l.b16 %v85
  %v548 = vunpack.c.l.b16 %v86
  %v549 = vunpack.c.l.b16 %v87
  %v550 = vunpack.c.l.b16 %v88
  %v551 = vunpack.c.l.b16 %v89
  %v552 = vunpack.c.l.b16 %v90
  %v553 = vunpack.c.l.b16 %v91
  %v554 = vunpack.c.l.b16 %v92
  %v555 = vunpack.c.l.b16 %v93
  %v556 = vunpack.c.l.b16 %v94
  %v557 = vunpack.c.l.b16 %v95
  %v558 = vunpack.c.l.b16 %v96
  %v559 = vunpack.c.l.b16 %v97
  %v560 = vunpack.c.l.b16 %v98
  %v561 = vunpack.c.l.b16 %v99
  %v562 = vunpack.c.l.b16 %v100
  %v563 = vunpack.c.l.b16 %v101
  %v564 = vunpack.c.l.b16 %v102
  %v565 = vunpack.c.l.b16 %v103
  %v566 = vunpack.c.l.b16 %v104
  %v567 = vunpack.c.l.b16 %v105
  %v568 = vunpack.c.l.b16 %v106
  %v569 = vunpack.c.l.b16 %v107
  %v570 = vunpack.c.l.b16 %v108
  %v571 = vunpack.c.l.b16 %v109
  %v572 = vunpack.c.l.b16 %v110
  %v573 = vunpack.c.l.b16 %v111
  %v574 = vunpack.c.l.b16 %v112
  %v575 = vunpack.c.l.b16 %v113
  %v576 = vunpack.c.l.b16 %v114
  %v577 = vunpack.c.l.b16 %v115
  %v578 = vunpack.c.l.b16 %v116
  %v579 = vunpack.c.l.b16 %v117
  %v580 = vunpack.c.l.b16 %v118
  %v581 = vunpack.c.l.b16 %v119
  %v582 = vunpack.c.l.b16 %v120
  %v583 = vunpack.c.l.b16 %v121
  %v584 = vunpack.c.l.b16 %v122
  %v585 = vunpack.c.l.b16 %v123
  %v586 = vunpack.c.l.b16 %v124
  %v587 = vunpack.c.l.b16 %v125
  %v588 = vunpack.c.l.b16 %v126
  %v589 = vunpack.c.l.b16 %v127
  %v590 = vunpack.c.l.b16 %v128
  %v591 = vunpack.c.l.b16 %v129
  %v592 = vunpack.c.l.b16 %v130
  %v593 = vunpack.c.l.b16 %v131
  %v594 = vunpack.c.l.b16 %v132
  %v595 = vunpack.c.l.b16 %v133
  %v596 = vunpack.c.l.b16 %v134
  %v597 = vunpack.c.l.b16 %v135
  %v598 = vunpack.c.l.b16 %v136
  %v599 = vunpack.c.l.b16 %v137
  %v600 = vunpack.c.l.b16 %v138
  %v601 = vunpack.c.l.b16 %v139
  %v602 = vunpack.c.l.b16 %v140
  %v603 = vunpack.c.l.b16 %v141
  %v604 = vunpack.c.l.b16 %v142
  %v605 = vunpack.c.l.b16 %v143
  %v606 = vunpack.c.l.b16 %v144
  %v607 = vunpack.c.l.b16 %v145
  %v608 = vunpack.c.l.b16 %v146
  %v609 = vunpack.c.l.b16 %v147
  %v610 = vunpack.c.l.b16 %v148
  %v611 = vunpack.c.l.b16 %v149
  %v612 = vunpack.c.l.b16 %v150
  %v613 = vunpack.c.l.b16 %v151
  %v614 = vunpack.c.l.b16 %v152
  %v615 = vunpack.c.l.b16 %v153
  %v616 = vunpack.c.l.b16 %v154
  %v617 = vunpack.c.l.b16 %v155
  %v618 = vunpack.c.l.b16 %v156
  %v619 = vunpack.c.l.b16 %v157
  %v620 = vunpack.c.l.b16 %v158
  %v621 = vunpack.c.l.b16 %v159
  %v622 = vunpack.c.l.b16 %v160
  %v623 = vunpack.c.l.b16 %v161
  %v624 = vunpack.c.l.b16 %v162
  %v625 = vunpack.c.l.b16 %v163
  %v626 = vunpack.c.l.b16 %v164
  %v627 = vunpack.c.l.b16 %v165
  %v628 = vunpack.c.l.b16 %v166
  %v629 = vunpack.c.l.b16 %v167
  %v630 = vunpack.c.l.b16 %v168
  %v631 = vunpack.c.l.b16 %v169
  %v632 = vunpack.c.l.b16 %v170
  %v633 = vunpack.c.l.b16 %v171
  %v634 = vunpack.c.l.b16 %v172
  %v635 = vunpack.c.l.b16 %v173
  %v636 = vunpack.c.l.b16 %v174
  %v637 = vunpack.c.l.b16 %v175
  %v638 = vunpack.c.l.b16 %v176
  %v639 = vunpack.c.l.b16 %v177
  %v640 = vunpack.c.l.b16 %v178
  %v641 = vunpack.c.l.b16 %v179
  %v642 = vunpack.c.l.b16 %v180
  %v643 = vunpack.c.l.b16 %v181
  %v644 = vunpack.c.l.b16 %v182
  %v645 = vunpack.c.l.b16 %v183
  %v646 = vunpack.c.l.b16 %v184
  %v647 = vunpack.c.l.b16 %v185
  %v648 = vunpack.c.l.b16 %v186
  %v649 = vunpack.c.l.b16 %v187
  %v650 = vunpack.c.l.b16 %v188
  %v651 = vunpack.c.l.b16 %v189
  %v652 = vunpack.c.l.b16 %v190
  %v653 = vunpack.c.l.b16 %v191
  %v654 = vunpack.c.l.b16 %v192
  %v655 = vunpack.c.l.b16 %v193
  %v656 = vunpack.c.l.b16 %v194
  %v657 = vunpack.c.l.b16 %v195
  %v658 = vunpack.c.l.b16 %v196
  %v659 = vunpack.c.l.b16 %v197
  %v660 = vunpack.c.l.b16 %v198
  %v661 = vunpack.c.l.b16 %v199
  %v662 = vunpack.c.l.b16 %v200
  %v663 = vunpack.c.l.b16 %v201
  %v664 = vunpack.c.l.b16 %v202
  %v665 = vunpack.c.l.b16 %v203
  %v666 = vunpack.c.l.b16 %v204
  %v667 = vunpack.c.l.b16 %v205
  %v668 = vunpack.c.l.b16 %v206
  %v669 = vunpack.c.l.b16 %v207
  %v670 = vunpack.c.l.b16 %v208
  %v671 = vunpack.c.l.b16 %v209
  %v672 = vunpack.c.l.b16 %v210
  %v673 = vunpack.c.l.b16 %v211
  %v674 = vunpack.c.l.b16 %v212
  %v675 = vunpack.c.l.b16 %v213
  %v676 = vunpack.c.l.b16 %v214
  %v677 = vunpack.c.l.b16 %v215
  %v678 = vunpack.c.l.b16 %v216
  %v679 = vunpack.c.l.b16 %v217
  %v680 = vunpack.c.l.b16 %v218
  %v681 = vunpack.c.l.b16 %v219
  %v682 = vunpack.c.l.b16 %v220
  %v683 = vunpack.c.l.b16 %v221
  %v684 = vunpack.c.l.b16 %v222
  %v685 = vunpack.c.l.b16 %v223
  %v686 = vunpack.c.l.b16 %v224
  %v687 = vunpack.c.l.b16 %v225
  %v688 = vunpack.c.l.b16 %v226
  %v689 = vunpack.c.l.b16 %v227
  %v690 = vunpack.c.l.b16 %v228
  %v691 = vunpack.c.l.b16 %v229
  %v692 = vunpack.c.l.b16 %v230
  %v693 = vunpack.c.l.b16 %v231
  %v694 = vunpack.c.l.b16 %v232
  %v695 = vunpack.c.l.b16 %v233
  %v696 = vunpack.c.l.b16 %v234
  %v697 = vunpack.c.l.b16 %v235
  %v698 = vunpack.c.l.b16 %v236
  %v699 = vunpack.c.l.b16 %v237
  %v700 = vunpack.c.l.b16 %v238
  %v701 = vunpack.c.l.b16 %v239
  %v702 = vunpack.c.l.b16 %v240
  %v703 = vunpack.c.l.b16 %v241
  %v704 = vunpack.c.l.b16 %v242
  %v705 = vunpack.c.l.b16 %v243
  %v706 = vunpack.c.l.b16 %v244
  %v707 = vunpack.c.l.b16 %v245
  %v708 = vunpack.c.l.b16 %v246
  %v709 = vpack.c.b16 %v502, %v501
  %v710 = vpack.c.b16 %v504, %v503
  %v711 = vpack.c.b16 %v506, %v505
  %v712 = vpack.c.b16 %v508, %v507
  %v713 = vpack.c.b16 %v510, %v509
  %v714 = vpack.c.b16 %v512, %v511
  %v715 = vpack.c.b16 %v514, %v513
  %v716 = vpack.c.b16 %v516, %v515
  %v717 = vpack.c.b16 %v518, %v517
  %v718 = vpack.c.b16 %v520, %v519
  %v719 = vpack.c.b16 %v522, %v521
  %v720 = vpack.c.b16 %v524, %v523
  %v721 = vpack.c.b16 %v526, %v525
  %v722 = vpack.c.b16 %v528, %v527
  %v723 = vpack.c.b16 %v530, %v529
  %v724 = vpack.c.b16 %v532, %v531
  %v725 = vpack.c.b16 %v534, %v533
  %v726 = vpack.c.b16 %v536, %v535
  %v727 = vpack.c.b16 %v538, %v537
  %v728 = vpack.c.b16 %v540, %v539
  %v729 = vpack.c.b16 %v542, %v541
  %v730 = vpack.c.b16 %v544, %v543
  %v731 = vpack.c.b16 %v546, %v545
  %v732 = vpack.c.b16 %v548, %v547
  %v733 = vpack.c.b16 %v550, %v549
  %v734 = vpack.c.b16 %v552, %v551
  %v735 = vpack.c.b16 %v554, %v553
  %v736 = vpack.c.b16 %v556, %v555
  %v737 = vpack.c.b16 %v558, %v557
  %v738 = vpack.c.b16 %v560, %v559
  %v739 = vpack.c.b16 %v562, %v561
  %v740 = vpack.c.b16 %v564, %v563
  %v741 = vpack.c.b16 %v566, %v565
  %v742 = vpack.c.b16 %v568, %v567
  %v743 = vpack.c.b16 %v570, %v569
  %v744 = vpack.c.b16 %v572, %v571
  %v745 = vpack.c.b16 %v574, %v573
  %v746 = vpack.c.b16 %v576, %v575
  %v747 = vpack.c.b16 %v578, %v577
  %v748 = vpack.c.b16 %v580, %v579
  %v749 = vpack.c.b16 %v582, %v581
  %v750 = vpack.c.b16 %v584, %v583
  %v751 = vpack.c.b16 %v586, %v585
  %v752 = vpack.c.b16 %v588, %v587
  %v753 = vpack.c.b16 %v590, %v589
  %v754 = vpack.c.b16 %v592, %v591
  %v755 = vpack.c.b16 %v594, %v593
  %v756 = vpack.c.b16 %v596, %v595
  %v757 = vpack.c.b16 %v598, %v597
  %v758 = vpack.c.b16 %v600, %v599
  %v759 = vpack.c.b16 %v602, %v601
  %v760 = vpack.c.b16 %v604, %v603
  %v761 = vpack.c.b16 %v606, %v605
  %v762 = vpack.c.b16 %v608, %v607
  %v763 = vpack.c.b16 %v610, %v609
  %v764 = vpack.c.b16 %v612, %v611
  %v765 = vpack.c.b16 %v614, %v613
  %v766 = vpack.c.b16 %v616, %v615
  %v767 = vpack.c.b16 %v618, %v617
  %v768 = vpack.c.b16 %v620, %v619
  %v769 = vpack.c.b16 %v622, %v621
  %v770 = vpack.c.b16 %v624, %v623
  %v771 = vpack.c.b16 %v626, %v625
  %v772 = vpack.c.b16 %v628, %v627
  %v773 = vpack.c.b16 %v630, %v629
  %v774 = vpack.c.b16 %v632, %v631
  %v775 = vpack.c.b16 %v634, %v633
  %v776 = vpack.c.b16 %v636, %v635
  %v777 = vpack.c.b16 %v638, %v637
  %v778 = vpack.c.b16 %v640, %v639
  %v779 = vpack.c.b16 %v642, %v641
  %v780 = vpack.c.b16 %v644, %v643
  %v781 = vpack.c.b16 %v646, %v645
  %v782 = vpack.c.b16 %v648, %v647
  %v783 = vpack.c.b16 %v650, %v649
  %v784 = vpack.c.b16 %v652, %v651
  %v785 = vpack.c.b16 %v654, %v653
  %v786 = vpack.c.b16 %v656, %v655
  %v787 = vpack.c.b16 %v658, %v657
  %v788 = vpack.c.b16 %v660, %v659
  %v789 = vpack.c.b16 %v662, %v661
  %v790 = vpack.c.b16 %v664, %v663
  %v791 = vpack.c.b16 %v666, %v665
  %v792 = vpack.c.b16 %v668, %v667
  %v793 = vpack.c.b16 %v670, %v669
  %v794 = vpack.c.b16 %v672, %v671
  %v795 = vpack.c.b16 %v674, %v673
  %v796 = vpack.c.b16 %v676, %v675
  %v797 = vpack.c.b16 %v678, %v677
  %v798 = vpack.c.b16 %v680, %v679
  %v799 = vpack.c.b16 %v682, %v681
  %v800 = vpack.c.b16 %v684, %v683
  %v801 = vpack.c.b16 %v686, %v685
  %v802 = vpack.c.b16 %v688, %v687
  %v803 = vpack.c.b16 %v690, %v689
  %v804 = vpack.c.b16 %v692, %v691
  %v805 = vpack.c.b16 %v694, %v693
  %v806 = vpack.c.b16 %v696, %v695
  %v807 = vpack.c.b16 %v698, %v697
  %v808 = vpack.c.b16 %v700, %v699
  %v809 = vpack.c.b16 %v702, %v701
  %v810 = vpack.c.b16 %v704, %v703
  %v811 = vpack.c.b16 %v706, %v705
  %v812 = vpack.c.b16 %v708, %v707
  %917 = vmatpush.bf16.msra.mxu0 %v716
  %918 = vmatpush.bf16.msra.mxu0 %v715
  %919 = vmatpush.bf16.msra.mxu0 %v714
  %920 = vmatpush.bf16.msra.mxu0 %v713
  %921 = vmatpush.bf16.msra.mxu0 %v712
  %922 = vmatpush.bf16.msra.mxu0 %v711
  %923 = vmatpush.bf16.msra.mxu0 %v710
  %924 = vmatpush.bf16.msra.mxu0 %v709
  %925 = vmatmul.bf16.gmra.mxu0 %v267
  %v926 = vpop.f32.mrf.mxu0
  %v927 = vadd.f32 0.0, %v926
  %v928 = vpop.f32.mrf.mxu0
  %929 = vdwg.mxu0
  %930 = vmatpush.bf16.msra.mxu0 %v724
  %931 = vmatpush.bf16.msra.mxu0 %v723
  %932 = vmatpush.bf16.msra.mxu0 %v722
  %933 = vmatpush.bf16.msra.mxu0 %v721
  %934 = vmatpush.bf16.msra.mxu0 %v720
  %935 = vmatpush.bf16.msra.mxu0 %v719
  %936 = vmatpush.bf16.msra.mxu0 %v718
  %937 = vmatpush.bf16.msra.mxu0 %v717
  %938 = vmatmul.bf16.gmra.mxu0 %v268
  %v939 = vpop.f32.mrf.mxu0
  %v940 = vadd.f32 %v927, %v939
  %v941 = vpop.f32.mrf.mxu0
  %942 = vdwg.mxu0
  %943 = vmatpush.bf16.msra.mxu0 %v732
  %944 = vmatpush.bf16.msra.mxu0 %v731
  %945 = vmatpush.bf16.msra.mxu0 %v730
  %946 = vmatpush.bf16.msra.mxu0 %v729
  %947 = vmatpush.bf16.msra.mxu0 %v728
  %948 = vmatpush.bf16.msra.mxu0 %v727
  %949 = vmatpush.bf16.msra.mxu0 %v726
  %950 = vmatpush.bf16.msra.mxu0 %v725
  %951 = vmatmul.bf16.gmra.mxu0 %v269
  %v952 = vpop.f32.mrf.mxu0
  %v953 = vadd.f32 %v940, %v952
  %v954 = vpop.f32.mrf.mxu0
  %955 = vdwg.mxu0
  %956 = vmatpush.bf16.msra.mxu0 %v740
  %957 = vmatpush.bf16.msra.mxu0 %v739
  %958 = vmatpush.bf16.msra.mxu0 %v738
  %959 = vmatpush.bf16.msra.mxu0 %v737
  %960 = vmatpush.bf16.msra.mxu0 %v736
  %961 = vmatpush.bf16.msra.mxu0 %v735
  %962 = vmatpush.bf16.msra.mxu0 %v734
  %963 = vmatpush.bf16.msra.mxu0 %v733
  %964 = vmatmul.bf16.gmra.mxu0 %v270
  %v965 = vpop.f32.mrf.mxu0
  %v966 = vadd.f32 %v953, %v965
  %v967 = vpop.f32.mrf.mxu0
  %968 = vdwg.mxu0
  %969 = vmatpush.bf16.msra.mxu0 %v748
  %970 = vmatpush.bf16.msra.mxu0 %v747
  %971 = vmatpush.bf16.msra.mxu0 %v746
  %972 = vmatpush.bf16.msra.mxu0 %v745
  %973 = vmatpush.bf16.msra.mxu0 %v744
  %974 = vmatpush.bf16.msra.mxu0 %v743
  %975 = vmatpush.bf16.msra.mxu0 %v742
  %976 = vmatpush.bf16.msra.mxu0 %v741
  %977 = vmatmul.bf16.gmra.mxu0 %v271
  %v978 = vpop.f32.mrf.mxu0
  %v979 = vadd.f32 %v966, %v978
  %v980 = vpop.f32.mrf.mxu0
  %981 = vdwg.mxu0
  %982 = vmatpush.bf16.msra.mxu0 %v756
  %983 = vmatpush.bf16.msra.mxu0 %v755
  %984 = vmatpush.bf16.msra.mxu0 %v754
  %985 = vmatpush.bf16.msra.mxu0 %v753
  %986 = vmatpush.bf16.msra.mxu0 %v752
  %987 = vmatpush.bf16.msra.mxu0 %v751
  %988 = vmatpush.bf16.msra.mxu0 %v750
  %989 = vmatpush.bf16.msra.mxu0 %v749
  %990 = vmatmul.bf16.gmra.mxu0 %v272
  %v991 = vpop.f32.mrf.mxu0
  %v992 = vadd.f32 %v979, %v991
  %v993 = vpop.f32.mrf.mxu0
  %994 = vdwg.mxu0
  %995 = vmatpush.bf16.msra.mxu0 %v764
  %996 = vmatpush.bf16.msra.mxu0 %v763
  %997 = vmatpush.bf16.msra.mxu0 %v762
  %998 = vmatpush.bf16.msra.mxu0 %v761
  %999 = vmatpush.bf16.msra.mxu0 %v760
  %1000 = vmatpush.bf16.msra.mxu0 %v759
  %1001 = vmatpush.bf16.msra.mxu0 %v758
  %1002 = vmatpush.bf16.msra.mxu0 %v757
  %1003 = vmatmul.bf16.gmra.mxu0 %v273
  %v1004 = vpop.f32.mrf.mxu0
  %v1005 = vadd.f32 %v992, %v1004
  %v1006 = vpop.f32.mrf.mxu0
  %1007 = vdwg.mxu0
  %1008 = vmatpush.bf16.msra.mxu0 %v772
  %1009 = vmatpush.bf16.msra.mxu0 %v771
  %1010 = vmatpush.bf16.msra.mxu0 %v770
  %1011 = vmatpush.bf16.msra.mxu0 %v769
  %1012 = vmatpush.bf16.msra.mxu0 %v768
  %1013 = vmatpush.bf16.msra.mxu0 %v767
  %1014 = vmatpush.bf16.msra.mxu0 %v766
  %1015 = vmatpush.bf16.msra.mxu0 %v765
  %1016 = vmatmul.bf16.gmra.mxu0 %v274
  %v1017 = vpop.f32.mrf.mxu0
  %v1018 = vadd.f32 %v1005, %v1017
  %v1019 = vpop.f32.mrf.mxu0
  %1020 = vdwg.mxu0
  %1021 = vmatpush.bf16.msra.mxu0 %v780
  %1022 = vmatpush.bf16.msra.mxu0 %v779
  %1023 = vmatpush.bf16.msra.mxu0 %v778
  %1024 = vmatpush.bf16.msra.mxu0 %v777
  %1025 = vmatpush.bf16.msra.mxu0 %v776
  %1026 = vmatpush.bf16.msra.mxu0 %v775
  %1027 = vmatpush.bf16.msra.mxu0 %v774
  %1028 = vmatpush.bf16.msra.mxu0 %v773
  %1029 = vmatmul.bf16.gmra.mxu0 %v275
  %v1030 = vpop.f32.mrf.mxu0
  %v1031 = vadd.f32 %v1018, %v1030
  %v1032 = vpop.f32.mrf.mxu0
  %1033 = vdwg.mxu0
  %1034 = vmatpush.bf16.msra.mxu0 %v788
  %1035 = vmatpush.bf16.msra.mxu0 %v787
  %1036 = vmatpush.bf16.msra.mxu0 %v786
  %1037 = vmatpush.bf16.msra.mxu0 %v785
  %1038 = vmatpush.bf16.msra.mxu0 %v784
  %1039 = vmatpush.bf16.msra.mxu0 %v783
  %1040 = vmatpush.bf16.msra.mxu0 %v782
  %1041 = vmatpush.bf16.msra.mxu0 %v781
  %1042 = vmatmul.bf16.gmra.mxu0 %v276
  %v1043 = vpop.f32.mrf.mxu0
  %v1044 = vadd.f32 %v1031, %v1043
  %v1045 = vpop.f32.mrf.mxu0
  %1046 = vdwg.mxu0
  %1047 = vmatpush.bf16.msra.mxu0 %v796
  %1048 = vmatpush.bf16.msra.mxu0 %v795
  %1049 = vmatpush.bf16.msra.mxu0 %v794
  %1050 = vmatpush.bf16.msra.mxu0 %v793
  %1051 = vmatpush.bf16.msra.mxu0 %v792
  %1052 = vmatpush.bf16.msra.mxu0 %v791
  %1053 = vmatpush.bf16.msra.mxu0 %v790
  %1054 = vmatpush.bf16.msra.mxu0 %v789
  %1055 = vmatmul.bf16.gmra.mxu0 %v277
  %v1056 = vpop.f32.mrf.mxu0
  %v1057 = vadd.f32 %v1044, %v1056
  %v1058 = vpop.f32.mrf.mxu0
  %1059 = vdwg.mxu0
  %1060 = vmatpush.bf16.msra.mxu0 %v804
  %1061 = vmatpush.bf16.msra.mxu0 %v803
  %1062 = vmatpush.bf16.msra.mxu0 %v802
  %1063 = vmatpush.bf16.msra.mxu0 %v801
  %1064 = vmatpush.bf16.msra.mxu0 %v800
  %1065 = vmatpush.bf16.msra.mxu0 %v799
  %1066 = vmatpush.bf16.msra.mxu0 %v798
  %1067 = vmatpush.bf16.msra.mxu0 %v797
  %1068 = vmatmul.bf16.gmra.mxu0 %v278
  %v1069 = vpop.f32.mrf.mxu0
  %v1070 = vadd.f32 %v1057, %v1069
  %v1071 = vpop.f32.mrf.mxu0
  %1072 = vdwg.mxu0
  %1073 = vmatpush.bf16.msra.mxu0 %v812
  %1074 = vmatpush.bf16.msra.mxu0 %v811
  %1075 = vmatpush.bf16.msra.mxu0 %v810
  %1076 = vmatpush.bf16.msra.mxu0 %v809
  %1077 = vmatpush.bf16.msra.mxu0 %v808
  %1078 = vmatpush.bf16.msra.mxu0 %v807
  %1079 = vmatpush.bf16.msra.mxu0 %v806
  %1080 = vmatpush.bf16.msra.mxu0 %v805
  %1081 = vmatmul.bf16.gmra.mxu0 %v279
  %v1082 = vpop.f32.mrf.mxu0
  %v1083 = vadd.f32 %v1070, %v1082
  %v1084 = vpop.f32.mrf.mxu0
  %1085 = vdwg.mxu0
  %s1086 = scalar_lea.vmem %s0, 52
  %v1087 = vld [vmem:[%s1086] sm:$0xff]
  %v1088 = vld [vmem:[%s1086 + $0x8] sm:$0xff]
  %v1089 = vld [vmem:[%s1086 + $0x10] sm:$0xff]
  %v1090 = vld [vmem:[%s1086 + $0x18] sm:$0xff]
  %v1091 = vld [vmem:[%s1086 + $0x20] sm:$0xff]
  %v1092 = vld [vmem:[%s1086 + $0x28] sm:$0xff]
  %v1093 = vld [vmem:[%s1086 + $0x30] sm:$0xf]
  %v1101 = vunpack.c.l.b16 %v1087
  %v1102 = vunpack.c.h.b16 %v1087
  %v1103 = vunpack.c.l.b16 %v1088
  %v1104 = vunpack.c.h.b16 %v1088
  %v1105 = vunpack.c.l.b16 %v1089
  %v1106 = vunpack.c.h.b16 %v1089
  %v1107 = vunpack.c.l.b16 %v1090
  %v1108 = vunpack.c.h.b16 %v1090
  %v1109 = vunpack.c.l.b16 %v1091
  %v1110 = vunpack.c.h.b16 %v1091
  %v1111 = vunpack.c.l.b16 %v1092
  %v1112 = vunpack.c.h.b16 %v1092
  %v1113 = vunpack.c.l.b16 %v1093
  %v1114 = vpack.c.b16 %v1101, %v1101
  %v1115 = vpack.c.b16 %v1102, %v1102
  %v1116 = vpack.c.b16 %v1103, %v1103
  %v1117 = vpack.c.b16 %v1104, %v1104
  %v1118 = vpack.c.b16 %v1105, %v1105
  %v1119 = vpack.c.b16 %v1106, %v1106
  %v1120 = vpack.c.b16 %v1107, %v1107
  %v1121 = vpack.c.b16 %v1108, %v1108
  %v1122 = vpack.c.b16 %v1109, %v1109
  %v1123 = vpack.c.b16 %v1110, %v1110
  %v1124 = vpack.c.b16 %v1111, %v1111
  %v1125 = vpack.c.b16 %v1112, %v1112
  %v1126 = vpack.c.b16 %v1113, %v1113
  %1140 = vmatpush.bf16.msra.mxu0 %v716
  %1141 = vmatpush.bf16.msra.mxu0 %v715
  %1142 = vmatpush.bf16.msra.mxu0 %v714
  %1143 = vmatpush.bf16.msra.mxu0 %v713
  %1144 = vmatpush.bf16.msra.mxu0 %v712
  %1145 = vmatpush.bf16.msra.mxu0 %v711
  %1146 = vmatpush.bf16.msra.mxu0 %v710
  %1147 = vmatpush.bf16.msra.mxu0 %v709
  %1148 = vmatmul.bf16.gmra.mxu0 %v1114
  %v1149 = vpop.f32.mrf.mxu0
  %v1150 = vadd.f32 0.0, %v1149
  %v1151 = vpop.f32.mrf.mxu0
  %1152 = vdwg.mxu0
  %1153 = vmatpush.bf16.msra.mxu0 %v724
  %1154 = vmatpush.bf16.msra.mxu0 %v723
  %1155 = vmatpush.bf16.msra.mxu0 %v722
  %1156 = vmatpush.bf16.msra.mxu0 %v721
  %1157 = vmatpush.bf16.msra.mxu0 %v720
  %1158 = vmatpush.bf16.msra.mxu0 %v719
  %1159 = vmatpush.bf16.msra.mxu0 %v718
  %1160 = vmatpush.bf16.msra.mxu0 %v717
  %1161 = vmatmul.bf16.gmra.mxu0 %v1115
  %v1162 = vpop.f32.mrf.mxu0
  %v1163 = vadd.f32 %v1150, %v1162
  %v1164 = vpop.f32.mrf.mxu0
  %1165 = vdwg.mxu0
  %1166 = vmatpush.bf16.msra.mxu0 %v732
  %1167 = vmatpush.bf16.msra.mxu0 %v731
  %1168 = vmatpush.bf16.msra.mxu0 %v730
  %1169 = vmatpush.bf16.msra.mxu0 %v729
  %1170 = vmatpush.bf16.msra.mxu0 %v728
  %1171 = vmatpush.bf16.msra.mxu0 %v727
  %1172 = vmatpush.bf16.msra.mxu0 %v726
  %1173 = vmatpush.bf16.msra.mxu0 %v725
  %1174 = vmatmul.bf16.gmra.mxu0 %v1116
  %v1175 = vpop.f32.mrf.mxu0
  %v1176 = vadd.f32 %v1163, %v1175
  %v1177 = vpop.f32.mrf.mxu0
  %1178 = vdwg.mxu0
  %1179 = vmatpush.bf16.msra.mxu0 %v740
  %1180 = vmatpush.bf16.msra.mxu0 %v739
  %1181 = vmatpush.bf16.msra.mxu0 %v738
  %1182 = vmatpush.bf16.msra.mxu0 %v737
  %1183 = vmatpush.bf16.msra.mxu0 %v736
  %1184 = vmatpush.bf16.msra.mxu0 %v735
  %1185 = vmatpush.bf16.msra.mxu0 %v734
  %1186 = vmatpush.bf16.msra.mxu0 %v733
  %1187 = vmatmul.bf16.gmra.mxu0 %v1117
  %v1188 = vpop.f32.mrf.mxu0
  %v1189 = vadd.f32 %v1176, %v1188
  %v1190 = vpop.f32.mrf.mxu0
  %1191 = vdwg.mxu0
  %1192 = vmatpush.bf16.msra.mxu0 %v748
  %1193 = vmatpush.bf16.msra.mxu0 %v747
  %1194 = vmatpush.bf16.msra.mxu0 %v746
  %1195 = vmatpush.bf16.msra.mxu0 %v745
  %1196 = vmatpush.bf16.msra.mxu0 %v744
  %1197 = vmatpush.bf16.msra.mxu0 %v743
  %1198 = vmatpush.bf16.msra.mxu0 %v742
  %1199 = vmatpush.bf16.msra.mxu0 %v741
  %1200 = vmatmul.bf16.gmra.mxu0 %v1118
  %v1201 = vpop.f32.mrf.mxu0
  %v1202 = vadd.f32 %v1189, %v1201
  %v1203 = vpop.f32.mrf.mxu0
  %1204 = vdwg.mxu0
  %1205 = vmatpush.bf16.msra.mxu0 %v756
  %1206 = vmatpush.bf16.msra.mxu0 %v755
  %1207 = vmatpush.bf16.msra.mxu0 %v754
  %1208 = vmatpush.bf16.msra.mxu0 %v753
  %1209 = vmatpush.bf16.msra.mxu0 %v752
  %1210 = vmatpush.bf16.msra.mxu0 %v751
  %1211 = vmatpush.bf16.msra.mxu0 %v750
  %1212 = vmatpush.bf16.msra.mxu0 %v749
  %1213 = vmatmul.bf16.gmra.mxu0 %v1119
  %v1214 = vpop.f32.mrf.mxu0
  %v1215 = vadd.f32 %v1202, %v1214
  %v1216 = vpop.f32.mrf.mxu0
  %1217 = vdwg.mxu0
  %1218 = vmatpush.bf16.msra.mxu0 %v764
  %1219 = vmatpush.bf16.msra.mxu0 %v763
  %1220 = vmatpush.bf16.msra.mxu0 %v762
  %1221 = vmatpush.bf16.msra.mxu0 %v761
  %1222 = vmatpush.bf16.msra.mxu0 %v760
  %1223 = vmatpush.bf16.msra.mxu0 %v759
  %1224 = vmatpush.bf16.msra.mxu0 %v758
  %1225 = vmatpush.bf16.msra.mxu0 %v757
  %1226 = vmatmul.bf16.gmra.mxu0 %v1120
  %v1227 = vpop.f32.mrf.mxu0
  %v1228 = vadd.f32 %v1215, %v1227
  %v1229 = vpop.f32.mrf.mxu0
  %1230 = vdwg.mxu0
  %1231 = vmatpush.bf16.msra.mxu0 %v772
  %1232 = vmatpush.bf16.msra.mxu0 %v771
  %1233 = vmatpush.bf16.msra.mxu0 %v770
  %1234 = vmatpush.bf16.msra.mxu0 %v769
  %1235 = vmatpush.bf16.msra.mxu0 %v768
  %1236 = vmatpush.bf16.msra.mxu0 %v767
  %1237 = vmatpush.bf16.msra.mxu0 %v766
  %1238 = vmatpush.bf16.msra.mxu0 %v765
  %1239 = vmatmul.bf16.gmra.mxu0 %v1121
  %v1240 = vpop.f32.mrf.mxu0
  %v1241 = vadd.f32 %v1228, %v1240
  %v1242 = vpop.f32.mrf.mxu0
  %1243 = vdwg.mxu0
  %1244 = vmatpush.bf16.msra.mxu0 %v780
  %1245 = vmatpush.bf16.msra.mxu0 %v779
  %1246 = vmatpush.bf16.msra.mxu0 %v778
  %1247 = vmatpush.bf16.msra.mxu0 %v777
  %1248 = vmatpush.bf16.msra.mxu0 %v776
  %1249 = vmatpush.bf16.msra.mxu0 %v775
  %1250 = vmatpush.bf16.msra.mxu0 %v774
  %1251 = vmatpush.bf16.msra.mxu0 %v773
  %1252 = vmatmul.bf16.gmra.mxu0 %v1122
  %v1253 = vpop.f32.mrf.mxu0
  %v1254 = vadd.f32 %v1241, %v1253
  %v1255 = vpop.f32.mrf.mxu0
  %1256 = vdwg.mxu0
  %1257 = vmatpush.bf16.msra.mxu0 %v788
  %1258 = vmatpush.bf16.msra.mxu0 %v787
  %1259 = vmatpush.bf16.msra.mxu0 %v786
  %1260 = vmatpush.bf16.msra.mxu0 %v785
  %1261 = vmatpush.bf16.msra.mxu0 %v784
  %1262 = vmatpush.bf16.msra.mxu0 %v783
  %1263 = vmatpush.bf16.msra.mxu0 %v782
  %1264 = vmatpush.bf16.msra.mxu0 %v781
  %1265 = vmatmul.bf16.gmra.mxu0 %v1123
  %v1266 = vpop.f32.mrf.mxu0
  %v1267 = vadd.f32 %v1254, %v1266
  %v1268 = vpop.f32.mrf.mxu0
  %1269 = vdwg.mxu0
  %1270 = vmatpush.bf16.msra.mxu0 %v796
  %1271 = vmatpush.bf16.msra.mxu0 %v795
  %1272 = vmatpush.bf16.msra.mxu0 %v794
  %1273 = vmatpush.bf16.msra.mxu0 %v793
  %1274 = vmatpush.bf16.msra.mxu0 %v792
  %1275 = vmatpush.bf16.msra.mxu0 %v791
  %1276 = vmatpush.bf16.msra.mxu0 %v790
  %1277 = vmatpush.bf16.msra.mxu0 %v789
  %1278 = vmatmul.bf16.gmra.mxu0 %v1124
  %v1279 = vpop.f32.mrf.mxu0
  %v1280 = vadd.f32 %v1267, %v1279
  %v1281 = vpop.f32.mrf.mxu0
  %1282 = vdwg.mxu0
  %1283 = vmatpush.bf16.msra.mxu0 %v804
  %1284 = vmatpush.bf16.msra.mxu0 %v803
  %1285 = vmatpush.bf16.msra.mxu0 %v802
  %1286 = vmatpush.bf16.msra.mxu0 %v801
  %1287 = vmatpush.bf16.msra.mxu0 %v800
  %1288 = vmatpush.bf16.msra.mxu0 %v799
  %1289 = vmatpush.bf16.msra.mxu0 %v798
  %1290 = vmatpush.bf16.msra.mxu0 %v797
  %1291 = vmatmul.bf16.gmra.mxu0 %v1125
  %v1292 = vpop.f32.mrf.mxu0
  %v1293 = vadd.f32 %v1280, %v1292
  %v1294 = vpop.f32.mrf.mxu0
  %1295 = vdwg.mxu0
  %1296 = vmatpush.bf16.msra.mxu0 %v812
  %1297 = vmatpush.bf16.msra.mxu0 %v811
  %1298 = vmatpush.bf16.msra.mxu0 %v810
  %1299 = vmatpush.bf16.msra.mxu0 %v809
  %1300 = vmatpush.bf16.msra.mxu0 %v808
  %1301 = vmatpush.bf16.msra.mxu0 %v807
  %1302 = vmatpush.bf16.msra.mxu0 %v806
  %1303 = vmatpush.bf16.msra.mxu0 %v805
  %1304 = vmatmul.bf16.gmra.mxu0 %v1126
  %v1305 = vpop.f32.mrf.mxu0
  %v1306 = vadd.f32 %v1293, %v1305
  %v1307 = vpop.f32.mrf.mxu0
  %1308 = vdwg.mxu0
  %v1309 = vmax.f32 %v1083, %v1306
  %s1310 = scalar_lea.vmem %s0, 104
  %v1311 = vld [vmem:[%s1310] sm:$0xff]
  %v1312 = vld [vmem:[%s1310 + $0x8] sm:$0xff]
  %v1313 = vld [vmem:[%s1310 + $0x10] sm:$0xff]
  %v1314 = vld [vmem:[%s1310 + $0x18] sm:$0xff]
  %v1315 = vld [vmem:[%s1310 + $0x20] sm:$0xff]
  %v1316 = vld [vmem:[%s1310 + $0x28] sm:$0xff]
  %v1317 = vld [vmem:[%s1310 + $0x30] sm:$0xf]
  %v1325 = vunpack.c.l.b16 %v1311
  %v1326 = vunpack.c.h.b16 %v1311
  %v1327 = vunpack.c.l.b16 %v1312
  %v1328 = vunpack.c.h.b16 %v1312
  %v1329 = vunpack.c.l.b16 %v1313
  %v1330 = vunpack.c.h.b16 %v1313
  %v1331 = vunpack.c.l.b16 %v1314
  %v1332 = vunpack.c.h.b16 %v1314
  %v1333 = vunpack.c.l.b16 %v1315
  %v1334 = vunpack.c.h.b16 %v1315
  %v1335 = vunpack.c.l.b16 %v1316
  %v1336 = vunpack.c.h.b16 %v1316
  %v1337 = vunpack.c.l.b16 %v1317
  %v1338 = vpack.c.b16 %v1325, %v1325
  %v1339 = vpack.c.b16 %v1326, %v1326
  %v1340 = vpack.c.b16 %v1327, %v1327
  %v1341 = vpack.c.b16 %v1328, %v1328
  %v1342 = vpack.c.b16 %v1329, %v1329
  %v1343 = vpack.c.b16 %v1330, %v1330
  %v1344 = vpack.c.b16 %v1331, %v1331
  %v1345 = vpack.c.b16 %v1332, %v1332
  %v1346 = vpack.c.b16 %v1333, %v1333
  %v1347 = vpack.c.b16 %v1334, %v1334
  %v1348 = vpack.c.b16 %v1335, %v1335
  %v1349 = vpack.c.b16 %v1336, %v1336
  %v1350 = vpack.c.b16 %v1337, %v1337
  %1364 = vmatpush.bf16.msra.mxu0 %v716
  %1365 = vmatpush.bf16.msra.mxu0 %v715
  %1366 = vmatpush.bf16.msra.mxu0 %v714
  %1367 = vmatpush.bf16.msra.mxu0 %v713
  %1368 = vmatpush.bf16.msra.mxu0 %v712
  %1369 = vmatpush.bf16.msra.mxu0 %v711
  %1370 = vmatpush.bf16.msra.mxu0 %v710
  %1371 = vmatpush.bf16.msra.mxu0 %v709
  %1372 = vmatmul.bf16.gmra.mxu0 %v1338
  %v1373 = vpop.f32.mrf.mxu0
  %v1374 = vadd.f32 0.0, %v1373
  %v1375 = vpop.f32.mrf.mxu0
  %1376 = vdwg.mxu0
  %1377 = vmatpush.bf16.msra.mxu0 %v724
  %1378 = vmatpush.bf16.msra.mxu0 %v723
  %1379 = vmatpush.bf16.msra.mxu0 %v722
  %1380 = vmatpush.bf16.msra.mxu0 %v721
  %1381 = vmatpush.bf16.msra.mxu0 %v720
  %1382 = vmatpush.bf16.msra.mxu0 %v719
  %1383 = vmatpush.bf16.msra.mxu0 %v718
  %1384 = vmatpush.bf16.msra.mxu0 %v717
  %1385 = vmatmul.bf16.gmra.mxu0 %v1339
  %v1386 = vpop.f32.mrf.mxu0
  %v1387 = vadd.f32 %v1374, %v1386
  %v1388 = vpop.f32.mrf.mxu0
  %1389 = vdwg.mxu0
  %1390 = vmatpush.bf16.msra.mxu0 %v732
  %1391 = vmatpush.bf16.msra.mxu0 %v731
  %1392 = vmatpush.bf16.msra.mxu0 %v730
  %1393 = vmatpush.bf16.msra.mxu0 %v729
  %1394 = vmatpush.bf16.msra.mxu0 %v728
  %1395 = vmatpush.bf16.msra.mxu0 %v727
  %1396 = vmatpush.bf16.msra.mxu0 %v726
  %1397 = vmatpush.bf16.msra.mxu0 %v725
  %1398 = vmatmul.bf16.gmra.mxu0 %v1340
  %v1399 = vpop.f32.mrf.mxu0
  %v1400 = vadd.f32 %v1387, %v1399
  %v1401 = vpop.f32.mrf.mxu0
  %1402 = vdwg.mxu0
  %1403 = vmatpush.bf16.msra.mxu0 %v740
  %1404 = vmatpush.bf16.msra.mxu0 %v739
  %1405 = vmatpush.bf16.msra.mxu0 %v738
  %1406 = vmatpush.bf16.msra.mxu0 %v737
  %1407 = vmatpush.bf16.msra.mxu0 %v736
  %1408 = vmatpush.bf16.msra.mxu0 %v735
  %1409 = vmatpush.bf16.msra.mxu0 %v734
  %1410 = vmatpush.bf16.msra.mxu0 %v733
  %1411 = vmatmul.bf16.gmra.mxu0 %v1341
  %v1412 = vpop.f32.mrf.mxu0
  %v1413 = vadd.f32 %v1400, %v1412
  %v1414 = vpop.f32.mrf.mxu0
  %1415 = vdwg.mxu0
  %1416 = vmatpush.bf16.msra.mxu0 %v748
  %1417 = vmatpush.bf16.msra.mxu0 %v747
  %1418 = vmatpush.bf16.msra.mxu0 %v746
  %1419 = vmatpush.bf16.msra.mxu0 %v745
  %1420 = vmatpush.bf16.msra.mxu0 %v744
  %1421 = vmatpush.bf16.msra.mxu0 %v743
  %1422 = vmatpush.bf16.msra.mxu0 %v742
  %1423 = vmatpush.bf16.msra.mxu0 %v741
  %1424 = vmatmul.bf16.gmra.mxu0 %v1342
  %v1425 = vpop.f32.mrf.mxu0
  %v1426 = vadd.f32 %v1413, %v1425
  %v1427 = vpop.f32.mrf.mxu0
  %1428 = vdwg.mxu0
  %1429 = vmatpush.bf16.msra.mxu0 %v756
  %1430 = vmatpush.bf16.msra.mxu0 %v755
  %1431 = vmatpush.bf16.msra.mxu0 %v754
  %1432 = vmatpush.bf16.msra.mxu0 %v753
  %1433 = vmatpush.bf16.msra.mxu0 %v752
  %1434 = vmatpush.bf16.msra.mxu0 %v751
  %1435 = vmatpush.bf16.msra.mxu0 %v750
  %1436 = vmatpush.bf16.msra.mxu0 %v749
  %1437 = vmatmul.bf16.gmra.mxu0 %v1343
  %v1438 = vpop.f32.mrf.mxu0
  %v1439 = vadd.f32 %v1426, %v1438
  %v1440 = vpop.f32.mrf.mxu0
  %1441 = vdwg.mxu0
  %1442 = vmatpush.bf16.msra.mxu0 %v764
  %1443 = vmatpush.bf16.msra.mxu0 %v763
  %1444 = vmatpush.bf16.msra.mxu0 %v762
  %1445 = vmatpush.bf16.msra.mxu0 %v761
  %1446 = vmatpush.bf16.msra.mxu0 %v760
  %1447 = vmatpush.bf16.msra.mxu0 %v759
  %1448 = vmatpush.bf16.msra.mxu0 %v758
  %1449 = vmatpush.bf16.msra.mxu0 %v757
  %1450 = vmatmul.bf16.gmra.mxu0 %v1344
  %v1451 = vpop.f32.mrf.mxu0
  %v1452 = vadd.f32 %v1439, %v1451
  %v1453 = vpop.f32.mrf.mxu0
  %1454 = vdwg.mxu0
  %1455 = vmatpush.bf16.msra.mxu0 %v772
  %1456 = vmatpush.bf16.msra.mxu0 %v771
  %1457 = vmatpush.bf16.msra.mxu0 %v770
  %1458 = vmatpush.bf16.msra.mxu0 %v769
  %1459 = vmatpush.bf16.msra.mxu0 %v768
  %1460 = vmatpush.bf16.msra.mxu0 %v767
  %1461 = vmatpush.bf16.msra.mxu0 %v766
  %1462 = vmatpush.bf16.msra.mxu0 %v765
  %1463 = vmatmul.bf16.gmra.mxu0 %v1345
  %v1464 = vpop.f32.mrf.mxu0
  %v1465 = vadd.f32 %v1452, %v1464
  %v1466 = vpop.f32.mrf.mxu0
  %1467 = vdwg.mxu0
  %1468 = vmatpush.bf16.msra.mxu0 %v780
  %1469 = vmatpush.bf16.msra.mxu0 %v779
  %1470 = vmatpush.bf16.msra.mxu0 %v778
  %1471 = vmatpush.bf16.msra.mxu0 %v777
  %1472 = vmatpush.bf16.msra.mxu0 %v776
  %1473 = vmatpush.bf16.msra.mxu0 %v775
  %1474 = vmatpush.bf16.msra.mxu0 %v774
  %1475 = vmatpush.bf16.msra.mxu0 %v773
  %1476 = vmatmul.bf16.gmra.mxu0 %v1346
  %v1477 = vpop.f32.mrf.mxu0
  %v1478 = vadd.f32 %v1465, %v1477
  %v1479 = vpop.f32.mrf.mxu0
  %1480 = vdwg.mxu0
  %1481 = vmatpush.bf16.msra.mxu0 %v788
  %1482 = vmatpush.bf16.msra.mxu0 %v787
  %1483 = vmatpush.bf16.msra.mxu0 %v786
  %1484 = vmatpush.bf16.msra.mxu0 %v785
  %1485 = vmatpush.bf16.msra.mxu0 %v784
  %1486 = vmatpush.bf16.msra.mxu0 %v783
  %1487 = vmatpush.bf16.msra.mxu0 %v782
  %1488 = vmatpush.bf16.msra.mxu0 %v781
  %1489 = vmatmul.bf16.gmra.mxu0 %v1347
  %v1490 = vpop.f32.mrf.mxu0
  %v1491 = vadd.f32 %v1478, %v1490
  %v1492 = vpop.f32.mrf.mxu0
  %1493 = vdwg.mxu0
  %1494 = vmatpush.bf16.msra.mxu0 %v796
  %1495 = vmatpush.bf16.msra.mxu0 %v795
  %1496 = vmatpush.bf16.msra.mxu0 %v794
  %1497 = vmatpush.bf16.msra.mxu0 %v793
  %1498 = vmatpush.bf16.msra.mxu0 %v792
  %1499 = vmatpush.bf16.msra.mxu0 %v791
  %1500 = vmatpush.bf16.msra.mxu0 %v790
  %1501 = vmatpush.bf16.msra.mxu0 %v789
  %1502 = vmatmul.bf16.gmra.mxu0 %v1348
  %v1503 = vpop.f32.mrf.mxu0
  %v1504 = vadd.f32 %v1491, %v1503
  %v1505 = vpop.f32.mrf.mxu0
  %1506 = vdwg.mxu0
  %1507 = vmatpush.bf16.msra.mxu0 %v804
  %1508 = vmatpush.bf16.msra.mxu0 %v803
  %1509 = vmatpush.bf16.msra.mxu0 %v802
  %1510 = vmatpush.bf16.msra.mxu0 %v801
  %1511 = vmatpush.bf16.msra.mxu0 %v800
  %1512 = vmatpush.bf16.msra.mxu0 %v799
  %1513 = vmatpush.bf16.msra.mxu0 %v798
  %1514 = vmatpush.bf16.msra.mxu0 %v797
  %1515 = vmatmul.bf16.gmra.mxu0 %v1349
  %v1516 = vpop.f32.mrf.mxu0
  %v1517 = vadd.f32 %v1504, %v1516
  %v1518 = vpop.f32.mrf.mxu0
  %1519 = vdwg.mxu0
  %1520 = vmatpush.bf16.msra.mxu0 %v812
  %1521 = vmatpush.bf16.msra.mxu0 %v811
  %1522 = vmatpush.bf16.msra.mxu0 %v810
  %1523 = vmatpush.bf16.msra.mxu0 %v809
  %1524 = vmatpush.bf16.msra.mxu0 %v808
  %1525 = vmatpush.bf16.msra.mxu0 %v807
  %1526 = vmatpush.bf16.msra.mxu0 %v806
  %1527 = vmatpush.bf16.msra.mxu0 %v805
  %1528 = vmatmul.bf16.gmra.mxu0 %v1350
  %v1529 = vpop.f32.mrf.mxu0
  %v1530 = vadd.f32 %v1517, %v1529
  %v1531 = vpop.f32.mrf.mxu0
  %1532 = vdwg.mxu0
  %v1533 = vmax.f32 %v1309, %v1530
  %s1534 = scalar_lea.vmem %s0, 156
  %v1535 = vld [vmem:[%s1534] sm:$0xff]
  %v1536 = vld [vmem:[%s1534 + $0x8] sm:$0xff]
  %v1537 = vld [vmem:[%s1534 + $0x10] sm:$0xff]
  %v1538 = vld [vmem:[%s1534 + $0x18] sm:$0xff]
  %v1539 = vld [vmem:[%s1534 + $0x20] sm:$0xff]
  %v1540 = vld [vmem:[%s1534 + $0x28] sm:$0xff]
  %v1541 = vld [vmem:[%s1534 + $0x30] sm:$0xf]
  %v1549 = vunpack.c.l.b16 %v1535
  %v1550 = vunpack.c.h.b16 %v1535
  %v1551 = vunpack.c.l.b16 %v1536
  %v1552 = vunpack.c.h.b16 %v1536
  %v1553 = vunpack.c.l.b16 %v1537
  %v1554 = vunpack.c.h.b16 %v1537
  %v1555 = vunpack.c.l.b16 %v1538
  %v1556 = vunpack.c.h.b16 %v1538
  %v1557 = vunpack.c.l.b16 %v1539
  %v1558 = vunpack.c.h.b16 %v1539
  %v1559 = vunpack.c.l.b16 %v1540
  %v1560 = vunpack.c.h.b16 %v1540
  %v1561 = vunpack.c.l.b16 %v1541
  %v1562 = vpack.c.b16 %v1549, %v1549
  %v1563 = vpack.c.b16 %v1550, %v1550
  %v1564 = vpack.c.b16 %v1551, %v1551
  %v1565 = vpack.c.b16 %v1552, %v1552
  %v1566 = vpack.c.b16 %v1553, %v1553
  %v1567 = vpack.c.b16 %v1554, %v1554
  %v1568 = vpack.c.b16 %v1555, %v1555
  %v1569 = vpack.c.b16 %v1556, %v1556
  %v1570 = vpack.c.b16 %v1557, %v1557
  %v1571 = vpack.c.b16 %v1558, %v1558
  %v1572 = vpack.c.b16 %v1559, %v1559
  %v1573 = vpack.c.b16 %v1560, %v1560
  %v1574 = vpack.c.b16 %v1561, %v1561
  %1588 = vmatpush.bf16.msra.mxu0 %v716
  %1589 = vmatpush.bf16.msra.mxu0 %v715
  %1590 = vmatpush.bf16.msra.mxu0 %v714
  %1591 = vmatpush.bf16.msra.mxu0 %v713
  %1592 = vmatpush.bf16.msra.mxu0 %v712
  %1593 = vmatpush.bf16.msra.mxu0 %v711
  %1594 = vmatpush.bf16.msra.mxu0 %v710
  %1595 = vmatpush.bf16.msra.mxu0 %v709
  %1596 = vmatmul.bf16.gmra.mxu0 %v1562
  %v1597 = vpop.f32.mrf.mxu0
  %v1598 = vadd.f32 0.0, %v1597
  %v1599 = vpop.f32.mrf.mxu0
  %1600 = vdwg.mxu0
  %1601 = vmatpush.bf16.msra.mxu0 %v724
  %1602 = vmatpush.bf16.msra.mxu0 %v723
  %1603 = vmatpush.bf16.msra.mxu0 %v722
  %1604 = vmatpush.bf16.msra.mxu0 %v721
  %1605 = vmatpush.bf16.msra.mxu0 %v720
  %1606 = vmatpush.bf16.msra.mxu0 %v719
  %1607 = vmatpush.bf16.msra.mxu0 %v718
  %1608 = vmatpush.bf16.msra.mxu0 %v717
  %1609 = vmatmul.bf16.gmra.mxu0 %v1563
  %v1610 = vpop.f32.mrf.mxu0
  %v1611 = vadd.f32 %v1598, %v1610
  %v1612 = vpop.f32.mrf.mxu0
  %1613 = vdwg.mxu0
  %1614 = vmatpush.bf16.msra.mxu0 %v732
  %1615 = vmatpush.bf16.msra.mxu0 %v731
  %1616 = vmatpush.bf16.msra.mxu0 %v730
  %1617 = vmatpush.bf16.msra.mxu0 %v729
  %1618 = vmatpush.bf16.msra.mxu0 %v728
  %1619 = vmatpush.bf16.msra.mxu0 %v727
  %1620 = vmatpush.bf16.msra.mxu0 %v726
  %1621 = vmatpush.bf16.msra.mxu0 %v725
  %1622 = vmatmul.bf16.gmra.mxu0 %v1564
  %v1623 = vpop.f32.mrf.mxu0
  %v1624 = vadd.f32 %v1611, %v1623
  %v1625 = vpop.f32.mrf.mxu0
  %1626 = vdwg.mxu0
  %1627 = vmatpush.bf16.msra.mxu0 %v740
  %1628 = vmatpush.bf16.msra.mxu0 %v739
  %1629 = vmatpush.bf16.msra.mxu0 %v738
  %1630 = vmatpush.bf16.msra.mxu0 %v737
  %1631 = vmatpush.bf16.msra.mxu0 %v736
  %1632 = vmatpush.bf16.msra.mxu0 %v735
  %1633 = vmatpush.bf16.msra.mxu0 %v734
  %1634 = vmatpush.bf16.msra.mxu0 %v733
  %1635 = vmatmul.bf16.gmra.mxu0 %v1565
  %v1636 = vpop.f32.mrf.mxu0
  %v1637 = vadd.f32 %v1624, %v1636
  %v1638 = vpop.f32.mrf.mxu0
  %1639 = vdwg.mxu0
  %1640 = vmatpush.bf16.msra.mxu0 %v748
  %1641 = vmatpush.bf16.msra.mxu0 %v747
  %1642 = vmatpush.bf16.msra.mxu0 %v746
  %1643 = vmatpush.bf16.msra.mxu0 %v745
  %1644 = vmatpush.bf16.msra.mxu0 %v744
  %1645 = vmatpush.bf16.msra.mxu0 %v743
  %1646 = vmatpush.bf16.msra.mxu0 %v742
  %1647 = vmatpush.bf16.msra.mxu0 %v741
  %1648 = vmatmul.bf16.gmra.mxu0 %v1566
  %v1649 = vpop.f32.mrf.mxu0
  %v1650 = vadd.f32 %v1637, %v1649
  %v1651 = vpop.f32.mrf.mxu0
  %1652 = vdwg.mxu0
  %1653 = vmatpush.bf16.msra.mxu0 %v756
  %1654 = vmatpush.bf16.msra.mxu0 %v755
  %1655 = vmatpush.bf16.msra.mxu0 %v754
  %1656 = vmatpush.bf16.msra.mxu0 %v753
  %1657 = vmatpush.bf16.msra.mxu0 %v752
  %1658 = vmatpush.bf16.msra.mxu0 %v751
  %1659 = vmatpush.bf16.msra.mxu0 %v750
  %1660 = vmatpush.bf16.msra.mxu0 %v749
  %1661 = vmatmul.bf16.gmra.mxu0 %v1567
  %v1662 = vpop.f32.mrf.mxu0
  %v1663 = vadd.f32 %v1650, %v1662
  %v1664 = vpop.f32.mrf.mxu0
  %1665 = vdwg.mxu0
  %1666 = vmatpush.bf16.msra.mxu0 %v764
  %1667 = vmatpush.bf16.msra.mxu0 %v763
  %1668 = vmatpush.bf16.msra.mxu0 %v762
  %1669 = vmatpush.bf16.msra.mxu0 %v761
  %1670 = vmatpush.bf16.msra.mxu0 %v760
  %1671 = vmatpush.bf16.msra.mxu0 %v759
  %1672 = vmatpush.bf16.msra.mxu0 %v758
  %1673 = vmatpush.bf16.msra.mxu0 %v757
  %1674 = vmatmul.bf16.gmra.mxu0 %v1568
  %v1675 = vpop.f32.mrf.mxu0
  %v1676 = vadd.f32 %v1663, %v1675
  %v1677 = vpop.f32.mrf.mxu0
  %1678 = vdwg.mxu0
  %1679 = vmatpush.bf16.msra.mxu0 %v772
  %1680 = vmatpush.bf16.msra.mxu0 %v771
  %1681 = vmatpush.bf16.msra.mxu0 %v770
  %1682 = vmatpush.bf16.msra.mxu0 %v769
  %1683 = vmatpush.bf16.msra.mxu0 %v768
  %1684 = vmatpush.bf16.msra.mxu0 %v767
  %1685 = vmatpush.bf16.msra.mxu0 %v766
  %1686 = vmatpush.bf16.msra.mxu0 %v765
  %1687 = vmatmul.bf16.gmra.mxu0 %v1569
  %v1688 = vpop.f32.mrf.mxu0
  %v1689 = vadd.f32 %v1676, %v1688
  %v1690 = vpop.f32.mrf.mxu0
  %1691 = vdwg.mxu0
  %1692 = vmatpush.bf16.msra.mxu0 %v780
  %1693 = vmatpush.bf16.msra.mxu0 %v779
  %1694 = vmatpush.bf16.msra.mxu0 %v778
  %1695 = vmatpush.bf16.msra.mxu0 %v777
  %1696 = vmatpush.bf16.msra.mxu0 %v776
  %1697 = vmatpush.bf16.msra.mxu0 %v775
  %1698 = vmatpush.bf16.msra.mxu0 %v774
  %1699 = vmatpush.bf16.msra.mxu0 %v773
  %1700 = vmatmul.bf16.gmra.mxu0 %v1570
  %v1701 = vpop.f32.mrf.mxu0
  %v1702 = vadd.f32 %v1689, %v1701
  %v1703 = vpop.f32.mrf.mxu0
  %1704 = vdwg.mxu0
  %1705 = vmatpush.bf16.msra.mxu0 %v788
  %1706 = vmatpush.bf16.msra.mxu0 %v787
  %1707 = vmatpush.bf16.msra.mxu0 %v786
  %1708 = vmatpush.bf16.msra.mxu0 %v785
  %1709 = vmatpush.bf16.msra.mxu0 %v784
  %1710 = vmatpush.bf16.msra.mxu0 %v783
  %1711 = vmatpush.bf16.msra.mxu0 %v782
  %1712 = vmatpush.bf16.msra.mxu0 %v781
  %1713 = vmatmul.bf16.gmra.mxu0 %v1571
  %v1714 = vpop.f32.mrf.mxu0
  %v1715 = vadd.f32 %v1702, %v1714
  %v1716 = vpop.f32.mrf.mxu0
  %1717 = vdwg.mxu0
  %1718 = vmatpush.bf16.msra.mxu0 %v796
  %1719 = vmatpush.bf16.msra.mxu0 %v795
  %1720 = vmatpush.bf16.msra.mxu0 %v794
  %1721 = vmatpush.bf16.msra.mxu0 %v793
  %1722 = vmatpush.bf16.msra.mxu0 %v792
  %1723 = vmatpush.bf16.msra.mxu0 %v791
  %1724 = vmatpush.bf16.msra.mxu0 %v790
  %1725 = vmatpush.bf16.msra.mxu0 %v789
  %1726 = vmatmul.bf16.gmra.mxu0 %v1572
  %v1727 = vpop.f32.mrf.mxu0
  %v1728 = vadd.f32 %v1715, %v1727
  %v1729 = vpop.f32.mrf.mxu0
  %1730 = vdwg.mxu0
  %1731 = vmatpush.bf16.msra.mxu0 %v804
  %1732 = vmatpush.bf16.msra.mxu0 %v803
  %1733 = vmatpush.bf16.msra.mxu0 %v802
  %1734 = vmatpush.bf16.msra.mxu0 %v801
  %1735 = vmatpush.bf16.msra.mxu0 %v800
  %1736 = vmatpush.bf16.msra.mxu0 %v799
  %1737 = vmatpush.bf16.msra.mxu0 %v798
  %1738 = vmatpush.bf16.msra.mxu0 %v797
  %1739 = vmatmul.bf16.gmra.mxu0 %v1573
  %v1740 = vpop.f32.mrf.mxu0
  %v1741 = vadd.f32 %v1728, %v1740
  %v1742 = vpop.f32.mrf.mxu0
  %1743 = vdwg.mxu0
  %1744 = vmatpush.bf16.msra.mxu0 %v812
  %1745 = vmatpush.bf16.msra.mxu0 %v811
  %1746 = vmatpush.bf16.msra.mxu0 %v810
  %1747 = vmatpush.bf16.msra.mxu0 %v809
  %1748 = vmatpush.bf16.msra.mxu0 %v808
  %1749 = vmatpush.bf16.msra.mxu0 %v807
  %1750 = vmatpush.bf16.msra.mxu0 %v806
  %1751 = vmatpush.bf16.msra.mxu0 %v805
  %1752 = vmatmul.bf16.gmra.mxu0 %v1574
  %v1753 = vpop.f32.mrf.mxu0
  %v1754 = vadd.f32 %v1741, %v1753
  %v1755 = vpop.f32.mrf.mxu0
  %1756 = vdwg.mxu0
  %v1757 = vmax.f32 %v1533, %v1754
  %v1758 = vld [vmem:[%s2] sm:$0x1]
  %v1760 = vperm.slane %v1758, 0
  %v1762 = vadd.f32 %v1757, %v1760
  %v1763 = vmax.f32 %v1762, 0.0
  %v1764 = vpack.c.bf16 %v1763, %v1763
  %v1765 = vld [vmem:[%s3] sm:$0xf]
  %v1766 = vld [vmem:[%s3 + $0x4] sm:$0xf]
  %v1767 = vld [vmem:[%s3 + $0x8] sm:$0xf]
  %v1768 = vld [vmem:[%s3 + $0xc] sm:$0xf]
  %v1769 = vld [vmem:[%s3 + $0x10] sm:$0xf]
  %v1770 = vld [vmem:[%s3 + $0x14] sm:$0xf]
  %v1771 = vld [vmem:[%s3 + $0x18] sm:$0xf]
  %v1772 = vld [vmem:[%s3 + $0x1c] sm:$0xf]
  %v1773 = vld [vmem:[%s3 + $0x20] sm:$0xf]
  %v1774 = vld [vmem:[%s3 + $0x24] sm:$0xf]
  %v1775 = vld [vmem:[%s3 + $0x28] sm:$0xf]
  %v1776 = vld [vmem:[%s3 + $0x2c] sm:$0xf]
  %v1777 = vld [vmem:[%s3 + $0x30] sm:$0xf]
  %v1778 = vld [vmem:[%s3 + $0x34] sm:$0xf]
  %v1779 = vld [vmem:[%s3 + $0x38] sm:$0xf]
  %v1780 = vld [vmem:[%s3 + $0x3c] sm:$0xf]
  %v1781 = vld [vmem:[%s4] sm:$0x1]
  %v1783 = vperm.slane %v1781, 0
  %v1801 = vunpack.c.l.b16 %v1765
  %v1802 = vunpack.c.l.b16 %v1766
  %v1803 = vunpack.c.l.b16 %v1767
  %v1804 = vunpack.c.l.b16 %v1768
  %v1805 = vunpack.c.l.b16 %v1769
  %v1806 = vunpack.c.l.b16 %v1770
  %v1807 = vunpack.c.l.b16 %v1771
  %v1808 = vunpack.c.l.b16 %v1772
  %v1809 = vunpack.c.l.b16 %v1773
  %v1810 = vunpack.c.l.b16 %v1774
  %v1811 = vunpack.c.l.b16 %v1775
  %v1812 = vunpack.c.l.b16 %v1776
  %v1813 = vunpack.c.l.b16 %v1777
  %v1814 = vunpack.c.l.b16 %v1778
  %v1815 = vunpack.c.l.b16 %v1779
  %v1816 = vunpack.c.l.b16 %v1780
  %v1817 = vpack.c.b16 %v1802, %v1801
  %v1818 = vpack.c.b16 %v1804, %v1803
  %v1819 = vpack.c.b16 %v1806, %v1805
  %v1820 = vpack.c.b16 %v1808, %v1807
  %v1821 = vpack.c.b16 %v1810, %v1809
  %v1822 = vpack.c.b16 %v1812, %v1811
  %v1823 = vpack.c.b16 %v1814, %v1813
  %v1824 = vpack.c.b16 %v1816, %v1815
  %1833 = vmatpush.bf16.msra.mxu0 %v1824
  %1834 = vmatpush.bf16.msra.mxu0 %v1823
  %1835 = vmatpush.bf16.msra.mxu0 %v1822
  %1836 = vmatpush.bf16.msra.mxu0 %v1821
  %1837 = vmatpush.bf16.msra.mxu0 %v1820
  %1838 = vmatpush.bf16.msra.mxu0 %v1819
  %1839 = vmatpush.bf16.msra.mxu0 %v1818
  %1840 = vmatpush.bf16.msra.mxu0 %v1817
  %1841 = vmatmul.bf16.gmra.mxu0 %v1764
  %v1842 = vpop.f32.mrf.mxu0
  %v1843 = vadd.f32 %v1783, %v1842
  %v1844 = vpop.f32.mrf.mxu0
  %1845 = vdwg.mxu0
  %v1846 = vmax.f32 %v1843, 0.0
  %v1847 = vpack.c.bf16 %v1846, %v1846
  %v1848 = vld [vmem:[%s5] sm:$0xff]
  %v1849 = vld [vmem:[%s5 + $0x8] sm:$0xff]
  %v1850 = vld [vmem:[%s5 + $0x10] sm:$0xff]
  %v1851 = vld [vmem:[%s5 + $0x18] sm:$0xff]
  %v1852 = vld [vmem:[%s5 + $0x20] sm:$0xff]
  %v1853 = vld [vmem:[%s5 + $0x28] sm:$0xff]
  %v1854 = vld [vmem:[%s5 + $0x30] sm:$0xff]
  %v1855 = vld [vmem:[%s5 + $0x38] sm:$0xff]
  %v1856 = vld [vmem:[%s5 + $0x40] sm:$0xff]
  %v1857 = vld [vmem:[%s5 + $0x48] sm:$0xff]
  %v1858 = vld [vmem:[%s5 + $0x50] sm:$0xff]
  %v1859 = vld [vmem:[%s5 + $0x58] sm:$0xff]
  %v1860 = vld [vmem:[%s5 + $0x60] sm:$0xff]
  %v1861 = vld [vmem:[%s5 + $0x68] sm:$0xff]
  %v1862 = vld [vmem:[%s5 + $0x70] sm:$0xff]
  %v1863 = vld [vmem:[%s5 + $0x78] sm:$0xff]
  %v1864 = vld [vmem:[%s6] sm:$0x3]
  %v1866 = vperm.slane %v1864, 0
  %v1867 = vperm.slane %v1864, 1
  %v1886 = vunpack.c.l.b16 %v1848
  %v1887 = vunpack.c.h.b16 %v1848
  %v1888 = vunpack.c.l.b16 %v1849
  %v1889 = vunpack.c.h.b16 %v1849
  %v1890 = vunpack.c.l.b16 %v1850
  %v1891 = vunpack.c.h.b16 %v1850
  %v1892 = vunpack.c.l.b16 %v1851
  %v1893 = vunpack.c.h.b16 %v1851
  %v1894 = vunpack.c.l.b16 %v1852
  %v1895 = vunpack.c.h.b16 %v1852
  %v1896 = vunpack.c.l.b16 %v1853
  %v1897 = vunpack.c.h.b16 %v1853
  %v1898 = vunpack.c.l.b16 %v1854
  %v1899 = vunpack.c.h.b16 %v1854
  %v1900 = vunpack.c.l.b16 %v1855
  %v1901 = vunpack.c.h.b16 %v1855
  %v1902 = vunpack.c.l.b16 %v1856
  %v1903 = vunpack.c.h.b16 %v1856
  %v1904 = vunpack.c.l.b16 %v1857
  %v1905 = vunpack.c.h.b16 %v1857
  %v1906 = vunpack.c.l.b16 %v1858
  %v1907 = vunpack.c.h.b16 %v1858
  %v1908 = vunpack.c.l.b16 %v1859
  %v1909 = vunpack.c.h.b16 %v1859
  %v1910 = vunpack.c.l.b16 %v1860
  %v1911 = vunpack.c.h.b16 %v1860
  %v1912 = vunpack.c.l.b16 %v1861
  %v1913 = vunpack.c.h.b16 %v1861
  %v1914 = vunpack.c.l.b16 %v1862
  %v1915 = vunpack.c.h.b16 %v1862
  %v1916 = vunpack.c.l.b16 %v1863
  %v1917 = vunpack.c.h.b16 %v1863
  %v1918 = vpack.c.b16 %v1888, %v1886
  %v1919 = vpack.c.b16 %v1889, %v1887
  %v1920 = vpack.c.b16 %v1892, %v1890
  %v1921 = vpack.c.b16 %v1893, %v1891
  %v1922 = vpack.c.b16 %v1896, %v1894
  %v1923 = vpack.c.b16 %v1897, %v1895
  %v1924 = vpack.c.b16 %v1900, %v1898
  %v1925 = vpack.c.b16 %v1901, %v1899
  %v1926 = vpack.c.b16 %v1904, %v1902
  %v1927 = vpack.c.b16 %v1905, %v1903
  %v1928 = vpack.c.b16 %v1908, %v1906
  %v1929 = vpack.c.b16 %v1909, %v1907
  %v1930 = vpack.c.b16 %v1912, %v1910
  %v1931 = vpack.c.b16 %v1913, %v1911
  %v1932 = vpack.c.b16 %v1916, %v1914
  %v1933 = vpack.c.b16 %v1917, %v1915
  %1950 = vmatpush.bf16.msra.mxu0 %v1932
  %1951 = vmatpush.bf16.msra.mxu0 %v1930
  %1952 = vmatpush.bf16.msra.mxu0 %v1928
  %1953 = vmatpush.bf16.msra.mxu0 %v1926
  %1954 = vmatpush.bf16.msra.mxu0 %v1924
  %1955 = vmatpush.bf16.msra.mxu0 %v1922
  %1956 = vmatpush.bf16.msra.mxu0 %v1920
  %1957 = vmatpush.bf16.msra.mxu0 %v1918
  %1958 = vmatmul.bf16.gmra.mxu0 %v1847
  %v1959 = vpop.f32.mrf.mxu0
  %v1960 = vadd.f32 %v1866, %v1959
  %v1961 = vpop.f32.mrf.mxu0
  %1962 = vdwg.mxu0
  %1963 = vmatpush.bf16.msra.mxu0 %v1933
  %1964 = vmatpush.bf16.msra.mxu0 %v1931
  %1965 = vmatpush.bf16.msra.mxu0 %v1929
  %1966 = vmatpush.bf16.msra.mxu0 %v1927
  %1967 = vmatpush.bf16.msra.mxu0 %v1925
  %1968 = vmatpush.bf16.msra.mxu0 %v1923
  %1969 = vmatpush.bf16.msra.mxu0 %v1921
  %1970 = vmatpush.bf16.msra.mxu0 %v1919
  %1971 = vmatmul.bf16.gmra.mxu0 %v1847
  %v1972 = vpop.f32.mrf.mxu0
  %v1973 = vadd.f32 %v1867, %v1972
  %v1974 = vpop.f32.mrf.mxu0
  %1975 = vdwg.mxu0
  %v1976 = vmax.f32 %v1960, 0.0
  %v1977 = vmax.f32 %v1973, 0.0
  %v1978 = vpack.c.bf16 %v1976, %v1976
  %v1979 = vpack.c.bf16 %v1977, %v1977
  %v1980 = vld [vmem:[%s7] sm:$0xf]
  %v1981 = vld [vmem:[%s7 + $0x4] sm:$0xf]
  %v1982 = vld [vmem:[%s7 + $0x8] sm:$0xf]
  %v1983 = vld [vmem:[%s7 + $0xc] sm:$0xf]
  %v1984 = vld [vmem:[%s7 + $0x10] sm:$0xf]
  %v1985 = vld [vmem:[%s7 + $0x14] sm:$0xf]
  %v1986 = vld [vmem:[%s7 + $0x18] sm:$0xf]
  %v1987 = vld [vmem:[%s7 + $0x1c] sm:$0xf]
  %v1988 = vld [vmem:[%s7 + $0x20] sm:$0xf]
  %v1989 = vld [vmem:[%s7 + $0x24] sm:$0xf]
  %v1990 = vld [vmem:[%s7 + $0x28] sm:$0xf]
  %v1991 = vld [vmem:[%s7 + $0x2c] sm:$0xf]
  %v1992 = vld [vmem:[%s7 + $0x30] sm:$0xf]
  %v1993 = vld [vmem:[%s7 + $0x34] sm:$0xf]
  %v1994 = vld [vmem:[%s7 + $0x38] sm:$0xf]
  %v1995 = vld [vmem:[%s7 + $0x3c] sm:$0xf]
  %v1996 = vld [vmem:[%s7 + $0x40] sm:$0xf]
  %v1997 = vld [vmem:[%s7 + $0x44] sm:$0xf]
  %v1998 = vld [vmem:[%s7 + $0x48] sm:$0xf]
  %v1999 = vld [vmem:[%s7 + $0x4c] sm:$0xf]
  %v2000 = vld [vmem:[%s7 + $0x50] sm:$0xf]
  %v2001 = vld [vmem:[%s7 + $0x54] sm:$0xf]
  %v2002 = vld [vmem:[%s7 + $0x58] sm:$0xf]
  %v2003 = vld [vmem:[%s7 + $0x5c] sm:$0xf]
  %v2004 = vld [vmem:[%s7 + $0x60] sm:$0xf]
  %v2005 = vld [vmem:[%s7 + $0x64] sm:$0xf]
  %v2006 = vld [vmem:[%s7 + $0x68] sm:$0xf]
  %v2007 = vld [vmem:[%s7 + $0x6c] sm:$0xf]
  %v2008 = vld [vmem:[%s7 + $0x70] sm:$0xf]
  %v2009 = vld [vmem:[%s7 + $0x74] sm:$0xf]
  %v2010 = vld [vmem:[%s7 + $0x78] sm:$0xf]
  %v2011 = vld [vmem:[%s7 + $0x7c] sm:$0xf]
  %v2012 = vld [vmem:[%s8] sm:$0x1]
  %v2014 = vperm.slane %v2012, 0
  %v2048 = vunpack.c.l.b16 %v1980
  %v2049 = vunpack.c.l.b16 %v1981
  %v2050 = vunpack.c.l.b16 %v1982
  %v2051 = vunpack.c.l.b16 %v1983
  %v2052 = vunpack.c.l.b16 %v1984
  %v2053 = vunpack.c.l.b16 %v1985
  %v2054 = vunpack.c.l.b16 %v1986
  %v2055 = vunpack.c.l.b16 %v1987
  %v2056 = vunpack.c.l.b16 %v1988
  %v2057 = vunpack.c.l.b16 %v1989
  %v2058 = vunpack.c.l.b16 %v1990
  %v2059 = vunpack.c.l.b16 %v1991
  %v2060 = vunpack.c.l.b16 %v1992
  %v2061 = vunpack.c.l.b16 %v1993
  %v2062 = vunpack.c.l.b16 %v1994
  %v2063 = vunpack.c.l.b16 %v1995
  %v2064 = vunpack.c.l.b16 %v1996
  %v2065 = vunpack.c.l.b16 %v1997
  %v2066 = vunpack.c.l.b16 %v1998
  %v2067 = vunpack.c.l.b16 %v1999
  %v2068 = vunpack.c.l.b16 %v2000
  %v2069 = vunpack.c.l.b16 %v2001
  %v2070 = vunpack.c.l.b16 %v2002
  %v2071 = vunpack.c.l.b16 %v2003
  %v2072 = vunpack.c.l.b16 %v2004
  %v2073 = vunpack.c.l.b16 %v2005
  %v2074 = vunpack.c.l.b16 %v2006
  %v2075 = vunpack.c.l.b16 %v2007
  %v2076 = vunpack.c.l.b16 %v2008
  %v2077 = vunpack.c.l.b16 %v2009
  %v2078 = vunpack.c.l.b16 %v2010
  %v2079 = vunpack.c.l.b16 %v2011
  %v2080 = vpack.c.b16 %v2049, %v2048
  %v2081 = vpack.c.b16 %v2051, %v2050
  %v2082 = vpack.c.b16 %v2053, %v2052
  %v2083 = vpack.c.b16 %v2055, %v2054
  %v2084 = vpack.c.b16 %v2057, %v2056
  %v2085 = vpack.c.b16 %v2059, %v2058
  %v2086 = vpack.c.b16 %v2061, %v2060
  %v2087 = vpack.c.b16 %v2063, %v2062
  %v2088 = vpack.c.b16 %v2065, %v2064
  %v2089 = vpack.c.b16 %v2067, %v2066
  %v2090 = vpack.c.b16 %v2069, %v2068
  %v2091 = vpack.c.b16 %v2071, %v2070
  %v2092 = vpack.c.b16 %v2073, %v2072
  %v2093 = vpack.c.b16 %v2075, %v2074
  %v2094 = vpack.c.b16 %v2077, %v2076
  %v2095 = vpack.c.b16 %v2079, %v2078
  %2112 = vmatpush.bf16.msra.mxu0 %v2087
  %2113 = vmatpush.bf16.msra.mxu0 %v2086
  %2114 = vmatpush.bf16.msra.mxu0 %v2085
  %2115 = vmatpush.bf16.msra.mxu0 %v2084
  %2116 = vmatpush.bf16.msra.mxu0 %v2083
  %2117 = vmatpush.bf16.msra.mxu0 %v2082
  %2118 = vmatpush.bf16.msra.mxu0 %v2081
  %2119 = vmatpush.bf16.msra.mxu0 %v2080
  %2120 = vmatmul.bf16.gmra.mxu0 %v1978
  %v2121 = vpop.f32.mrf.mxu0
  %v2122 = vadd.f32 %v2014, %v2121
  %v2123 = vpop.f32.mrf.mxu0
  %2124 = vdwg.mxu0
  %2125 = vmatpush.bf16.msra.mxu0 %v2095
  %2126 = vmatpush.bf16.msra.mxu0 %v2094
  %2127 = vmatpush.bf16.msra.mxu0 %v2093
  %2128 = vmatpush.bf16.msra.mxu0 %v2092
  %2129 = vmatpush.bf16.msra.mxu0 %v2091
  %2130 = vmatpush.bf16.msra.mxu0 %v2090
  %2131 = vmatpush.bf16.msra.mxu0 %v2089
  %2132 = vmatpush.bf16.msra.mxu0 %v2088
  %2133 = vmatmul.bf16.gmra.mxu0 %v1979
  %v2134 = vpop.f32.mrf.mxu0
  %v2135 = vadd.f32 %v2122, %v2134
  %v2136 = vpop.f32.mrf.mxu0
  %2137 = vdwg.mxu0
  %2138 = vst [vmem:[%s9] sm:$0xff] %v2135
  // Predicated region
  $region38: #{cnn_model_l2_forward.9} parent=0 // pred_check
    _
  $region39: #{cnn_model_l2_forward.9} parent=0 // pred_check_branch
    %2140 = sbr.rel (0) target = $region41
  $region40: #{cnn_model_l2_forward.9} parent=0 // pred_region
    _
  $region41: #{cnn_model_l2_forward.9} parent=0 // pred_fallthru
    _
  // Predicated region
  $region42: #{cnn_model_l2_forward.9} parent=0 // pred_check
    _
  $region43: #{cnn_model_l2_forward.9} parent=0 // pred_check_branch
    %2142 = sbr.rel (0) target = $region45
  $region44: #{cnn_model_l2_forward.9} parent=0 // pred_region
    _
  $region45: #{cnn_model_l2_forward.9} parent=0 // pred_fallthru
    _

</llo_original>
